<compile_context>
chip_gen: v7x
topology: tpu7x:2x2x1
jax: 0.10.0
libtpu: 0.0.40
codegen_flags: <defaults>
</compile_context>

<pallas_src>
import functools

import jax
import jax.numpy as jnp
import numpy as np
from jax.experimental import pallas as pl
from jax.experimental.pallas import tpu as pltpu


# ---------------------------------------------------------------------------
# kernels
# ---------------------------------------------------------------------------
def _to_bf16(v):
    """Widen int8 0/1 adjacency (or pass through bf16) -- exact, VPU-side."""
    return v if v.dtype == jnp.bfloat16 else v.astype(jnp.bfloat16)


def _proj_kernel(x_ref, w01_ref, b01_ref, h01_ref):
    """Row block of relu(x @ [Wa0|Wb0] + [ba0|bb0]) -> bf16, 2H lanes."""
    y = jnp.dot(x_ref[...], w01_ref[...], preferred_element_type=jnp.float32)
    h01_ref[...] = jnp.maximum(y + b01_ref[...], 0.0).astype(h01_ref.dtype)


def _agg_hidden_kernel(adj_a_ref, adj_b_ref, h01_ref, w12_ref, b12_ref, h12_ref,
                       *, hidden):
    """Row block of relu([A@h_a0 | B@h_b1] @ blockdiag(Wa1,Wb1) + [ba1|bb1])."""
    f32 = jnp.float32
    h = hidden
    adj_a = _to_bf16(adj_a_ref[...])           # bf16 MXU LHS (0/1 -> exact)
    adj_b = _to_bf16(adj_b_ref[...])
    h01 = h01_ref[...]                         # (n_pad, 2H) bf16, VMEM resident
    agg = jnp.concatenate(
        [jnp.dot(adj_a, h01[:, :h], preferred_element_type=f32),
         jnp.dot(adj_b, h01[:, h:], preferred_element_type=f32)], axis=1)
    h12 = jnp.dot(agg, w12_ref[...], preferred_element_type=f32) + b12_ref[...]
    h12_ref[...] = jnp.maximum(h12, 0.0).astype(h12_ref.dtype)


def _final_kernel(adj_a_ref, adj_b_ref, h12_ref, h01_blk_ref,
                  wm_ref, bm_ref, wo_ref, bo_ref, out_ref, *, hidden, tm):
    """Row block of the final aggregations + merge layer + lane-padded output."""
    f32 = jnp.float32
    h = hidden
    adj_a = _to_bf16(adj_a_ref[...])
    adj_b = _to_bf16(adj_b_ref[...])
    h12 = h12_ref[...]                                               # (n_pad, 2H) bf16
    x_a = jnp.dot(adj_a, h12[:, :h], preferred_element_type=f32)    # A @ h_a1
    h_b3 = jnp.dot(adj_b, h12[:, h:], preferred_element_type=f32)   # B @ h_b2
    # row block of h_b2 sliced from the resident full ref (no duplicate DMA stream)
    row0 = pl.multiple_of(pl.program_id(0) * tm, tm)
    h2_blk = h12_ref[pl.ds(row0, tm), :][:, h:].astype(f32)
    h1_blk = h01_blk_ref[...][:, h:].astype(f32)
    # merge_layer_b(cat([h1,h2,h3])) as accumulated partial dots (no 96-lane concat)
    wm = wm_ref[...]
    x_b = (jnp.dot(h1_blk, wm[:h, :], preferred_element_type=f32)
           + jnp.dot(h2_blk, wm[h:2 * h, :], preferred_element_type=f32)
           + jnp.dot(h_b3, wm[2 * h:, :], preferred_element_type=f32)
           + bm_ref[...])
    x_b = jnp.maximum(x_b, 0.0)
    # output_layer(cat([x_a, x_b])); wo/bo are zero-padded to 128 lanes
    wo = wo_ref[...]
    out_ref[...] = (jnp.dot(x_a, wo[:h, :], preferred_element_type=f32)
                    + jnp.dot(x_b, wo[h:, :], preferred_element_type=f32)
                    + bo_ref[...])


def _fused_kernel(x_ref, adj_a_ref, adj_b_ref, w01_ref, b01_ref, w12_ref, b12_ref,
                  wm_ref, bm_ref, wo_ref, bo_ref, out_ref, *, hidden):
    """Small-graph fast path: the whole forward with both adjacencies resident."""
    f32, bf16 = jnp.float32, jnp.bfloat16
    h = hidden
    adj_a = _to_bf16(adj_a_ref[...])
    adj_b = _to_bf16(adj_b_ref[...])
    # layer 0 of both paths (shared LHS): relu(x @ [Wa0|Wb0] + [ba0|bb0])
    h01 = jnp.maximum(
        jnp.dot(x_ref[...], w01_ref[...], preferred_element_type=f32) + b01_ref[...],
        0.0)
    h01b = h01.astype(bf16)
    # layer 1: per-graph aggregation + block-diag(Wa1, Wb1) hidden linear
    agg = jnp.concatenate(
        [jnp.dot(adj_a, h01b[:, :h], preferred_element_type=f32),
         jnp.dot(adj_b, h01b[:, h:], preferred_element_type=f32)], axis=1)
    h12 = jnp.maximum(
        jnp.dot(agg, w12_ref[...], preferred_element_type=f32) + b12_ref[...], 0.0)
    h12b = h12.astype(bf16)
    # final aggregations
    x_a = jnp.dot(adj_a, h12b[:, :h], preferred_element_type=f32)    # A @ h_a1
    h_b3 = jnp.dot(adj_b, h12b[:, h:], preferred_element_type=f32)   # B @ h_b2
    # merge layer as accumulated partial dots
    wm = wm_ref[...]
    x_b = jnp.maximum(
        jnp.dot(h01[:, h:], wm[:h, :], preferred_element_type=f32)
        + jnp.dot(h12[:, h:], wm[h:2 * h, :], preferred_element_type=f32)
        + jnp.dot(h_b3, wm[2 * h:, :], preferred_element_type=f32)
        + bm_ref[...], 0.0)
    # output layer (lane-padded to 128)
    wo = wo_ref[...]
    out_ref[...] = (jnp.dot(x_a, wo[:h, :], preferred_element_type=f32)
                    + jnp.dot(x_b, wo[h:, :], preferred_element_type=f32)
                    + bo_ref[...])


# ---------------------------------------------------------------------------
# planning helpers
# ---------------------------------------------------------------------------
def _round_up(v, m):
    return (v + m - 1) // m * m


def _pad2d(a, rows, cols):
    return jnp.pad(a, ((0, rows - a.shape[0]), (0, cols - a.shape[1])))


def _vmem_capacity_bytes():
    """Generation-aware VMEM size (128 MiB v5e/v6e, 64 MiB v7x)."""
    try:
        return int(pltpu.get_tpu_info().vmem_capacity_bytes)
    except Exception:
        return 64 * 1024 * 1024            # conservative (v7x-sized) fallback


def _fused_vmem_bytes(n_pad, in_ch, hidden, out_pad, adj_isz):
    h2 = 2 * hidden
    adj_in = 2 * n_pad * n_pad * adj_isz               # both adjacencies resident
    adj_cvt = 2 * n_pad * n_pad * 2                    # bf16 widen copies (conservative)
    acts = n_pad * (in_ch * 4 + 2 * h2 * (4 + 2) + 3 * hidden * 4 + out_pad * 4)
    wts = 4 * (in_ch * h2 + h2 * h2 + 3 * hidden * hidden + h2 * out_pad
               + 4 * h2 + out_pad)
    return adj_in + adj_cvt + acts + wts


def _tiled_vmem_bytes(tm, n_pad, in_ch, hidden, out_pad, adj_isz):
    h2 = 2 * hidden
    adj_in = 2 * 2 * tm * n_pad * adj_isz              # 2 graphs x double-buffered tiles
    adj_cvt = 2 * tm * n_pad * 2                       # in-kernel bf16 widen copies
    h_full = 2 * n_pad * h2 * 2                        # resident full bf16 activations
    h_blk = 2 * tm * (h2 * 2 + in_ch * 4)              # row-block activation / x inputs
    outs = 2 * tm * max(h2 * 2, out_pad * 4)           # double-buffered output blocks
    tmp = tm * (2 * h2 + 3 * hidden + out_pad) * 4     # in-kernel f32 temporaries
    wts = 8 * (in_ch * h2 + h2 * h2 + 3 * hidden * hidden + h2 * out_pad
               + 4 * h2 + out_pad)
    return adj_in + adj_cvt + h_full + h_blk + outs + tmp + wts


def _plan_row_tile(n128, in_ch, hidden, out_pad, adj_isz, budget):
    """Largest 128-multiple row tile whose per-step residents fit `budget`, then
    shrunk (when possible) so the block count is even -> balanced across the two
    TensorCores of a v7x chip under dimension_semantics=("parallel",)."""
    tm = 128
    for cand in (2048, 1024, 512, 256, 128):
        if cand <= max(n128, 128):
            n_est = _round_up(n128, cand)
            if _tiled_vmem_bytes(cand, n_est, in_ch, hidden, out_pad, adj_isz) <= budget:
                tm = cand
                break
    while tm > 128 and pl.cdiv(n128, tm) > 1 and pl.cdiv(n128, tm) % 2 == 1:
        tm //= 2
    blocks = pl.cdiv(n128, tm)
    # TODO(synk): N so large that even tm=128 overflows the budget additionally
    # needs column tiling of the adjacency (not implemented).
    return tm, blocks, blocks * tm


# ---------------------------------------------------------------------------
# wrapper
# ---------------------------------------------------------------------------
def deltagnn_forward(x, adj_a, adj_b, params, *,
                     adj_storage_dtype=jnp.int8, force_tiled=False):
    """DeltaGNN.forward (flow_flag=False; residual/batch_norm/dropout disabled)."""
    n, in_ch = x.shape
    hidden = params["wa1"].shape[0]
    out_ch = params["wo"].shape[1]
    f32 = jnp.float32
    h2 = 2 * hidden

    out_pad = _round_up(out_ch, 128)                  # lane-dense output block
    adj_isz = np.dtype(adj_storage_dtype).itemsize
    n128 = _round_up(n, 128)

    vmem_cap = _vmem_capacity_bytes()
    vmem_limit = min(vmem_cap * 3 // 4, 112 * 1024 * 1024)   # ~96 MiB v5e/v6e, 48 MiB v7x

    # ---- exact wrapper-side weight fusion / padding ----
    w01 = jnp.concatenate([params["wa0"], params["wb0"]], axis=1)   # (IN, 2H)
    b01 = jnp.concatenate([params["ba0"], params["bb0"]], axis=1)   # (1, 2H)
    w12 = jnp.zeros((h2, h2), f32)                                  # blockdiag(Wa1, Wb1)
    w12 = w12.at[:hidden, :hidden].set(params["wa1"])
    w12 = w12.at[hidden:, hidden:].set(params["wb1"])
    b12 = jnp.concatenate([params["ba1"], params["bb1"]], axis=1)   # (1, 2H)
    wo_p = _pad2d(params["wo"], h2, out_pad)                        # zero lane padding
    bo_p = _pad2d(params["bo"], 1, out_pad)

    use_fused = (not force_tiled) and (
        _fused_vmem_bytes(n128, in_ch, hidden, out_pad, adj_isz)
        <= int(vmem_limit * 0.6))

    if use_fused:
        n_pad = n128
    else:
        tm, blocks, n_pad = _plan_row_tile(
            n128, in_ch, hidden, out_pad, adj_isz, int(vmem_limit * 0.8))

    # ---- pad inputs; 0/1 adjacency is exact in int8 / bf16 ----
    x_p = _pad2d(x, n_pad, in_ch)
    adj_a_p = _pad2d(adj_a, n_pad, n_pad).astype(adj_storage_dtype)
    adj_b_p = _pad2d(adj_b, n_pad, n_pad).astype(adj_storage_dtype)

    if use_fused:
        # ---- small-graph fast path: one call, adjacencies read from HBM once ----
        vspec = pl.BlockSpec(memory_space=pltpu.MemorySpace.VMEM)
        out_p = pl.pallas_call(
            functools.partial(_fused_kernel, hidden=hidden),
            in_specs=[vspec] * 11,
            out_specs=vspec,
            out_shape=jax.ShapeDtypeStruct((n_pad, out_pad), f32),
            compiler_params=pltpu.CompilerParams(vmem_limit_bytes=vmem_limit),
            cost_estimate=pl.CostEstimate(
                flops=8 * n_pad * n_pad * hidden
                      + 8 * n_pad * hidden * (in_ch + 4 * hidden + out_pad),
                transcendentals=0,
                bytes_accessed=2 * n_pad * n_pad * adj_isz
                               + 4 * n_pad * (in_ch + out_pad)),
        )(x_p, adj_a_p, adj_b_p, w01, b01, w12, b12,
          params["wm"], params["bm"], wo_p, bo_p)
        return out_p[:n, :out_ch]

    # ---- large-graph path: 3 row-block-gridded passes streaming the adjacency ----
    row_blk = lambda i: (i, 0)
    full_blk = lambda i: (0, 0)
    grid = (blocks,)
    cparams = pltpu.CompilerParams(dimension_semantics=("parallel",),
                                   vmem_limit_bytes=vmem_limit)
    adj_bytes = 2 * n_pad * n_pad * adj_isz
    h_bytes = n_pad * h2 * 2

    # pass 0: fused first-layer projection of both paths -> bf16 [h_a0 | h_b1]
    h01 = pl.pallas_call(
        _proj_kernel,
        grid=grid,
        in_specs=[pl.BlockSpec((tm, in_ch), row_blk),
                  pl.BlockSpec((in_ch, h2), full_blk),
                  pl.BlockSpec((1, h2), full_blk)],
        out_specs=pl.BlockSpec((tm, h2), row_blk),
        out_shape=jax.ShapeDtypeStruct((n_pad, h2), jnp.bfloat16),
        compiler_params=cparams,
        cost_estimate=pl.CostEstimate(
            flops=2 * n_pad * in_ch * h2, transcendentals=0,
            bytes_accessed=4 * n_pad * in_ch + h_bytes),
    )(x_p, w01, b01)

    # pass 1: per-graph aggregation + block-diag hidden linear -> bf16 [h_a1 | h_b2]
    h12 = pl.pallas_call(
        functools.partial(_agg_hidden_kernel, hidden=hidden),
        grid=grid,
        in_specs=[pl.BlockSpec((tm, n_pad), row_blk),        # adj_a row block
                  pl.BlockSpec((tm, n_pad), row_blk),        # adj_b row block
                  pl.BlockSpec((n_pad, h2), full_blk),       # [h_a0|h_b1] (resident)
                  pl.BlockSpec((h2, h2), full_blk),
                  pl.BlockSpec((1, h2), full_blk)],
        out_specs=pl.BlockSpec((tm, h2), row_blk),
        out_shape=jax.ShapeDtypeStruct((n_pad, h2), jnp.bfloat16),
        compiler_params=cparams,
        cost_estimate=pl.CostEstimate(
            flops=4 * n_pad * n_pad * hidden + 2 * n_pad * h2 * h2,
            transcendentals=0,
            bytes_accessed=adj_bytes + 2 * h_bytes),
    )(adj_a_p, adj_b_p, h01, w12, b12)

    # pass 2: final aggregations + merge layer + lane-padded output layer
    out_p = pl.pallas_call(
        functools.partial(_final_kernel, hidden=hidden, tm=tm),
        grid=grid,
        in_specs=[pl.BlockSpec((tm, n_pad), row_blk),        # adj_a row block
                  pl.BlockSpec((tm, n_pad), row_blk),        # adj_b row block
                  pl.BlockSpec((n_pad, h2), full_blk),       # [h_a1|h_b2] (resident)
                  pl.BlockSpec((tm, h2), row_blk),           # [h_a0|h_b1] row block
                  pl.BlockSpec((3 * hidden, hidden), full_blk),
                  pl.BlockSpec((1, hidden), full_blk),
                  pl.BlockSpec((h2, out_pad), full_blk),
                  pl.BlockSpec((1, out_pad), full_blk)],
        out_specs=pl.BlockSpec((tm, out_pad), row_blk),
        out_shape=jax.ShapeDtypeStruct((n_pad, out_pad), f32),
        compiler_params=cparams,
        cost_estimate=pl.CostEstimate(
            flops=(4 * n_pad * n_pad * hidden
                   + 2 * n_pad * 3 * hidden * hidden
                   + 2 * n_pad * h2 * out_pad),
            transcendentals=0,
            bytes_accessed=adj_bytes + 2 * h_bytes + 4 * n_pad * out_pad),
    )(adj_a_p, adj_b_p, h12, h01, params["wm"], params["bm"], wo_p, bo_p)

    # drop node padding and the lane padding of the output layer
    return out_p[:n, :out_ch]


# ---------------------------------------------------------------------------
# reference, params, demo
# ---------------------------------------------------------------------------
def deltagnn_reference(x, adj_a, adj_b, p):
    """Pure-JAX (f32) reference of the same forward pass."""
    def lin(v, w, b):
        return jnp.maximum(v @ w + b, 0.0)
    h = lin(x, p["wa0"], p["ba0"])
    h = lin(adj_a @ h, p["wa1"], p["ba1"])
    x_a = adj_a @ h
    h1 = lin(x, p["wb0"], p["bb0"])
    h2 = lin(adj_b @ h1, p["wb1"], p["bb1"])
    h3 = adj_b @ h2
    x_b = jnp.maximum(jnp.concatenate([h1, h2, h3], axis=1) @ p["wm"] + p["bm"], 0.0)
    return jnp.concatenate([x_a, x_b], axis=1) @ p["wo"] + p["bo"]


def init_params(key, in_channels, hidden, out_channels):
    ks = jax.random.split(key, 8)

    def kaiming_relu_uniform(k, fan_in, fan_out):
        bound = float(np.sqrt(6.0 / fan_in))          # gain=sqrt(2), kaiming_uniform
        return jax.random.uniform(k, (fan_in, fan_out), jnp.float32, -bound, bound)

    def torch_default_w(k, fan_in, fan_out):
        bound = float(np.sqrt(1.0 / fan_in))          # nn.Linear default init
        return jax.random.uniform(k, (fan_in, fan_out), jnp.float32, -bound, bound)

    def torch_default_b(k, fan_in, fan_out):
        bound = float(np.sqrt(1.0 / fan_in))
        return jax.random.uniform(k, (1, fan_out), jnp.float32, -bound, bound)

    bias_const = lambda d: jnp.full((1, d), 0.01, jnp.float32)
    return {
        "wa0": kaiming_relu_uniform(ks[0], in_channels, hidden), "ba0": bias_const(hidden),
        "wa1": kaiming_relu_uniform(ks[1], hidden, hidden),      "ba1": bias_const(hidden),
        "wb0": kaiming_relu_uniform(ks[2], in_channels, hidden), "bb0": bias_const(hidden),
        "wb1": kaiming_relu_uniform(ks[3], hidden, hidden),      "bb1": bias_const(hidden),
        "wm": torch_default_w(ks[4], 3 * hidden, hidden),
        "bm": torch_default_b(ks[5], 3 * hidden, hidden),
        "wo": torch_default_w(ks[6], 2 * hidden, out_channels),
        "bo": torch_default_b(ks[7], 2 * hidden, out_channels),
    }


def make_adjacency(key, n, p_edge):
    """Random symmetric 0/1 adjacency with self loops (dense float32)."""
    a = (jax.random.uniform(key, (n, n)) < p_edge).astype(jnp.float32)
    a = jnp.maximum(a, a.T)                            # symmetrize
    a = jnp.maximum(a, jnp.eye(n, dtype=jnp.float32))  # self loops
    return a


if __name__ == "__main__":
    N = 300            # nodes (128-rounded to 384; tiled path pads to 2 x 256)
    IN_CH = 32         # in_channels
    HIDDEN = 32        # hidden_channels
    OUT_CH = 8         # out_channels
    # num_layers=3, residual=False, batch_norm=False, dropout=0.0, flow_flag=False

    key = jax.random.PRNGKey(0)
    k_x, k_a, k_b, k_p = jax.random.split(key, 4)
    x = jax.random.normal(k_x, (N, IN_CH), jnp.float32)
    adj_a = make_adjacency(k_a, N, 0.05)               # homophily graph
    adj_b = make_adjacency(k_b, N, 0.02)               # heterophily graph (given)
    params = init_params(k_p, IN_CH, HIDDEN, OUT_CH)

    ref = np.asarray(jax.block_until_ready(deltagnn_reference(x, adj_a, adj_b, params)))
    ref_scale = float(np.max(np.abs(ref))) + 1e-6

    def run_checked(force_tiled, dtypes):
        last_err = None
        for dt in dtypes:
            try:
                out = jax.block_until_ready(deltagnn_forward(
                    x, adj_a, adj_b, params,
                    adj_storage_dtype=dt, force_tiled=force_tiled))
                diff = float(np.max(np.abs(np.asarray(out) - ref))) / ref_scale
                assert diff < 2.5e-2, f"max scaled error {diff:.3e}"
                return dt
            except Exception as e:      # int8-storage fallback -> bf16 (also exact 0/1)
                last_err = e
        raise last_err

    # small-graph fused fast path (exercised at this demo size)
    used_dtype = run_checked(False, (jnp.int8, jnp.bfloat16))
    # row-block-tiled streaming path (used when the graph does not fit VMEM)
    run_checked(True, (used_dtype, jnp.bfloat16))
    print("KERNEL_OK")
</pallas_src>

<mosaic_0001>
module attributes {stable_mosaic.version = 11 : i64} {
  func.func @_fused_kernel(%arg0: memref<384x32xf32, #tpu.memory_space<vmem>>, %arg1: memref<384x384xi8, #tpu.memory_space<vmem>>, %arg2: memref<384x384xi8, #tpu.memory_space<vmem>>, %arg3: memref<32x64xf32, #tpu.memory_space<vmem>>, %arg4: memref<1x64xf32, #tpu.memory_space<vmem>>, %arg5: memref<64x64xf32, #tpu.memory_space<vmem>>, %arg6: memref<1x64xf32, #tpu.memory_space<vmem>>, %arg7: memref<96x32xf32, #tpu.memory_space<vmem>>, %arg8: memref<1x32xf32, #tpu.memory_space<vmem>>, %arg9: memref<64x128xf32, #tpu.memory_space<vmem>>, %arg10: memref<1x128xf32, #tpu.memory_space<vmem>>, %arg11: memref<384x128xf32, #tpu.memory_space<vmem>>) attributes {dimension_semantics = [], scalar_prefetch = 0 : i64, scratch_operands = 0 : i64, tpu.core_type = #tpu.core_type<tc>} {
    %c0 = arith.constant 0 : index
    %c0_0 = arith.constant 0 : index
    %0 = vector.load %arg1[%c0, %c0_0] : memref<384x384xi8, #tpu.memory_space<vmem>>, vector<384x384xi8>
    %1 = arith.sitofp %0 : vector<384x384xi8> to vector<384x384xbf16>
    %c0_1 = arith.constant 0 : index
    %c0_2 = arith.constant 0 : index
    %2 = vector.load %arg2[%c0_1, %c0_2] : memref<384x384xi8, #tpu.memory_space<vmem>>, vector<384x384xi8>
    %3 = arith.sitofp %2 : vector<384x384xi8> to vector<384x384xbf16>
    %c0_3 = arith.constant 0 : index
    %c0_4 = arith.constant 0 : index
    %4 = vector.load %arg0[%c0_3, %c0_4] : memref<384x32xf32, #tpu.memory_space<vmem>>, vector<384x32xf32>
    %c0_5 = arith.constant 0 : index
    %c0_6 = arith.constant 0 : index
    %5 = vector.load %arg3[%c0_5, %c0_6] : memref<32x64xf32, #tpu.memory_space<vmem>>, vector<32x64xf32>
    %cst = arith.constant dense<0.000000e+00> : vector<384x64xf32>
    %6 = tpu.matmul %4, %5, %cst {dimension_numbers = #tpu.dot_dimension_numbers<[1], [0], [0], [1], [0, 0, 1, 1], [], []>} : vector<384x32xf32>, vector<32x64xf32>, vector<384x64xf32> -> vector<384x64xf32>
    %c0_7 = arith.constant 0 : index
    %c0_8 = arith.constant 0 : index
    %7 = vector.load %arg4[%c0_7, %c0_8] : memref<1x64xf32, #tpu.memory_space<vmem>>, vector<1x64xf32>
    %8 = vector.broadcast %7 : vector<1x64xf32> to vector<384x64xf32>
    %9 = arith.addf %6, %8 : vector<384x64xf32>
    %cst_9 = arith.constant 0.000000e+00 : f32
    %10 = vector.broadcast %cst_9 : f32 to vector<384x64xf32>
    %11 = arith.maximumf %9, %10 : vector<384x64xf32>
    %12 = arith.truncf %11 : vector<384x64xf32> to vector<384x64xbf16>
    %13 = vector.extract_strided_slice %12 {offsets = [0, 0], sizes = [384, 32], strides = [1, 1]} : vector<384x64xbf16> to vector<384x32xbf16>
    %cst_10 = arith.constant dense<0.000000e+00> : vector<384x32xf32>
    %14 = tpu.matmul %1, %13, %cst_10 {dimension_numbers = #tpu.dot_dimension_numbers<[1], [0], [0], [1], [0, 0, 1, 1], [], []>} : vector<384x384xbf16>, vector<384x32xbf16>, vector<384x32xf32> -> vector<384x32xf32>
    %15 = vector.extract_strided_slice %12 {offsets = [0, 32], sizes = [384, 32], strides = [1, 1]} : vector<384x64xbf16> to vector<384x32xbf16>
    %cst_11 = arith.constant dense<0.000000e+00> : vector<384x32xf32>
    %16 = tpu.matmul %3, %15, %cst_11 {dimension_numbers = #tpu.dot_dimension_numbers<[1], [0], [0], [1], [0, 0, 1, 1], [], []>} : vector<384x384xbf16>, vector<384x32xbf16>, vector<384x32xf32> -> vector<384x32xf32>
    %17 = tpu.concatenate %14, %16 in 1 : vector<384x32xf32>, vector<384x32xf32> -> vector<384x64xf32>
    %c0_12 = arith.constant 0 : index
    %c0_13 = arith.constant 0 : index
    %18 = vector.load %arg5[%c0_12, %c0_13] : memref<64x64xf32, #tpu.memory_space<vmem>>, vector<64x64xf32>
    %cst_14 = arith.constant dense<0.000000e+00> : vector<384x64xf32>
    %19 = tpu.matmul %17, %18, %cst_14 {dimension_numbers = #tpu.dot_dimension_numbers<[1], [0], [0], [1], [0, 0, 1, 1], [], []>} : vector<384x64xf32>, vector<64x64xf32>, vector<384x64xf32> -> vector<384x64xf32>
    %c0_15 = arith.constant 0 : index
    %c0_16 = arith.constant 0 : index
    %20 = vector.load %arg6[%c0_15, %c0_16] : memref<1x64xf32, #tpu.memory_space<vmem>>, vector<1x64xf32>
    %21 = vector.broadcast %20 : vector<1x64xf32> to vector<384x64xf32>
    %22 = arith.addf %19, %21 : vector<384x64xf32>
    %cst_17 = arith.constant 0.000000e+00 : f32
    %23 = vector.broadcast %cst_17 : f32 to vector<384x64xf32>
    %24 = arith.maximumf %22, %23 : vector<384x64xf32>
    %25 = arith.truncf %24 : vector<384x64xf32> to vector<384x64xbf16>
    %26 = vector.extract_strided_slice %25 {offsets = [0, 0], sizes = [384, 32], strides = [1, 1]} : vector<384x64xbf16> to vector<384x32xbf16>
    %cst_18 = arith.constant dense<0.000000e+00> : vector<384x32xf32>
    %27 = tpu.matmul %1, %26, %cst_18 {dimension_numbers = #tpu.dot_dimension_numbers<[1], [0], [0], [1], [0, 0, 1, 1], [], []>} : vector<384x384xbf16>, vector<384x32xbf16>, vector<384x32xf32> -> vector<384x32xf32>
    %28 = vector.extract_strided_slice %25 {offsets = [0, 32], sizes = [384, 32], strides = [1, 1]} : vector<384x64xbf16> to vector<384x32xbf16>
    %cst_19 = arith.constant dense<0.000000e+00> : vector<384x32xf32>
    %29 = tpu.matmul %3, %28, %cst_19 {dimension_numbers = #tpu.dot_dimension_numbers<[1], [0], [0], [1], [0, 0, 1, 1], [], []>} : vector<384x384xbf16>, vector<384x32xbf16>, vector<384x32xf32> -> vector<384x32xf32>
    %c0_20 = arith.constant 0 : index
    %c0_21 = arith.constant 0 : index
    %30 = vector.load %arg7[%c0_20, %c0_21] : memref<96x32xf32, #tpu.memory_space<vmem>>, vector<96x32xf32>
    %31 = vector.extract_strided_slice %11 {offsets = [0, 32], sizes = [384, 32], strides = [1, 1]} : vector<384x64xf32> to vector<384x32xf32>
    %32 = vector.extract_strided_slice %30 {offsets = [0, 0], sizes = [32, 32], strides = [1, 1]} : vector<96x32xf32> to vector<32x32xf32>
    %cst_22 = arith.constant dense<0.000000e+00> : vector<384x32xf32>
    %33 = tpu.matmul %31, %32, %cst_22 {dimension_numbers = #tpu.dot_dimension_numbers<[1], [0], [0], [1], [0, 0, 1, 1], [], []>} : vector<384x32xf32>, vector<32x32xf32>, vector<384x32xf32> -> vector<384x32xf32>
    %34 = vector.extract_strided_slice %24 {offsets = [0, 32], sizes = [384, 32], strides = [1, 1]} : vector<384x64xf32> to vector<384x32xf32>
    %35 = vector.extract_strided_slice %30 {offsets = [32, 0], sizes = [32, 32], strides = [1, 1]} : vector<96x32xf32> to vector<32x32xf32>
    %cst_23 = arith.constant dense<0.000000e+00> : vector<384x32xf32>
    %36 = tpu.matmul %34, %35, %cst_23 {dimension_numbers = #tpu.dot_dimension_numbers<[1], [0], [0], [1], [0, 0, 1, 1], [], []>} : vector<384x32xf32>, vector<32x32xf32>, vector<384x32xf32> -> vector<384x32xf32>
    %37 = arith.addf %33, %36 : vector<384x32xf32>
    %38 = vector.extract_strided_slice %30 {offsets = [64, 0], sizes = [32, 32], strides = [1, 1]} : vector<96x32xf32> to vector<32x32xf32>
    %cst_24 = arith.constant dense<0.000000e+00> : vector<384x32xf32>
    %39 = tpu.matmul %29, %38, %cst_24 {dimension_numbers = #tpu.dot_dimension_numbers<[1], [0], [0], [1], [0, 0, 1, 1], [], []>} : vector<384x32xf32>, vector<32x32xf32>, vector<384x32xf32> -> vector<384x32xf32>
    %40 = arith.addf %37, %39 : vector<384x32xf32>
    %c0_25 = arith.constant 0 : index
    %c0_26 = arith.constant 0 : index
    %41 = vector.load %arg8[%c0_25, %c0_26] : memref<1x32xf32, #tpu.memory_space<vmem>>, vector<1x32xf32>
    %42 = vector.broadcast %41 : vector<1x32xf32> to vector<384x32xf32>
    %43 = arith.addf %40, %42 : vector<384x32xf32>
    %cst_27 = arith.constant 0.000000e+00 : f32
    %44 = vector.broadcast %cst_27 : f32 to vector<384x32xf32>
    %45 = arith.maximumf %43, %44 : vector<384x32xf32>
    %c0_28 = arith.constant 0 : index
    %c0_29 = arith.constant 0 : index
    %46 = vector.load %arg9[%c0_28, %c0_29] : memref<64x128xf32, #tpu.memory_space<vmem>>, vector<64x128xf32>
    %47 = vector.extract_strided_slice %46 {offsets = [0, 0], sizes = [32, 128], strides = [1, 1]} : vector<64x128xf32> to vector<32x128xf32>
    %cst_30 = arith.constant dense<0.000000e+00> : vector<384x128xf32>
    %48 = tpu.matmul %27, %47, %cst_30 {dimension_numbers = #tpu.dot_dimension_numbers<[1], [0], [0], [1], [0, 0, 1, 1], [], []>} : vector<384x32xf32>, vector<32x128xf32>, vector<384x128xf32> -> vector<384x128xf32>
    %49 = vector.extract_strided_slice %46 {offsets = [32, 0], sizes = [32, 128], strides = [1, 1]} : vector<64x128xf32> to vector<32x128xf32>
    %cst_31 = arith.constant dense<0.000000e+00> : vector<384x128xf32>
    %50 = tpu.matmul %45, %49, %cst_31 {dimension_numbers = #tpu.dot_dimension_numbers<[1], [0], [0], [1], [0, 0, 1, 1], [], []>} : vector<384x32xf32>, vector<32x128xf32>, vector<384x128xf32> -> vector<384x128xf32>
    %51 = arith.addf %48, %50 : vector<384x128xf32>
    %c0_32 = arith.constant 0 : index
    %c0_33 = arith.constant 0 : index
    %52 = vector.load %arg10[%c0_32, %c0_33] : memref<1x128xf32, #tpu.memory_space<vmem>>, vector<1x128xf32>
    %53 = vector.broadcast %52 : vector<1x128xf32> to vector<384x128xf32>
    %54 = arith.addf %51, %53 : vector<384x128xf32>
    %c0_34 = arith.constant 0 : index
    %c0_35 = arith.constant 0 : index
    %55 = vector.load %arg11[%c0_34, %c0_35] : memref<384x128xf32, #tpu.memory_space<vmem>>, vector<384x128xf32>
    tpu.vector_store %arg11[%c0_34, %c0_35], %54 {strides = array<i32>} : memref<384x128xf32, #tpu.memory_space<vmem>>, vector<384x128xf32>,
    return
  }
}

module attributes {stable_mosaic.version = 11 : i64} {
  func.func @_fused_kernel(%arg0: memref<384x32xf32, #tpu.memory_space<vmem>>, %arg1: memref<384x384xbf16, #tpu.memory_space<vmem>>, %arg2: memref<384x384xbf16, #tpu.memory_space<vmem>>, %arg3: memref<32x64xf32, #tpu.memory_space<vmem>>, %arg4: memref<1x64xf32, #tpu.memory_space<vmem>>, %arg5: memref<64x64xf32, #tpu.memory_space<vmem>>, %arg6: memref<1x64xf32, #tpu.memory_space<vmem>>, %arg7: memref<96x32xf32, #tpu.memory_space<vmem>>, %arg8: memref<1x32xf32, #tpu.memory_space<vmem>>, %arg9: memref<64x128xf32, #tpu.memory_space<vmem>>, %arg10: memref<1x128xf32, #tpu.memory_space<vmem>>, %arg11: memref<384x128xf32, #tpu.memory_space<vmem>>) attributes {dimension_semantics = [], scalar_prefetch = 0 : i64, scratch_operands = 0 : i64, tpu.core_type = #tpu.core_type<tc>} {
    %c0 = arith.constant 0 : index
    %c0_0 = arith.constant 0 : index
    %0 = vector.load %arg1[%c0, %c0_0] : memref<384x384xbf16, #tpu.memory_space<vmem>>, vector<384x384xbf16>
    %c0_1 = arith.constant 0 : index
    %c0_2 = arith.constant 0 : index
    %1 = vector.load %arg2[%c0_1, %c0_2] : memref<384x384xbf16, #tpu.memory_space<vmem>>, vector<384x384xbf16>
    %c0_3 = arith.constant 0 : index
    %c0_4 = arith.constant 0 : index
    %2 = vector.load %arg0[%c0_3, %c0_4] : memref<384x32xf32, #tpu.memory_space<vmem>>, vector<384x32xf32>
    %c0_5 = arith.constant 0 : index
    %c0_6 = arith.constant 0 : index
    %3 = vector.load %arg3[%c0_5, %c0_6] : memref<32x64xf32, #tpu.memory_space<vmem>>, vector<32x64xf32>
    %cst = arith.constant dense<0.000000e+00> : vector<384x64xf32>
    %4 = tpu.matmul %2, %3, %cst {dimension_numbers = #tpu.dot_dimension_numbers<[1], [0], [0], [1], [0, 0, 1, 1], [], []>} : vector<384x32xf32>, vector<32x64xf32>, vector<384x64xf32> -> vector<384x64xf32>
    %c0_7 = arith.constant 0 : index
    %c0_8 = arith.constant 0 : index
    %5 = vector.load %arg4[%c0_7, %c0_8] : memref<1x64xf32, #tpu.memory_space<vmem>>, vector<1x64xf32>
    %6 = vector.broadcast %5 : vector<1x64xf32> to vector<384x64xf32>
    %7 = arith.addf %4, %6 : vector<384x64xf32>
    %cst_9 = arith.constant 0.000000e+00 : f32
    %8 = vector.broadcast %cst_9 : f32 to vector<384x64xf32>
    %9 = arith.maximumf %7, %8 : vector<384x64xf32>
    %10 = arith.truncf %9 : vector<384x64xf32> to vector<384x64xbf16>
    %11 = vector.extract_strided_slice %10 {offsets = [0, 0], sizes = [384, 32], strides = [1, 1]} : vector<384x64xbf16> to vector<384x32xbf16>
    %cst_10 = arith.constant dense<0.000000e+00> : vector<384x32xf32>
    %12 = tpu.matmul %0, %11, %cst_10 {dimension_numbers = #tpu.dot_dimension_numbers<[1], [0], [0], [1], [0, 0, 1, 1], [], []>} : vector<384x384xbf16>, vector<384x32xbf16>, vector<384x32xf32> -> vector<384x32xf32>
    %13 = vector.extract_strided_slice %10 {offsets = [0, 32], sizes = [384, 32], strides = [1, 1]} : vector<384x64xbf16> to vector<384x32xbf16>
    %cst_11 = arith.constant dense<0.000000e+00> : vector<384x32xf32>
    %14 = tpu.matmul %1, %13, %cst_11 {dimension_numbers = #tpu.dot_dimension_numbers<[1], [0], [0], [1], [0, 0, 1, 1], [], []>} : vector<384x384xbf16>, vector<384x32xbf16>, vector<384x32xf32> -> vector<384x32xf32>
    %15 = tpu.concatenate %12, %14 in 1 : vector<384x32xf32>, vector<384x32xf32> -> vector<384x64xf32>
    %c0_12 = arith.constant 0 : index
    %c0_13 = arith.constant 0 : index
    %16 = vector.load %arg5[%c0_12, %c0_13] : memref<64x64xf32, #tpu.memory_space<vmem>>, vector<64x64xf32>
    %cst_14 = arith.constant dense<0.000000e+00> : vector<384x64xf32>
    %17 = tpu.matmul %15, %16, %cst_14 {dimension_numbers = #tpu.dot_dimension_numbers<[1], [0], [0], [1], [0, 0, 1, 1], [], []>} : vector<384x64xf32>, vector<64x64xf32>, vector<384x64xf32> -> vector<384x64xf32>
    %c0_15 = arith.constant 0 : index
    %c0_16 = arith.constant 0 : index
    %18 = vector.load %arg6[%c0_15, %c0_16] : memref<1x64xf32, #tpu.memory_space<vmem>>, vector<1x64xf32>
    %19 = vector.broadcast %18 : vector<1x64xf32> to vector<384x64xf32>
    %20 = arith.addf %17, %19 : vector<384x64xf32>
    %cst_17 = arith.constant 0.000000e+00 : f32
    %21 = vector.broadcast %cst_17 : f32 to vector<384x64xf32>
    %22 = arith.maximumf %20, %21 : vector<384x64xf32>
    %23 = arith.truncf %22 : vector<384x64xf32> to vector<384x64xbf16>
    %24 = vector.extract_strided_slice %23 {offsets = [0, 0], sizes = [384, 32], strides = [1, 1]} : vector<384x64xbf16> to vector<384x32xbf16>
    %cst_18 = arith.constant dense<0.000000e+00> : vector<384x32xf32>
    %25 = tpu.matmul %0, %24, %cst_18 {dimension_numbers = #tpu.dot_dimension_numbers<[1], [0], [0], [1], [0, 0, 1, 1], [], []>} : vector<384x384xbf16>, vector<384x32xbf16>, vector<384x32xf32> -> vector<384x32xf32>
    %26 = vector.extract_strided_slice %23 {offsets = [0, 32], sizes = [384, 32], strides = [1, 1]} : vector<384x64xbf16> to vector<384x32xbf16>
    %cst_19 = arith.constant dense<0.000000e+00> : vector<384x32xf32>
    %27 = tpu.matmul %1, %26, %cst_19 {dimension_numbers = #tpu.dot_dimension_numbers<[1], [0], [0], [1], [0, 0, 1, 1], [], []>} : vector<384x384xbf16>, vector<384x32xbf16>, vector<384x32xf32> -> vector<384x32xf32>
    %c0_20 = arith.constant 0 : index
    %c0_21 = arith.constant 0 : index
    %28 = vector.load %arg7[%c0_20, %c0_21] : memref<96x32xf32, #tpu.memory_space<vmem>>, vector<96x32xf32>
    %29 = vector.extract_strided_slice %9 {offsets = [0, 32], sizes = [384, 32], strides = [1, 1]} : vector<384x64xf32> to vector<384x32xf32>
    %30 = vector.extract_strided_slice %28 {offsets = [0, 0], sizes = [32, 32], strides = [1, 1]} : vector<96x32xf32> to vector<32x32xf32>
    %cst_22 = arith.constant dense<0.000000e+00> : vector<384x32xf32>
    %31 = tpu.matmul %29, %30, %cst_22 {dimension_numbers = #tpu.dot_dimension_numbers<[1], [0], [0], [1], [0, 0, 1, 1], [], []>} : vector<384x32xf32>, vector<32x32xf32>, vector<384x32xf32> -> vector<384x32xf32>
    %32 = vector.extract_strided_slice %22 {offsets = [0, 32], sizes = [384, 32], strides = [1, 1]} : vector<384x64xf32> to vector<384x32xf32>
    %33 = vector.extract_strided_slice %28 {offsets = [32, 0], sizes = [32, 32], strides = [1, 1]} : vector<96x32xf32> to vector<32x32xf32>
    %cst_23 = arith.constant dense<0.000000e+00> : vector<384x32xf32>
    %34 = tpu.matmul %32, %33, %cst_23 {dimension_numbers = #tpu.dot_dimension_numbers<[1], [0], [0], [1], [0, 0, 1, 1], [], []>} : vector<384x32xf32>, vector<32x32xf32>, vector<384x32xf32> -> vector<384x32xf32>
    %35 = arith.addf %31, %34 : vector<384x32xf32>
    %36 = vector.extract_strided_slice %28 {offsets = [64, 0], sizes = [32, 32], strides = [1, 1]} : vector<96x32xf32> to vector<32x32xf32>
    %cst_24 = arith.constant dense<0.000000e+00> : vector<384x32xf32>
    %37 = tpu.matmul %27, %36, %cst_24 {dimension_numbers = #tpu.dot_dimension_numbers<[1], [0], [0], [1], [0, 0, 1, 1], [], []>} : vector<384x32xf32>, vector<32x32xf32>, vector<384x32xf32> -> vector<384x32xf32>
    %38 = arith.addf %35, %37 : vector<384x32xf32>
    %c0_25 = arith.constant 0 : index
    %c0_26 = arith.constant 0 : index
    %39 = vector.load %arg8[%c0_25, %c0_26] : memref<1x32xf32, #tpu.memory_space<vmem>>, vector<1x32xf32>
    %40 = vector.broadcast %39 : vector<1x32xf32> to vector<384x32xf32>
    %41 = arith.addf %38, %40 : vector<384x32xf32>
    %cst_27 = arith.constant 0.000000e+00 : f32
    %42 = vector.broadcast %cst_27 : f32 to vector<384x32xf32>
    %43 = arith.maximumf %41, %42 : vector<384x32xf32>
    %c0_28 = arith.constant 0 : index
    %c0_29 = arith.constant 0 : index
    %44 = vector.load %arg9[%c0_28, %c0_29] : memref<64x128xf32, #tpu.memory_space<vmem>>, vector<64x128xf32>
    %45 = vector.extract_strided_slice %44 {offsets = [0, 0], sizes = [32, 128], strides = [1, 1]} : vector<64x128xf32> to vector<32x128xf32>
    %cst_30 = arith.constant dense<0.000000e+00> : vector<384x128xf32>
    %46 = tpu.matmul %25, %45, %cst_30 {dimension_numbers = #tpu.dot_dimension_numbers<[1], [0], [0], [1], [0, 0, 1, 1], [], []>} : vector<384x32xf32>, vector<32x128xf32>, vector<384x128xf32> -> vector<384x128xf32>
    %47 = vector.extract_strided_slice %44 {offsets = [32, 0], sizes = [32, 128], strides = [1, 1]} : vector<64x128xf32> to vector<32x128xf32>
    %cst_31 = arith.constant dense<0.000000e+00> : vector<384x128xf32>
    %48 = tpu.matmul %43, %47, %cst_31 {dimension_numbers = #tpu.dot_dimension_numbers<[1], [0], [0], [1], [0, 0, 1, 1], [], []>} : vector<384x32xf32>, vector<32x128xf32>, vector<384x128xf32> -> vector<384x128xf32>
    %49 = arith.addf %46, %48 : vector<384x128xf32>
    %c0_32 = arith.constant 0 : index
    %c0_33 = arith.constant 0 : index
    %50 = vector.load %arg10[%c0_32, %c0_33] : memref<1x128xf32, #tpu.memory_space<vmem>>, vector<1x128xf32>
    %51 = vector.broadcast %50 : vector<1x128xf32> to vector<384x128xf32>
    %52 = arith.addf %49, %51 : vector<384x128xf32>
    %c0_34 = arith.constant 0 : index
    %c0_35 = arith.constant 0 : index
    %53 = vector.load %arg11[%c0_34, %c0_35] : memref<384x128xf32, #tpu.memory_space<vmem>>, vector<384x128xf32>
    tpu.vector_store %arg11[%c0_34, %c0_35], %52 {strides = array<i32>} : memref<384x128xf32, #tpu.memory_space<vmem>>, vector<384x128xf32>,
    return
  }
}

</mosaic_0001>

<llo_original>
// kernel: tpu_custom_call.1
$region0: #{tpu_custom_call.1}
  #allocation0 [shape = 'u32[]', space=smem, size = 0x4, offset = 0x4, fixed_abs, tag = 'smem constant byte address 0x4 - core index']
  #allocation1 [shape = 'u32[144,128]{1,0:T(1,128)}', space=vmem, size = 0x12000, scoped, tag = 'internal scratch']
  %s0 = inlined_call_operand.vmem [shape: f32[384,32], index: 0, kind: input, shape index: {}]
  %s1 = inlined_call_operand.vmem [shape: s8[384,384], index: 1, kind: input, shape index: {}]
  %s2 = inlined_call_operand.vmem [shape: s8[384,384], index: 2, kind: input, shape index: {}]
  %s3 = inlined_call_operand.vmem [shape: f32[32,64], index: 3, kind: input, shape index: {}]
  %s4 = inlined_call_operand.vmem [shape: f32[1,64], index: 4, kind: input, shape index: {}]
  %s5 = inlined_call_operand.hbm [shape: f32[64,64], index: 5, kind: input, shape index: {}]
  %s6 = inlined_call_operand.vmem [shape: f32[1,64], index: 6, kind: input, shape index: {}]
  %s7 = inlined_call_operand.vmem [shape: f32[96,32], index: 7, kind: input, shape index: {}]
  %s8 = inlined_call_operand.vmem [shape: f32[1,32], index: 8, kind: input, shape index: {}]
  %s9 = inlined_call_operand.hbm [shape: f32[64,128], index: 9, kind: input, shape index: {}]
  %s10 = inlined_call_operand.vmem [shape: f32[1,128], index: 10, kind: input, shape index: {}]
  %s11 = inlined_call_operand.hbm [shape: f32[384,128], index: 11, kind: output, shape index: {}]
  %s12 = sld [smem:[#allocation0]]
  $region62: #{tpu_custom_call.1} parent=0
    _
  %s14 = ssub.s32 1, %s12
  %s15 = scalar_select 0, %s14, %s12
  $region1: #{tpu_custom_call.1} parent=0
    #allocation2 [shape = 'u8[32768]{0}', space=vmem, size = 0x8000, scoped, tag = 'input window, operand 5, single buffered']
    #allocation3 [shape = 's32[1]{0}', space=sflag, size = 0x4, scoped, tag = 'scoped memory for tpu_custom_call.1']
    #allocation4 [shape = 's32[1]{0}', space=sflag, size = 0x4, scoped, tag = 'scoped memory for tpu_custom_call.1']
    #allocation5 [shape = 'u8[32768]{0}', space=vmem, size = 0x8000, scoped, tag = 'input window, operand 9, single buffered']
    #allocation6 [shape = 's32[1]{0}', space=sflag, size = 0x4, scoped, tag = 'scoped memory for tpu_custom_call.1']
    #allocation7 [shape = 'u8[196608]{0}', space=vmem, size = 0x30000, scoped, tag = 'output window, operand 0, single buffered']
    %16 = vsyncpa [#allocation3], 0
    %17 = vsyncpa [#allocation6], 0
    %18 = vsyncpa [#allocation4], 0
    // Predicated region
    $region2: #{tpu_custom_call.1} parent=1 // pred_check
      _
    $region3: #{tpu_custom_call.1} parent=1 // pred_check_branch
      %20 = sbr.rel (0) target = $region5
    $region4: #{tpu_custom_call.1} parent=1 // pred_region
      _
    $region5: #{tpu_custom_call.1} parent=1 // pred_fallthru
      _
    // Predicated region
    $region6: #{tpu_custom_call.1} parent=1 // pred_check
      _
    $region7: #{tpu_custom_call.1} parent=1 // pred_check_branch
      %22 = sbr.rel (0) target = $region9
    $region8: #{tpu_custom_call.1} parent=1 // pred_region
      _
    $region9: #{tpu_custom_call.1} parent=1 // pred_fallthru
      _
    // Predicated region
    $region10: #{tpu_custom_call.1} parent=1 // pred_check
      _
    $region11: #{tpu_custom_call.1} parent=1 // pred_check_branch
      %24 = sbr.rel (0) target = $region13
    $region12: #{tpu_custom_call.1} parent=1 // pred_region
      _
    $region13: #{tpu_custom_call.1} parent=1 // pred_fallthru
      _
    // Predicated region
    $region14: #{tpu_custom_call.1} parent=1 // pred_check
      _
    $region15: #{tpu_custom_call.1} parent=1 // pred_check_branch
      %26 = sbr.rel (0) target = $region17
    $region16: #{tpu_custom_call.1} parent=1 // pred_region
      _
    $region17: #{tpu_custom_call.1} parent=1 // pred_fallthru
      _
    // Predicated region
    $region18: #{tpu_custom_call.1} parent=1 // pred_check
      _
    $region19: #{tpu_custom_call.1} parent=1 // pred_check_branch
      %28 = sbr.rel (0) target = $region21
    $region20: #{tpu_custom_call.1} parent=1 // pred_region
      _
    $region21: #{tpu_custom_call.1} parent=1 // pred_fallthru
      _
    // Predicated region
    $region22: #{tpu_custom_call.1} parent=1 // pred_check
      _
    $region23: #{tpu_custom_call.1} parent=1 // pred_check_branch
      %30 = sbr.rel (0) target = $region25
    $region24: #{tpu_custom_call.1} parent=1 // pred_region
      %s32 = ssub.s32 1024, 1024
      %33 = vsyncadd [#allocation3], %s32
      %s34 = sshll.u32 [#allocation2], 4
      %s35 = int_to_ptr.vmem [resolvable:$true] %s34
      %40 = dma.hbm_to_vmem [thread:$0]  %s5, 1024, %s35, [#allocation3], 128, 128, 8
    $region25: #{tpu_custom_call.1} parent=1 // pred_fallthru
      _
    // Predicated region
    $region26: #{tpu_custom_call.1} parent=1 // pred_check
      _
    $region27: #{tpu_custom_call.1} parent=1 // pred_check_branch
      %42 = sbr.rel (0) target = $region29
    $region28: #{tpu_custom_call.1} parent=1 // pred_region
      _
    $region29: #{tpu_custom_call.1} parent=1 // pred_fallthru
      _
    // Predicated region
    $region30: #{tpu_custom_call.1} parent=1 // pred_check
      _
    $region31: #{tpu_custom_call.1} parent=1 // pred_check_branch
      %44 = sbr.rel (0) target = $region33
    $region32: #{tpu_custom_call.1} parent=1 // pred_region
      _
    $region33: #{tpu_custom_call.1} parent=1 // pred_fallthru
      _
    // Predicated region
    $region34: #{tpu_custom_call.1} parent=1 // pred_check
      _
    $region35: #{tpu_custom_call.1} parent=1 // pred_check_branch
      %46 = sbr.rel (0) target = $region37
    $region36: #{tpu_custom_call.1} parent=1 // pred_region
      _
    $region37: #{tpu_custom_call.1} parent=1 // pred_fallthru
      _
    // Predicated region
    $region38: #{tpu_custom_call.1} parent=1 // pred_check
      _
    $region39: #{tpu_custom_call.1} parent=1 // pred_check_branch
      %48 = sbr.rel (0) target = $region41
    $region40: #{tpu_custom_call.1} parent=1 // pred_region
      %s50 = ssub.s32 1024, 1024
      %51 = vsyncadd [#allocation6], %s50
      %s52 = sshll.u32 [#allocation5], 4
      %s53 = int_to_ptr.vmem [resolvable:$true] %s52
      %58 = dma.hbm_to_vmem [thread:$0]  %s9, 1024, %s53, [#allocation6], 128, 128, 8
    $region41: #{tpu_custom_call.1} parent=1 // pred_fallthru
      _
    // Predicated region
    $region42: #{tpu_custom_call.1} parent=1 // pred_check
      _
    $region43: #{tpu_custom_call.1} parent=1 // pred_check_branch
      %60 = sbr.rel (0) target = $region45
    $region44: #{tpu_custom_call.1} parent=1 // pred_region
      _
    $region45: #{tpu_custom_call.1} parent=1 // pred_fallthru
      _
    // Predicated region
    $region46: #{tpu_custom_call.1} parent=1 // pred_check
      _
    $region47: #{tpu_custom_call.1} parent=1 // pred_check_branch
      %62 = sbr.rel (0) target = $region49
    $region48: #{tpu_custom_call.1} parent=1 // pred_region
      %63 = dma.done [#allocation3], 1024
    $region49: #{tpu_custom_call.1} parent=1 // pred_fallthru
      _
    // Predicated region
    $region50: #{tpu_custom_call.1} parent=1 // pred_check
      _
    $region51: #{tpu_custom_call.1} parent=1 // pred_check_branch
      %65 = sbr.rel (0) target = $region53
    $region52: #{tpu_custom_call.1} parent=1 // pred_region
      %66 = dma.done [#allocation6], 1024
    $region53: #{tpu_custom_call.1} parent=1 // pred_fallthru
      _
    %v68 = vld [vmem:[%s1] sm:$0xff]
    %v69 = vld [vmem:[%s1 + $0x8] sm:$0xff]
    %v70 = vld [vmem:[%s1 + $0x10] sm:$0xff]
    %v71 = vld [vmem:[%s1 + $0x18] sm:$0xff]
    %v72 = vld [vmem:[%s1 + $0x20] sm:$0xff]
    %v73 = vld [vmem:[%s1 + $0x28] sm:$0xff]
    %v74 = vld [vmem:[%s1 + $0x30] sm:$0xff]
    %v75 = vld [vmem:[%s1 + $0x38] sm:$0xff]
    %v76 = vld [vmem:[%s1 + $0x40] sm:$0xff]
    %v77 = vld [vmem:[%s1 + $0x48] sm:$0xff]
    %v78 = vld [vmem:[%s1 + $0x50] sm:$0xff]
    %v79 = vld [vmem:[%s1 + $0x58] sm:$0xff]
    %v80 = vld [vmem:[%s1 + $0x60] sm:$0xff]
    %v81 = vld [vmem:[%s1 + $0x68] sm:$0xff]
    %v82 = vld [vmem:[%s1 + $0x70] sm:$0xff]
    %v83 = vld [vmem:[%s1 + $0x78] sm:$0xff]
    %v84 = vld [vmem:[%s1 + $0x80] sm:$0xff]
    %v85 = vld [vmem:[%s1 + $0x88] sm:$0xff]
    %v86 = vld [vmem:[%s1 + $0x90] sm:$0xff]
    %v87 = vld [vmem:[%s1 + $0x98] sm:$0xff]
    %v88 = vld [vmem:[%s1 + $0xa0] sm:$0xff]
    %v89 = vld [vmem:[%s1 + $0xa8] sm:$0xff]
    %v90 = vld [vmem:[%s1 + $0xb0] sm:$0xff]
    %v91 = vld [vmem:[%s1 + $0xb8] sm:$0xff]
    %v92 = vld [vmem:[%s1 + $0xc0] sm:$0xff]
    %v93 = vld [vmem:[%s1 + $0xc8] sm:$0xff]
    %v94 = vld [vmem:[%s1 + $0xd0] sm:$0xff]
    %v95 = vld [vmem:[%s1 + $0xd8] sm:$0xff]
    %v96 = vld [vmem:[%s1 + $0xe0] sm:$0xff]
    %v97 = vld [vmem:[%s1 + $0xe8] sm:$0xff]
    %v98 = vld [vmem:[%s1 + $0xf0] sm:$0xff]
    %v99 = vld [vmem:[%s1 + $0xf8] sm:$0xff]
    %v100 = vld [vmem:[%s1 + $0x100] sm:$0xff]
    %v101 = vld [vmem:[%s1 + $0x108] sm:$0xff]
    %v102 = vld [vmem:[%s1 + $0x110] sm:$0xff]
    %v103 = vld [vmem:[%s1 + $0x118] sm:$0xff]
    %v104 = vunpack.c.l.s8.bf16 %v68
    %v105 = vunpack.c.l.s8.bf16 %v69
    %v106 = vunpack.c.l.s8.bf16 %v70
    %v107 = vunpack.c.h.s8.bf16 %v68
    %v108 = vunpack.c.h.s8.bf16 %v69
    %v109 = vunpack.c.h.s8.bf16 %v70
    %v110 = vunpack.c.l.s8.bf16 %v71
    %v111 = vunpack.c.l.s8.bf16 %v72
    %v112 = vunpack.c.l.s8.bf16 %v73
    %v113 = vunpack.c.h.s8.bf16 %v71
    %v114 = vunpack.c.h.s8.bf16 %v72
    %v115 = vunpack.c.h.s8.bf16 %v73
    %v116 = vunpack.c.l.s8.bf16 %v74
    %v117 = vunpack.c.l.s8.bf16 %v75
    %v118 = vunpack.c.l.s8.bf16 %v76
    %v119 = vunpack.c.h.s8.bf16 %v74
    %v120 = vunpack.c.h.s8.bf16 %v75
    %v121 = vunpack.c.h.s8.bf16 %v76
    %v122 = vunpack.c.l.s8.bf16 %v77
    %v123 = vunpack.c.l.s8.bf16 %v78
    %v124 = vunpack.c.l.s8.bf16 %v79
    %v125 = vunpack.c.h.s8.bf16 %v77
    %v126 = vunpack.c.h.s8.bf16 %v78
    %v127 = vunpack.c.h.s8.bf16 %v79
    %v128 = vunpack.c.l.s8.bf16 %v80
    %v129 = vunpack.c.l.s8.bf16 %v81
    %v130 = vunpack.c.l.s8.bf16 %v82
    %v131 = vunpack.c.h.s8.bf16 %v80
    %v132 = vunpack.c.h.s8.bf16 %v81
    %v133 = vunpack.c.h.s8.bf16 %v82
    %v134 = vunpack.c.l.s8.bf16 %v83
    %v135 = vunpack.c.l.s8.bf16 %v84
    %v136 = vunpack.c.l.s8.bf16 %v85
    %v137 = vunpack.c.h.s8.bf16 %v83
    %v138 = vunpack.c.h.s8.bf16 %v84
    %v139 = vunpack.c.h.s8.bf16 %v85
    %v140 = vunpack.c.l.s8.bf16 %v86
    %v141 = vunpack.c.l.s8.bf16 %v87
    %v142 = vunpack.c.l.s8.bf16 %v88
    %v143 = vunpack.c.h.s8.bf16 %v86
    %v144 = vunpack.c.h.s8.bf16 %v87
    %v145 = vunpack.c.h.s8.bf16 %v88
    %v146 = vunpack.c.l.s8.bf16 %v89
    %v147 = vunpack.c.l.s8.bf16 %v90
    %v148 = vunpack.c.l.s8.bf16 %v91
    %v149 = vunpack.c.h.s8.bf16 %v89
    %v150 = vunpack.c.h.s8.bf16 %v90
    %v151 = vunpack.c.h.s8.bf16 %v91
    %v152 = vunpack.c.l.s8.bf16 %v92
    %v153 = vunpack.c.l.s8.bf16 %v93
    %v154 = vunpack.c.l.s8.bf16 %v94
    %v155 = vunpack.c.h.s8.bf16 %v92
    %v156 = vunpack.c.h.s8.bf16 %v93
    %v157 = vunpack.c.h.s8.bf16 %v94
    %v158 = vunpack.c.l.s8.bf16 %v95
    %v159 = vunpack.c.l.s8.bf16 %v96
    %v160 = vunpack.c.l.s8.bf16 %v97
    %v161 = vunpack.c.h.s8.bf16 %v95
    %v162 = vunpack.c.h.s8.bf16 %v96
    %v163 = vunpack.c.h.s8.bf16 %v97
    %v164 = vunpack.c.l.s8.bf16 %v98
    %v165 = vunpack.c.l.s8.bf16 %v99
    %v166 = vunpack.c.l.s8.bf16 %v100
    %v167 = vunpack.c.h.s8.bf16 %v98
    %v168 = vunpack.c.h.s8.bf16 %v99
    %v169 = vunpack.c.h.s8.bf16 %v100
    %v170 = vunpack.c.l.s8.bf16 %v101
    %v171 = vunpack.c.l.s8.bf16 %v102
    %v172 = vunpack.c.l.s8.bf16 %v103
    %v173 = vunpack.c.h.s8.bf16 %v101
    %v174 = vunpack.c.h.s8.bf16 %v102
    %v175 = vunpack.c.h.s8.bf16 %v103
    %v176 = vld [vmem:[%s2] sm:$0xff]
    %v177 = vld [vmem:[%s2 + $0x8] sm:$0xff]
    %v178 = vld [vmem:[%s2 + $0x10] sm:$0xff]
    %v179 = vld [vmem:[%s2 + $0x18] sm:$0xff]
    %v180 = vld [vmem:[%s2 + $0x20] sm:$0xff]
    %v181 = vld [vmem:[%s2 + $0x28] sm:$0xff]
    %v182 = vld [vmem:[%s2 + $0x30] sm:$0xff]
    %v183 = vld [vmem:[%s2 + $0x38] sm:$0xff]
    %v184 = vld [vmem:[%s2 + $0x40] sm:$0xff]
    %v185 = vld [vmem:[%s2 + $0x48] sm:$0xff]
    %v186 = vld [vmem:[%s2 + $0x50] sm:$0xff]
    %v187 = vld [vmem:[%s2 + $0x58] sm:$0xff]
    %v188 = vld [vmem:[%s2 + $0x60] sm:$0xff]
    %v189 = vld [vmem:[%s2 + $0x68] sm:$0xff]
    %v190 = vld [vmem:[%s2 + $0x70] sm:$0xff]
    %v191 = vld [vmem:[%s2 + $0x78] sm:$0xff]
    %v192 = vld [vmem:[%s2 + $0x80] sm:$0xff]
    %v193 = vld [vmem:[%s2 + $0x88] sm:$0xff]
    %v194 = vld [vmem:[%s2 + $0x90] sm:$0xff]
    %v195 = vld [vmem:[%s2 + $0x98] sm:$0xff]
    %v196 = vld [vmem:[%s2 + $0xa0] sm:$0xff]
    %v197 = vld [vmem:[%s2 + $0xa8] sm:$0xff]
    %v198 = vld [vmem:[%s2 + $0xb0] sm:$0xff]
    %v199 = vld [vmem:[%s2 + $0xb8] sm:$0xff]
    %v200 = vld [vmem:[%s2 + $0xc0] sm:$0xff]
    %v201 = vld [vmem:[%s2 + $0xc8] sm:$0xff]
    %v202 = vld [vmem:[%s2 + $0xd0] sm:$0xff]
    %v203 = vld [vmem:[%s2 + $0xd8] sm:$0xff]
    %v204 = vld [vmem:[%s2 + $0xe0] sm:$0xff]
    %v205 = vld [vmem:[%s2 + $0xe8] sm:$0xff]
    %v206 = vld [vmem:[%s2 + $0xf0] sm:$0xff]
    %v207 = vld [vmem:[%s2 + $0xf8] sm:$0xff]
    %v208 = vld [vmem:[%s2 + $0x100] sm:$0xff]
    %v209 = vld [vmem:[%s2 + $0x108] sm:$0xff]
    %v210 = vld [vmem:[%s2 + $0x110] sm:$0xff]
    %v211 = vld [vmem:[%s2 + $0x118] sm:$0xff]
    %v212 = vunpack.c.l.s8.bf16 %v176
    %v213 = vunpack.c.l.s8.bf16 %v177
    %v214 = vunpack.c.l.s8.bf16 %v178
    %v215 = vunpack.c.h.s8.bf16 %v176
    %v216 = vunpack.c.h.s8.bf16 %v177
    %v217 = vunpack.c.h.s8.bf16 %v178
    %v218 = vunpack.c.l.s8.bf16 %v179
    %v219 = vunpack.c.l.s8.bf16 %v180
    %v220 = vunpack.c.l.s8.bf16 %v181
    %v221 = vunpack.c.h.s8.bf16 %v179
    %v222 = vunpack.c.h.s8.bf16 %v180
    %v223 = vunpack.c.h.s8.bf16 %v181
    %v224 = vunpack.c.l.s8.bf16 %v182
    %v225 = vunpack.c.l.s8.bf16 %v183
    %v226 = vunpack.c.l.s8.bf16 %v184
    %v227 = vunpack.c.h.s8.bf16 %v182
    %v228 = vunpack.c.h.s8.bf16 %v183
    %v229 = vunpack.c.h.s8.bf16 %v184
    %v230 = vunpack.c.l.s8.bf16 %v185
    %v231 = vunpack.c.l.s8.bf16 %v186
    %v232 = vunpack.c.l.s8.bf16 %v187
    %v233 = vunpack.c.h.s8.bf16 %v185
    %v234 = vunpack.c.h.s8.bf16 %v186
    %v235 = vunpack.c.h.s8.bf16 %v187
    %v236 = vunpack.c.l.s8.bf16 %v188
    %v237 = vunpack.c.l.s8.bf16 %v189
    %v238 = vunpack.c.l.s8.bf16 %v190
    %v239 = vunpack.c.h.s8.bf16 %v188
    %v240 = vunpack.c.h.s8.bf16 %v189
    %v241 = vunpack.c.h.s8.bf16 %v190
    %v242 = vunpack.c.l.s8.bf16 %v191
    %v243 = vunpack.c.l.s8.bf16 %v192
    %v244 = vunpack.c.l.s8.bf16 %v193
    %v245 = vunpack.c.h.s8.bf16 %v191
    %v246 = vunpack.c.h.s8.bf16 %v192
    %v247 = vunpack.c.h.s8.bf16 %v193
    %v248 = vunpack.c.l.s8.bf16 %v194
    %v249 = vunpack.c.l.s8.bf16 %v195
    %v250 = vunpack.c.l.s8.bf16 %v196
    %v251 = vunpack.c.h.s8.bf16 %v194
    %v252 = vunpack.c.h.s8.bf16 %v195
    %v253 = vunpack.c.h.s8.bf16 %v196
    %v254 = vunpack.c.l.s8.bf16 %v197
    %v255 = vunpack.c.l.s8.bf16 %v198
    %v256 = vunpack.c.l.s8.bf16 %v199
    %v257 = vunpack.c.h.s8.bf16 %v197
    %v258 = vunpack.c.h.s8.bf16 %v198
    %v259 = vunpack.c.h.s8.bf16 %v199
    %v260 = vunpack.c.l.s8.bf16 %v200
    %v261 = vunpack.c.l.s8.bf16 %v201
    %v262 = vunpack.c.l.s8.bf16 %v202
    %v263 = vunpack.c.h.s8.bf16 %v200
    %v264 = vunpack.c.h.s8.bf16 %v201
    %v265 = vunpack.c.h.s8.bf16 %v202
    %v266 = vunpack.c.l.s8.bf16 %v203
    %v267 = vunpack.c.l.s8.bf16 %v204
    %v268 = vunpack.c.l.s8.bf16 %v205
    %v269 = vunpack.c.h.s8.bf16 %v203
    %v270 = vunpack.c.h.s8.bf16 %v204
    %v271 = vunpack.c.h.s8.bf16 %v205
    %v272 = vunpack.c.l.s8.bf16 %v206
    %v273 = vunpack.c.l.s8.bf16 %v207
    %v274 = vunpack.c.l.s8.bf16 %v208
    %v275 = vunpack.c.h.s8.bf16 %v206
    %v276 = vunpack.c.h.s8.bf16 %v207
    %v277 = vunpack.c.h.s8.bf16 %v208
    %v278 = vunpack.c.l.s8.bf16 %v209
    %v279 = vunpack.c.l.s8.bf16 %v210
    %v280 = vunpack.c.l.s8.bf16 %v211
    %v281 = vunpack.c.h.s8.bf16 %v209
    %v282 = vunpack.c.h.s8.bf16 %v210
    %v283 = vunpack.c.h.s8.bf16 %v211
    %v284 = vld [vmem:[%s0] sm:$0xff]
    %v285 = vld [vmem:[%s0 + $0x8] sm:$0xff]
    %v286 = vld [vmem:[%s0 + $0x10] sm:$0xff]
    %v287 = vld [vmem:[%s0 + $0x18] sm:$0xff]
    %v288 = vld [vmem:[%s0 + $0x20] sm:$0xff]
    %v289 = vld [vmem:[%s0 + $0x28] sm:$0xff]
    %v290 = vld [vmem:[%s0 + $0x30] sm:$0xff]
    %v291 = vld [vmem:[%s0 + $0x38] sm:$0xff]
    %v292 = vld [vmem:[%s0 + $0x40] sm:$0xff]
    %v293 = vld [vmem:[%s0 + $0x48] sm:$0xff]
    %v294 = vld [vmem:[%s0 + $0x50] sm:$0xff]
    %v295 = vld [vmem:[%s0 + $0x58] sm:$0xff]
    %v296 = vld [vmem:[%s0 + $0x60] sm:$0xff]
    %v297 = vld [vmem:[%s0 + $0x68] sm:$0xff]
    %v298 = vld [vmem:[%s0 + $0x70] sm:$0xff]
    %v299 = vld [vmem:[%s0 + $0x78] sm:$0xff]
    %v300 = vld [vmem:[%s0 + $0x80] sm:$0xff]
    %v301 = vld [vmem:[%s0 + $0x88] sm:$0xff]
    %v302 = vld [vmem:[%s0 + $0x90] sm:$0xff]
    %v303 = vld [vmem:[%s0 + $0x98] sm:$0xff]
    %v304 = vld [vmem:[%s0 + $0xa0] sm:$0xff]
    %v305 = vld [vmem:[%s0 + $0xa8] sm:$0xff]
    %v306 = vld [vmem:[%s0 + $0xb0] sm:$0xff]
    %v307 = vld [vmem:[%s0 + $0xb8] sm:$0xff]
    %v308 = vld [vmem:[%s0 + $0xc0] sm:$0xff]
    %v309 = vld [vmem:[%s0 + $0xc8] sm:$0xff]
    %v310 = vld [vmem:[%s0 + $0xd0] sm:$0xff]
    %v311 = vld [vmem:[%s0 + $0xd8] sm:$0xff]
    %v312 = vld [vmem:[%s0 + $0xe0] sm:$0xff]
    %v313 = vld [vmem:[%s0 + $0xe8] sm:$0xff]
    %v314 = vld [vmem:[%s0 + $0xf0] sm:$0xff]
    %v315 = vld [vmem:[%s0 + $0xf8] sm:$0xff]
    %v316 = vld [vmem:[%s0 + $0x100] sm:$0xff]
    %v317 = vld [vmem:[%s0 + $0x108] sm:$0xff]
    %v318 = vld [vmem:[%s0 + $0x110] sm:$0xff]
    %v319 = vld [vmem:[%s0 + $0x118] sm:$0xff]
    %v320 = vld [vmem:[%s0 + $0x120] sm:$0xff]
    %v321 = vld [vmem:[%s0 + $0x128] sm:$0xff]
    %v322 = vld [vmem:[%s0 + $0x130] sm:$0xff]
    %v323 = vld [vmem:[%s0 + $0x138] sm:$0xff]
    %v324 = vld [vmem:[%s0 + $0x140] sm:$0xff]
    %v325 = vld [vmem:[%s0 + $0x148] sm:$0xff]
    %v326 = vld [vmem:[%s0 + $0x150] sm:$0xff]
    %v327 = vld [vmem:[%s0 + $0x158] sm:$0xff]
    %v328 = vld [vmem:[%s0 + $0x160] sm:$0xff]
    %v329 = vld [vmem:[%s0 + $0x168] sm:$0xff]
    %v330 = vld [vmem:[%s0 + $0x170] sm:$0xff]
    %v331 = vld [vmem:[%s0 + $0x178] sm:$0xff]
    %v332 = vld [vmem:[%s3] sm:$0xff]
    %v333 = vld [vmem:[%s3 + $0x8] sm:$0xff]
    %v334 = vld [vmem:[%s3 + $0x10] sm:$0xff]
    %v335 = vld [vmem:[%s3 + $0x18] sm:$0xff]
    %v336 = vld [vmem:[%s4] sm:$0x1]
    %v338 = vlaneseq
    %v339 = vshrl.u32 %v338, 7
    %v340 = vsub.s32 0, %v339
    %v341 = vrot.slane %v336, %v340
    %vm343 = vcmask 261120
    %v345 = vsel %vm343, %v284, 0
    %v348 = vsel %vm343, %v285, 0
    %v351 = vsel %vm343, %v286, 0
    %v354 = vsel %vm343, %v287, 0
    %v357 = vsel %vm343, %v288, 0
    %v360 = vsel %vm343, %v289, 0
    %v363 = vsel %vm343, %v290, 0
    %v366 = vsel %vm343, %v291, 0
    %v369 = vsel %vm343, %v292, 0
    %v372 = vsel %vm343, %v293, 0
    %v375 = vsel %vm343, %v294, 0
    %v378 = vsel %vm343, %v295, 0
    %v381 = vsel %vm343, %v296, 0
    %v384 = vsel %vm343, %v297, 0
    %v387 = vsel %vm343, %v298, 0
    %v390 = vsel %vm343, %v299, 0
    %v393 = vsel %vm343, %v300, 0
    %v396 = vsel %vm343, %v301, 0
    %v399 = vsel %vm343, %v302, 0
    %v402 = vsel %vm343, %v303, 0
    %v405 = vsel %vm343, %v304, 0
    %v408 = vsel %vm343, %v305, 0
    %v411 = vsel %vm343, %v306, 0
    %v414 = vsel %vm343, %v307, 0
    %v417 = vsel %vm343, %v308, 0
    %v420 = vsel %vm343, %v309, 0
    %v423 = vsel %vm343, %v310, 0
    %v426 = vsel %vm343, %v311, 0
    %v429 = vsel %vm343, %v312, 0
    %v432 = vsel %vm343, %v313, 0
    %v435 = vsel %vm343, %v314, 0
    %v438 = vsel %vm343, %v315, 0
    %v441 = vsel %vm343, %v316, 0
    %v444 = vsel %vm343, %v317, 0
    %v447 = vsel %vm343, %v318, 0
    %v450 = vsel %vm343, %v319, 0
    %v453 = vsel %vm343, %v320, 0
    %v456 = vsel %vm343, %v321, 0
    %v459 = vsel %vm343, %v322, 0
    %v462 = vsel %vm343, %v323, 0
    %v465 = vsel %vm343, %v324, 0
    %v468 = vsel %vm343, %v325, 0
    %v471 = vsel %vm343, %v326, 0
    %v474 = vsel %vm343, %v327, 0
    %v477 = vsel %vm343, %v328, 0
    %v480 = vsel %vm343, %v329, 0
    %v483 = vsel %vm343, %v330, 0
    %v486 = vsel %vm343, %v331, 0
    %488 = vmatprep.subr.mxu0 0.0
    %489 = vmatpush1.msra.mxu0 %v332
    %490 = vmatprep.subr.mxu0 0.0
    %491 = vmatpush1.msra.mxu0 %v333
    %492 = vmatprep.subr.mxu0 0.0
    %493 = vmatpush1.msra.mxu0 %v334
    %494 = vmatprep.subr.mxu0 0.0
    %495 = vmatpush1.msra.mxu0 %v335
    %496 = vmatprep.subr.mxu0 0.0
    %497 = vmatpush1.msra.mxu0 0.0
    %498 = vmatprep.subr.mxu0 0.0
    %499 = vmatpush1.msra.mxu0 0.0
    %500 = vmatprep.subr.mxu0 0.0
    %501 = vmatpush1.msra.mxu0 0.0
    %502 = vmatprep.subr.mxu0 0.0
    %503 = vmatpush1.msra.mxu0 0.0
    %504 = vmatprep.subr.mxu0 0.0
    %505 = vmatpush1.msra.mxu0 0.0
    %506 = vmatprep.subr.mxu0 0.0
    %507 = vmatpush1.msra.mxu0 0.0
    %508 = vmatprep.subr.mxu0 0.0
    %509 = vmatpush1.msra.mxu0 0.0
    %510 = vmatprep.subr.mxu0 0.0
    %511 = vmatpush1.msra.mxu0 0.0
    %512 = vmatprep.subr.mxu0 0.0
    %513 = vmatpush1.msra.mxu0 0.0
    %514 = vmatprep.subr.mxu0 0.0
    %515 = vmatpush1.msra.mxu0 0.0
    %516 = vmatprep.subr.mxu0 0.0
    %517 = vmatpush1.msra.mxu0 0.0
    %518 = vmatprep.subr.mxu0 0.0
    %519 = vmatpush1.msra.mxu0 0.0
    %520 = vmatprep.subr.mxu0 0.0
    %521 = vmatpush1.msra.mxu0 0.0
    %522 = vmatprep.subr.mxu0 0.0
    %523 = vmatpush1.msra.mxu0 0.0
    %524 = vmatprep.subr.mxu0 0.0
    %525 = vmatpush1.msra.mxu0 0.0
    %526 = vmatprep.subr.mxu0 0.0
    %527 = vmatpush1.msra.mxu0 0.0
    %528 = vmatprep.subr.mxu0 0.0
    %529 = vmatpush1.msra.mxu0 0.0
    %530 = vmatprep.subr.mxu0 0.0
    %531 = vmatpush1.msra.mxu0 0.0
    %532 = vmatprep.subr.mxu0 0.0
    %533 = vmatpush1.msra.mxu0 0.0
    %534 = vmatprep.subr.mxu0 0.0
    %535 = vmatpush1.msra.mxu0 0.0
    %536 = vmatprep.subr.mxu0 0.0
    %537 = vmatpush1.msra.mxu0 0.0
    %538 = vmatprep.subr.mxu0 0.0
    %539 = vmatpush1.msra.mxu0 0.0
    %540 = vmatprep.subr.mxu0 0.0
    %541 = vmatpush1.msra.mxu0 0.0
    %542 = vmatprep.subr.mxu0 0.0
    %543 = vmatpush1.msra.mxu0 0.0
    %544 = vmatprep.subr.mxu0 0.0
    %545 = vmatpush1.msra.mxu0 0.0
    %546 = vmatprep.subr.mxu0 0.0
    %547 = vmatpush1.msra.mxu0 0.0
    %548 = vmatprep.subr.mxu0 0.0
    %549 = vmatpush1.msra.mxu0 0.0
    %550 = vmatprep.subr.mxu0 0.0
    %551 = vmatpush1.msra.mxu0 0.0
    %552 = vmatprep.mubr.f32.mxu0 0.0
    %553 = vmatmul.mubr.f32.gmra.mrb[0].mxu0 %v345
    %v554 = vpop.f32.mrb[0].mxu0
    %v555 = vadd.f32 %v341, %v554
    %v556 = vpop.f32.mrb[0].mxu0
    %557 = vmatprep.mubr.f32.mxu0 0.0
    %558 = vmatmul.mubr.f32.gmra.mrb[0].mxu0 %v348
    %v559 = vpop.f32.mrb[0].mxu0
    %v560 = vadd.f32 %v341, %v559
    %v561 = vpop.f32.mrb[0].mxu0
    %562 = vmatprep.mubr.f32.mxu0 0.0
    %563 = vmatmul.mubr.f32.gmra.mrb[0].mxu0 %v351
    %v564 = vpop.f32.mrb[0].mxu0
    %v565 = vadd.f32 %v341, %v564
    %v566 = vpop.f32.mrb[0].mxu0
    %567 = vmatprep.mubr.f32.mxu0 0.0
    %568 = vmatmul.mubr.f32.gmra.mrb[0].mxu0 %v354
    %v569 = vpop.f32.mrb[0].mxu0
    %v570 = vadd.f32 %v341, %v569
    %v571 = vpop.f32.mrb[0].mxu0
    %572 = vmatprep.mubr.f32.mxu0 0.0
    %573 = vmatmul.mubr.f32.gmra.mrb[0].mxu0 %v357
    %v574 = vpop.f32.mrb[0].mxu0
    %v575 = vadd.f32 %v341, %v574
    %v576 = vpop.f32.mrb[0].mxu0
    %577 = vmatprep.mubr.f32.mxu0 0.0
    %578 = vmatmul.mubr.f32.gmra.mrb[0].mxu0 %v360
    %v579 = vpop.f32.mrb[0].mxu0
    %v580 = vadd.f32 %v341, %v579
    %v581 = vpop.f32.mrb[0].mxu0
    %582 = vmatprep.mubr.f32.mxu0 0.0
    %583 = vmatmul.mubr.f32.gmra.mrb[0].mxu0 %v363
    %v584 = vpop.f32.mrb[0].mxu0
    %v585 = vadd.f32 %v341, %v584
    %v586 = vpop.f32.mrb[0].mxu0
    %587 = vmatprep.mubr.f32.mxu0 0.0
    %588 = vmatmul.mubr.f32.gmra.mrb[0].mxu0 %v366
    %v589 = vpop.f32.mrb[0].mxu0
    %v590 = vadd.f32 %v341, %v589
    %v591 = vpop.f32.mrb[0].mxu0
    %592 = vmatprep.mubr.f32.mxu0 0.0
    %593 = vmatmul.mubr.f32.gmra.mrb[0].mxu0 %v369
    %v594 = vpop.f32.mrb[0].mxu0
    %v595 = vadd.f32 %v341, %v594
    %v596 = vpop.f32.mrb[0].mxu0
    %597 = vmatprep.mubr.f32.mxu0 0.0
    %598 = vmatmul.mubr.f32.gmra.mrb[0].mxu0 %v372
    %v599 = vpop.f32.mrb[0].mxu0
    %v600 = vadd.f32 %v341, %v599
    %v601 = vpop.f32.mrb[0].mxu0
    %602 = vmatprep.mubr.f32.mxu0 0.0
    %603 = vmatmul.mubr.f32.gmra.mrb[0].mxu0 %v375
    %v604 = vpop.f32.mrb[0].mxu0
    %v605 = vadd.f32 %v341, %v604
    %v606 = vpop.f32.mrb[0].mxu0
    %607 = vmatprep.mubr.f32.mxu0 0.0
    %608 = vmatmul.mubr.f32.gmra.mrb[0].mxu0 %v378
    %v609 = vpop.f32.mrb[0].mxu0
    %v610 = vadd.f32 %v341, %v609
    %v611 = vpop.f32.mrb[0].mxu0
    %612 = vmatprep.mubr.f32.mxu0 0.0
    %613 = vmatmul.mubr.f32.gmra.mrb[0].mxu0 %v381
    %v614 = vpop.f32.mrb[0].mxu0
    %v615 = vadd.f32 %v341, %v614
    %v616 = vpop.f32.mrb[0].mxu0
    %617 = vmatprep.mubr.f32.mxu0 0.0
    %618 = vmatmul.mubr.f32.gmra.mrb[0].mxu0 %v384
    %v619 = vpop.f32.mrb[0].mxu0
    %v620 = vadd.f32 %v341, %v619
    %v621 = vpop.f32.mrb[0].mxu0
    %622 = vmatprep.mubr.f32.mxu0 0.0
    %623 = vmatmul.mubr.f32.gmra.mrb[0].mxu0 %v387
    %v624 = vpop.f32.mrb[0].mxu0
    %v625 = vadd.f32 %v341, %v624
    %v626 = vpop.f32.mrb[0].mxu0
    %627 = vmatprep.mubr.f32.mxu0 0.0
    %628 = vmatmul.mubr.f32.gmra.mrb[0].mxu0 %v390
    %v629 = vpop.f32.mrb[0].mxu0
    %v630 = vadd.f32 %v341, %v629
    %v631 = vpop.f32.mrb[0].mxu0
    %632 = vmatprep.mubr.f32.mxu0 0.0
    %633 = vmatmul.mubr.f32.gmra.mrb[0].mxu0 %v393
    %v634 = vpop.f32.mrb[0].mxu0
    %v635 = vadd.f32 %v341, %v634
    %v636 = vpop.f32.mrb[0].mxu0
    %637 = vmatprep.mubr.f32.mxu0 0.0
    %638 = vmatmul.mubr.f32.gmra.mrb[0].mxu0 %v396
    %v639 = vpop.f32.mrb[0].mxu0
    %v640 = vadd.f32 %v341, %v639
    %v641 = vpop.f32.mrb[0].mxu0
    %642 = vmatprep.mubr.f32.mxu0 0.0
    %643 = vmatmul.mubr.f32.gmra.mrb[0].mxu0 %v399
    %v644 = vpop.f32.mrb[0].mxu0
    %v645 = vadd.f32 %v341, %v644
    %v646 = vpop.f32.mrb[0].mxu0
    %647 = vmatprep.mubr.f32.mxu0 0.0
    %648 = vmatmul.mubr.f32.gmra.mrb[0].mxu0 %v402
    %v649 = vpop.f32.mrb[0].mxu0
    %v650 = vadd.f32 %v341, %v649
    %v651 = vpop.f32.mrb[0].mxu0
    %652 = vmatprep.mubr.f32.mxu0 0.0
    %653 = vmatmul.mubr.f32.gmra.mrb[0].mxu0 %v405
    %v654 = vpop.f32.mrb[0].mxu0
    %v655 = vadd.f32 %v341, %v654
    %v656 = vpop.f32.mrb[0].mxu0
    %657 = vmatprep.mubr.f32.mxu0 0.0
    %658 = vmatmul.mubr.f32.gmra.mrb[0].mxu0 %v408
    %v659 = vpop.f32.mrb[0].mxu0
    %v660 = vadd.f32 %v341, %v659
    %v661 = vpop.f32.mrb[0].mxu0
    %662 = vmatprep.mubr.f32.mxu0 0.0
    %663 = vmatmul.mubr.f32.gmra.mrb[0].mxu0 %v411
    %v664 = vpop.f32.mrb[0].mxu0
    %v665 = vadd.f32 %v341, %v664
    %v666 = vpop.f32.mrb[0].mxu0
    %667 = vmatprep.mubr.f32.mxu0 0.0
    %668 = vmatmul.mubr.f32.gmra.mrb[0].mxu0 %v414
    %v669 = vpop.f32.mrb[0].mxu0
    %v670 = vadd.f32 %v341, %v669
    %v671 = vpop.f32.mrb[0].mxu0
    %672 = vmatprep.mubr.f32.mxu0 0.0
    %673 = vmatmul.mubr.f32.gmra.mrb[0].mxu0 %v417
    %v674 = vpop.f32.mrb[0].mxu0
    %v675 = vadd.f32 %v341, %v674
    %v676 = vpop.f32.mrb[0].mxu0
    %677 = vmatprep.mubr.f32.mxu0 0.0
    %678 = vmatmul.mubr.f32.gmra.mrb[0].mxu0 %v420
    %v679 = vpop.f32.mrb[0].mxu0
    %v680 = vadd.f32 %v341, %v679
    %v681 = vpop.f32.mrb[0].mxu0
    %682 = vmatprep.mubr.f32.mxu0 0.0
    %683 = vmatmul.mubr.f32.gmra.mrb[0].mxu0 %v423
    %v684 = vpop.f32.mrb[0].mxu0
    %v685 = vadd.f32 %v341, %v684
    %v686 = vpop.f32.mrb[0].mxu0
    %687 = vmatprep.mubr.f32.mxu0 0.0
    %688 = vmatmul.mubr.f32.gmra.mrb[0].mxu0 %v426
    %v689 = vpop.f32.mrb[0].mxu0
    %v690 = vadd.f32 %v341, %v689
    %v691 = vpop.f32.mrb[0].mxu0
    %692 = vmatprep.mubr.f32.mxu0 0.0
    %693 = vmatmul.mubr.f32.gmra.mrb[0].mxu0 %v429
    %v694 = vpop.f32.mrb[0].mxu0
    %v695 = vadd.f32 %v341, %v694
    %v696 = vpop.f32.mrb[0].mxu0
    %697 = vmatprep.mubr.f32.mxu0 0.0
    %698 = vmatmul.mubr.f32.gmra.mrb[0].mxu0 %v432
    %v699 = vpop.f32.mrb[0].mxu0
    %v700 = vadd.f32 %v341, %v699
    %v701 = vpop.f32.mrb[0].mxu0
    %702 = vmatprep.mubr.f32.mxu0 0.0
    %703 = vmatmul.mubr.f32.gmra.mrb[0].mxu0 %v435
    %v704 = vpop.f32.mrb[0].mxu0
    %v705 = vadd.f32 %v341, %v704
    %v706 = vpop.f32.mrb[0].mxu0
    %707 = vmatprep.mubr.f32.mxu0 0.0
    %708 = vmatmul.mubr.f32.gmra.mrb[0].mxu0 %v438
    %v709 = vpop.f32.mrb[0].mxu0
    %v710 = vadd.f32 %v341, %v709
    %v711 = vpop.f32.mrb[0].mxu0
    %712 = vmatprep.mubr.f32.mxu0 0.0
    %713 = vmatmul.mubr.f32.gmra.mrb[0].mxu0 %v441
    %v714 = vpop.f32.mrb[0].mxu0
    %v715 = vadd.f32 %v341, %v714
    %v716 = vpop.f32.mrb[0].mxu0
    %717 = vmatprep.mubr.f32.mxu0 0.0
    %718 = vmatmul.mubr.f32.gmra.mrb[0].mxu0 %v444
    %v719 = vpop.f32.mrb[0].mxu0
    %v720 = vadd.f32 %v341, %v719
    %v721 = vpop.f32.mrb[0].mxu0
    %722 = vmatprep.mubr.f32.mxu0 0.0
    %723 = vmatmul.mubr.f32.gmra.mrb[0].mxu0 %v447
    %v724 = vpop.f32.mrb[0].mxu0
    %v725 = vadd.f32 %v341, %v724
    %v726 = vpop.f32.mrb[0].mxu0
    %727 = vmatprep.mubr.f32.mxu0 0.0
    %728 = vmatmul.mubr.f32.gmra.mrb[0].mxu0 %v450
    %v729 = vpop.f32.mrb[0].mxu0
    %v730 = vadd.f32 %v341, %v729
    %v731 = vpop.f32.mrb[0].mxu0
    %732 = vmatprep.mubr.f32.mxu0 0.0
    %733 = vmatmul.mubr.f32.gmra.mrb[0].mxu0 %v453
    %v734 = vpop.f32.mrb[0].mxu0
    %v735 = vadd.f32 %v341, %v734
    %v736 = vpop.f32.mrb[0].mxu0
    %737 = vmatprep.mubr.f32.mxu0 0.0
    %738 = vmatmul.mubr.f32.gmra.mrb[0].mxu0 %v456
    %v739 = vpop.f32.mrb[0].mxu0
    %v740 = vadd.f32 %v341, %v739
    %v741 = vpop.f32.mrb[0].mxu0
    %742 = vmatprep.mubr.f32.mxu0 0.0
    %743 = vmatmul.mubr.f32.gmra.mrb[0].mxu0 %v459
    %v744 = vpop.f32.mrb[0].mxu0
    %v745 = vadd.f32 %v341, %v744
    %v746 = vpop.f32.mrb[0].mxu0
    %747 = vmatprep.mubr.f32.mxu0 0.0
    %748 = vmatmul.mubr.f32.gmra.mrb[0].mxu0 %v462
    %v749 = vpop.f32.mrb[0].mxu0
    %v750 = vadd.f32 %v341, %v749
    %v751 = vpop.f32.mrb[0].mxu0
    %752 = vmatprep.mubr.f32.mxu0 0.0
    %753 = vmatmul.mubr.f32.gmra.mrb[0].mxu0 %v465
    %v754 = vpop.f32.mrb[0].mxu0
    %v755 = vadd.f32 %v341, %v754
    %v756 = vpop.f32.mrb[0].mxu0
    %757 = vmatprep.mubr.f32.mxu0 0.0
    %758 = vmatmul.mubr.f32.gmra.mrb[0].mxu0 %v468
    %v759 = vpop.f32.mrb[0].mxu0
    %v760 = vadd.f32 %v341, %v759
    %v761 = vpop.f32.mrb[0].mxu0
    %762 = vmatprep.mubr.f32.mxu0 0.0
    %763 = vmatmul.mubr.f32.gmra.mrb[0].mxu0 %v471
    %v764 = vpop.f32.mrb[0].mxu0
    %v765 = vadd.f32 %v341, %v764
    %v766 = vpop.f32.mrb[0].mxu0
    %767 = vmatprep.mubr.f32.mxu0 0.0
    %768 = vmatmul.mubr.f32.gmra.mrb[0].mxu0 %v474
    %v769 = vpop.f32.mrb[0].mxu0
    %v770 = vadd.f32 %v341, %v769
    %v771 = vpop.f32.mrb[0].mxu0
    %772 = vmatprep.mubr.f32.mxu0 0.0
    %773 = vmatmul.mubr.f32.gmra.mrb[0].mxu0 %v477
    %v774 = vpop.f32.mrb[0].mxu0
    %v775 = vadd.f32 %v341, %v774
    %v776 = vpop.f32.mrb[0].mxu0
    %777 = vmatprep.mubr.f32.mxu0 0.0
    %778 = vmatmul.mubr.f32.gmra.mrb[0].mxu0 %v480
    %v779 = vpop.f32.mrb[0].mxu0
    %v780 = vadd.f32 %v341, %v779
    %v781 = vpop.f32.mrb[0].mxu0
    %782 = vmatprep.mubr.f32.mxu0 0.0
    %783 = vmatmul.mubr.f32.gmra.mrb[0].mxu0 %v483
    %v784 = vpop.f32.mrb[0].mxu0
    %v785 = vadd.f32 %v341, %v784
    %v786 = vpop.f32.mrb[0].mxu0
    %787 = vmatprep.mubr.f32.mxu0 0.0
    %788 = vmatmul.mubr.f32.gmra.mrb[0].mxu0 %v486
    %v789 = vpop.f32.mrb[0].mxu0
    %v790 = vadd.f32 %v341, %v789
    %v791 = vpop.f32.mrb[0].mxu0
    %792 = vdwg.mxu0
    %v793 = vmax.f32 %v555, 0.0
    %v794 = vmax.f32 %v560, 0.0
    %v795 = vmax.f32 %v565, 0.0
    %v796 = vmax.f32 %v570, 0.0
    %v797 = vmax.f32 %v575, 0.0
    %v798 = vmax.f32 %v580, 0.0
    %v799 = vmax.f32 %v585, 0.0
    %v800 = vmax.f32 %v590, 0.0
    %v801 = vmax.f32 %v595, 0.0
    %v802 = vmax.f32 %v600, 0.0
    %v803 = vmax.f32 %v605, 0.0
    %v804 = vmax.f32 %v610, 0.0
    %v805 = vmax.f32 %v615, 0.0
    %v806 = vmax.f32 %v620, 0.0
    %v807 = vmax.f32 %v625, 0.0
    %v808 = vmax.f32 %v630, 0.0
    %v809 = vmax.f32 %v635, 0.0
    %v810 = vmax.f32 %v640, 0.0
    %v811 = vmax.f32 %v645, 0.0
    %v812 = vmax.f32 %v650, 0.0
    %v813 = vmax.f32 %v655, 0.0
    %v814 = vmax.f32 %v660, 0.0
    %v815 = vmax.f32 %v665, 0.0
    %v816 = vmax.f32 %v670, 0.0
    %v817 = vmax.f32 %v675, 0.0
    %v818 = vmax.f32 %v680, 0.0
    %v819 = vmax.f32 %v685, 0.0
    %v820 = vmax.f32 %v690, 0.0
    %v821 = vmax.f32 %v695, 0.0
    %v822 = vmax.f32 %v700, 0.0
    %v823 = vmax.f32 %v705, 0.0
    %v824 = vmax.f32 %v710, 0.0
    %v825 = vmax.f32 %v715, 0.0
    %v826 = vmax.f32 %v720, 0.0
    %v827 = vmax.f32 %v725, 0.0
    %v828 = vmax.f32 %v730, 0.0
    %v829 = vmax.f32 %v735, 0.0
    %v830 = vmax.f32 %v740, 0.0
    %v831 = vmax.f32 %v745, 0.0
    %v832 = vmax.f32 %v750, 0.0
    %v833 = vmax.f32 %v755, 0.0
    %v834 = vmax.f32 %v760, 0.0
    %v835 = vmax.f32 %v765, 0.0
    %v836 = vmax.f32 %v770, 0.0
    %v837 = vmax.f32 %v775, 0.0
    %v838 = vmax.f32 %v780, 0.0
    %v839 = vmax.f32 %v785, 0.0
    %v840 = vmax.f32 %v790, 0.0
    %v841 = vpack.c.bf16 %v794, %v793
    %v842 = vpack.c.bf16 %v796, %v795
    %v843 = vpack.c.bf16 %v798, %v797
    %v844 = vpack.c.bf16 %v800, %v799
    %v845 = vpack.c.bf16 %v802, %v801
    %v846 = vpack.c.bf16 %v804, %v803
    %v847 = vpack.c.bf16 %v806, %v805
    %v848 = vpack.c.bf16 %v808, %v807
    %v849 = vpack.c.bf16 %v810, %v809
    %v850 = vpack.c.bf16 %v812, %v811
    %v851 = vpack.c.bf16 %v814, %v813
    %v852 = vpack.c.bf16 %v816, %v815
    %v853 = vpack.c.bf16 %v818, %v817
    %v854 = vpack.c.bf16 %v820, %v819
    %v855 = vpack.c.bf16 %v822, %v821
    %v856 = vpack.c.bf16 %v824, %v823
    %v857 = vpack.c.bf16 %v826, %v825
    %v858 = vpack.c.bf16 %v828, %v827
    %v859 = vpack.c.bf16 %v830, %v829
    %v860 = vpack.c.bf16 %v832, %v831
    %v861 = vpack.c.bf16 %v834, %v833
    %v862 = vpack.c.bf16 %v836, %v835
    %v863 = vpack.c.bf16 %v838, %v837
    %v864 = vpack.c.bf16 %v840, %v839
    %865 = vmatprep.subr.bf16.mxu0 0
    %866 = vmatpush1.bf16.msra.mxu0 %v841
    %867 = vmatprep.subr.bf16.mxu0 0
    %868 = vmatpush1.bf16.msra.mxu0 %v842
    %869 = vmatprep.subr.bf16.mxu0 0
    %870 = vmatpush1.bf16.msra.mxu0 %v843
    %871 = vmatprep.subr.bf16.mxu0 0
    %872 = vmatpush1.bf16.msra.mxu0 %v844
    %873 = vmatprep.subr.bf16.mxu0 0
    %874 = vmatpush1.bf16.msra.mxu0 %v845
    %875 = vmatprep.subr.bf16.mxu0 0
    %876 = vmatpush1.bf16.msra.mxu0 %v846
    %877 = vmatprep.subr.bf16.mxu0 0
    %878 = vmatpush1.bf16.msra.mxu0 %v847
    %879 = vmatprep.subr.bf16.mxu0 0
    %880 = vmatpush1.bf16.msra.mxu0 %v848
    %881 = vmatprep.subr.bf16.mxu0 0
    %882 = vmatpush1.bf16.msra.mxu0 %v849
    %883 = vmatprep.subr.bf16.mxu0 0
    %884 = vmatpush1.bf16.msra.mxu0 %v850
    %885 = vmatprep.subr.bf16.mxu0 0
    %886 = vmatpush1.bf16.msra.mxu0 %v851
    %887 = vmatprep.subr.bf16.mxu0 0
    %888 = vmatpush1.bf16.msra.mxu0 %v852
    %889 = vmatprep.subr.bf16.mxu0 0
    %890 = vmatpush1.bf16.msra.mxu0 %v853
    %891 = vmatprep.subr.bf16.mxu0 0
    %892 = vmatpush1.bf16.msra.mxu0 %v854
    %893 = vmatprep.subr.bf16.mxu0 0
    %894 = vmatpush1.bf16.msra.mxu0 %v855
    %895 = vmatprep.subr.bf16.mxu0 0
    %896 = vmatpush1.bf16.msra.mxu0 %v856
    %897 = vmatprep.mubr.bf16.mxu0 %v105
    %898 = vmatmul.mubr.bf16.gmra.mrb[0].mxu0 %v104
    %v899 = vpop.f32.mrb[0].mxu0
    %v900 = vadd.f32 0.0, %v899
    %v901 = vpop.f32.mrb[0].mxu0
    %v902 = vpop.f32.mrb[0].mxu0
    %v903 = vadd.f32 0.0, %v902
    %v904 = vpop.f32.mrb[0].mxu0
    %905 = vmatprep.mubr.bf16.mxu0 %v108
    %906 = vmatmul.mubr.bf16.gmra.mrb[0].mxu0 %v107
    %v907 = vpop.f32.mrb[0].mxu0
    %v908 = vadd.f32 0.0, %v907
    %v909 = vpop.f32.mrb[0].mxu0
    %v910 = vpop.f32.mrb[0].mxu0
    %v911 = vadd.f32 0.0, %v910
    %v912 = vpop.f32.mrb[0].mxu0
    %913 = vmatprep.mubr.bf16.mxu0 %v111
    %914 = vmatmul.mubr.bf16.gmra.mrb[0].mxu0 %v110
    %v915 = vpop.f32.mrb[0].mxu0
    %v916 = vadd.f32 0.0, %v915
    %v917 = vpop.f32.mrb[0].mxu0
    %v918 = vpop.f32.mrb[0].mxu0
    %v919 = vadd.f32 0.0, %v918
    %v920 = vpop.f32.mrb[0].mxu0
    %921 = vmatprep.mubr.bf16.mxu0 %v114
    %922 = vmatmul.mubr.bf16.gmra.mrb[0].mxu0 %v113
    %v923 = vpop.f32.mrb[0].mxu0
    %v924 = vadd.f32 0.0, %v923
    %v925 = vpop.f32.mrb[0].mxu0
    %v926 = vpop.f32.mrb[0].mxu0
    %v927 = vadd.f32 0.0, %v926
    %v928 = vpop.f32.mrb[0].mxu0
    %929 = vmatprep.mubr.bf16.mxu0 %v117
    %930 = vmatmul.mubr.bf16.gmra.mrb[0].mxu0 %v116
    %v931 = vpop.f32.mrb[0].mxu0
    %v932 = vadd.f32 0.0, %v931
    %v933 = vpop.f32.mrb[0].mxu0
    %v934 = vpop.f32.mrb[0].mxu0
    %v935 = vadd.f32 0.0, %v934
    %v936 = vpop.f32.mrb[0].mxu0
    %937 = vmatprep.mubr.bf16.mxu0 %v120
    %938 = vmatmul.mubr.bf16.gmra.mrb[0].mxu0 %v119
    %v939 = vpop.f32.mrb[0].mxu0
    %v940 = vadd.f32 0.0, %v939
    %v941 = vpop.f32.mrb[0].mxu0
    %v942 = vpop.f32.mrb[0].mxu0
    %v943 = vadd.f32 0.0, %v942
    %v944 = vpop.f32.mrb[0].mxu0
    %945 = vmatprep.mubr.bf16.mxu0 %v123
    %946 = vmatmul.mubr.bf16.gmra.mrb[0].mxu0 %v122
    %v947 = vpop.f32.mrb[0].mxu0
    %v948 = vadd.f32 0.0, %v947
    %v949 = vpop.f32.mrb[0].mxu0
    %v950 = vpop.f32.mrb[0].mxu0
    %v951 = vadd.f32 0.0, %v950
    %v952 = vpop.f32.mrb[0].mxu0
    %953 = vmatprep.mubr.bf16.mxu0 %v126
    %954 = vmatmul.mubr.bf16.gmra.mrb[0].mxu0 %v125
    %v955 = vpop.f32.mrb[0].mxu0
    %v956 = vadd.f32 0.0, %v955
    %v957 = vpop.f32.mrb[0].mxu0
    %v958 = vpop.f32.mrb[0].mxu0
    %v959 = vadd.f32 0.0, %v958
    %v960 = vpop.f32.mrb[0].mxu0
    %961 = vmatprep.mubr.bf16.mxu0 %v129
    %962 = vmatmul.mubr.bf16.gmra.mrb[0].mxu0 %v128
    %v963 = vpop.f32.mrb[0].mxu0
    %v964 = vadd.f32 0.0, %v963
    %v965 = vpop.f32.mrb[0].mxu0
    %v966 = vpop.f32.mrb[0].mxu0
    %v967 = vadd.f32 0.0, %v966
    %v968 = vpop.f32.mrb[0].mxu0
    %969 = vmatprep.mubr.bf16.mxu0 %v132
    %970 = vmatmul.mubr.bf16.gmra.mrb[0].mxu0 %v131
    %v971 = vpop.f32.mrb[0].mxu0
    %v972 = vadd.f32 0.0, %v971
    %v973 = vpop.f32.mrb[0].mxu0
    %v974 = vpop.f32.mrb[0].mxu0
    %v975 = vadd.f32 0.0, %v974
    %v976 = vpop.f32.mrb[0].mxu0
    %977 = vmatprep.mubr.bf16.mxu0 %v135
    %978 = vmatmul.mubr.bf16.gmra.mrb[0].mxu0 %v134
    %v979 = vpop.f32.mrb[0].mxu0
    %v980 = vadd.f32 0.0, %v979
    %v981 = vpop.f32.mrb[0].mxu0
    %v982 = vpop.f32.mrb[0].mxu0
    %v983 = vadd.f32 0.0, %v982
    %v984 = vpop.f32.mrb[0].mxu0
    %985 = vmatprep.mubr.bf16.mxu0 %v138
    %986 = vmatmul.mubr.bf16.gmra.mrb[0].mxu0 %v137
    %v987 = vpop.f32.mrb[0].mxu0
    %v988 = vadd.f32 0.0, %v987
    %v989 = vpop.f32.mrb[0].mxu0
    %v990 = vpop.f32.mrb[0].mxu0
    %v991 = vadd.f32 0.0, %v990
    %v992 = vpop.f32.mrb[0].mxu0
    %993 = vmatprep.mubr.bf16.mxu0 %v141
    %994 = vmatmul.mubr.bf16.gmra.mrb[0].mxu0 %v140
    %v995 = vpop.f32.mrb[0].mxu0
    %v996 = vadd.f32 0.0, %v995
    %v997 = vpop.f32.mrb[0].mxu0
    %v998 = vpop.f32.mrb[0].mxu0
    %v999 = vadd.f32 0.0, %v998
    %v1000 = vpop.f32.mrb[0].mxu0
    %1001 = vmatprep.mubr.bf16.mxu0 %v144
    %1002 = vmatmul.mubr.bf16.gmra.mrb[0].mxu0 %v143
    %v1003 = vpop.f32.mrb[0].mxu0
    %v1004 = vadd.f32 0.0, %v1003
    %v1005 = vpop.f32.mrb[0].mxu0
    %v1006 = vpop.f32.mrb[0].mxu0
    %v1007 = vadd.f32 0.0, %v1006
    %v1008 = vpop.f32.mrb[0].mxu0
    %1009 = vmatprep.mubr.bf16.mxu0 %v147
    %1010 = vmatmul.mubr.bf16.gmra.mrb[0].mxu0 %v146
    %v1011 = vpop.f32.mrb[0].mxu0
    %v1012 = vadd.f32 0.0, %v1011
    %v1013 = vpop.f32.mrb[0].mxu0
    %v1014 = vpop.f32.mrb[0].mxu0
    %v1015 = vadd.f32 0.0, %v1014
    %v1016 = vpop.f32.mrb[0].mxu0
    %1017 = vmatprep.mubr.bf16.mxu0 %v150
    %1018 = vmatmul.mubr.bf16.gmra.mrb[0].mxu0 %v149
    %v1019 = vpop.f32.mrb[0].mxu0
    %v1020 = vadd.f32 0.0, %v1019
    %v1021 = vpop.f32.mrb[0].mxu0
    %v1022 = vpop.f32.mrb[0].mxu0
    %v1023 = vadd.f32 0.0, %v1022
    %v1024 = vpop.f32.mrb[0].mxu0
    %1025 = vmatprep.mubr.bf16.mxu0 %v153
    %1026 = vmatmul.mubr.bf16.gmra.mrb[0].mxu0 %v152
    %v1027 = vpop.f32.mrb[0].mxu0
    %v1028 = vadd.f32 0.0, %v1027
    %v1029 = vpop.f32.mrb[0].mxu0
    %v1030 = vpop.f32.mrb[0].mxu0
    %v1031 = vadd.f32 0.0, %v1030
    %v1032 = vpop.f32.mrb[0].mxu0
    %1033 = vmatprep.mubr.bf16.mxu0 %v156
    %1034 = vmatmul.mubr.bf16.gmra.mrb[0].mxu0 %v155
    %v1035 = vpop.f32.mrb[0].mxu0
    %v1036 = vadd.f32 0.0, %v1035
    %v1037 = vpop.f32.mrb[0].mxu0
    %v1038 = vpop.f32.mrb[0].mxu0
    %v1039 = vadd.f32 0.0, %v1038
    %v1040 = vpop.f32.mrb[0].mxu0
    %1041 = vmatprep.mubr.bf16.mxu0 %v159
    %1042 = vmatmul.mubr.bf16.gmra.mrb[0].mxu0 %v158
    %v1043 = vpop.f32.mrb[0].mxu0
    %v1044 = vadd.f32 0.0, %v1043
    %v1045 = vpop.f32.mrb[0].mxu0
    %v1046 = vpop.f32.mrb[0].mxu0
    %v1047 = vadd.f32 0.0, %v1046
    %v1048 = vpop.f32.mrb[0].mxu0
    %1049 = vmatprep.mubr.bf16.mxu0 %v162
    %1050 = vmatmul.mubr.bf16.gmra.mrb[0].mxu0 %v161
    %v1051 = vpop.f32.mrb[0].mxu0
    %v1052 = vadd.f32 0.0, %v1051
    %v1053 = vpop.f32.mrb[0].mxu0
    %v1054 = vpop.f32.mrb[0].mxu0
    %v1055 = vadd.f32 0.0, %v1054
    %v1056 = vpop.f32.mrb[0].mxu0
    %1057 = vmatprep.mubr.bf16.mxu0 %v165
    %1058 = vmatmul.mubr.bf16.gmra.mrb[0].mxu0 %v164
    %v1059 = vpop.f32.mrb[0].mxu0
    %v1060 = vadd.f32 0.0, %v1059
    %v1061 = vpop.f32.mrb[0].mxu0
    %v1062 = vpop.f32.mrb[0].mxu0
    %v1063 = vadd.f32 0.0, %v1062
    %v1064 = vpop.f32.mrb[0].mxu0
    %1065 = vmatprep.mubr.bf16.mxu0 %v168
    %1066 = vmatmul.mubr.bf16.gmra.mrb[0].mxu0 %v167
    %v1067 = vpop.f32.mrb[0].mxu0
    %v1068 = vadd.f32 0.0, %v1067
    %v1069 = vpop.f32.mrb[0].mxu0
    %v1070 = vpop.f32.mrb[0].mxu0
    %v1071 = vadd.f32 0.0, %v1070
    %v1072 = vpop.f32.mrb[0].mxu0
    %1073 = vmatprep.mubr.bf16.mxu0 %v171
    %1074 = vmatmul.mubr.bf16.gmra.mrb[0].mxu0 %v170
    %v1075 = vpop.f32.mrb[0].mxu0
    %v1076 = vadd.f32 0.0, %v1075
    %v1077 = vpop.f32.mrb[0].mxu0
    %v1078 = vpop.f32.mrb[0].mxu0
    %v1079 = vadd.f32 0.0, %v1078
    %v1080 = vpop.f32.mrb[0].mxu0
    %1081 = vmatprep.mubr.bf16.mxu0 %v174
    %1082 = vmatmul.mubr.bf16.gmra.mrb[0].mxu0 %v173
    %v1083 = vpop.f32.mrb[0].mxu0
    %v1084 = vadd.f32 0.0, %v1083
    %v1085 = vpop.f32.mrb[0].mxu0
    %v1086 = vpop.f32.mrb[0].mxu0
    %v1087 = vadd.f32 0.0, %v1086
    %v1088 = vpop.f32.mrb[0].mxu0
    %1089 = vdwg.mxu0
    %1090 = vmatprep.subr.bf16.mxu0 0
    %1091 = vmatpush1.bf16.msra.mxu0 %v857
    %1092 = vmatprep.subr.bf16.mxu0 0
    %1093 = vmatpush1.bf16.msra.mxu0 %v858
    %1094 = vmatprep.subr.bf16.mxu0 0
    %1095 = vmatpush1.bf16.msra.mxu0 %v859
    %1096 = vmatprep.subr.bf16.mxu0 0
    %1097 = vmatpush1.bf16.msra.mxu0 %v860
    %1098 = vmatprep.subr.bf16.mxu0 0
    %1099 = vmatpush1.bf16.msra.mxu0 %v861
    %1100 = vmatprep.subr.bf16.mxu0 0
    %1101 = vmatpush1.bf16.msra.mxu0 %v862
    %1102 = vmatprep.subr.bf16.mxu0 0
    %1103 = vmatpush1.bf16.msra.mxu0 %v863
    %1104 = vmatprep.subr.bf16.mxu0 0
    %1105 = vmatpush1.bf16.msra.mxu0 %v864
    %1106 = vmatprep.subr.bf16.mxu0 0
    %1107 = vmatpush1.bf16.msra.mxu0 0
    %1108 = vmatprep.subr.bf16.mxu0 0
    %1109 = vmatpush1.bf16.msra.mxu0 0
    %1110 = vmatprep.subr.bf16.mxu0 0
    %1111 = vmatpush1.bf16.msra.mxu0 0
    %1112 = vmatprep.subr.bf16.mxu0 0
    %1113 = vmatpush1.bf16.msra.mxu0 0
    %1114 = vmatprep.subr.bf16.mxu0 0
    %1115 = vmatpush1.bf16.msra.mxu0 0
    %1116 = vmatprep.subr.bf16.mxu0 0
    %1117 = vmatpush1.bf16.msra.mxu0 0
    %1118 = vmatprep.subr.bf16.mxu0 0
    %1119 = vmatpush1.bf16.msra.mxu0 0
    %1120 = vmatprep.subr.bf16.mxu0 0
    %1121 = vmatpush1.bf16.msra.mxu0 0
    %1122 = vmatprep.mubr.bf16.mxu0 0
    %1123 = vmatmul.mubr.bf16.gmra.mrb[0].mxu0 %v106
    %v1124 = vpop.f32.mrb[0].mxu0
    %v1125 = vadd.f32 %v900, %v1124
    %v1126 = vpop.f32.mrb[0].mxu0
    %v1127 = vpop.f32.mrb[0].mxu0
    %v1128 = vadd.f32 %v903, %v1127
    %v1129 = vpop.f32.mrb[0].mxu0
    %1130 = vmatprep.mubr.bf16.mxu0 0
    %1131 = vmatmul.mubr.bf16.gmra.mrb[0].mxu0 %v109
    %v1132 = vpop.f32.mrb[0].mxu0
    %v1133 = vadd.f32 %v908, %v1132
    %v1134 = vpop.f32.mrb[0].mxu0
    %v1135 = vpop.f32.mrb[0].mxu0
    %v1136 = vadd.f32 %v911, %v1135
    %v1137 = vpop.f32.mrb[0].mxu0
    %1138 = vmatprep.mubr.bf16.mxu0 0
    %1139 = vmatmul.mubr.bf16.gmra.mrb[0].mxu0 %v112
    %v1140 = vpop.f32.mrb[0].mxu0
    %v1141 = vadd.f32 %v916, %v1140
    %v1142 = vpop.f32.mrb[0].mxu0
    %v1143 = vpop.f32.mrb[0].mxu0
    %v1144 = vadd.f32 %v919, %v1143
    %v1145 = vpop.f32.mrb[0].mxu0
    %1146 = vmatprep.mubr.bf16.mxu0 0
    %1147 = vmatmul.mubr.bf16.gmra.mrb[0].mxu0 %v115
    %v1148 = vpop.f32.mrb[0].mxu0
    %v1149 = vadd.f32 %v924, %v1148
    %v1150 = vpop.f32.mrb[0].mxu0
    %v1151 = vpop.f32.mrb[0].mxu0
    %v1152 = vadd.f32 %v927, %v1151
    %v1153 = vpop.f32.mrb[0].mxu0
    %1154 = vmatprep.mubr.bf16.mxu0 0
    %1155 = vmatmul.mubr.bf16.gmra.mrb[0].mxu0 %v118
    %v1156 = vpop.f32.mrb[0].mxu0
    %v1157 = vadd.f32 %v932, %v1156
    %v1158 = vpop.f32.mrb[0].mxu0
    %v1159 = vpop.f32.mrb[0].mxu0
    %v1160 = vadd.f32 %v935, %v1159
    %v1161 = vpop.f32.mrb[0].mxu0
    %1162 = vmatprep.mubr.bf16.mxu0 0
    %1163 = vmatmul.mubr.bf16.gmra.mrb[0].mxu0 %v121
    %v1164 = vpop.f32.mrb[0].mxu0
    %v1165 = vadd.f32 %v940, %v1164
    %v1166 = vpop.f32.mrb[0].mxu0
    %v1167 = vpop.f32.mrb[0].mxu0
    %v1168 = vadd.f32 %v943, %v1167
    %v1169 = vpop.f32.mrb[0].mxu0
    %1170 = vmatprep.mubr.bf16.mxu0 0
    %1171 = vmatmul.mubr.bf16.gmra.mrb[0].mxu0 %v124
    %v1172 = vpop.f32.mrb[0].mxu0
    %v1173 = vadd.f32 %v948, %v1172
    %v1174 = vpop.f32.mrb[0].mxu0
    %v1175 = vpop.f32.mrb[0].mxu0
    %v1176 = vadd.f32 %v951, %v1175
    %v1177 = vpop.f32.mrb[0].mxu0
    %1178 = vmatprep.mubr.bf16.mxu0 0
    %1179 = vmatmul.mubr.bf16.gmra.mrb[0].mxu0 %v127
    %v1180 = vpop.f32.mrb[0].mxu0
    %v1181 = vadd.f32 %v956, %v1180
    %v1182 = vpop.f32.mrb[0].mxu0
    %v1183 = vpop.f32.mrb[0].mxu0
    %v1184 = vadd.f32 %v959, %v1183
    %v1185 = vpop.f32.mrb[0].mxu0
    %1186 = vmatprep.mubr.bf16.mxu0 0
    %1187 = vmatmul.mubr.bf16.gmra.mrb[0].mxu0 %v130
    %v1188 = vpop.f32.mrb[0].mxu0
    %v1189 = vadd.f32 %v964, %v1188
    %v1190 = vpop.f32.mrb[0].mxu0
    %v1191 = vpop.f32.mrb[0].mxu0
    %v1192 = vadd.f32 %v967, %v1191
    %v1193 = vpop.f32.mrb[0].mxu0
    %1194 = vmatprep.mubr.bf16.mxu0 0
    %1195 = vmatmul.mubr.bf16.gmra.mrb[0].mxu0 %v133
    %v1196 = vpop.f32.mrb[0].mxu0
    %v1197 = vadd.f32 %v972, %v1196
    %v1198 = vpop.f32.mrb[0].mxu0
    %v1199 = vpop.f32.mrb[0].mxu0
    %v1200 = vadd.f32 %v975, %v1199
    %v1201 = vpop.f32.mrb[0].mxu0
    %1202 = vmatprep.mubr.bf16.mxu0 0
    %1203 = vmatmul.mubr.bf16.gmra.mrb[0].mxu0 %v136
    %v1204 = vpop.f32.mrb[0].mxu0
    %v1205 = vadd.f32 %v980, %v1204
    %v1206 = vpop.f32.mrb[0].mxu0
    %v1207 = vpop.f32.mrb[0].mxu0
    %v1208 = vadd.f32 %v983, %v1207
    %v1209 = vpop.f32.mrb[0].mxu0
    %1210 = vmatprep.mubr.bf16.mxu0 0
    %1211 = vmatmul.mubr.bf16.gmra.mrb[0].mxu0 %v139
    %v1212 = vpop.f32.mrb[0].mxu0
    %v1213 = vadd.f32 %v988, %v1212
    %v1214 = vpop.f32.mrb[0].mxu0
    %v1215 = vpop.f32.mrb[0].mxu0
    %v1216 = vadd.f32 %v991, %v1215
    %v1217 = vpop.f32.mrb[0].mxu0
    %1218 = vmatprep.mubr.bf16.mxu0 0
    %1219 = vmatmul.mubr.bf16.gmra.mrb[0].mxu0 %v142
    %v1220 = vpop.f32.mrb[0].mxu0
    %v1221 = vadd.f32 %v996, %v1220
    %v1222 = vpop.f32.mrb[0].mxu0
    %v1223 = vpop.f32.mrb[0].mxu0
    %v1224 = vadd.f32 %v999, %v1223
    %v1225 = vpop.f32.mrb[0].mxu0
    %1226 = vmatprep.mubr.bf16.mxu0 0
    %1227 = vmatmul.mubr.bf16.gmra.mrb[0].mxu0 %v145
    %v1228 = vpop.f32.mrb[0].mxu0
    %v1229 = vadd.f32 %v1004, %v1228
    %v1230 = vpop.f32.mrb[0].mxu0
    %v1231 = vpop.f32.mrb[0].mxu0
    %v1232 = vadd.f32 %v1007, %v1231
    %v1233 = vpop.f32.mrb[0].mxu0
    %1234 = vmatprep.mubr.bf16.mxu0 0
    %1235 = vmatmul.mubr.bf16.gmra.mrb[0].mxu0 %v148
    %v1236 = vpop.f32.mrb[0].mxu0
    %v1237 = vadd.f32 %v1012, %v1236
    %v1238 = vpop.f32.mrb[0].mxu0
    %v1239 = vpop.f32.mrb[0].mxu0
    %v1240 = vadd.f32 %v1015, %v1239
    %v1241 = vpop.f32.mrb[0].mxu0
    %1242 = vmatprep.mubr.bf16.mxu0 0
    %1243 = vmatmul.mubr.bf16.gmra.mrb[0].mxu0 %v151
    %v1244 = vpop.f32.mrb[0].mxu0
    %v1245 = vadd.f32 %v1020, %v1244
    %v1246 = vpop.f32.mrb[0].mxu0
    %v1247 = vpop.f32.mrb[0].mxu0
    %v1248 = vadd.f32 %v1023, %v1247
    %v1249 = vpop.f32.mrb[0].mxu0
    %1250 = vmatprep.mubr.bf16.mxu0 0
    %1251 = vmatmul.mubr.bf16.gmra.mrb[0].mxu0 %v154
    %v1252 = vpop.f32.mrb[0].mxu0
    %v1253 = vadd.f32 %v1028, %v1252
    %v1254 = vpop.f32.mrb[0].mxu0
    %v1255 = vpop.f32.mrb[0].mxu0
    %v1256 = vadd.f32 %v1031, %v1255
    %v1257 = vpop.f32.mrb[0].mxu0
    %1258 = vmatprep.mubr.bf16.mxu0 0
    %1259 = vmatmul.mubr.bf16.gmra.mrb[0].mxu0 %v157
    %v1260 = vpop.f32.mrb[0].mxu0
    %v1261 = vadd.f32 %v1036, %v1260
    %v1262 = vpop.f32.mrb[0].mxu0
    %v1263 = vpop.f32.mrb[0].mxu0
    %v1264 = vadd.f32 %v1039, %v1263
    %v1265 = vpop.f32.mrb[0].mxu0
    %1266 = vmatprep.mubr.bf16.mxu0 0
    %1267 = vmatmul.mubr.bf16.gmra.mrb[0].mxu0 %v160
    %v1268 = vpop.f32.mrb[0].mxu0
    %v1269 = vadd.f32 %v1044, %v1268
    %v1270 = vpop.f32.mrb[0].mxu0
    %v1271 = vpop.f32.mrb[0].mxu0
    %v1272 = vadd.f32 %v1047, %v1271
    %v1273 = vpop.f32.mrb[0].mxu0
    %1274 = vmatprep.mubr.bf16.mxu0 0
    %1275 = vmatmul.mubr.bf16.gmra.mrb[0].mxu0 %v163
    %v1276 = vpop.f32.mrb[0].mxu0
    %v1277 = vadd.f32 %v1052, %v1276
    %v1278 = vpop.f32.mrb[0].mxu0
    %v1279 = vpop.f32.mrb[0].mxu0
    %v1280 = vadd.f32 %v1055, %v1279
    %v1281 = vpop.f32.mrb[0].mxu0
    %1282 = vmatprep.mubr.bf16.mxu0 0
    %1283 = vmatmul.mubr.bf16.gmra.mrb[0].mxu0 %v166
    %v1284 = vpop.f32.mrb[0].mxu0
    %v1285 = vadd.f32 %v1060, %v1284
    %v1286 = vpop.f32.mrb[0].mxu0
    %v1287 = vpop.f32.mrb[0].mxu0
    %v1288 = vadd.f32 %v1063, %v1287
    %v1289 = vpop.f32.mrb[0].mxu0
    %1290 = vmatprep.mubr.bf16.mxu0 0
    %1291 = vmatmul.mubr.bf16.gmra.mrb[0].mxu0 %v169
    %v1292 = vpop.f32.mrb[0].mxu0
    %v1293 = vadd.f32 %v1068, %v1292
    %v1294 = vpop.f32.mrb[0].mxu0
    %v1295 = vpop.f32.mrb[0].mxu0
    %v1296 = vadd.f32 %v1071, %v1295
    %v1297 = vpop.f32.mrb[0].mxu0
    %1298 = vmatprep.mubr.bf16.mxu0 0
    %1299 = vmatmul.mubr.bf16.gmra.mrb[0].mxu0 %v172
    %v1300 = vpop.f32.mrb[0].mxu0
    %v1301 = vadd.f32 %v1076, %v1300
    %v1302 = vpop.f32.mrb[0].mxu0
    %v1303 = vpop.f32.mrb[0].mxu0
    %v1304 = vadd.f32 %v1079, %v1303
    %v1305 = vpop.f32.mrb[0].mxu0
    %1306 = vmatprep.mubr.bf16.mxu0 0
    %1307 = vmatmul.mubr.bf16.gmra.mrb[0].mxu0 %v175
    %v1308 = vpop.f32.mrb[0].mxu0
    %v1309 = vadd.f32 %v1084, %v1308
    %v1310 = vpop.f32.mrb[0].mxu0
    %v1311 = vpop.f32.mrb[0].mxu0
    %v1312 = vadd.f32 %v1087, %v1311
    %v1313 = vpop.f32.mrb[0].mxu0
    %1314 = vdwg.mxu0
    %1339 = vrot.lane.b32.xlu0 %v841, 96
    %v1340 = vpop.permute.xlu0 %1339
    %1341 = vrot.lane.b32.xlu0 %v842, 96
    %v1342 = vpop.permute.xlu0 %1341
    %1343 = vrot.lane.b32.xlu0 %v843, 96
    %v1344 = vpop.permute.xlu0 %1343
    %1345 = vrot.lane.b32.xlu0 %v844, 96
    %v1346 = vpop.permute.xlu0 %1345
    %1347 = vrot.lane.b32.xlu0 %v845, 96
    %v1348 = vpop.permute.xlu0 %1347
    %1349 = vrot.lane.b32.xlu0 %v846, 96
    %v1350 = vpop.permute.xlu0 %1349
    %1351 = vrot.lane.b32.xlu0 %v847, 96
    %v1352 = vpop.permute.xlu0 %1351
    %1353 = vrot.lane.b32.xlu0 %v848, 96
    %v1354 = vpop.permute.xlu0 %1353
    %1355 = vrot.lane.b32.xlu0 %v849, 96
    %v1356 = vpop.permute.xlu0 %1355
    %1357 = vrot.lane.b32.xlu0 %v850, 96
    %v1358 = vpop.permute.xlu0 %1357
    %1359 = vrot.lane.b32.xlu0 %v851, 96
    %v1360 = vpop.permute.xlu0 %1359
    %1361 = vrot.lane.b32.xlu0 %v852, 96
    %v1362 = vpop.permute.xlu0 %1361
    %1363 = vrot.lane.b32.xlu0 %v853, 96
    %v1364 = vpop.permute.xlu0 %1363
    %1365 = vrot.lane.b32.xlu0 %v854, 96
    %v1366 = vpop.permute.xlu0 %1365
    %1367 = vrot.lane.b32.xlu0 %v855, 96
    %v1368 = vpop.permute.xlu0 %1367
    %1369 = vrot.lane.b32.xlu0 %v856, 96
    %v1370 = vpop.permute.xlu0 %1369
    %1371 = vrot.lane.b32.xlu0 %v857, 96
    %v1372 = vpop.permute.xlu0 %1371
    %1373 = vrot.lane.b32.xlu0 %v858, 96
    %v1374 = vpop.permute.xlu0 %1373
    %1375 = vrot.lane.b32.xlu0 %v859, 96
    %v1376 = vpop.permute.xlu0 %1375
    %1377 = vrot.lane.b32.xlu0 %v860, 96
    %v1378 = vpop.permute.xlu0 %1377
    %1379 = vrot.lane.b32.xlu0 %v861, 96
    %v1380 = vpop.permute.xlu0 %1379
    %1381 = vrot.lane.b32.xlu0 %v862, 96
    %v1382 = vpop.permute.xlu0 %1381
    %1383 = vrot.lane.b32.xlu0 %v863, 96
    %v1384 = vpop.permute.xlu0 %1383
    %1385 = vrot.lane.b32.xlu0 %v864, 96
    %v1386 = vpop.permute.xlu0 %1385
    %1411 = vmatprep.subr.bf16.mxu0 0
    %1412 = vmatpush1.bf16.msra.mxu0 %v1340
    %1413 = vmatprep.subr.bf16.mxu0 0
    %1414 = vmatpush1.bf16.msra.mxu0 %v1342
    %1415 = vmatprep.subr.bf16.mxu0 0
    %1416 = vmatpush1.bf16.msra.mxu0 %v1344
    %1417 = vmatprep.subr.bf16.mxu0 0
    %1418 = vmatpush1.bf16.msra.mxu0 %v1346
    %1419 = vmatprep.subr.bf16.mxu0 0
    %1420 = vmatpush1.bf16.msra.mxu0 %v1348
    %1421 = vmatprep.subr.bf16.mxu0 0
    %1422 = vmatpush1.bf16.msra.mxu0 %v1350
    %1423 = vmatprep.subr.bf16.mxu0 0
    %1424 = vmatpush1.bf16.msra.mxu0 %v1352
    %1425 = vmatprep.subr.bf16.mxu0 0
    %1426 = vmatpush1.bf16.msra.mxu0 %v1354
    %1427 = vmatprep.subr.bf16.mxu0 0
    %1428 = vmatpush1.bf16.msra.mxu0 %v1356
    %1429 = vmatprep.subr.bf16.mxu0 0
    %1430 = vmatpush1.bf16.msra.mxu0 %v1358
    %1431 = vmatprep.subr.bf16.mxu0 0
    %1432 = vmatpush1.bf16.msra.mxu0 %v1360
    %1433 = vmatprep.subr.bf16.mxu0 0
    %1434 = vmatpush1.bf16.msra.mxu0 %v1362
    %1435 = vmatprep.subr.bf16.mxu0 0
    %1436 = vmatpush1.bf16.msra.mxu0 %v1364
    %1437 = vmatprep.subr.bf16.mxu0 0
    %1438 = vmatpush1.bf16.msra.mxu0 %v1366
    %1439 = vmatprep.subr.bf16.mxu0 0
    %1440 = vmatpush1.bf16.msra.mxu0 %v1368
    %1441 = vmatprep.subr.bf16.mxu0 0
    %1442 = vmatpush1.bf16.msra.mxu0 %v1370
    %1443 = vmatprep.mubr.bf16.mxu0 %v213
    %1444 = vmatmul.mubr.bf16.gmra.mrb[0].mxu0 %v212
    %v1445 = vpop.f32.mrb[0].mxu0
    %v1446 = vadd.f32 0.0, %v1445
    %v1447 = vpop.f32.mrb[0].mxu0
    %v1448 = vpop.f32.mrb[0].mxu0
    %v1449 = vadd.f32 0.0, %v1448
    %v1450 = vpop.f32.mrb[0].mxu0
    %1451 = vmatprep.mubr.bf16.mxu0 %v216
    %1452 = vmatmul.mubr.bf16.gmra.mrb[0].mxu0 %v215
    %v1453 = vpop.f32.mrb[0].mxu0
    %v1454 = vadd.f32 0.0, %v1453
    %v1455 = vpop.f32.mrb[0].mxu0
    %v1456 = vpop.f32.mrb[0].mxu0
    %v1457 = vadd.f32 0.0, %v1456
    %v1458 = vpop.f32.mrb[0].mxu0
    %1459 = vmatprep.mubr.bf16.mxu0 %v219
    %1460 = vmatmul.mubr.bf16.gmra.mrb[0].mxu0 %v218
    %v1461 = vpop.f32.mrb[0].mxu0
    %v1462 = vadd.f32 0.0, %v1461
    %v1463 = vpop.f32.mrb[0].mxu0
    %v1464 = vpop.f32.mrb[0].mxu0
    %v1465 = vadd.f32 0.0, %v1464
    %v1466 = vpop.f32.mrb[0].mxu0
    %1467 = vmatprep.mubr.bf16.mxu0 %v222
    %1468 = vmatmul.mubr.bf16.gmra.mrb[0].mxu0 %v221
    %v1469 = vpop.f32.mrb[0].mxu0
    %v1470 = vadd.f32 0.0, %v1469
    %v1471 = vpop.f32.mrb[0].mxu0
    %v1472 = vpop.f32.mrb[0].mxu0
    %v1473 = vadd.f32 0.0, %v1472
    %v1474 = vpop.f32.mrb[0].mxu0
    %1475 = vmatprep.mubr.bf16.mxu0 %v225
    %1476 = vmatmul.mubr.bf16.gmra.mrb[0].mxu0 %v224
    %v1477 = vpop.f32.mrb[0].mxu0
    %v1478 = vadd.f32 0.0, %v1477
    %v1479 = vpop.f32.mrb[0].mxu0
    %v1480 = vpop.f32.mrb[0].mxu0
    %v1481 = vadd.f32 0.0, %v1480
    %v1482 = vpop.f32.mrb[0].mxu0
    %1483 = vmatprep.mubr.bf16.mxu0 %v228
    %1484 = vmatmul.mubr.bf16.gmra.mrb[0].mxu0 %v227
    %v1485 = vpop.f32.mrb[0].mxu0
    %v1486 = vadd.f32 0.0, %v1485
    %v1487 = vpop.f32.mrb[0].mxu0
    %v1488 = vpop.f32.mrb[0].mxu0
    %v1489 = vadd.f32 0.0, %v1488
    %v1490 = vpop.f32.mrb[0].mxu0
    %1491 = vmatprep.mubr.bf16.mxu0 %v231
    %1492 = vmatmul.mubr.bf16.gmra.mrb[0].mxu0 %v230
    %v1493 = vpop.f32.mrb[0].mxu0
    %v1494 = vadd.f32 0.0, %v1493
    %v1495 = vpop.f32.mrb[0].mxu0
    %v1496 = vpop.f32.mrb[0].mxu0
    %v1497 = vadd.f32 0.0, %v1496
    %v1498 = vpop.f32.mrb[0].mxu0
    %1499 = vmatprep.mubr.bf16.mxu0 %v234
    %1500 = vmatmul.mubr.bf16.gmra.mrb[0].mxu0 %v233
    %v1501 = vpop.f32.mrb[0].mxu0
    %v1502 = vadd.f32 0.0, %v1501
    %v1503 = vpop.f32.mrb[0].mxu0
    %v1504 = vpop.f32.mrb[0].mxu0
    %v1505 = vadd.f32 0.0, %v1504
    %v1506 = vpop.f32.mrb[0].mxu0
    %1507 = vmatprep.mubr.bf16.mxu0 %v237
    %1508 = vmatmul.mubr.bf16.gmra.mrb[0].mxu0 %v236
    %v1509 = vpop.f32.mrb[0].mxu0
    %v1510 = vadd.f32 0.0, %v1509
    %v1511 = vpop.f32.mrb[0].mxu0
    %v1512 = vpop.f32.mrb[0].mxu0
    %v1513 = vadd.f32 0.0, %v1512
    %v1514 = vpop.f32.mrb[0].mxu0
    %1515 = vmatprep.mubr.bf16.mxu0 %v240
    %1516 = vmatmul.mubr.bf16.gmra.mrb[0].mxu0 %v239
    %v1517 = vpop.f32.mrb[0].mxu0
    %v1518 = vadd.f32 0.0, %v1517
    %v1519 = vpop.f32.mrb[0].mxu0
    %v1520 = vpop.f32.mrb[0].mxu0
    %v1521 = vadd.f32 0.0, %v1520
    %v1522 = vpop.f32.mrb[0].mxu0
    %1523 = vmatprep.mubr.bf16.mxu0 %v243
    %1524 = vmatmul.mubr.bf16.gmra.mrb[0].mxu0 %v242
    %v1525 = vpop.f32.mrb[0].mxu0
    %v1526 = vadd.f32 0.0, %v1525
    %v1527 = vpop.f32.mrb[0].mxu0
    %v1528 = vpop.f32.mrb[0].mxu0
    %v1529 = vadd.f32 0.0, %v1528
    %v1530 = vpop.f32.mrb[0].mxu0
    %1531 = vmatprep.mubr.bf16.mxu0 %v246
    %1532 = vmatmul.mubr.bf16.gmra.mrb[0].mxu0 %v245
    %v1533 = vpop.f32.mrb[0].mxu0
    %v1534 = vadd.f32 0.0, %v1533
    %v1535 = vpop.f32.mrb[0].mxu0
    %v1536 = vpop.f32.mrb[0].mxu0
    %v1537 = vadd.f32 0.0, %v1536
    %v1538 = vpop.f32.mrb[0].mxu0
    %1539 = vmatprep.mubr.bf16.mxu0 %v249
    %1540 = vmatmul.mubr.bf16.gmra.mrb[0].mxu0 %v248
    %v1541 = vpop.f32.mrb[0].mxu0
    %v1542 = vadd.f32 0.0, %v1541
    %v1543 = vpop.f32.mrb[0].mxu0
    %v1544 = vpop.f32.mrb[0].mxu0
    %v1545 = vadd.f32 0.0, %v1544
    %v1546 = vpop.f32.mrb[0].mxu0
    %1547 = vmatprep.mubr.bf16.mxu0 %v252
    %1548 = vmatmul.mubr.bf16.gmra.mrb[0].mxu0 %v251
    %v1549 = vpop.f32.mrb[0].mxu0
    %v1550 = vadd.f32 0.0, %v1549
    %v1551 = vpop.f32.mrb[0].mxu0
    %v1552 = vpop.f32.mrb[0].mxu0
    %v1553 = vadd.f32 0.0, %v1552
    %v1554 = vpop.f32.mrb[0].mxu0
    %1555 = vmatprep.mubr.bf16.mxu0 %v255
    %1556 = vmatmul.mubr.bf16.gmra.mrb[0].mxu0 %v254
    %v1557 = vpop.f32.mrb[0].mxu0
    %v1558 = vadd.f32 0.0, %v1557
    %v1559 = vpop.f32.mrb[0].mxu0
    %v1560 = vpop.f32.mrb[0].mxu0
    %v1561 = vadd.f32 0.0, %v1560
    %v1562 = vpop.f32.mrb[0].mxu0
    %1563 = vmatprep.mubr.bf16.mxu0 %v258
    %1564 = vmatmul.mubr.bf16.gmra.mrb[0].mxu0 %v257
    %v1565 = vpop.f32.mrb[0].mxu0
    %v1566 = vadd.f32 0.0, %v1565
    %v1567 = vpop.f32.mrb[0].mxu0
    %v1568 = vpop.f32.mrb[0].mxu0
    %v1569 = vadd.f32 0.0, %v1568
    %v1570 = vpop.f32.mrb[0].mxu0
    %1571 = vmatprep.mubr.bf16.mxu0 %v261
    %1572 = vmatmul.mubr.bf16.gmra.mrb[0].mxu0 %v260
    %v1573 = vpop.f32.mrb[0].mxu0
    %v1574 = vadd.f32 0.0, %v1573
    %v1575 = vpop.f32.mrb[0].mxu0
    %v1576 = vpop.f32.mrb[0].mxu0
    %v1577 = vadd.f32 0.0, %v1576
    %v1578 = vpop.f32.mrb[0].mxu0
    %1579 = vmatprep.mubr.bf16.mxu0 %v264
    %1580 = vmatmul.mubr.bf16.gmra.mrb[0].mxu0 %v263
    %v1581 = vpop.f32.mrb[0].mxu0
    %v1582 = vadd.f32 0.0, %v1581
    %v1583 = vpop.f32.mrb[0].mxu0
    %v1584 = vpop.f32.mrb[0].mxu0
    %v1585 = vadd.f32 0.0, %v1584
    %v1586 = vpop.f32.mrb[0].mxu0
    %1587 = vmatprep.mubr.bf16.mxu0 %v267
    %1588 = vmatmul.mubr.bf16.gmra.mrb[0].mxu0 %v266
    %v1589 = vpop.f32.mrb[0].mxu0
    %v1590 = vadd.f32 0.0, %v1589
    %v1591 = vpop.f32.mrb[0].mxu0
    %v1592 = vpop.f32.mrb[0].mxu0
    %v1593 = vadd.f32 0.0, %v1592
    %v1594 = vpop.f32.mrb[0].mxu0
    %1595 = vmatprep.mubr.bf16.mxu0 %v270
    %1596 = vmatmul.mubr.bf16.gmra.mrb[0].mxu0 %v269
    %v1597 = vpop.f32.mrb[0].mxu0
    %v1598 = vadd.f32 0.0, %v1597
    %v1599 = vpop.f32.mrb[0].mxu0
    %v1600 = vpop.f32.mrb[0].mxu0
    %v1601 = vadd.f32 0.0, %v1600
    %v1602 = vpop.f32.mrb[0].mxu0
    %1603 = vmatprep.mubr.bf16.mxu0 %v273
    %1604 = vmatmul.mubr.bf16.gmra.mrb[0].mxu0 %v272
    %v1605 = vpop.f32.mrb[0].mxu0
    %v1606 = vadd.f32 0.0, %v1605
    %v1607 = vpop.f32.mrb[0].mxu0
    %v1608 = vpop.f32.mrb[0].mxu0
    %v1609 = vadd.f32 0.0, %v1608
    %v1610 = vpop.f32.mrb[0].mxu0
    %1611 = vmatprep.mubr.bf16.mxu0 %v276
    %1612 = vmatmul.mubr.bf16.gmra.mrb[0].mxu0 %v275
    %v1613 = vpop.f32.mrb[0].mxu0
    %v1614 = vadd.f32 0.0, %v1613
    %v1615 = vpop.f32.mrb[0].mxu0
    %v1616 = vpop.f32.mrb[0].mxu0
    %v1617 = vadd.f32 0.0, %v1616
    %v1618 = vpop.f32.mrb[0].mxu0
    %1619 = vmatprep.mubr.bf16.mxu0 %v279
    %1620 = vmatmul.mubr.bf16.gmra.mrb[0].mxu0 %v278
    %v1621 = vpop.f32.mrb[0].mxu0
    %v1622 = vadd.f32 0.0, %v1621
    %v1623 = vpop.f32.mrb[0].mxu0
    %v1624 = vpop.f32.mrb[0].mxu0
    %v1625 = vadd.f32 0.0, %v1624
    %v1626 = vpop.f32.mrb[0].mxu0
    %1627 = vmatprep.mubr.bf16.mxu0 %v282
    %1628 = vmatmul.mubr.bf16.gmra.mrb[0].mxu0 %v281
    %v1629 = vpop.f32.mrb[0].mxu0
    %v1630 = vadd.f32 0.0, %v1629
    %v1631 = vpop.f32.mrb[0].mxu0
    %v1632 = vpop.f32.mrb[0].mxu0
    %v1633 = vadd.f32 0.0, %v1632
    %v1634 = vpop.f32.mrb[0].mxu0
    %1635 = vdwg.mxu0
    %1636 = vmatprep.subr.bf16.mxu0 0
    %1637 = vmatpush1.bf16.msra.mxu0 %v1372
    %1638 = vmatprep.subr.bf16.mxu0 0
    %1639 = vmatpush1.bf16.msra.mxu0 %v1374
    %1640 = vmatprep.subr.bf16.mxu0 0
    %1641 = vmatpush1.bf16.msra.mxu0 %v1376
    %1642 = vmatprep.subr.bf16.mxu0 0
    %1643 = vmatpush1.bf16.msra.mxu0 %v1378
    %1644 = vmatprep.subr.bf16.mxu0 0
    %1645 = vmatpush1.bf16.msra.mxu0 %v1380
    %1646 = vmatprep.subr.bf16.mxu0 0
    %1647 = vmatpush1.bf16.msra.mxu0 %v1382
    %1648 = vmatprep.subr.bf16.mxu0 0
    %1649 = vmatpush1.bf16.msra.mxu0 %v1384
    %1650 = vmatprep.subr.bf16.mxu0 0
    %1651 = vmatpush1.bf16.msra.mxu0 %v1386
    %1652 = vmatprep.subr.bf16.mxu0 0
    %1653 = vmatpush1.bf16.msra.mxu0 0
    %1654 = vmatprep.subr.bf16.mxu0 0
    %1655 = vmatpush1.bf16.msra.mxu0 0
    %1656 = vmatprep.subr.bf16.mxu0 0
    %1657 = vmatpush1.bf16.msra.mxu0 0
    %1658 = vmatprep.subr.bf16.mxu0 0
    %1659 = vmatpush1.bf16.msra.mxu0 0
    %1660 = vmatprep.subr.bf16.mxu0 0
    %1661 = vmatpush1.bf16.msra.mxu0 0
    %1662 = vmatprep.subr.bf16.mxu0 0
    %1663 = vmatpush1.bf16.msra.mxu0 0
    %1664 = vmatprep.subr.bf16.mxu0 0
    %1665 = vmatpush1.bf16.msra.mxu0 0
    %1666 = vmatprep.subr.bf16.mxu0 0
    %1667 = vmatpush1.bf16.msra.mxu0 0
    %1668 = vmatprep.mubr.bf16.mxu0 0
    %1669 = vmatmul.mubr.bf16.gmra.mrb[0].mxu0 %v214
    %v1670 = vpop.f32.mrb[0].mxu0
    %v1671 = vadd.f32 %v1446, %v1670
    %v1672 = vpop.f32.mrb[0].mxu0
    %v1673 = vpop.f32.mrb[0].mxu0
    %v1674 = vadd.f32 %v1449, %v1673
    %v1675 = vpop.f32.mrb[0].mxu0
    %1676 = vmatprep.mubr.bf16.mxu0 0
    %1677 = vmatmul.mubr.bf16.gmra.mrb[0].mxu0 %v217
    %v1678 = vpop.f32.mrb[0].mxu0
    %v1679 = vadd.f32 %v1454, %v1678
    %v1680 = vpop.f32.mrb[0].mxu0
    %v1681 = vpop.f32.mrb[0].mxu0
    %v1682 = vadd.f32 %v1457, %v1681
    %v1683 = vpop.f32.mrb[0].mxu0
    %1684 = vmatprep.mubr.bf16.mxu0 0
    %1685 = vmatmul.mubr.bf16.gmra.mrb[0].mxu0 %v220
    %v1686 = vpop.f32.mrb[0].mxu0
    %v1687 = vadd.f32 %v1462, %v1686
    %v1688 = vpop.f32.mrb[0].mxu0
    %v1689 = vpop.f32.mrb[0].mxu0
    %v1690 = vadd.f32 %v1465, %v1689
    %v1691 = vpop.f32.mrb[0].mxu0
    %1692 = vmatprep.mubr.bf16.mxu0 0
    %1693 = vmatmul.mubr.bf16.gmra.mrb[0].mxu0 %v223
    %v1694 = vpop.f32.mrb[0].mxu0
    %v1695 = vadd.f32 %v1470, %v1694
    %v1696 = vpop.f32.mrb[0].mxu0
    %v1697 = vpop.f32.mrb[0].mxu0
    %v1698 = vadd.f32 %v1473, %v1697
    %v1699 = vpop.f32.mrb[0].mxu0
    %1700 = vmatprep.mubr.bf16.mxu0 0
    %1701 = vmatmul.mubr.bf16.gmra.mrb[0].mxu0 %v226
    %v1702 = vpop.f32.mrb[0].mxu0
    %v1703 = vadd.f32 %v1478, %v1702
    %v1704 = vpop.f32.mrb[0].mxu0
    %v1705 = vpop.f32.mrb[0].mxu0
    %v1706 = vadd.f32 %v1481, %v1705
    %v1707 = vpop.f32.mrb[0].mxu0
    %1708 = vmatprep.mubr.bf16.mxu0 0
    %1709 = vmatmul.mubr.bf16.gmra.mrb[0].mxu0 %v229
    %v1710 = vpop.f32.mrb[0].mxu0
    %v1711 = vadd.f32 %v1486, %v1710
    %v1712 = vpop.f32.mrb[0].mxu0
    %v1713 = vpop.f32.mrb[0].mxu0
    %v1714 = vadd.f32 %v1489, %v1713
    %v1715 = vpop.f32.mrb[0].mxu0
    %1716 = vmatprep.mubr.bf16.mxu0 0
    %1717 = vmatmul.mubr.bf16.gmra.mrb[0].mxu0 %v232
    %v1718 = vpop.f32.mrb[0].mxu0
    %v1719 = vadd.f32 %v1494, %v1718
    %v1720 = vpop.f32.mrb[0].mxu0
    %v1721 = vpop.f32.mrb[0].mxu0
    %v1722 = vadd.f32 %v1497, %v1721
    %v1723 = vpop.f32.mrb[0].mxu0
    %1724 = vmatprep.mubr.bf16.mxu0 0
    %1725 = vmatmul.mubr.bf16.gmra.mrb[0].mxu0 %v235
    %v1726 = vpop.f32.mrb[0].mxu0
    %v1727 = vadd.f32 %v1502, %v1726
    %v1728 = vpop.f32.mrb[0].mxu0
    %v1729 = vpop.f32.mrb[0].mxu0
    %v1730 = vadd.f32 %v1505, %v1729
    %v1731 = vpop.f32.mrb[0].mxu0
    %1732 = vmatprep.mubr.bf16.mxu0 0
    %1733 = vmatmul.mubr.bf16.gmra.mrb[0].mxu0 %v238
    %v1734 = vpop.f32.mrb[0].mxu0
    %v1735 = vadd.f32 %v1510, %v1734
    %v1736 = vpop.f32.mrb[0].mxu0
    %v1737 = vpop.f32.mrb[0].mxu0
    %v1738 = vadd.f32 %v1513, %v1737
    %v1739 = vpop.f32.mrb[0].mxu0
    %1740 = vmatprep.mubr.bf16.mxu0 0
    %1741 = vmatmul.mubr.bf16.gmra.mrb[0].mxu0 %v241
    %v1742 = vpop.f32.mrb[0].mxu0
    %v1743 = vadd.f32 %v1518, %v1742
    %v1744 = vpop.f32.mrb[0].mxu0
    %v1745 = vpop.f32.mrb[0].mxu0
    %v1746 = vadd.f32 %v1521, %v1745
    %v1747 = vpop.f32.mrb[0].mxu0
    %1748 = vmatprep.mubr.bf16.mxu0 0
    %1749 = vmatmul.mubr.bf16.gmra.mrb[0].mxu0 %v244
    %v1750 = vpop.f32.mrb[0].mxu0
    %v1751 = vadd.f32 %v1526, %v1750
    %v1752 = vpop.f32.mrb[0].mxu0
    %v1753 = vpop.f32.mrb[0].mxu0
    %v1754 = vadd.f32 %v1529, %v1753
    %v1755 = vpop.f32.mrb[0].mxu0
    %1756 = vmatprep.mubr.bf16.mxu0 0
    %1757 = vmatmul.mubr.bf16.gmra.mrb[0].mxu0 %v247
    %v1758 = vpop.f32.mrb[0].mxu0
    %v1759 = vadd.f32 %v1534, %v1758
    %v1760 = vpop.f32.mrb[0].mxu0
    %v1761 = vpop.f32.mrb[0].mxu0
    %v1762 = vadd.f32 %v1537, %v1761
    %v1763 = vpop.f32.mrb[0].mxu0
    %1764 = vmatprep.mubr.bf16.mxu0 0
    %1765 = vmatmul.mubr.bf16.gmra.mrb[0].mxu0 %v250
    %v1766 = vpop.f32.mrb[0].mxu0
    %v1767 = vadd.f32 %v1542, %v1766
    %v1768 = vpop.f32.mrb[0].mxu0
    %v1769 = vpop.f32.mrb[0].mxu0
    %v1770 = vadd.f32 %v1545, %v1769
    %v1771 = vpop.f32.mrb[0].mxu0
    %1772 = vmatprep.mubr.bf16.mxu0 0
    %1773 = vmatmul.mubr.bf16.gmra.mrb[0].mxu0 %v253
    %v1774 = vpop.f32.mrb[0].mxu0
    %v1775 = vadd.f32 %v1550, %v1774
    %v1776 = vpop.f32.mrb[0].mxu0
    %v1777 = vpop.f32.mrb[0].mxu0
    %v1778 = vadd.f32 %v1553, %v1777
    %v1779 = vpop.f32.mrb[0].mxu0
    %1780 = vmatprep.mubr.bf16.mxu0 0
    %1781 = vmatmul.mubr.bf16.gmra.mrb[0].mxu0 %v256
    %v1782 = vpop.f32.mrb[0].mxu0
    %v1783 = vadd.f32 %v1558, %v1782
    %v1784 = vpop.f32.mrb[0].mxu0
    %v1785 = vpop.f32.mrb[0].mxu0
    %v1786 = vadd.f32 %v1561, %v1785
    %v1787 = vpop.f32.mrb[0].mxu0
    %1788 = vmatprep.mubr.bf16.mxu0 0
    %1789 = vmatmul.mubr.bf16.gmra.mrb[0].mxu0 %v259
    %v1790 = vpop.f32.mrb[0].mxu0
    %v1791 = vadd.f32 %v1566, %v1790
    %v1792 = vpop.f32.mrb[0].mxu0
    %v1793 = vpop.f32.mrb[0].mxu0
    %v1794 = vadd.f32 %v1569, %v1793
    %v1795 = vpop.f32.mrb[0].mxu0
    %1796 = vmatprep.mubr.bf16.mxu0 0
    %1797 = vmatmul.mubr.bf16.gmra.mrb[0].mxu0 %v262
    %v1798 = vpop.f32.mrb[0].mxu0
    %v1799 = vadd.f32 %v1574, %v1798
    %v1800 = vpop.f32.mrb[0].mxu0
    %v1801 = vpop.f32.mrb[0].mxu0
    %v1802 = vadd.f32 %v1577, %v1801
    %v1803 = vpop.f32.mrb[0].mxu0
    %1804 = vmatprep.mubr.bf16.mxu0 0
    %1805 = vmatmul.mubr.bf16.gmra.mrb[0].mxu0 %v265
    %v1806 = vpop.f32.mrb[0].mxu0
    %v1807 = vadd.f32 %v1582, %v1806
    %v1808 = vpop.f32.mrb[0].mxu0
    %v1809 = vpop.f32.mrb[0].mxu0
    %v1810 = vadd.f32 %v1585, %v1809
    %v1811 = vpop.f32.mrb[0].mxu0
    %1812 = vmatprep.mubr.bf16.mxu0 0
    %1813 = vmatmul.mubr.bf16.gmra.mrb[0].mxu0 %v268
    %v1814 = vpop.f32.mrb[0].mxu0
    %v1815 = vadd.f32 %v1590, %v1814
    %v1816 = vpop.f32.mrb[0].mxu0
    %v1817 = vpop.f32.mrb[0].mxu0
    %v1818 = vadd.f32 %v1593, %v1817
    %v1819 = vpop.f32.mrb[0].mxu0
    %1820 = vmatprep.mubr.bf16.mxu0 0
    %1821 = vmatmul.mubr.bf16.gmra.mrb[0].mxu0 %v271
    %v1822 = vpop.f32.mrb[0].mxu0
    %v1823 = vadd.f32 %v1598, %v1822
    %v1824 = vpop.f32.mrb[0].mxu0
    %v1825 = vpop.f32.mrb[0].mxu0
    %v1826 = vadd.f32 %v1601, %v1825
    %v1827 = vpop.f32.mrb[0].mxu0
    %1828 = vmatprep.mubr.bf16.mxu0 0
    %1829 = vmatmul.mubr.bf16.gmra.mrb[0].mxu0 %v274
    %v1830 = vpop.f32.mrb[0].mxu0
    %v1831 = vadd.f32 %v1606, %v1830
    %v1832 = vpop.f32.mrb[0].mxu0
    %v1833 = vpop.f32.mrb[0].mxu0
    %v1834 = vadd.f32 %v1609, %v1833
    %v1835 = vpop.f32.mrb[0].mxu0
    %1836 = vmatprep.mubr.bf16.mxu0 0
    %1837 = vmatmul.mubr.bf16.gmra.mrb[0].mxu0 %v277
    %v1838 = vpop.f32.mrb[0].mxu0
    %v1839 = vadd.f32 %v1614, %v1838
    %v1840 = vpop.f32.mrb[0].mxu0
    %v1841 = vpop.f32.mrb[0].mxu0
    %v1842 = vadd.f32 %v1617, %v1841
    %v1843 = vpop.f32.mrb[0].mxu0
    %1844 = vmatprep.mubr.bf16.mxu0 0
    %1845 = vmatmul.mubr.bf16.gmra.mrb[0].mxu0 %v280
    %v1846 = vpop.f32.mrb[0].mxu0
    %v1847 = vadd.f32 %v1622, %v1846
    %v1848 = vpop.f32.mrb[0].mxu0
    %v1849 = vpop.f32.mrb[0].mxu0
    %v1850 = vadd.f32 %v1625, %v1849
    %v1851 = vpop.f32.mrb[0].mxu0
    %1852 = vmatprep.mubr.bf16.mxu0 0
    %1853 = vmatmul.mubr.bf16.gmra.mrb[0].mxu0 %v283
    %v1854 = vpop.f32.mrb[0].mxu0
    %v1855 = vadd.f32 %v1630, %v1854
    %v1856 = vpop.f32.mrb[0].mxu0
    %v1857 = vpop.f32.mrb[0].mxu0
    %v1858 = vadd.f32 %v1633, %v1857
    %v1859 = vpop.f32.mrb[0].mxu0
    %1860 = vdwg.mxu0
    %1909 = vrot.lane.b32.xlu0 %v1671, 32
    %v1910 = vpop.permute.xlu0 %1909
    %1911 = vrot.lane.b32.xlu0 %v1674, 32
    %v1912 = vpop.permute.xlu0 %1911
    %1913 = vrot.lane.b32.xlu0 %v1679, 32
    %v1914 = vpop.permute.xlu0 %1913
    %1915 = vrot.lane.b32.xlu0 %v1682, 32
    %v1916 = vpop.permute.xlu0 %1915
    %1917 = vrot.lane.b32.xlu0 %v1687, 32
    %v1918 = vpop.permute.xlu0 %1917
    %1919 = vrot.lane.b32.xlu0 %v1690, 32
    %v1920 = vpop.permute.xlu0 %1919
    %1921 = vrot.lane.b32.xlu0 %v1695, 32
    %v1922 = vpop.permute.xlu0 %1921
    %1923 = vrot.lane.b32.xlu0 %v1698, 32
    %v1924 = vpop.permute.xlu0 %1923
    %1925 = vrot.lane.b32.xlu0 %v1703, 32
    %v1926 = vpop.permute.xlu0 %1925
    %1927 = vrot.lane.b32.xlu0 %v1706, 32
    %v1928 = vpop.permute.xlu0 %1927
    %1929 = vrot.lane.b32.xlu0 %v1711, 32
    %v1930 = vpop.permute.xlu0 %1929
    %1931 = vrot.lane.b32.xlu0 %v1714, 32
    %v1932 = vpop.permute.xlu0 %1931
    %1933 = vrot.lane.b32.xlu0 %v1719, 32
    %v1934 = vpop.permute.xlu0 %1933
    %1935 = vrot.lane.b32.xlu0 %v1722, 32
    %v1936 = vpop.permute.xlu0 %1935
    %1937 = vrot.lane.b32.xlu0 %v1727, 32
    %v1938 = vpop.permute.xlu0 %1937
    %1939 = vrot.lane.b32.xlu0 %v1730, 32
    %v1940 = vpop.permute.xlu0 %1939
    %1941 = vrot.lane.b32.xlu0 %v1735, 32
    %v1942 = vpop.permute.xlu0 %1941
    %1943 = vrot.lane.b32.xlu0 %v1738, 32
    %v1944 = vpop.permute.xlu0 %1943
    %1945 = vrot.lane.b32.xlu0 %v1743, 32
    %v1946 = vpop.permute.xlu0 %1945
    %1947 = vrot.lane.b32.xlu0 %v1746, 32
    %v1948 = vpop.permute.xlu0 %1947
    %1949 = vrot.lane.b32.xlu0 %v1751, 32
    %v1950 = vpop.permute.xlu0 %1949
    %1951 = vrot.lane.b32.xlu0 %v1754, 32
    %v1952 = vpop.permute.xlu0 %1951
    %1953 = vrot.lane.b32.xlu0 %v1759, 32
    %v1954 = vpop.permute.xlu0 %1953
    %1955 = vrot.lane.b32.xlu0 %v1762, 32
    %v1956 = vpop.permute.xlu0 %1955
    %1957 = vrot.lane.b32.xlu0 %v1767, 32
    %v1958 = vpop.permute.xlu0 %1957
    %1959 = vrot.lane.b32.xlu0 %v1770, 32
    %v1960 = vpop.permute.xlu0 %1959
    %1961 = vrot.lane.b32.xlu0 %v1775, 32
    %v1962 = vpop.permute.xlu0 %1961
    %1963 = vrot.lane.b32.xlu0 %v1778, 32
    %v1964 = vpop.permute.xlu0 %1963
    %1965 = vrot.lane.b32.xlu0 %v1783, 32
    %v1966 = vpop.permute.xlu0 %1965
    %1967 = vrot.lane.b32.xlu0 %v1786, 32
    %v1968 = vpop.permute.xlu0 %1967
    %1969 = vrot.lane.b32.xlu0 %v1791, 32
    %v1970 = vpop.permute.xlu0 %1969
    %1971 = vrot.lane.b32.xlu0 %v1794, 32
    %v1972 = vpop.permute.xlu0 %1971
    %1973 = vrot.lane.b32.xlu0 %v1799, 32
    %v1974 = vpop.permute.xlu0 %1973
    %1975 = vrot.lane.b32.xlu0 %v1802, 32
    %v1976 = vpop.permute.xlu0 %1975
    %1977 = vrot.lane.b32.xlu0 %v1807, 32
    %v1978 = vpop.permute.xlu0 %1977
    %1979 = vrot.lane.b32.xlu0 %v1810, 32
    %v1980 = vpop.permute.xlu0 %1979
    %1981 = vrot.lane.b32.xlu0 %v1815, 32
    %v1982 = vpop.permute.xlu0 %1981
    %1983 = vrot.lane.b32.xlu0 %v1818, 32
    %v1984 = vpop.permute.xlu0 %1983
    %1985 = vrot.lane.b32.xlu0 %v1823, 32
    %v1986 = vpop.permute.xlu0 %1985
    %1987 = vrot.lane.b32.xlu0 %v1826, 32
    %v1988 = vpop.permute.xlu0 %1987
    %1989 = vrot.lane.b32.xlu0 %v1831, 32
    %v1990 = vpop.permute.xlu0 %1989
    %1991 = vrot.lane.b32.xlu0 %v1834, 32
    %v1992 = vpop.permute.xlu0 %1991
    %1993 = vrot.lane.b32.xlu0 %v1839, 32
    %v1994 = vpop.permute.xlu0 %1993
    %1995 = vrot.lane.b32.xlu0 %v1842, 32
    %v1996 = vpop.permute.xlu0 %1995
    %1997 = vrot.lane.b32.xlu0 %v1847, 32
    %v1998 = vpop.permute.xlu0 %1997
    %1999 = vrot.lane.b32.xlu0 %v1850, 32
    %v2000 = vpop.permute.xlu0 %1999
    %2001 = vrot.lane.b32.xlu0 %v1855, 32
    %v2002 = vpop.permute.xlu0 %2001
    %2003 = vrot.lane.b32.xlu0 %v1858, 32
    %v2004 = vpop.permute.xlu0 %2003
    %v2053 = vsel %vm343, %v1125, %v1910
    %v2054 = vsel %vm343, %v1128, %v1912
    %v2055 = vsel %vm343, %v1133, %v1914
    %v2056 = vsel %vm343, %v1136, %v1916
    %v2057 = vsel %vm343, %v1141, %v1918
    %v2058 = vsel %vm343, %v1144, %v1920
    %v2059 = vsel %vm343, %v1149, %v1922
    %v2060 = vsel %vm343, %v1152, %v1924
    %v2061 = vsel %vm343, %v1157, %v1926
    %v2062 = vsel %vm343, %v1160, %v1928
    %v2063 = vsel %vm343, %v1165, %v1930
    %v2064 = vsel %vm343, %v1168, %v1932
    %v2065 = vsel %vm343, %v1173, %v1934
    %v2066 = vsel %vm343, %v1176, %v1936
    %v2067 = vsel %vm343, %v1181, %v1938
    %v2068 = vsel %vm343, %v1184, %v1940
    %v2069 = vsel %vm343, %v1189, %v1942
    %v2070 = vsel %vm343, %v1192, %v1944
    %v2071 = vsel %vm343, %v1197, %v1946
    %v2072 = vsel %vm343, %v1200, %v1948
    %v2073 = vsel %vm343, %v1205, %v1950
    %v2074 = vsel %vm343, %v1208, %v1952
    %v2075 = vsel %vm343, %v1213, %v1954
    %v2076 = vsel %vm343, %v1216, %v1956
    %v2077 = vsel %vm343, %v1221, %v1958
    %v2078 = vsel %vm343, %v1224, %v1960
    %v2079 = vsel %vm343, %v1229, %v1962
    %v2080 = vsel %vm343, %v1232, %v1964
    %v2081 = vsel %vm343, %v1237, %v1966
    %v2082 = vsel %vm343, %v1240, %v1968
    %v2083 = vsel %vm343, %v1245, %v1970
    %v2084 = vsel %vm343, %v1248, %v1972
    %v2085 = vsel %vm343, %v1253, %v1974
    %v2086 = vsel %vm343, %v1256, %v1976
    %v2087 = vsel %vm343, %v1261, %v1978
    %v2088 = vsel %vm343, %v1264, %v1980
    %v2089 = vsel %vm343, %v1269, %v1982
    %v2090 = vsel %vm343, %v1272, %v1984
    %v2091 = vsel %vm343, %v1277, %v1986
    %v2092 = vsel %vm343, %v1280, %v1988
    %v2093 = vsel %vm343, %v1285, %v1990
    %v2094 = vsel %vm343, %v1288, %v1992
    %v2095 = vsel %vm343, %v1293, %v1994
    %v2096 = vsel %vm343, %v1296, %v1996
    %v2097 = vsel %vm343, %v1301, %v1998
    %v2098 = vsel %vm343, %v1304, %v2000
    %v2099 = vsel %vm343, %v1309, %v2002
    %v2100 = vsel %vm343, %v1312, %v2004
    %v2101 = vld [vmem:[#allocation2] sm:$0xff]
    %v2102 = vld [vmem:[#allocation2 + $0x8] sm:$0xff]
    %v2103 = vld [vmem:[#allocation2 + $0x10] sm:$0xff]
    %v2104 = vld [vmem:[#allocation2 + $0x18] sm:$0xff]
    %v2105 = vld [vmem:[#allocation2 + $0x20] sm:$0xff]
    %v2106 = vld [vmem:[#allocation2 + $0x28] sm:$0xff]
    %v2107 = vld [vmem:[#allocation2 + $0x30] sm:$0xff]
    %v2108 = vld [vmem:[#allocation2 + $0x38] sm:$0xff]
    %v2109 = vld [vmem:[%s6] sm:$0x1]
    %v2111 = vlaneseq
    %v2112 = vshrl.u32 %v2111, 7
    %v2113 = vsub.s32 0, %v2112
    %v2114 = vrot.slane %v2109, %v2113
    %vm2116 = vcmask 523264
    %v2118 = vsel %vm2116, %v2053, 0
    %v2121 = vsel %vm2116, %v2054, 0
    %v2124 = vsel %vm2116, %v2055, 0
    %v2127 = vsel %vm2116, %v2056, 0
    %v2130 = vsel %vm2116, %v2057, 0
    %v2133 = vsel %vm2116, %v2058, 0
    %v2136 = vsel %vm2116, %v2059, 0
    %v2139 = vsel %vm2116, %v2060, 0
    %v2142 = vsel %vm2116, %v2061, 0
    %v2145 = vsel %vm2116, %v2062, 0
    %v2148 = vsel %vm2116, %v2063, 0
    %v2151 = vsel %vm2116, %v2064, 0
    %v2154 = vsel %vm2116, %v2065, 0
    %v2157 = vsel %vm2116, %v2066, 0
    %v2160 = vsel %vm2116, %v2067, 0
    %v2163 = vsel %vm2116, %v2068, 0
    %v2166 = vsel %vm2116, %v2069, 0
    %v2169 = vsel %vm2116, %v2070, 0
    %v2172 = vsel %vm2116, %v2071, 0
    %v2175 = vsel %vm2116, %v2072, 0
    %v2178 = vsel %vm2116, %v2073, 0
    %v2181 = vsel %vm2116, %v2074, 0
    %v2184 = vsel %vm2116, %v2075, 0
    %v2187 = vsel %vm2116, %v2076, 0
    %v2190 = vsel %vm2116, %v2077, 0
    %v2193 = vsel %vm2116, %v2078, 0
    %v2196 = vsel %vm2116, %v2079, 0
    %v2199 = vsel %vm2116, %v2080, 0
    %v2202 = vsel %vm2116, %v2081, 0
    %v2205 = vsel %vm2116, %v2082, 0
    %v2208 = vsel %vm2116, %v2083, 0
    %v2211 = vsel %vm2116, %v2084, 0
    %v2214 = vsel %vm2116, %v2085, 0
    %v2217 = vsel %vm2116, %v2086, 0
    %v2220 = vsel %vm2116, %v2087, 0
    %v2223 = vsel %vm2116, %v2088, 0
    %v2226 = vsel %vm2116, %v2089, 0
    %v2229 = vsel %vm2116, %v2090, 0
    %v2232 = vsel %vm2116, %v2091, 0
    %v2235 = vsel %vm2116, %v2092, 0
    %v2238 = vsel %vm2116, %v2093, 0
    %v2241 = vsel %vm2116, %v2094, 0
    %v2244 = vsel %vm2116, %v2095, 0
    %v2247 = vsel %vm2116, %v2096, 0
    %v2250 = vsel %vm2116, %v2097, 0
    %v2253 = vsel %vm2116, %v2098, 0
    %v2256 = vsel %vm2116, %v2099, 0
    %v2259 = vsel %vm2116, %v2100, 0
    %2261 = vmatprep.subr.mxu0 0.0
    %2262 = vmatpush1.msra.mxu0 %v2101
    %2263 = vmatprep.subr.mxu0 0.0
    %2264 = vmatpush1.msra.mxu0 %v2102
    %2265 = vmatprep.subr.mxu0 0.0
    %2266 = vmatpush1.msra.mxu0 %v2103
    %2267 = vmatprep.subr.mxu0 0.0
    %2268 = vmatpush1.msra.mxu0 %v2104
    %2269 = vmatprep.subr.mxu0 0.0
    %2270 = vmatpush1.msra.mxu0 %v2105
    %2271 = vmatprep.subr.mxu0 0.0
    %2272 = vmatpush1.msra.mxu0 %v2106
    %2273 = vmatprep.subr.mxu0 0.0
    %2274 = vmatpush1.msra.mxu0 %v2107
    %2275 = vmatprep.subr.mxu0 0.0
    %2276 = vmatpush1.msra.mxu0 %v2108
    %2277 = vmatprep.subr.mxu0 0.0
    %2278 = vmatpush1.msra.mxu0 0.0
    %2279 = vmatprep.subr.mxu0 0.0
    %2280 = vmatpush1.msra.mxu0 0.0
    %2281 = vmatprep.subr.mxu0 0.0
    %2282 = vmatpush1.msra.mxu0 0.0
    %2283 = vmatprep.subr.mxu0 0.0
    %2284 = vmatpush1.msra.mxu0 0.0
    %2285 = vmatprep.subr.mxu0 0.0
    %2286 = vmatpush1.msra.mxu0 0.0
    %2287 = vmatprep.subr.mxu0 0.0
    %2288 = vmatpush1.msra.mxu0 0.0
    %2289 = vmatprep.subr.mxu0 0.0
    %2290 = vmatpush1.msra.mxu0 0.0
    %2291 = vmatprep.subr.mxu0 0.0
    %2292 = vmatpush1.msra.mxu0 0.0
    %2293 = vmatprep.subr.mxu0 0.0
    %2294 = vmatpush1.msra.mxu0 0.0
    %2295 = vmatprep.subr.mxu0 0.0
    %2296 = vmatpush1.msra.mxu0 0.0
    %2297 = vmatprep.subr.mxu0 0.0
    %2298 = vmatpush1.msra.mxu0 0.0
    %2299 = vmatprep.subr.mxu0 0.0
    %2300 = vmatpush1.msra.mxu0 0.0
    %2301 = vmatprep.subr.mxu0 0.0
    %2302 = vmatpush1.msra.mxu0 0.0
    %2303 = vmatprep.subr.mxu0 0.0
    %2304 = vmatpush1.msra.mxu0 0.0
    %2305 = vmatprep.subr.mxu0 0.0
    %2306 = vmatpush1.msra.mxu0 0.0
    %2307 = vmatprep.subr.mxu0 0.0
    %2308 = vmatpush1.msra.mxu0 0.0
    %2309 = vmatprep.subr.mxu0 0.0
    %2310 = vmatpush1.msra.mxu0 0.0
    %2311 = vmatprep.subr.mxu0 0.0
    %2312 = vmatpush1.msra.mxu0 0.0
    %2313 = vmatprep.subr.mxu0 0.0
    %2314 = vmatpush1.msra.mxu0 0.0
    %2315 = vmatprep.subr.mxu0 0.0
    %2316 = vmatpush1.msra.mxu0 0.0
    %2317 = vmatprep.subr.mxu0 0.0
    %2318 = vmatpush1.msra.mxu0 0.0
    %2319 = vmatprep.subr.mxu0 0.0
    %2320 = vmatpush1.msra.mxu0 0.0
    %2321 = vmatprep.subr.mxu0 0.0
    %2322 = vmatpush1.msra.mxu0 0.0
    %2323 = vmatprep.subr.mxu0 0.0
    %2324 = vmatpush1.msra.mxu0 0.0
    %2325 = vmatprep.mubr.f32.mxu0 0.0
    %2326 = vmatmul.mubr.f32.gmra.mrb[0].mxu0 %v2118
    %v2327 = vpop.f32.mrb[0].mxu0
    %v2328 = vadd.f32 %v2114, %v2327
    %v2329 = vpop.f32.mrb[0].mxu0
    %2330 = vmatprep.mubr.f32.mxu0 0.0
    %2331 = vmatmul.mubr.f32.gmra.mrb[0].mxu0 %v2121
    %v2332 = vpop.f32.mrb[0].mxu0
    %v2333 = vadd.f32 %v2114, %v2332
    %v2334 = vpop.f32.mrb[0].mxu0
    %2335 = vmatprep.mubr.f32.mxu0 0.0
    %2336 = vmatmul.mubr.f32.gmra.mrb[0].mxu0 %v2124
    %v2337 = vpop.f32.mrb[0].mxu0
    %v2338 = vadd.f32 %v2114, %v2337
    %v2339 = vpop.f32.mrb[0].mxu0
    %2340 = vmatprep.mubr.f32.mxu0 0.0
    %2341 = vmatmul.mubr.f32.gmra.mrb[0].mxu0 %v2127
    %v2342 = vpop.f32.mrb[0].mxu0
    %v2343 = vadd.f32 %v2114, %v2342
    %v2344 = vpop.f32.mrb[0].mxu0
    %2345 = vmatprep.mubr.f32.mxu0 0.0
    %2346 = vmatmul.mubr.f32.gmra.mrb[0].mxu0 %v2130
    %v2347 = vpop.f32.mrb[0].mxu0
    %v2348 = vadd.f32 %v2114, %v2347
    %v2349 = vpop.f32.mrb[0].mxu0
    %2350 = vmatprep.mubr.f32.mxu0 0.0
    %2351 = vmatmul.mubr.f32.gmra.mrb[0].mxu0 %v2133
    %v2352 = vpop.f32.mrb[0].mxu0
    %v2353 = vadd.f32 %v2114, %v2352
    %v2354 = vpop.f32.mrb[0].mxu0
    %2355 = vmatprep.mubr.f32.mxu0 0.0
    %2356 = vmatmul.mubr.f32.gmra.mrb[0].mxu0 %v2136
    %v2357 = vpop.f32.mrb[0].mxu0
    %v2358 = vadd.f32 %v2114, %v2357
    %v2359 = vpop.f32.mrb[0].mxu0
    %2360 = vmatprep.mubr.f32.mxu0 0.0
    %2361 = vmatmul.mubr.f32.gmra.mrb[0].mxu0 %v2139
    %v2362 = vpop.f32.mrb[0].mxu0
    %v2363 = vadd.f32 %v2114, %v2362
    %v2364 = vpop.f32.mrb[0].mxu0
    %2365 = vmatprep.mubr.f32.mxu0 0.0
    %2366 = vmatmul.mubr.f32.gmra.mrb[0].mxu0 %v2142
    %v2367 = vpop.f32.mrb[0].mxu0
    %v2368 = vadd.f32 %v2114, %v2367
    %v2369 = vpop.f32.mrb[0].mxu0
    %2370 = vmatprep.mubr.f32.mxu0 0.0
    %2371 = vmatmul.mubr.f32.gmra.mrb[0].mxu0 %v2145
    %v2372 = vpop.f32.mrb[0].mxu0
    %v2373 = vadd.f32 %v2114, %v2372
    %v2374 = vpop.f32.mrb[0].mxu0
    %2375 = vmatprep.mubr.f32.mxu0 0.0
    %2376 = vmatmul.mubr.f32.gmra.mrb[0].mxu0 %v2148
    %v2377 = vpop.f32.mrb[0].mxu0
    %v2378 = vadd.f32 %v2114, %v2377
    %v2379 = vpop.f32.mrb[0].mxu0
    %2380 = vmatprep.mubr.f32.mxu0 0.0
    %2381 = vmatmul.mubr.f32.gmra.mrb[0].mxu0 %v2151
    %v2382 = vpop.f32.mrb[0].mxu0
    %v2383 = vadd.f32 %v2114, %v2382
    %v2384 = vpop.f32.mrb[0].mxu0
    %2385 = vmatprep.mubr.f32.mxu0 0.0
    %2386 = vmatmul.mubr.f32.gmra.mrb[0].mxu0 %v2154
    %v2387 = vpop.f32.mrb[0].mxu0
    %v2388 = vadd.f32 %v2114, %v2387
    %v2389 = vpop.f32.mrb[0].mxu0
    %2390 = vmatprep.mubr.f32.mxu0 0.0
    %2391 = vmatmul.mubr.f32.gmra.mrb[0].mxu0 %v2157
    %v2392 = vpop.f32.mrb[0].mxu0
    %v2393 = vadd.f32 %v2114, %v2392
    %v2394 = vpop.f32.mrb[0].mxu0
    %2395 = vmatprep.mubr.f32.mxu0 0.0
    %2396 = vmatmul.mubr.f32.gmra.mrb[0].mxu0 %v2160
    %v2397 = vpop.f32.mrb[0].mxu0
    %v2398 = vadd.f32 %v2114, %v2397
    %v2399 = vpop.f32.mrb[0].mxu0
    %2400 = vmatprep.mubr.f32.mxu0 0.0
    %2401 = vmatmul.mubr.f32.gmra.mrb[0].mxu0 %v2163
    %v2402 = vpop.f32.mrb[0].mxu0
    %v2403 = vadd.f32 %v2114, %v2402
    %v2404 = vpop.f32.mrb[0].mxu0
    %2405 = vmatprep.mubr.f32.mxu0 0.0
    %2406 = vmatmul.mubr.f32.gmra.mrb[0].mxu0 %v2166
    %v2407 = vpop.f32.mrb[0].mxu0
    %v2408 = vadd.f32 %v2114, %v2407
    %v2409 = vpop.f32.mrb[0].mxu0
    %2410 = vmatprep.mubr.f32.mxu0 0.0
    %2411 = vmatmul.mubr.f32.gmra.mrb[0].mxu0 %v2169
    %v2412 = vpop.f32.mrb[0].mxu0
    %v2413 = vadd.f32 %v2114, %v2412
    %v2414 = vpop.f32.mrb[0].mxu0
    %2415 = vmatprep.mubr.f32.mxu0 0.0
    %2416 = vmatmul.mubr.f32.gmra.mrb[0].mxu0 %v2172
    %v2417 = vpop.f32.mrb[0].mxu0
    %v2418 = vadd.f32 %v2114, %v2417
    %v2419 = vpop.f32.mrb[0].mxu0
    %2420 = vmatprep.mubr.f32.mxu0 0.0
    %2421 = vmatmul.mubr.f32.gmra.mrb[0].mxu0 %v2175
    %v2422 = vpop.f32.mrb[0].mxu0
    %v2423 = vadd.f32 %v2114, %v2422
    %v2424 = vpop.f32.mrb[0].mxu0
    %2425 = vmatprep.mubr.f32.mxu0 0.0
    %2426 = vmatmul.mubr.f32.gmra.mrb[0].mxu0 %v2178
    %v2427 = vpop.f32.mrb[0].mxu0
    %v2428 = vadd.f32 %v2114, %v2427
    %v2429 = vpop.f32.mrb[0].mxu0
    %2430 = vmatprep.mubr.f32.mxu0 0.0
    %2431 = vmatmul.mubr.f32.gmra.mrb[0].mxu0 %v2181
    %v2432 = vpop.f32.mrb[0].mxu0
    %v2433 = vadd.f32 %v2114, %v2432
    %v2434 = vpop.f32.mrb[0].mxu0
    %2435 = vmatprep.mubr.f32.mxu0 0.0
    %2436 = vmatmul.mubr.f32.gmra.mrb[0].mxu0 %v2184
    %v2437 = vpop.f32.mrb[0].mxu0
    %v2438 = vadd.f32 %v2114, %v2437
    %v2439 = vpop.f32.mrb[0].mxu0
    %2440 = vmatprep.mubr.f32.mxu0 0.0
    %2441 = vmatmul.mubr.f32.gmra.mrb[0].mxu0 %v2187
    %v2442 = vpop.f32.mrb[0].mxu0
    %v2443 = vadd.f32 %v2114, %v2442
    %v2444 = vpop.f32.mrb[0].mxu0
    %2445 = vmatprep.mubr.f32.mxu0 0.0
    %2446 = vmatmul.mubr.f32.gmra.mrb[0].mxu0 %v2190
    %v2447 = vpop.f32.mrb[0].mxu0
    %v2448 = vadd.f32 %v2114, %v2447
    %v2449 = vpop.f32.mrb[0].mxu0
    %2450 = vmatprep.mubr.f32.mxu0 0.0
    %2451 = vmatmul.mubr.f32.gmra.mrb[0].mxu0 %v2193
    %v2452 = vpop.f32.mrb[0].mxu0
    %v2453 = vadd.f32 %v2114, %v2452
    %v2454 = vpop.f32.mrb[0].mxu0
    %2455 = vmatprep.mubr.f32.mxu0 0.0
    %2456 = vmatmul.mubr.f32.gmra.mrb[0].mxu0 %v2196
    %v2457 = vpop.f32.mrb[0].mxu0
    %v2458 = vadd.f32 %v2114, %v2457
    %v2459 = vpop.f32.mrb[0].mxu0
    %2460 = vmatprep.mubr.f32.mxu0 0.0
    %2461 = vmatmul.mubr.f32.gmra.mrb[0].mxu0 %v2199
    %v2462 = vpop.f32.mrb[0].mxu0
    %v2463 = vadd.f32 %v2114, %v2462
    %v2464 = vpop.f32.mrb[0].mxu0
    %2465 = vmatprep.mubr.f32.mxu0 0.0
    %2466 = vmatmul.mubr.f32.gmra.mrb[0].mxu0 %v2202
    %v2467 = vpop.f32.mrb[0].mxu0
    %v2468 = vadd.f32 %v2114, %v2467
    %v2469 = vpop.f32.mrb[0].mxu0
    %2470 = vmatprep.mubr.f32.mxu0 0.0
    %2471 = vmatmul.mubr.f32.gmra.mrb[0].mxu0 %v2205
    %v2472 = vpop.f32.mrb[0].mxu0
    %v2473 = vadd.f32 %v2114, %v2472
    %v2474 = vpop.f32.mrb[0].mxu0
    %2475 = vmatprep.mubr.f32.mxu0 0.0
    %2476 = vmatmul.mubr.f32.gmra.mrb[0].mxu0 %v2208
    %v2477 = vpop.f32.mrb[0].mxu0
    %v2478 = vadd.f32 %v2114, %v2477
    %v2479 = vpop.f32.mrb[0].mxu0
    %2480 = vmatprep.mubr.f32.mxu0 0.0
    %2481 = vmatmul.mubr.f32.gmra.mrb[0].mxu0 %v2211
    %v2482 = vpop.f32.mrb[0].mxu0
    %v2483 = vadd.f32 %v2114, %v2482
    %v2484 = vpop.f32.mrb[0].mxu0
    %2485 = vmatprep.mubr.f32.mxu0 0.0
    %2486 = vmatmul.mubr.f32.gmra.mrb[0].mxu0 %v2214
    %v2487 = vpop.f32.mrb[0].mxu0
    %v2488 = vadd.f32 %v2114, %v2487
    %v2489 = vpop.f32.mrb[0].mxu0
    %2490 = vmatprep.mubr.f32.mxu0 0.0
    %2491 = vmatmul.mubr.f32.gmra.mrb[0].mxu0 %v2217
    %v2492 = vpop.f32.mrb[0].mxu0
    %v2493 = vadd.f32 %v2114, %v2492
    %v2494 = vpop.f32.mrb[0].mxu0
    %2495 = vmatprep.mubr.f32.mxu0 0.0
    %2496 = vmatmul.mubr.f32.gmra.mrb[0].mxu0 %v2220
    %v2497 = vpop.f32.mrb[0].mxu0
    %v2498 = vadd.f32 %v2114, %v2497
    %v2499 = vpop.f32.mrb[0].mxu0
    %2500 = vmatprep.mubr.f32.mxu0 0.0
    %2501 = vmatmul.mubr.f32.gmra.mrb[0].mxu0 %v2223
    %v2502 = vpop.f32.mrb[0].mxu0
    %v2503 = vadd.f32 %v2114, %v2502
    %v2504 = vpop.f32.mrb[0].mxu0
    %2505 = vmatprep.mubr.f32.mxu0 0.0
    %2506 = vmatmul.mubr.f32.gmra.mrb[0].mxu0 %v2226
    %v2507 = vpop.f32.mrb[0].mxu0
    %v2508 = vadd.f32 %v2114, %v2507
    %v2509 = vpop.f32.mrb[0].mxu0
    %2510 = vmatprep.mubr.f32.mxu0 0.0
    %2511 = vmatmul.mubr.f32.gmra.mrb[0].mxu0 %v2229
    %v2512 = vpop.f32.mrb[0].mxu0
    %v2513 = vadd.f32 %v2114, %v2512
    %v2514 = vpop.f32.mrb[0].mxu0
    %2515 = vmatprep.mubr.f32.mxu0 0.0
    %2516 = vmatmul.mubr.f32.gmra.mrb[0].mxu0 %v2232
    %v2517 = vpop.f32.mrb[0].mxu0
    %v2518 = vadd.f32 %v2114, %v2517
    %v2519 = vpop.f32.mrb[0].mxu0
    %2520 = vmatprep.mubr.f32.mxu0 0.0
    %2521 = vmatmul.mubr.f32.gmra.mrb[0].mxu0 %v2235
    %v2522 = vpop.f32.mrb[0].mxu0
    %v2523 = vadd.f32 %v2114, %v2522
    %v2524 = vpop.f32.mrb[0].mxu0
    %2525 = vmatprep.mubr.f32.mxu0 0.0
    %2526 = vmatmul.mubr.f32.gmra.mrb[0].mxu0 %v2238
    %v2527 = vpop.f32.mrb[0].mxu0
    %v2528 = vadd.f32 %v2114, %v2527
    %v2529 = vpop.f32.mrb[0].mxu0
    %2530 = vmatprep.mubr.f32.mxu0 0.0
    %2531 = vmatmul.mubr.f32.gmra.mrb[0].mxu0 %v2241
    %v2532 = vpop.f32.mrb[0].mxu0
    %v2533 = vadd.f32 %v2114, %v2532
    %v2534 = vpop.f32.mrb[0].mxu0
    %2535 = vmatprep.mubr.f32.mxu0 0.0
    %2536 = vmatmul.mubr.f32.gmra.mrb[0].mxu0 %v2244
    %v2537 = vpop.f32.mrb[0].mxu0
    %v2538 = vadd.f32 %v2114, %v2537
    %v2539 = vpop.f32.mrb[0].mxu0
    %2540 = vmatprep.mubr.f32.mxu0 0.0
    %2541 = vmatmul.mubr.f32.gmra.mrb[0].mxu0 %v2247
    %v2542 = vpop.f32.mrb[0].mxu0
    %v2543 = vadd.f32 %v2114, %v2542
    %v2544 = vpop.f32.mrb[0].mxu0
    %2545 = vmatprep.mubr.f32.mxu0 0.0
    %2546 = vmatmul.mubr.f32.gmra.mrb[0].mxu0 %v2250
    %v2547 = vpop.f32.mrb[0].mxu0
    %v2548 = vadd.f32 %v2114, %v2547
    %v2549 = vpop.f32.mrb[0].mxu0
    %2550 = vmatprep.mubr.f32.mxu0 0.0
    %2551 = vmatmul.mubr.f32.gmra.mrb[0].mxu0 %v2253
    %v2552 = vpop.f32.mrb[0].mxu0
    %v2553 = vadd.f32 %v2114, %v2552
    %v2554 = vpop.f32.mrb[0].mxu0
    %2555 = vmatprep.mubr.f32.mxu0 0.0
    %2556 = vmatmul.mubr.f32.gmra.mrb[0].mxu0 %v2256
    %v2557 = vpop.f32.mrb[0].mxu0
    %v2558 = vadd.f32 %v2114, %v2557
    %v2559 = vpop.f32.mrb[0].mxu0
    %2560 = vmatprep.mubr.f32.mxu0 0.0
    %2561 = vmatmul.mubr.f32.gmra.mrb[0].mxu0 %v2259
    %v2562 = vpop.f32.mrb[0].mxu0
    %v2563 = vadd.f32 %v2114, %v2562
    %v2564 = vpop.f32.mrb[0].mxu0
    %2565 = vdwg.mxu0
    %v2566 = vmax.f32 %v2328, 0.0
    %v2567 = vmax.f32 %v2333, 0.0
    %v2568 = vmax.f32 %v2338, 0.0
    %v2569 = vmax.f32 %v2343, 0.0
    %v2570 = vmax.f32 %v2348, 0.0
    %v2571 = vmax.f32 %v2353, 0.0
    %v2572 = vmax.f32 %v2358, 0.0
    %v2573 = vmax.f32 %v2363, 0.0
    %v2574 = vmax.f32 %v2368, 0.0
    %v2575 = vmax.f32 %v2373, 0.0
    %v2576 = vmax.f32 %v2378, 0.0
    %v2577 = vmax.f32 %v2383, 0.0
    %v2578 = vmax.f32 %v2388, 0.0
    %v2579 = vmax.f32 %v2393, 0.0
    %v2580 = vmax.f32 %v2398, 0.0
    %v2581 = vmax.f32 %v2403, 0.0
    %v2582 = vmax.f32 %v2408, 0.0
    %v2583 = vmax.f32 %v2413, 0.0
    %v2584 = vmax.f32 %v2418, 0.0
    %v2585 = vmax.f32 %v2423, 0.0
    %v2586 = vmax.f32 %v2428, 0.0
    %v2587 = vmax.f32 %v2433, 0.0
    %v2588 = vmax.f32 %v2438, 0.0
    %v2589 = vmax.f32 %v2443, 0.0
    %v2590 = vmax.f32 %v2448, 0.0
    %v2591 = vmax.f32 %v2453, 0.0
    %v2592 = vmax.f32 %v2458, 0.0
    %v2593 = vmax.f32 %v2463, 0.0
    %v2594 = vmax.f32 %v2468, 0.0
    %v2595 = vmax.f32 %v2473, 0.0
    %v2596 = vmax.f32 %v2478, 0.0
    %v2597 = vmax.f32 %v2483, 0.0
    %v2598 = vmax.f32 %v2488, 0.0
    %v2599 = vmax.f32 %v2493, 0.0
    %v2600 = vmax.f32 %v2498, 0.0
    %v2601 = vmax.f32 %v2503, 0.0
    %v2602 = vmax.f32 %v2508, 0.0
    %v2603 = vmax.f32 %v2513, 0.0
    %v2604 = vmax.f32 %v2518, 0.0
    %v2605 = vmax.f32 %v2523, 0.0
    %v2606 = vmax.f32 %v2528, 0.0
    %v2607 = vmax.f32 %v2533, 0.0
    %v2608 = vmax.f32 %v2538, 0.0
    %v2609 = vmax.f32 %v2543, 0.0
    %v2610 = vmax.f32 %v2548, 0.0
    %v2611 = vmax.f32 %v2553, 0.0
    %v2612 = vmax.f32 %v2558, 0.0
    %v2613 = vmax.f32 %v2563, 0.0
    %v2614 = vpack.c.bf16 %v2567, %v2566
    %v2615 = vpack.c.bf16 %v2569, %v2568
    %v2616 = vpack.c.bf16 %v2571, %v2570
    %v2617 = vpack.c.bf16 %v2573, %v2572
    %v2618 = vpack.c.bf16 %v2575, %v2574
    %v2619 = vpack.c.bf16 %v2577, %v2576
    %v2620 = vpack.c.bf16 %v2579, %v2578
    %v2621 = vpack.c.bf16 %v2581, %v2580
    %v2622 = vpack.c.bf16 %v2583, %v2582
    %v2623 = vpack.c.bf16 %v2585, %v2584
    %v2624 = vpack.c.bf16 %v2587, %v2586
    %v2625 = vpack.c.bf16 %v2589, %v2588
    %v2626 = vpack.c.bf16 %v2591, %v2590
    %v2627 = vpack.c.bf16 %v2593, %v2592
    %v2628 = vpack.c.bf16 %v2595, %v2594
    %v2629 = vpack.c.bf16 %v2597, %v2596
    %v2630 = vpack.c.bf16 %v2599, %v2598
    %v2631 = vpack.c.bf16 %v2601, %v2600
    %v2632 = vpack.c.bf16 %v2603, %v2602
    %v2633 = vpack.c.bf16 %v2605, %v2604
    %v2634 = vpack.c.bf16 %v2607, %v2606
    %v2635 = vpack.c.bf16 %v2609, %v2608
    %v2636 = vpack.c.bf16 %v2611, %v2610
    %v2637 = vpack.c.bf16 %v2613, %v2612
    %2638 = vmatprep.subr.bf16.mxu0 0
    %2639 = vmatpush1.bf16.msra.mxu0 %v2614
    %2640 = vmatprep.subr.bf16.mxu0 0
    %2641 = vmatpush1.bf16.msra.mxu0 %v2615
    %2642 = vmatprep.subr.bf16.mxu0 0
    %2643 = vmatpush1.bf16.msra.mxu0 %v2616
    %2644 = vmatprep.subr.bf16.mxu0 0
    %2645 = vmatpush1.bf16.msra.mxu0 %v2617
    %2646 = vmatprep.subr.bf16.mxu0 0
    %2647 = vmatpush1.bf16.msra.mxu0 %v2618
    %2648 = vmatprep.subr.bf16.mxu0 0
    %2649 = vmatpush1.bf16.msra.mxu0 %v2619
    %2650 = vmatprep.subr.bf16.mxu0 0
    %2651 = vmatpush1.bf16.msra.mxu0 %v2620
    %2652 = vmatprep.subr.bf16.mxu0 0
    %2653 = vmatpush1.bf16.msra.mxu0 %v2621
    %2654 = vmatprep.subr.bf16.mxu0 0
    %2655 = vmatpush1.bf16.msra.mxu0 %v2622
    %2656 = vmatprep.subr.bf16.mxu0 0
    %2657 = vmatpush1.bf16.msra.mxu0 %v2623
    %2658 = vmatprep.subr.bf16.mxu0 0
    %2659 = vmatpush1.bf16.msra.mxu0 %v2624
    %2660 = vmatprep.subr.bf16.mxu0 0
    %2661 = vmatpush1.bf16.msra.mxu0 %v2625
    %2662 = vmatprep.subr.bf16.mxu0 0
    %2663 = vmatpush1.bf16.msra.mxu0 %v2626
    %2664 = vmatprep.subr.bf16.mxu0 0
    %2665 = vmatpush1.bf16.msra.mxu0 %v2627
    %2666 = vmatprep.subr.bf16.mxu0 0
    %2667 = vmatpush1.bf16.msra.mxu0 %v2628
    %2668 = vmatprep.subr.bf16.mxu0 0
    %2669 = vmatpush1.bf16.msra.mxu0 %v2629
    %2670 = vmatprep.mubr.bf16.mxu0 %v105
    %2671 = vmatmul.mubr.bf16.gmra.mrb[0].mxu0 %v104
    %v2672 = vpop.f32.mrb[0].mxu0
    %v2673 = vadd.f32 0.0, %v2672
    %v2674 = vpop.f32.mrb[0].mxu0
    %v2675 = vpop.f32.mrb[0].mxu0
    %v2676 = vadd.f32 0.0, %v2675
    %v2677 = vpop.f32.mrb[0].mxu0
    %2678 = vmatprep.mubr.bf16.mxu0 %v108
    %2679 = vmatmul.mubr.bf16.gmra.mrb[0].mxu0 %v107
    %v2680 = vpop.f32.mrb[0].mxu0
    %v2681 = vadd.f32 0.0, %v2680
    %v2682 = vpop.f32.mrb[0].mxu0
    %v2683 = vpop.f32.mrb[0].mxu0
    %v2684 = vadd.f32 0.0, %v2683
    %v2685 = vpop.f32.mrb[0].mxu0
    %2686 = vmatprep.mubr.bf16.mxu0 %v111
    %2687 = vmatmul.mubr.bf16.gmra.mrb[0].mxu0 %v110
    %v2688 = vpop.f32.mrb[0].mxu0
    %v2689 = vadd.f32 0.0, %v2688
    %v2690 = vpop.f32.mrb[0].mxu0
    %v2691 = vpop.f32.mrb[0].mxu0
    %v2692 = vadd.f32 0.0, %v2691
    %v2693 = vpop.f32.mrb[0].mxu0
    %2694 = vmatprep.mubr.bf16.mxu0 %v114
    %2695 = vmatmul.mubr.bf16.gmra.mrb[0].mxu0 %v113
    %v2696 = vpop.f32.mrb[0].mxu0
    %v2697 = vadd.f32 0.0, %v2696
    %v2698 = vpop.f32.mrb[0].mxu0
    %v2699 = vpop.f32.mrb[0].mxu0
    %v2700 = vadd.f32 0.0, %v2699
    %v2701 = vpop.f32.mrb[0].mxu0
    %2702 = vmatprep.mubr.bf16.mxu0 %v117
    %2703 = vmatmul.mubr.bf16.gmra.mrb[0].mxu0 %v116
    %v2704 = vpop.f32.mrb[0].mxu0
    %v2705 = vadd.f32 0.0, %v2704
    %v2706 = vpop.f32.mrb[0].mxu0
    %v2707 = vpop.f32.mrb[0].mxu0
    %v2708 = vadd.f32 0.0, %v2707
    %v2709 = vpop.f32.mrb[0].mxu0
    %2710 = vmatprep.mubr.bf16.mxu0 %v120
    %2711 = vmatmul.mubr.bf16.gmra.mrb[0].mxu0 %v119
    %v2712 = vpop.f32.mrb[0].mxu0
    %v2713 = vadd.f32 0.0, %v2712
    %v2714 = vpop.f32.mrb[0].mxu0
    %v2715 = vpop.f32.mrb[0].mxu0
    %v2716 = vadd.f32 0.0, %v2715
    %v2717 = vpop.f32.mrb[0].mxu0
    %2718 = vmatprep.mubr.bf16.mxu0 %v123
    %2719 = vmatmul.mubr.bf16.gmra.mrb[0].mxu0 %v122
    %v2720 = vpop.f32.mrb[0].mxu0
    %v2721 = vadd.f32 0.0, %v2720
    %v2722 = vpop.f32.mrb[0].mxu0
    %v2723 = vpop.f32.mrb[0].mxu0
    %v2724 = vadd.f32 0.0, %v2723
    %v2725 = vpop.f32.mrb[0].mxu0
    %2726 = vmatprep.mubr.bf16.mxu0 %v126
    %2727 = vmatmul.mubr.bf16.gmra.mrb[0].mxu0 %v125
    %v2728 = vpop.f32.mrb[0].mxu0
    %v2729 = vadd.f32 0.0, %v2728
    %v2730 = vpop.f32.mrb[0].mxu0
    %v2731 = vpop.f32.mrb[0].mxu0
    %v2732 = vadd.f32 0.0, %v2731
    %v2733 = vpop.f32.mrb[0].mxu0
    %2734 = vmatprep.mubr.bf16.mxu0 %v129
    %2735 = vmatmul.mubr.bf16.gmra.mrb[0].mxu0 %v128
    %v2736 = vpop.f32.mrb[0].mxu0
    %v2737 = vadd.f32 0.0, %v2736
    %v2738 = vpop.f32.mrb[0].mxu0
    %v2739 = vpop.f32.mrb[0].mxu0
    %v2740 = vadd.f32 0.0, %v2739
    %v2741 = vpop.f32.mrb[0].mxu0
    %2742 = vmatprep.mubr.bf16.mxu0 %v132
    %2743 = vmatmul.mubr.bf16.gmra.mrb[0].mxu0 %v131
    %v2744 = vpop.f32.mrb[0].mxu0
    %v2745 = vadd.f32 0.0, %v2744
    %v2746 = vpop.f32.mrb[0].mxu0
    %v2747 = vpop.f32.mrb[0].mxu0
    %v2748 = vadd.f32 0.0, %v2747
    %v2749 = vpop.f32.mrb[0].mxu0
    %2750 = vmatprep.mubr.bf16.mxu0 %v135
    %2751 = vmatmul.mubr.bf16.gmra.mrb[0].mxu0 %v134
    %v2752 = vpop.f32.mrb[0].mxu0
    %v2753 = vadd.f32 0.0, %v2752
    %v2754 = vpop.f32.mrb[0].mxu0
    %v2755 = vpop.f32.mrb[0].mxu0
    %v2756 = vadd.f32 0.0, %v2755
    %v2757 = vpop.f32.mrb[0].mxu0
    %2758 = vmatprep.mubr.bf16.mxu0 %v138
    %2759 = vmatmul.mubr.bf16.gmra.mrb[0].mxu0 %v137
    %v2760 = vpop.f32.mrb[0].mxu0
    %v2761 = vadd.f32 0.0, %v2760
    %v2762 = vpop.f32.mrb[0].mxu0
    %v2763 = vpop.f32.mrb[0].mxu0
    %v2764 = vadd.f32 0.0, %v2763
    %v2765 = vpop.f32.mrb[0].mxu0
    %2766 = vmatprep.mubr.bf16.mxu0 %v141
    %2767 = vmatmul.mubr.bf16.gmra.mrb[0].mxu0 %v140
    %v2768 = vpop.f32.mrb[0].mxu0
    %v2769 = vadd.f32 0.0, %v2768
    %v2770 = vpop.f32.mrb[0].mxu0
    %v2771 = vpop.f32.mrb[0].mxu0
    %v2772 = vadd.f32 0.0, %v2771
    %v2773 = vpop.f32.mrb[0].mxu0
    %2774 = vmatprep.mubr.bf16.mxu0 %v144
    %2775 = vmatmul.mubr.bf16.gmra.mrb[0].mxu0 %v143
    %v2776 = vpop.f32.mrb[0].mxu0
    %v2777 = vadd.f32 0.0, %v2776
    %v2778 = vpop.f32.mrb[0].mxu0
    %v2779 = vpop.f32.mrb[0].mxu0
    %v2780 = vadd.f32 0.0, %v2779
    %v2781 = vpop.f32.mrb[0].mxu0
    %2782 = vmatprep.mubr.bf16.mxu0 %v147
    %2783 = vmatmul.mubr.bf16.gmra.mrb[0].mxu0 %v146
    %v2784 = vpop.f32.mrb[0].mxu0
    %v2785 = vadd.f32 0.0, %v2784
    %v2786 = vpop.f32.mrb[0].mxu0
    %v2787 = vpop.f32.mrb[0].mxu0
    %v2788 = vadd.f32 0.0, %v2787
    %v2789 = vpop.f32.mrb[0].mxu0
    %2790 = vmatprep.mubr.bf16.mxu0 %v150
    %2791 = vmatmul.mubr.bf16.gmra.mrb[0].mxu0 %v149
    %v2792 = vpop.f32.mrb[0].mxu0
    %v2793 = vadd.f32 0.0, %v2792
    %v2794 = vpop.f32.mrb[0].mxu0
    %v2795 = vpop.f32.mrb[0].mxu0
    %v2796 = vadd.f32 0.0, %v2795
    %v2797 = vpop.f32.mrb[0].mxu0
    %2798 = vmatprep.mubr.bf16.mxu0 %v153
    %2799 = vmatmul.mubr.bf16.gmra.mrb[0].mxu0 %v152
    %v2800 = vpop.f32.mrb[0].mxu0
    %v2801 = vadd.f32 0.0, %v2800
    %v2802 = vpop.f32.mrb[0].mxu0
    %v2803 = vpop.f32.mrb[0].mxu0
    %v2804 = vadd.f32 0.0, %v2803
    %v2805 = vpop.f32.mrb[0].mxu0
    %2806 = vmatprep.mubr.bf16.mxu0 %v156
    %2807 = vmatmul.mubr.bf16.gmra.mrb[0].mxu0 %v155
    %v2808 = vpop.f32.mrb[0].mxu0
    %v2809 = vadd.f32 0.0, %v2808
    %v2810 = vpop.f32.mrb[0].mxu0
    %v2811 = vpop.f32.mrb[0].mxu0
    %v2812 = vadd.f32 0.0, %v2811
    %v2813 = vpop.f32.mrb[0].mxu0
    %2814 = vmatprep.mubr.bf16.mxu0 %v159
    %2815 = vmatmul.mubr.bf16.gmra.mrb[0].mxu0 %v158
    %v2816 = vpop.f32.mrb[0].mxu0
    %v2817 = vadd.f32 0.0, %v2816
    %v2818 = vpop.f32.mrb[0].mxu0
    %v2819 = vpop.f32.mrb[0].mxu0
    %v2820 = vadd.f32 0.0, %v2819
    %v2821 = vpop.f32.mrb[0].mxu0
    %2822 = vmatprep.mubr.bf16.mxu0 %v162
    %2823 = vmatmul.mubr.bf16.gmra.mrb[0].mxu0 %v161
    %v2824 = vpop.f32.mrb[0].mxu0
    %v2825 = vadd.f32 0.0, %v2824
    %v2826 = vpop.f32.mrb[0].mxu0
    %v2827 = vpop.f32.mrb[0].mxu0
    %v2828 = vadd.f32 0.0, %v2827
    %v2829 = vpop.f32.mrb[0].mxu0
    %2830 = vmatprep.mubr.bf16.mxu0 %v165
    %2831 = vmatmul.mubr.bf16.gmra.mrb[0].mxu0 %v164
    %v2832 = vpop.f32.mrb[0].mxu0
    %v2833 = vadd.f32 0.0, %v2832
    %v2834 = vpop.f32.mrb[0].mxu0
    %v2835 = vpop.f32.mrb[0].mxu0
    %v2836 = vadd.f32 0.0, %v2835
    %v2837 = vpop.f32.mrb[0].mxu0
    %2838 = vmatprep.mubr.bf16.mxu0 %v168
    %2839 = vmatmul.mubr.bf16.gmra.mrb[0].mxu0 %v167
    %v2840 = vpop.f32.mrb[0].mxu0
    %v2841 = vadd.f32 0.0, %v2840
    %v2842 = vpop.f32.mrb[0].mxu0
    %v2843 = vpop.f32.mrb[0].mxu0
    %v2844 = vadd.f32 0.0, %v2843
    %v2845 = vpop.f32.mrb[0].mxu0
    %2846 = vmatprep.mubr.bf16.mxu0 %v171
    %2847 = vmatmul.mubr.bf16.gmra.mrb[0].mxu0 %v170
    %v2848 = vpop.f32.mrb[0].mxu0
    %v2849 = vadd.f32 0.0, %v2848
    %v2850 = vpop.f32.mrb[0].mxu0
    %v2851 = vpop.f32.mrb[0].mxu0
    %v2852 = vadd.f32 0.0, %v2851
    %v2853 = vpop.f32.mrb[0].mxu0
    %2854 = vmatprep.mubr.bf16.mxu0 %v174
    %2855 = vmatmul.mubr.bf16.gmra.mrb[0].mxu0 %v173
    %v2856 = vpop.f32.mrb[0].mxu0
    %v2857 = vadd.f32 0.0, %v2856
    %v2858 = vpop.f32.mrb[0].mxu0
    %v2859 = vpop.f32.mrb[0].mxu0
    %v2860 = vadd.f32 0.0, %v2859
    %v2861 = vpop.f32.mrb[0].mxu0
    %2862 = vdwg.mxu0
    %2863 = vmatprep.subr.bf16.mxu0 0
    %2864 = vmatpush1.bf16.msra.mxu0 %v2630
    %2865 = vmatprep.subr.bf16.mxu0 0
    %2866 = vmatpush1.bf16.msra.mxu0 %v2631
    %2867 = vmatprep.subr.bf16.mxu0 0
    %2868 = vmatpush1.bf16.msra.mxu0 %v2632
    %2869 = vmatprep.subr.bf16.mxu0 0
    %2870 = vmatpush1.bf16.msra.mxu0 %v2633
    %2871 = vmatprep.subr.bf16.mxu0 0
    %2872 = vmatpush1.bf16.msra.mxu0 %v2634
    %2873 = vmatprep.subr.bf16.mxu0 0
    %2874 = vmatpush1.bf16.msra.mxu0 %v2635
    %2875 = vmatprep.subr.bf16.mxu0 0
    %2876 = vmatpush1.bf16.msra.mxu0 %v2636
    %2877 = vmatprep.subr.bf16.mxu0 0
    %2878 = vmatpush1.bf16.msra.mxu0 %v2637
    %2879 = vmatprep.subr.bf16.mxu0 0
    %2880 = vmatpush1.bf16.msra.mxu0 0
    %2881 = vmatprep.subr.bf16.mxu0 0
    %2882 = vmatpush1.bf16.msra.mxu0 0
    %2883 = vmatprep.subr.bf16.mxu0 0
    %2884 = vmatpush1.bf16.msra.mxu0 0
    %2885 = vmatprep.subr.bf16.mxu0 0
    %2886 = vmatpush1.bf16.msra.mxu0 0
    %2887 = vmatprep.subr.bf16.mxu0 0
    %2888 = vmatpush1.bf16.msra.mxu0 0
    %2889 = vmatprep.subr.bf16.mxu0 0
    %2890 = vmatpush1.bf16.msra.mxu0 0
    %2891 = vmatprep.subr.bf16.mxu0 0
    %2892 = vmatpush1.bf16.msra.mxu0 0
    %2893 = vmatprep.subr.bf16.mxu0 0
    %2894 = vmatpush1.bf16.msra.mxu0 0
    %2895 = vmatprep.mubr.bf16.mxu0 0
    %2896 = vmatmul.mubr.bf16.gmra.mrb[0].mxu0 %v106
    %v2897 = vpop.f32.mrb[0].mxu0
    %v2898 = vadd.f32 %v2673, %v2897
    %v2899 = vpop.f32.mrb[0].mxu0
    %v2900 = vpop.f32.mrb[0].mxu0
    %v2901 = vadd.f32 %v2676, %v2900
    %v2902 = vpop.f32.mrb[0].mxu0
    %2903 = vmatprep.mubr.bf16.mxu0 0
    %2904 = vmatmul.mubr.bf16.gmra.mrb[0].mxu0 %v109
    %v2905 = vpop.f32.mrb[0].mxu0
    %v2906 = vadd.f32 %v2681, %v2905
    %v2907 = vpop.f32.mrb[0].mxu0
    %v2908 = vpop.f32.mrb[0].mxu0
    %v2909 = vadd.f32 %v2684, %v2908
    %v2910 = vpop.f32.mrb[0].mxu0
    %2911 = vmatprep.mubr.bf16.mxu0 0
    %2912 = vmatmul.mubr.bf16.gmra.mrb[0].mxu0 %v112
    %v2913 = vpop.f32.mrb[0].mxu0
    %v2914 = vadd.f32 %v2689, %v2913
    %v2915 = vpop.f32.mrb[0].mxu0
    %v2916 = vpop.f32.mrb[0].mxu0
    %v2917 = vadd.f32 %v2692, %v2916
    %v2918 = vpop.f32.mrb[0].mxu0
    %2919 = vmatprep.mubr.bf16.mxu0 0
    %2920 = vmatmul.mubr.bf16.gmra.mrb[0].mxu0 %v115
    %v2921 = vpop.f32.mrb[0].mxu0
    %v2922 = vadd.f32 %v2697, %v2921
    %v2923 = vpop.f32.mrb[0].mxu0
    %v2924 = vpop.f32.mrb[0].mxu0
    %v2925 = vadd.f32 %v2700, %v2924
    %v2926 = vpop.f32.mrb[0].mxu0
    %2927 = vmatprep.mubr.bf16.mxu0 0
    %2928 = vmatmul.mubr.bf16.gmra.mrb[0].mxu0 %v118
    %v2929 = vpop.f32.mrb[0].mxu0
    %v2930 = vadd.f32 %v2705, %v2929
    %v2931 = vpop.f32.mrb[0].mxu0
    %v2932 = vpop.f32.mrb[0].mxu0
    %v2933 = vadd.f32 %v2708, %v2932
    %v2934 = vpop.f32.mrb[0].mxu0
    %2935 = vmatprep.mubr.bf16.mxu0 0
    %2936 = vmatmul.mubr.bf16.gmra.mrb[0].mxu0 %v121
    %v2937 = vpop.f32.mrb[0].mxu0
    %v2938 = vadd.f32 %v2713, %v2937
    %v2939 = vpop.f32.mrb[0].mxu0
    %v2940 = vpop.f32.mrb[0].mxu0
    %v2941 = vadd.f32 %v2716, %v2940
    %v2942 = vpop.f32.mrb[0].mxu0
    %2943 = vmatprep.mubr.bf16.mxu0 0
    %2944 = vmatmul.mubr.bf16.gmra.mrb[0].mxu0 %v124
    %v2945 = vpop.f32.mrb[0].mxu0
    %v2946 = vadd.f32 %v2721, %v2945
    %v2947 = vpop.f32.mrb[0].mxu0
    %v2948 = vpop.f32.mrb[0].mxu0
    %v2949 = vadd.f32 %v2724, %v2948
    %v2950 = vpop.f32.mrb[0].mxu0
    %2951 = vmatprep.mubr.bf16.mxu0 0
    %2952 = vmatmul.mubr.bf16.gmra.mrb[0].mxu0 %v127
    %v2953 = vpop.f32.mrb[0].mxu0
    %v2954 = vadd.f32 %v2729, %v2953
    %v2955 = vpop.f32.mrb[0].mxu0
    %v2956 = vpop.f32.mrb[0].mxu0
    %v2957 = vadd.f32 %v2732, %v2956
    %v2958 = vpop.f32.mrb[0].mxu0
    %2959 = vmatprep.mubr.bf16.mxu0 0
    %2960 = vmatmul.mubr.bf16.gmra.mrb[0].mxu0 %v130
    %v2961 = vpop.f32.mrb[0].mxu0
    %v2962 = vadd.f32 %v2737, %v2961
    %v2963 = vpop.f32.mrb[0].mxu0
    %v2964 = vpop.f32.mrb[0].mxu0
    %v2965 = vadd.f32 %v2740, %v2964
    %v2966 = vpop.f32.mrb[0].mxu0
    %2967 = vmatprep.mubr.bf16.mxu0 0
    %2968 = vmatmul.mubr.bf16.gmra.mrb[0].mxu0 %v133
    %v2969 = vpop.f32.mrb[0].mxu0
    %v2970 = vadd.f32 %v2745, %v2969
    %v2971 = vpop.f32.mrb[0].mxu0
    %v2972 = vpop.f32.mrb[0].mxu0
    %v2973 = vadd.f32 %v2748, %v2972
    %v2974 = vpop.f32.mrb[0].mxu0
    %2975 = vmatprep.mubr.bf16.mxu0 0
    %2976 = vmatmul.mubr.bf16.gmra.mrb[0].mxu0 %v136
    %v2977 = vpop.f32.mrb[0].mxu0
    %v2978 = vadd.f32 %v2753, %v2977
    %v2979 = vpop.f32.mrb[0].mxu0
    %v2980 = vpop.f32.mrb[0].mxu0
    %v2981 = vadd.f32 %v2756, %v2980
    %v2982 = vpop.f32.mrb[0].mxu0
    %2983 = vmatprep.mubr.bf16.mxu0 0
    %2984 = vmatmul.mubr.bf16.gmra.mrb[0].mxu0 %v139
    %v2985 = vpop.f32.mrb[0].mxu0
    %v2986 = vadd.f32 %v2761, %v2985
    %v2987 = vpop.f32.mrb[0].mxu0
    %v2988 = vpop.f32.mrb[0].mxu0
    %v2989 = vadd.f32 %v2764, %v2988
    %v2990 = vpop.f32.mrb[0].mxu0
    %2991 = vmatprep.mubr.bf16.mxu0 0
    %2992 = vmatmul.mubr.bf16.gmra.mrb[0].mxu0 %v142
    %v2993 = vpop.f32.mrb[0].mxu0
    %v2994 = vadd.f32 %v2769, %v2993
    %v2995 = vpop.f32.mrb[0].mxu0
    %v2996 = vpop.f32.mrb[0].mxu0
    %v2997 = vadd.f32 %v2772, %v2996
    %v2998 = vpop.f32.mrb[0].mxu0
    %2999 = vmatprep.mubr.bf16.mxu0 0
    %3000 = vmatmul.mubr.bf16.gmra.mrb[0].mxu0 %v145
    %v3001 = vpop.f32.mrb[0].mxu0
    %v3002 = vadd.f32 %v2777, %v3001
    %v3003 = vpop.f32.mrb[0].mxu0
    %v3004 = vpop.f32.mrb[0].mxu0
    %v3005 = vadd.f32 %v2780, %v3004
    %v3006 = vpop.f32.mrb[0].mxu0
    %3007 = vmatprep.mubr.bf16.mxu0 0
    %3008 = vmatmul.mubr.bf16.gmra.mrb[0].mxu0 %v148
    %v3009 = vpop.f32.mrb[0].mxu0
    %v3010 = vadd.f32 %v2785, %v3009
    %v3011 = vpop.f32.mrb[0].mxu0
    %v3012 = vpop.f32.mrb[0].mxu0
    %v3013 = vadd.f32 %v2788, %v3012
    %v3014 = vpop.f32.mrb[0].mxu0
    %3015 = vmatprep.mubr.bf16.mxu0 0
    %3016 = vmatmul.mubr.bf16.gmra.mrb[0].mxu0 %v151
    %v3017 = vpop.f32.mrb[0].mxu0
    %v3018 = vadd.f32 %v2793, %v3017
    %v3019 = vpop.f32.mrb[0].mxu0
    %v3020 = vpop.f32.mrb[0].mxu0
    %v3021 = vadd.f32 %v2796, %v3020
    %v3022 = vpop.f32.mrb[0].mxu0
    %3023 = vmatprep.mubr.bf16.mxu0 0
    %3024 = vmatmul.mubr.bf16.gmra.mrb[0].mxu0 %v154
    %v3025 = vpop.f32.mrb[0].mxu0
    %v3026 = vadd.f32 %v2801, %v3025
    %v3027 = vpop.f32.mrb[0].mxu0
    %v3028 = vpop.f32.mrb[0].mxu0
    %v3029 = vadd.f32 %v2804, %v3028
    %v3030 = vpop.f32.mrb[0].mxu0
    %3031 = vmatprep.mubr.bf16.mxu0 0
    %3032 = vmatmul.mubr.bf16.gmra.mrb[0].mxu0 %v157
    %v3033 = vpop.f32.mrb[0].mxu0
    %v3034 = vadd.f32 %v2809, %v3033
    %v3035 = vpop.f32.mrb[0].mxu0
    %v3036 = vpop.f32.mrb[0].mxu0
    %v3037 = vadd.f32 %v2812, %v3036
    %v3038 = vpop.f32.mrb[0].mxu0
    %3039 = vmatprep.mubr.bf16.mxu0 0
    %3040 = vmatmul.mubr.bf16.gmra.mrb[0].mxu0 %v160
    %v3041 = vpop.f32.mrb[0].mxu0
    %v3042 = vadd.f32 %v2817, %v3041
    %v3043 = vpop.f32.mrb[0].mxu0
    %v3044 = vpop.f32.mrb[0].mxu0
    %v3045 = vadd.f32 %v2820, %v3044
    %v3046 = vpop.f32.mrb[0].mxu0
    %3047 = vmatprep.mubr.bf16.mxu0 0
    %3048 = vmatmul.mubr.bf16.gmra.mrb[0].mxu0 %v163
    %v3049 = vpop.f32.mrb[0].mxu0
    %v3050 = vadd.f32 %v2825, %v3049
    %v3051 = vpop.f32.mrb[0].mxu0
    %v3052 = vpop.f32.mrb[0].mxu0
    %v3053 = vadd.f32 %v2828, %v3052
    %v3054 = vpop.f32.mrb[0].mxu0
    %3055 = vmatprep.mubr.bf16.mxu0 0
    %3056 = vmatmul.mubr.bf16.gmra.mrb[0].mxu0 %v166
    %v3057 = vpop.f32.mrb[0].mxu0
    %v3058 = vadd.f32 %v2833, %v3057
    %v3059 = vpop.f32.mrb[0].mxu0
    %v3060 = vpop.f32.mrb[0].mxu0
    %v3061 = vadd.f32 %v2836, %v3060
    %v3062 = vpop.f32.mrb[0].mxu0
    %3063 = vmatprep.mubr.bf16.mxu0 0
    %3064 = vmatmul.mubr.bf16.gmra.mrb[0].mxu0 %v169
    %v3065 = vpop.f32.mrb[0].mxu0
    %v3066 = vadd.f32 %v2841, %v3065
    %v3067 = vpop.f32.mrb[0].mxu0
    %v3068 = vpop.f32.mrb[0].mxu0
    %v3069 = vadd.f32 %v2844, %v3068
    %v3070 = vpop.f32.mrb[0].mxu0
    %3071 = vmatprep.mubr.bf16.mxu0 0
    %3072 = vmatmul.mubr.bf16.gmra.mrb[0].mxu0 %v172
    %v3073 = vpop.f32.mrb[0].mxu0
    %v3074 = vadd.f32 %v2849, %v3073
    %v3075 = vpop.f32.mrb[0].mxu0
    %v3076 = vpop.f32.mrb[0].mxu0
    %v3077 = vadd.f32 %v2852, %v3076
    %v3078 = vpop.f32.mrb[0].mxu0
    %3079 = vmatprep.mubr.bf16.mxu0 0
    %3080 = vmatmul.mubr.bf16.gmra.mrb[0].mxu0 %v175
    %v3081 = vpop.f32.mrb[0].mxu0
    %v3082 = vadd.f32 %v2857, %v3081
    %v3083 = vpop.f32.mrb[0].mxu0
    %v3084 = vpop.f32.mrb[0].mxu0
    %v3085 = vadd.f32 %v2860, %v3084
    %v3086 = vpop.f32.mrb[0].mxu0
    %3087 = vdwg.mxu0
    %3112 = vrot.lane.b32.xlu0 %v2614, 96
    %v3113 = vpop.permute.xlu0 %3112
    %3114 = vrot.lane.b32.xlu0 %v2615, 96
    %v3115 = vpop.permute.xlu0 %3114
    %3116 = vrot.lane.b32.xlu0 %v2616, 96
    %v3117 = vpop.permute.xlu0 %3116
    %3118 = vrot.lane.b32.xlu0 %v2617, 96
    %v3119 = vpop.permute.xlu0 %3118
    %3120 = vrot.lane.b32.xlu0 %v2618, 96
    %v3121 = vpop.permute.xlu0 %3120
    %3122 = vrot.lane.b32.xlu0 %v2619, 96
    %v3123 = vpop.permute.xlu0 %3122
    %3124 = vrot.lane.b32.xlu0 %v2620, 96
    %v3125 = vpop.permute.xlu0 %3124
    %3126 = vrot.lane.b32.xlu0 %v2621, 96
    %v3127 = vpop.permute.xlu0 %3126
    %3128 = vrot.lane.b32.xlu0 %v2622, 96
    %v3129 = vpop.permute.xlu0 %3128
    %3130 = vrot.lane.b32.xlu0 %v2623, 96
    %v3131 = vpop.permute.xlu0 %3130
    %3132 = vrot.lane.b32.xlu0 %v2624, 96
    %v3133 = vpop.permute.xlu0 %3132
    %3134 = vrot.lane.b32.xlu0 %v2625, 96
    %v3135 = vpop.permute.xlu0 %3134
    %3136 = vrot.lane.b32.xlu0 %v2626, 96
    %v3137 = vpop.permute.xlu0 %3136
    %3138 = vrot.lane.b32.xlu0 %v2627, 96
    %v3139 = vpop.permute.xlu0 %3138
    %3140 = vrot.lane.b32.xlu0 %v2628, 96
    %v3141 = vpop.permute.xlu0 %3140
    %3142 = vrot.lane.b32.xlu0 %v2629, 96
    %v3143 = vpop.permute.xlu0 %3142
    %3144 = vrot.lane.b32.xlu0 %v2630, 96
    %v3145 = vpop.permute.xlu0 %3144
    %3146 = vrot.lane.b32.xlu0 %v2631, 96
    %v3147 = vpop.permute.xlu0 %3146
    %3148 = vrot.lane.b32.xlu0 %v2632, 96
    %v3149 = vpop.permute.xlu0 %3148
    %3150 = vrot.lane.b32.xlu0 %v2633, 96
    %v3151 = vpop.permute.xlu0 %3150
    %3152 = vrot.lane.b32.xlu0 %v2634, 96
    %v3153 = vpop.permute.xlu0 %3152
    %3154 = vrot.lane.b32.xlu0 %v2635, 96
    %v3155 = vpop.permute.xlu0 %3154
    %3156 = vrot.lane.b32.xlu0 %v2636, 96
    %v3157 = vpop.permute.xlu0 %3156
    %3158 = vrot.lane.b32.xlu0 %v2637, 96
    %v3159 = vpop.permute.xlu0 %3158
    %3184 = vmatprep.subr.bf16.mxu0 0
    %3185 = vmatpush1.bf16.msra.mxu0 %v3113
    %3186 = vmatprep.subr.bf16.mxu0 0
    %3187 = vmatpush1.bf16.msra.mxu0 %v3115
    %3188 = vmatprep.subr.bf16.mxu0 0
    %3189 = vmatpush1.bf16.msra.mxu0 %v3117
    %3190 = vmatprep.subr.bf16.mxu0 0
    %3191 = vmatpush1.bf16.msra.mxu0 %v3119
    %3192 = vmatprep.subr.bf16.mxu0 0
    %3193 = vmatpush1.bf16.msra.mxu0 %v3121
    %3194 = vmatprep.subr.bf16.mxu0 0
    %3195 = vmatpush1.bf16.msra.mxu0 %v3123
    %3196 = vmatprep.subr.bf16.mxu0 0
    %3197 = vmatpush1.bf16.msra.mxu0 %v3125
    %3198 = vmatprep.subr.bf16.mxu0 0
    %3199 = vmatpush1.bf16.msra.mxu0 %v3127
    %3200 = vmatprep.subr.bf16.mxu0 0
    %3201 = vmatpush1.bf16.msra.mxu0 %v3129
    %3202 = vmatprep.subr.bf16.mxu0 0
    %3203 = vmatpush1.bf16.msra.mxu0 %v3131
    %3204 = vmatprep.subr.bf16.mxu0 0
    %3205 = vmatpush1.bf16.msra.mxu0 %v3133
    %3206 = vmatprep.subr.bf16.mxu0 0
    %3207 = vmatpush1.bf16.msra.mxu0 %v3135
    %3208 = vmatprep.subr.bf16.mxu0 0
    %3209 = vmatpush1.bf16.msra.mxu0 %v3137
    %3210 = vmatprep.subr.bf16.mxu0 0
    %3211 = vmatpush1.bf16.msra.mxu0 %v3139
    %3212 = vmatprep.subr.bf16.mxu0 0
    %3213 = vmatpush1.bf16.msra.mxu0 %v3141
    %3214 = vmatprep.subr.bf16.mxu0 0
    %3215 = vmatpush1.bf16.msra.mxu0 %v3143
    %3216 = vmatprep.mubr.bf16.mxu0 %v213
    %3217 = vmatmul.mubr.bf16.gmra.mrb[0].mxu0 %v212
    %v3218 = vpop.f32.mrb[0].mxu0
    %v3219 = vadd.f32 0.0, %v3218
    %v3220 = vpop.f32.mrb[0].mxu0
    %v3221 = vpop.f32.mrb[0].mxu0
    %v3222 = vadd.f32 0.0, %v3221
    %v3223 = vpop.f32.mrb[0].mxu0
    %3224 = vmatprep.mubr.bf16.mxu0 %v216
    %3225 = vmatmul.mubr.bf16.gmra.mrb[0].mxu0 %v215
    %v3226 = vpop.f32.mrb[0].mxu0
    %v3227 = vadd.f32 0.0, %v3226
    %v3228 = vpop.f32.mrb[0].mxu0
    %v3229 = vpop.f32.mrb[0].mxu0
    %v3230 = vadd.f32 0.0, %v3229
    %v3231 = vpop.f32.mrb[0].mxu0
    %3232 = vmatprep.mubr.bf16.mxu0 %v219
    %3233 = vmatmul.mubr.bf16.gmra.mrb[0].mxu0 %v218
    %v3234 = vpop.f32.mrb[0].mxu0
    %v3235 = vadd.f32 0.0, %v3234
    %v3236 = vpop.f32.mrb[0].mxu0
    %v3237 = vpop.f32.mrb[0].mxu0
    %v3238 = vadd.f32 0.0, %v3237
    %v3239 = vpop.f32.mrb[0].mxu0
    %3240 = vmatprep.mubr.bf16.mxu0 %v222
    %3241 = vmatmul.mubr.bf16.gmra.mrb[0].mxu0 %v221
    %v3242 = vpop.f32.mrb[0].mxu0
    %v3243 = vadd.f32 0.0, %v3242
    %v3244 = vpop.f32.mrb[0].mxu0
    %v3245 = vpop.f32.mrb[0].mxu0
    %v3246 = vadd.f32 0.0, %v3245
    %v3247 = vpop.f32.mrb[0].mxu0
    %3248 = vmatprep.mubr.bf16.mxu0 %v225
    %3249 = vmatmul.mubr.bf16.gmra.mrb[0].mxu0 %v224
    %v3250 = vpop.f32.mrb[0].mxu0
    %v3251 = vadd.f32 0.0, %v3250
    %v3252 = vpop.f32.mrb[0].mxu0
    %v3253 = vpop.f32.mrb[0].mxu0
    %v3254 = vadd.f32 0.0, %v3253
    %v3255 = vpop.f32.mrb[0].mxu0
    %3256 = vmatprep.mubr.bf16.mxu0 %v228
    %3257 = vmatmul.mubr.bf16.gmra.mrb[0].mxu0 %v227
    %v3258 = vpop.f32.mrb[0].mxu0
    %v3259 = vadd.f32 0.0, %v3258
    %v3260 = vpop.f32.mrb[0].mxu0
    %v3261 = vpop.f32.mrb[0].mxu0
    %v3262 = vadd.f32 0.0, %v3261
    %v3263 = vpop.f32.mrb[0].mxu0
    %3264 = vmatprep.mubr.bf16.mxu0 %v231
    %3265 = vmatmul.mubr.bf16.gmra.mrb[0].mxu0 %v230
    %v3266 = vpop.f32.mrb[0].mxu0
    %v3267 = vadd.f32 0.0, %v3266
    %v3268 = vpop.f32.mrb[0].mxu0
    %v3269 = vpop.f32.mrb[0].mxu0
    %v3270 = vadd.f32 0.0, %v3269
    %v3271 = vpop.f32.mrb[0].mxu0
    %3272 = vmatprep.mubr.bf16.mxu0 %v234
    %3273 = vmatmul.mubr.bf16.gmra.mrb[0].mxu0 %v233
    %v3274 = vpop.f32.mrb[0].mxu0
    %v3275 = vadd.f32 0.0, %v3274
    %v3276 = vpop.f32.mrb[0].mxu0
    %v3277 = vpop.f32.mrb[0].mxu0
    %v3278 = vadd.f32 0.0, %v3277
    %v3279 = vpop.f32.mrb[0].mxu0
    %3280 = vmatprep.mubr.bf16.mxu0 %v237
    %3281 = vmatmul.mubr.bf16.gmra.mrb[0].mxu0 %v236
    %v3282 = vpop.f32.mrb[0].mxu0
    %v3283 = vadd.f32 0.0, %v3282
    %v3284 = vpop.f32.mrb[0].mxu0
    %v3285 = vpop.f32.mrb[0].mxu0
    %v3286 = vadd.f32 0.0, %v3285
    %v3287 = vpop.f32.mrb[0].mxu0
    %3288 = vmatprep.mubr.bf16.mxu0 %v240
    %3289 = vmatmul.mubr.bf16.gmra.mrb[0].mxu0 %v239
    %v3290 = vpop.f32.mrb[0].mxu0
    %v3291 = vadd.f32 0.0, %v3290
    %v3292 = vpop.f32.mrb[0].mxu0
    %v3293 = vpop.f32.mrb[0].mxu0
    %v3294 = vadd.f32 0.0, %v3293
    %v3295 = vpop.f32.mrb[0].mxu0
    %3296 = vmatprep.mubr.bf16.mxu0 %v243
    %3297 = vmatmul.mubr.bf16.gmra.mrb[0].mxu0 %v242
    %v3298 = vpop.f32.mrb[0].mxu0
    %v3299 = vadd.f32 0.0, %v3298
    %v3300 = vpop.f32.mrb[0].mxu0
    %v3301 = vpop.f32.mrb[0].mxu0
    %v3302 = vadd.f32 0.0, %v3301
    %v3303 = vpop.f32.mrb[0].mxu0
    %3304 = vmatprep.mubr.bf16.mxu0 %v246
    %3305 = vmatmul.mubr.bf16.gmra.mrb[0].mxu0 %v245
    %v3306 = vpop.f32.mrb[0].mxu0
    %v3307 = vadd.f32 0.0, %v3306
    %v3308 = vpop.f32.mrb[0].mxu0
    %v3309 = vpop.f32.mrb[0].mxu0
    %v3310 = vadd.f32 0.0, %v3309
    %v3311 = vpop.f32.mrb[0].mxu0
    %3312 = vmatprep.mubr.bf16.mxu0 %v249
    %3313 = vmatmul.mubr.bf16.gmra.mrb[0].mxu0 %v248
    %v3314 = vpop.f32.mrb[0].mxu0
    %v3315 = vadd.f32 0.0, %v3314
    %v3316 = vpop.f32.mrb[0].mxu0
    %v3317 = vpop.f32.mrb[0].mxu0
    %v3318 = vadd.f32 0.0, %v3317
    %v3319 = vpop.f32.mrb[0].mxu0
    %3320 = vmatprep.mubr.bf16.mxu0 %v252
    %3321 = vmatmul.mubr.bf16.gmra.mrb[0].mxu0 %v251
    %v3322 = vpop.f32.mrb[0].mxu0
    %v3323 = vadd.f32 0.0, %v3322
    %v3324 = vpop.f32.mrb[0].mxu0
    %v3325 = vpop.f32.mrb[0].mxu0
    %v3326 = vadd.f32 0.0, %v3325
    %v3327 = vpop.f32.mrb[0].mxu0
    %3328 = vmatprep.mubr.bf16.mxu0 %v255
    %3329 = vmatmul.mubr.bf16.gmra.mrb[0].mxu0 %v254
    %v3330 = vpop.f32.mrb[0].mxu0
    %v3331 = vadd.f32 0.0, %v3330
    %v3332 = vpop.f32.mrb[0].mxu0
    %v3333 = vpop.f32.mrb[0].mxu0
    %v3334 = vadd.f32 0.0, %v3333
    %v3335 = vpop.f32.mrb[0].mxu0
    %3336 = vmatprep.mubr.bf16.mxu0 %v258
    %3337 = vmatmul.mubr.bf16.gmra.mrb[0].mxu0 %v257
    %v3338 = vpop.f32.mrb[0].mxu0
    %v3339 = vadd.f32 0.0, %v3338
    %v3340 = vpop.f32.mrb[0].mxu0
    %v3341 = vpop.f32.mrb[0].mxu0
    %v3342 = vadd.f32 0.0, %v3341
    %v3343 = vpop.f32.mrb[0].mxu0
    %3344 = vmatprep.mubr.bf16.mxu0 %v261
    %3345 = vmatmul.mubr.bf16.gmra.mrb[0].mxu0 %v260
    %v3346 = vpop.f32.mrb[0].mxu0
    %v3347 = vadd.f32 0.0, %v3346
    %v3348 = vpop.f32.mrb[0].mxu0
    %v3349 = vpop.f32.mrb[0].mxu0
    %v3350 = vadd.f32 0.0, %v3349
    %v3351 = vpop.f32.mrb[0].mxu0
    %3352 = vmatprep.mubr.bf16.mxu0 %v264
    %3353 = vmatmul.mubr.bf16.gmra.mrb[0].mxu0 %v263
    %v3354 = vpop.f32.mrb[0].mxu0
    %v3355 = vadd.f32 0.0, %v3354
    %v3356 = vpop.f32.mrb[0].mxu0
    %v3357 = vpop.f32.mrb[0].mxu0
    %v3358 = vadd.f32 0.0, %v3357
    %v3359 = vpop.f32.mrb[0].mxu0
    %3360 = vmatprep.mubr.bf16.mxu0 %v267
    %3361 = vmatmul.mubr.bf16.gmra.mrb[0].mxu0 %v266
    %v3362 = vpop.f32.mrb[0].mxu0
    %v3363 = vadd.f32 0.0, %v3362
    %v3364 = vpop.f32.mrb[0].mxu0
    %v3365 = vpop.f32.mrb[0].mxu0
    %v3366 = vadd.f32 0.0, %v3365
    %v3367 = vpop.f32.mrb[0].mxu0
    %3368 = vmatprep.mubr.bf16.mxu0 %v270
    %3369 = vmatmul.mubr.bf16.gmra.mrb[0].mxu0 %v269
    %v3370 = vpop.f32.mrb[0].mxu0
    %v3371 = vadd.f32 0.0, %v3370
    %v3372 = vpop.f32.mrb[0].mxu0
    %v3373 = vpop.f32.mrb[0].mxu0
    %v3374 = vadd.f32 0.0, %v3373
    %v3375 = vpop.f32.mrb[0].mxu0
    %3376 = vmatprep.mubr.bf16.mxu0 %v273
    %3377 = vmatmul.mubr.bf16.gmra.mrb[0].mxu0 %v272
    %v3378 = vpop.f32.mrb[0].mxu0
    %v3379 = vadd.f32 0.0, %v3378
    %v3380 = vpop.f32.mrb[0].mxu0
    %v3381 = vpop.f32.mrb[0].mxu0
    %v3382 = vadd.f32 0.0, %v3381
    %v3383 = vpop.f32.mrb[0].mxu0
    %3384 = vmatprep.mubr.bf16.mxu0 %v276
    %3385 = vmatmul.mubr.bf16.gmra.mrb[0].mxu0 %v275
    %v3386 = vpop.f32.mrb[0].mxu0
    %v3387 = vadd.f32 0.0, %v3386
    %v3388 = vpop.f32.mrb[0].mxu0
    %v3389 = vpop.f32.mrb[0].mxu0
    %v3390 = vadd.f32 0.0, %v3389
    %v3391 = vpop.f32.mrb[0].mxu0
    %3392 = vmatprep.mubr.bf16.mxu0 %v279
    %3393 = vmatmul.mubr.bf16.gmra.mrb[0].mxu0 %v278
    %v3394 = vpop.f32.mrb[0].mxu0
    %v3395 = vadd.f32 0.0, %v3394
    %v3396 = vpop.f32.mrb[0].mxu0
    %v3397 = vpop.f32.mrb[0].mxu0
    %v3398 = vadd.f32 0.0, %v3397
    %v3399 = vpop.f32.mrb[0].mxu0
    %3400 = vmatprep.mubr.bf16.mxu0 %v282
    %3401 = vmatmul.mubr.bf16.gmra.mrb[0].mxu0 %v281
    %v3402 = vpop.f32.mrb[0].mxu0
    %v3403 = vadd.f32 0.0, %v3402
    %v3404 = vpop.f32.mrb[0].mxu0
    %v3405 = vpop.f32.mrb[0].mxu0
    %v3406 = vadd.f32 0.0, %v3405
    %v3407 = vpop.f32.mrb[0].mxu0
    %3408 = vdwg.mxu0
    %3409 = vmatprep.subr.bf16.mxu0 0
    %3410 = vmatpush1.bf16.msra.mxu0 %v3145
    %3411 = vmatprep.subr.bf16.mxu0 0
    %3412 = vmatpush1.bf16.msra.mxu0 %v3147
    %3413 = vmatprep.subr.bf16.mxu0 0
    %3414 = vmatpush1.bf16.msra.mxu0 %v3149
    %3415 = vmatprep.subr.bf16.mxu0 0
    %3416 = vmatpush1.bf16.msra.mxu0 %v3151
    %3417 = vmatprep.subr.bf16.mxu0 0
    %3418 = vmatpush1.bf16.msra.mxu0 %v3153
    %3419 = vmatprep.subr.bf16.mxu0 0
    %3420 = vmatpush1.bf16.msra.mxu0 %v3155
    %3421 = vmatprep.subr.bf16.mxu0 0
    %3422 = vmatpush1.bf16.msra.mxu0 %v3157
    %3423 = vmatprep.subr.bf16.mxu0 0
    %3424 = vmatpush1.bf16.msra.mxu0 %v3159
    %3425 = vmatprep.subr.bf16.mxu0 0
    %3426 = vmatpush1.bf16.msra.mxu0 0
    %3427 = vmatprep.subr.bf16.mxu0 0
    %3428 = vmatpush1.bf16.msra.mxu0 0
    %3429 = vmatprep.subr.bf16.mxu0 0
    %3430 = vmatpush1.bf16.msra.mxu0 0
    %3431 = vmatprep.subr.bf16.mxu0 0
    %3432 = vmatpush1.bf16.msra.mxu0 0
    %3433 = vmatprep.subr.bf16.mxu0 0
    %3434 = vmatpush1.bf16.msra.mxu0 0
    %3435 = vmatprep.subr.bf16.mxu0 0
    %3436 = vmatpush1.bf16.msra.mxu0 0
    %3437 = vmatprep.subr.bf16.mxu0 0
    %3438 = vmatpush1.bf16.msra.mxu0 0
    %3439 = vmatprep.subr.bf16.mxu0 0
    %3440 = vmatpush1.bf16.msra.mxu0 0
    %3441 = vmatprep.mubr.bf16.mxu0 0
    %3442 = vmatmul.mubr.bf16.gmra.mrb[0].mxu0 %v214
    %v3443 = vpop.f32.mrb[0].mxu0
    %v3444 = vadd.f32 %v3219, %v3443
    %v3445 = vpop.f32.mrb[0].mxu0
    %v3446 = vpop.f32.mrb[0].mxu0
    %v3447 = vadd.f32 %v3222, %v3446
    %v3448 = vpop.f32.mrb[0].mxu0
    %3449 = vmatprep.mubr.bf16.mxu0 0
    %3450 = vmatmul.mubr.bf16.gmra.mrb[0].mxu0 %v217
    %v3451 = vpop.f32.mrb[0].mxu0
    %v3452 = vadd.f32 %v3227, %v3451
    %v3453 = vpop.f32.mrb[0].mxu0
    %v3454 = vpop.f32.mrb[0].mxu0
    %v3455 = vadd.f32 %v3230, %v3454
    %v3456 = vpop.f32.mrb[0].mxu0
    %3457 = vmatprep.mubr.bf16.mxu0 0
    %3458 = vmatmul.mubr.bf16.gmra.mrb[0].mxu0 %v220
    %v3459 = vpop.f32.mrb[0].mxu0
    %v3460 = vadd.f32 %v3235, %v3459
    %v3461 = vpop.f32.mrb[0].mxu0
    %v3462 = vpop.f32.mrb[0].mxu0
    %v3463 = vadd.f32 %v3238, %v3462
    %v3464 = vpop.f32.mrb[0].mxu0
    %3465 = vmatprep.mubr.bf16.mxu0 0
    %3466 = vmatmul.mubr.bf16.gmra.mrb[0].mxu0 %v223
    %v3467 = vpop.f32.mrb[0].mxu0
    %v3468 = vadd.f32 %v3243, %v3467
    %v3469 = vpop.f32.mrb[0].mxu0
    %v3470 = vpop.f32.mrb[0].mxu0
    %v3471 = vadd.f32 %v3246, %v3470
    %v3472 = vpop.f32.mrb[0].mxu0
    %3473 = vmatprep.mubr.bf16.mxu0 0
    %3474 = vmatmul.mubr.bf16.gmra.mrb[0].mxu0 %v226
    %v3475 = vpop.f32.mrb[0].mxu0
    %v3476 = vadd.f32 %v3251, %v3475
    %v3477 = vpop.f32.mrb[0].mxu0
    %v3478 = vpop.f32.mrb[0].mxu0
    %v3479 = vadd.f32 %v3254, %v3478
    %v3480 = vpop.f32.mrb[0].mxu0
    %3481 = vmatprep.mubr.bf16.mxu0 0
    %3482 = vmatmul.mubr.bf16.gmra.mrb[0].mxu0 %v229
    %v3483 = vpop.f32.mrb[0].mxu0
    %v3484 = vadd.f32 %v3259, %v3483
    %v3485 = vpop.f32.mrb[0].mxu0
    %v3486 = vpop.f32.mrb[0].mxu0
    %v3487 = vadd.f32 %v3262, %v3486
    %v3488 = vpop.f32.mrb[0].mxu0
    %3489 = vmatprep.mubr.bf16.mxu0 0
    %3490 = vmatmul.mubr.bf16.gmra.mrb[0].mxu0 %v232
    %v3491 = vpop.f32.mrb[0].mxu0
    %v3492 = vadd.f32 %v3267, %v3491
    %v3493 = vpop.f32.mrb[0].mxu0
    %v3494 = vpop.f32.mrb[0].mxu0
    %v3495 = vadd.f32 %v3270, %v3494
    %v3496 = vpop.f32.mrb[0].mxu0
    %3497 = vmatprep.mubr.bf16.mxu0 0
    %3498 = vmatmul.mubr.bf16.gmra.mrb[0].mxu0 %v235
    %v3499 = vpop.f32.mrb[0].mxu0
    %v3500 = vadd.f32 %v3275, %v3499
    %v3501 = vpop.f32.mrb[0].mxu0
    %v3502 = vpop.f32.mrb[0].mxu0
    %v3503 = vadd.f32 %v3278, %v3502
    %v3504 = vpop.f32.mrb[0].mxu0
    %3505 = vmatprep.mubr.bf16.mxu0 0
    %3506 = vmatmul.mubr.bf16.gmra.mrb[0].mxu0 %v238
    %v3507 = vpop.f32.mrb[0].mxu0
    %v3508 = vadd.f32 %v3283, %v3507
    %v3509 = vpop.f32.mrb[0].mxu0
    %v3510 = vpop.f32.mrb[0].mxu0
    %v3511 = vadd.f32 %v3286, %v3510
    %v3512 = vpop.f32.mrb[0].mxu0
    %3513 = vmatprep.mubr.bf16.mxu0 0
    %3514 = vmatmul.mubr.bf16.gmra.mrb[0].mxu0 %v241
    %v3515 = vpop.f32.mrb[0].mxu0
    %v3516 = vadd.f32 %v3291, %v3515
    %v3517 = vpop.f32.mrb[0].mxu0
    %v3518 = vpop.f32.mrb[0].mxu0
    %v3519 = vadd.f32 %v3294, %v3518
    %v3520 = vpop.f32.mrb[0].mxu0
    %3521 = vmatprep.mubr.bf16.mxu0 0
    %3522 = vmatmul.mubr.bf16.gmra.mrb[0].mxu0 %v244
    %v3523 = vpop.f32.mrb[0].mxu0
    %v3524 = vadd.f32 %v3299, %v3523
    %v3525 = vpop.f32.mrb[0].mxu0
    %v3526 = vpop.f32.mrb[0].mxu0
    %v3527 = vadd.f32 %v3302, %v3526
    %v3528 = vpop.f32.mrb[0].mxu0
    %3529 = vmatprep.mubr.bf16.mxu0 0
    %3530 = vmatmul.mubr.bf16.gmra.mrb[0].mxu0 %v247
    %v3531 = vpop.f32.mrb[0].mxu0
    %v3532 = vadd.f32 %v3307, %v3531
    %v3533 = vpop.f32.mrb[0].mxu0
    %v3534 = vpop.f32.mrb[0].mxu0
    %v3535 = vadd.f32 %v3310, %v3534
    %v3536 = vpop.f32.mrb[0].mxu0
    %3537 = vmatprep.mubr.bf16.mxu0 0
    %3538 = vmatmul.mubr.bf16.gmra.mrb[0].mxu0 %v250
    %v3539 = vpop.f32.mrb[0].mxu0
    %v3540 = vadd.f32 %v3315, %v3539
    %v3541 = vpop.f32.mrb[0].mxu0
    %v3542 = vpop.f32.mrb[0].mxu0
    %v3543 = vadd.f32 %v3318, %v3542
    %v3544 = vpop.f32.mrb[0].mxu0
    %3545 = vmatprep.mubr.bf16.mxu0 0
    %3546 = vmatmul.mubr.bf16.gmra.mrb[0].mxu0 %v253
    %v3547 = vpop.f32.mrb[0].mxu0
    %v3548 = vadd.f32 %v3323, %v3547
    %v3549 = vpop.f32.mrb[0].mxu0
    %v3550 = vpop.f32.mrb[0].mxu0
    %v3551 = vadd.f32 %v3326, %v3550
    %v3552 = vpop.f32.mrb[0].mxu0
    %3553 = vmatprep.mubr.bf16.mxu0 0
    %3554 = vmatmul.mubr.bf16.gmra.mrb[0].mxu0 %v256
    %v3555 = vpop.f32.mrb[0].mxu0
    %v3556 = vadd.f32 %v3331, %v3555
    %v3557 = vpop.f32.mrb[0].mxu0
    %v3558 = vpop.f32.mrb[0].mxu0
    %v3559 = vadd.f32 %v3334, %v3558
    %v3560 = vpop.f32.mrb[0].mxu0
    %3561 = vmatprep.mubr.bf16.mxu0 0
    %3562 = vmatmul.mubr.bf16.gmra.mrb[0].mxu0 %v259
    %v3563 = vpop.f32.mrb[0].mxu0
    %v3564 = vadd.f32 %v3339, %v3563
    %v3565 = vpop.f32.mrb[0].mxu0
    %v3566 = vpop.f32.mrb[0].mxu0
    %v3567 = vadd.f32 %v3342, %v3566
    %v3568 = vpop.f32.mrb[0].mxu0
    %3569 = vmatprep.mubr.bf16.mxu0 0
    %3570 = vmatmul.mubr.bf16.gmra.mrb[0].mxu0 %v262
    %v3571 = vpop.f32.mrb[0].mxu0
    %v3572 = vadd.f32 %v3347, %v3571
    %v3573 = vpop.f32.mrb[0].mxu0
    %v3574 = vpop.f32.mrb[0].mxu0
    %v3575 = vadd.f32 %v3350, %v3574
    %v3576 = vpop.f32.mrb[0].mxu0
    %3577 = vmatprep.mubr.bf16.mxu0 0
    %3578 = vmatmul.mubr.bf16.gmra.mrb[0].mxu0 %v265
    %v3579 = vpop.f32.mrb[0].mxu0
    %v3580 = vadd.f32 %v3355, %v3579
    %v3581 = vpop.f32.mrb[0].mxu0
    %v3582 = vpop.f32.mrb[0].mxu0
    %v3583 = vadd.f32 %v3358, %v3582
    %v3584 = vpop.f32.mrb[0].mxu0
    %3585 = vmatprep.mubr.bf16.mxu0 0
    %3586 = vmatmul.mubr.bf16.gmra.mrb[0].mxu0 %v268
    %v3587 = vpop.f32.mrb[0].mxu0
    %v3588 = vadd.f32 %v3363, %v3587
    %v3589 = vpop.f32.mrb[0].mxu0
    %v3590 = vpop.f32.mrb[0].mxu0
    %v3591 = vadd.f32 %v3366, %v3590
    %v3592 = vpop.f32.mrb[0].mxu0
    %3593 = vmatprep.mubr.bf16.mxu0 0
    %3594 = vmatmul.mubr.bf16.gmra.mrb[0].mxu0 %v271
    %v3595 = vpop.f32.mrb[0].mxu0
    %v3596 = vadd.f32 %v3371, %v3595
    %v3597 = vpop.f32.mrb[0].mxu0
    %v3598 = vpop.f32.mrb[0].mxu0
    %v3599 = vadd.f32 %v3374, %v3598
    %v3600 = vpop.f32.mrb[0].mxu0
    %3601 = vmatprep.mubr.bf16.mxu0 0
    %3602 = vmatmul.mubr.bf16.gmra.mrb[0].mxu0 %v274
    %v3603 = vpop.f32.mrb[0].mxu0
    %v3604 = vadd.f32 %v3379, %v3603
    %v3605 = vpop.f32.mrb[0].mxu0
    %v3606 = vpop.f32.mrb[0].mxu0
    %v3607 = vadd.f32 %v3382, %v3606
    %v3608 = vpop.f32.mrb[0].mxu0
    %3609 = vmatprep.mubr.bf16.mxu0 0
    %3610 = vmatmul.mubr.bf16.gmra.mrb[0].mxu0 %v277
    %v3611 = vpop.f32.mrb[0].mxu0
    %v3612 = vadd.f32 %v3387, %v3611
    %v3613 = vpop.f32.mrb[0].mxu0
    %v3614 = vpop.f32.mrb[0].mxu0
    %v3615 = vadd.f32 %v3390, %v3614
    %v3616 = vpop.f32.mrb[0].mxu0
    %3617 = vmatprep.mubr.bf16.mxu0 0
    %3618 = vmatmul.mubr.bf16.gmra.mrb[0].mxu0 %v280
    %v3619 = vpop.f32.mrb[0].mxu0
    %v3620 = vadd.f32 %v3395, %v3619
    %v3621 = vpop.f32.mrb[0].mxu0
    %v3622 = vpop.f32.mrb[0].mxu0
    %v3623 = vadd.f32 %v3398, %v3622
    %v3624 = vpop.f32.mrb[0].mxu0
    %3625 = vmatprep.mubr.bf16.mxu0 0
    %3626 = vmatmul.mubr.bf16.gmra.mrb[0].mxu0 %v283
    %v3627 = vpop.f32.mrb[0].mxu0
    %v3628 = vadd.f32 %v3403, %v3627
    %v3629 = vpop.f32.mrb[0].mxu0
    %v3630 = vpop.f32.mrb[0].mxu0
    %v3631 = vadd.f32 %v3406, %v3630
    %v3632 = vpop.f32.mrb[0].mxu0
    %3633 = vdwg.mxu0
    %v3634 = vld [vmem:[%s7] sm:$0xff]
    %v3635 = vld [vmem:[%s7 + $0x8] sm:$0xff]
    %v3636 = vld [vmem:[%s7 + $0x10] sm:$0xff]
    %v3637 = vld [vmem:[%s7 + $0x18] sm:$0xff]
    %v3638 = vld [vmem:[%s7 + $0x20] sm:$0xff]
    %v3639 = vld [vmem:[%s7 + $0x28] sm:$0xff]
    %v3640 = vld [vmem:[%s7 + $0x30] sm:$0xff]
    %v3641 = vld [vmem:[%s7 + $0x38] sm:$0xff]
    %v3642 = vld [vmem:[%s7 + $0x40] sm:$0xff]
    %v3643 = vld [vmem:[%s7 + $0x48] sm:$0xff]
    %v3644 = vld [vmem:[%s7 + $0x50] sm:$0xff]
    %v3645 = vld [vmem:[%s7 + $0x58] sm:$0xff]
    %3694 = vrot.lane.b32.xlu0 %v2566, 96
    %v3695 = vpop.permute.xlu0 %3694
    %3696 = vrot.lane.b32.xlu0 %v2567, 96
    %v3697 = vpop.permute.xlu0 %3696
    %3698 = vrot.lane.b32.xlu0 %v2568, 96
    %v3699 = vpop.permute.xlu0 %3698
    %3700 = vrot.lane.b32.xlu0 %v2569, 96
    %v3701 = vpop.permute.xlu0 %3700
    %3702 = vrot.lane.b32.xlu0 %v2570, 96
    %v3703 = vpop.permute.xlu0 %3702
    %3704 = vrot.lane.b32.xlu0 %v2571, 96
    %v3705 = vpop.permute.xlu0 %3704
    %3706 = vrot.lane.b32.xlu0 %v2572, 96
    %v3707 = vpop.permute.xlu0 %3706
    %3708 = vrot.lane.b32.xlu0 %v2573, 96
    %v3709 = vpop.permute.xlu0 %3708
    %3710 = vrot.lane.b32.xlu0 %v2574, 96
    %v3711 = vpop.permute.xlu0 %3710
    %3712 = vrot.lane.b32.xlu0 %v2575, 96
    %v3713 = vpop.permute.xlu0 %3712
    %3714 = vrot.lane.b32.xlu0 %v2576, 96
    %v3715 = vpop.permute.xlu0 %3714
    %3716 = vrot.lane.b32.xlu0 %v2577, 96
    %v3717 = vpop.permute.xlu0 %3716
    %3718 = vrot.lane.b32.xlu0 %v2578, 96
    %v3719 = vpop.permute.xlu0 %3718
    %3720 = vrot.lane.b32.xlu0 %v2579, 96
    %v3721 = vpop.permute.xlu0 %3720
    %3722 = vrot.lane.b32.xlu0 %v2580, 96
    %v3723 = vpop.permute.xlu0 %3722
    %3724 = vrot.lane.b32.xlu0 %v2581, 96
    %v3725 = vpop.permute.xlu0 %3724
    %3726 = vrot.lane.b32.xlu0 %v2582, 96
    %v3727 = vpop.permute.xlu0 %3726
    %3728 = vrot.lane.b32.xlu0 %v2583, 96
    %v3729 = vpop.permute.xlu0 %3728
    %3730 = vrot.lane.b32.xlu0 %v2584, 96
    %v3731 = vpop.permute.xlu0 %3730
    %3732 = vrot.lane.b32.xlu0 %v2585, 96
    %v3733 = vpop.permute.xlu0 %3732
    %3734 = vrot.lane.b32.xlu0 %v2586, 96
    %v3735 = vpop.permute.xlu0 %3734
    %3736 = vrot.lane.b32.xlu0 %v2587, 96
    %v3737 = vpop.permute.xlu0 %3736
    %3738 = vrot.lane.b32.xlu0 %v2588, 96
    %v3739 = vpop.permute.xlu0 %3738
    %3740 = vrot.lane.b32.xlu0 %v2589, 96
    %v3741 = vpop.permute.xlu0 %3740
    %3742 = vrot.lane.b32.xlu0 %v2590, 96
    %v3743 = vpop.permute.xlu0 %3742
    %3744 = vrot.lane.b32.xlu0 %v2591, 96
    %v3745 = vpop.permute.xlu0 %3744
    %3746 = vrot.lane.b32.xlu0 %v2592, 96
    %v3747 = vpop.permute.xlu0 %3746
    %3748 = vrot.lane.b32.xlu0 %v2593, 96
    %v3749 = vpop.permute.xlu0 %3748
    %3750 = vrot.lane.b32.xlu0 %v2594, 96
    %v3751 = vpop.permute.xlu0 %3750
    %3752 = vrot.lane.b32.xlu0 %v2595, 96
    %v3753 = vpop.permute.xlu0 %3752
    %3754 = vrot.lane.b32.xlu0 %v2596, 96
    %v3755 = vpop.permute.xlu0 %3754
    %3756 = vrot.lane.b32.xlu0 %v2597, 96
    %v3757 = vpop.permute.xlu0 %3756
    %3758 = vrot.lane.b32.xlu0 %v2598, 96
    %v3759 = vpop.permute.xlu0 %3758
    %3760 = vrot.lane.b32.xlu0 %v2599, 96
    %v3761 = vpop.permute.xlu0 %3760
    %3762 = vrot.lane.b32.xlu0 %v2600, 96
    %v3763 = vpop.permute.xlu0 %3762
    %3764 = vrot.lane.b32.xlu0 %v2601, 96
    %v3765 = vpop.permute.xlu0 %3764
    %3766 = vrot.lane.b32.xlu0 %v2602, 96
    %v3767 = vpop.permute.xlu0 %3766
    %3768 = vrot.lane.b32.xlu0 %v2603, 96
    %v3769 = vpop.permute.xlu0 %3768
    %3770 = vrot.lane.b32.xlu0 %v2604, 96
    %v3771 = vpop.permute.xlu0 %3770
    %3772 = vrot.lane.b32.xlu0 %v2605, 96
    %v3773 = vpop.permute.xlu0 %3772
    %3774 = vrot.lane.b32.xlu0 %v2606, 96
    %v3775 = vpop.permute.xlu0 %3774
    %3776 = vrot.lane.b32.xlu0 %v2607, 96
    %v3777 = vpop.permute.xlu0 %3776
    %3778 = vrot.lane.b32.xlu0 %v2608, 96
    %v3779 = vpop.permute.xlu0 %3778
    %3780 = vrot.lane.b32.xlu0 %v2609, 96
    %v3781 = vpop.permute.xlu0 %3780
    %3782 = vrot.lane.b32.xlu0 %v2610, 96
    %v3783 = vpop.permute.xlu0 %3782
    %3784 = vrot.lane.b32.xlu0 %v2611, 96
    %v3785 = vpop.permute.xlu0 %3784
    %3786 = vrot.lane.b32.xlu0 %v2612, 96
    %v3787 = vpop.permute.xlu0 %3786
    %3788 = vrot.lane.b32.xlu0 %v2613, 96
    %v3789 = vpop.permute.xlu0 %3788
    %v3790 = vsel %vm343, %v3695, 0
    %v3792 = vsel %vm343, %v3697, 0
    %v3794 = vsel %vm343, %v3699, 0
    %v3796 = vsel %vm343, %v3701, 0
    %v3798 = vsel %vm343, %v3703, 0
    %v3800 = vsel %vm343, %v3705, 0
    %v3802 = vsel %vm343, %v3707, 0
    %v3804 = vsel %vm343, %v3709, 0
    %v3806 = vsel %vm343, %v3711, 0
    %v3808 = vsel %vm343, %v3713, 0
    %v3810 = vsel %vm343, %v3715, 0
    %v3812 = vsel %vm343, %v3717, 0
    %v3814 = vsel %vm343, %v3719, 0
    %v3816 = vsel %vm343, %v3721, 0
    %v3818 = vsel %vm343, %v3723, 0
    %v3820 = vsel %vm343, %v3725, 0
    %v3822 = vsel %vm343, %v3727, 0
    %v3824 = vsel %vm343, %v3729, 0
    %v3826 = vsel %vm343, %v3731, 0
    %v3828 = vsel %vm343, %v3733, 0
    %v3830 = vsel %vm343, %v3735, 0
    %v3832 = vsel %vm343, %v3737, 0
    %v3834 = vsel %vm343, %v3739, 0
    %v3836 = vsel %vm343, %v3741, 0
    %v3838 = vsel %vm343, %v3743, 0
    %v3840 = vsel %vm343, %v3745, 0
    %v3842 = vsel %vm343, %v3747, 0
    %v3844 = vsel %vm343, %v3749, 0
    %v3846 = vsel %vm343, %v3751, 0
    %v3848 = vsel %vm343, %v3753, 0
    %v3850 = vsel %vm343, %v3755, 0
    %v3852 = vsel %vm343, %v3757, 0
    %v3854 = vsel %vm343, %v3759, 0
    %v3856 = vsel %vm343, %v3761, 0
    %v3858 = vsel %vm343, %v3763, 0
    %v3860 = vsel %vm343, %v3765, 0
    %v3862 = vsel %vm343, %v3767, 0
    %v3864 = vsel %vm343, %v3769, 0
    %v3866 = vsel %vm343, %v3771, 0
    %v3868 = vsel %vm343, %v3773, 0
    %v3870 = vsel %vm343, %v3775, 0
    %v3872 = vsel %vm343, %v3777, 0
    %v3874 = vsel %vm343, %v3779, 0
    %v3876 = vsel %vm343, %v3781, 0
    %v3878 = vsel %vm343, %v3783, 0
    %v3880 = vsel %vm343, %v3785, 0
    %v3882 = vsel %vm343, %v3787, 0
    %v3884 = vsel %vm343, %v3789, 0
    %3886 = vmatprep.subr.mxu0 0.0
    %3887 = vmatpush1.msra.mxu0 %v3638
    %3888 = vmatprep.subr.mxu0 0.0
    %3889 = vmatpush1.msra.mxu0 %v3639
    %3890 = vmatprep.subr.mxu0 0.0
    %3891 = vmatpush1.msra.mxu0 %v3640
    %3892 = vmatprep.subr.mxu0 0.0
    %3893 = vmatpush1.msra.mxu0 %v3641
    %3894 = vmatprep.subr.mxu0 0.0
    %3895 = vmatpush1.msra.mxu0 0.0
    %3896 = vmatprep.subr.mxu0 0.0
    %3897 = vmatpush1.msra.mxu0 0.0
    %3898 = vmatprep.subr.mxu0 0.0
    %3899 = vmatpush1.msra.mxu0 0.0
    %3900 = vmatprep.subr.mxu0 0.0
    %3901 = vmatpush1.msra.mxu0 0.0
    %3902 = vmatprep.subr.mxu0 0.0
    %3903 = vmatpush1.msra.mxu0 0.0
    %3904 = vmatprep.subr.mxu0 0.0
    %3905 = vmatpush1.msra.mxu0 0.0
    %3906 = vmatprep.subr.mxu0 0.0
    %3907 = vmatpush1.msra.mxu0 0.0
    %3908 = vmatprep.subr.mxu0 0.0
    %3909 = vmatpush1.msra.mxu0 0.0
    %3910 = vmatprep.subr.mxu0 0.0
    %3911 = vmatpush1.msra.mxu0 0.0
    %3912 = vmatprep.subr.mxu0 0.0
    %3913 = vmatpush1.msra.mxu0 0.0
    %3914 = vmatprep.subr.mxu0 0.0
    %3915 = vmatpush1.msra.mxu0 0.0
    %3916 = vmatprep.subr.mxu0 0.0
    %3917 = vmatpush1.msra.mxu0 0.0
    %3918 = vmatprep.subr.mxu0 0.0
    %3919 = vmatpush1.msra.mxu0 0.0
    %3920 = vmatprep.subr.mxu0 0.0
    %3921 = vmatpush1.msra.mxu0 0.0
    %3922 = vmatprep.subr.mxu0 0.0
    %3923 = vmatpush1.msra.mxu0 0.0
    %3924 = vmatprep.subr.mxu0 0.0
    %3925 = vmatpush1.msra.mxu0 0.0
    %3926 = vmatprep.subr.mxu0 0.0
    %3927 = vmatpush1.msra.mxu0 0.0
    %3928 = vmatprep.subr.mxu0 0.0
    %3929 = vmatpush1.msra.mxu0 0.0
    %3930 = vmatprep.subr.mxu0 0.0
    %3931 = vmatpush1.msra.mxu0 0.0
    %3932 = vmatprep.subr.mxu0 0.0
    %3933 = vmatpush1.msra.mxu0 0.0
    %3934 = vmatprep.subr.mxu0 0.0
    %3935 = vmatpush1.msra.mxu0 0.0
    %3936 = vmatprep.subr.mxu0 0.0
    %3937 = vmatpush1.msra.mxu0 0.0
    %3938 = vmatprep.subr.mxu0 0.0
    %3939 = vmatpush1.msra.mxu0 0.0
    %3940 = vmatprep.subr.mxu0 0.0
    %3941 = vmatpush1.msra.mxu0 0.0
    %3942 = vmatprep.subr.mxu0 0.0
    %3943 = vmatpush1.msra.mxu0 0.0
    %3944 = vmatprep.subr.mxu0 0.0
    %3945 = vmatpush1.msra.mxu0 0.0
    %3946 = vmatprep.subr.mxu0 0.0
    %3947 = vmatpush1.msra.mxu0 0.0
    %3948 = vmatprep.subr.mxu0 0.0
    %3949 = vmatpush1.msra.mxu0 0.0
    %3950 = vmatprep.mubr.f32.mxu0 0.0
    %3951 = vmatmul.mubr.f32.gmra.mrb[0].mxu0 %v3790
    %v3952 = vpop.f32.mrb[0].mxu0
    %v3953 = vadd.f32 0.0, %v3952
    %v3954 = vpop.f32.mrb[0].mxu0
    %3955 = vmatprep.mubr.f32.mxu0 0.0
    %3956 = vmatmul.mubr.f32.gmra.mrb[0].mxu0 %v3792
    %v3957 = vpop.f32.mrb[0].mxu0
    %v3958 = vadd.f32 0.0, %v3957
    %v3959 = vpop.f32.mrb[0].mxu0
    %3960 = vmatprep.mubr.f32.mxu0 0.0
    %3961 = vmatmul.mubr.f32.gmra.mrb[0].mxu0 %v3794
    %v3962 = vpop.f32.mrb[0].mxu0
    %v3963 = vadd.f32 0.0, %v3962
    %v3964 = vpop.f32.mrb[0].mxu0
    %3965 = vmatprep.mubr.f32.mxu0 0.0
    %3966 = vmatmul.mubr.f32.gmra.mrb[0].mxu0 %v3796
    %v3967 = vpop.f32.mrb[0].mxu0
    %v3968 = vadd.f32 0.0, %v3967
    %v3969 = vpop.f32.mrb[0].mxu0
    %3970 = vmatprep.mubr.f32.mxu0 0.0
    %3971 = vmatmul.mubr.f32.gmra.mrb[0].mxu0 %v3798
    %v3972 = vpop.f32.mrb[0].mxu0
    %v3973 = vadd.f32 0.0, %v3972
    %v3974 = vpop.f32.mrb[0].mxu0
    %3975 = vmatprep.mubr.f32.mxu0 0.0
    %3976 = vmatmul.mubr.f32.gmra.mrb[0].mxu0 %v3800
    %v3977 = vpop.f32.mrb[0].mxu0
    %v3978 = vadd.f32 0.0, %v3977
    %v3979 = vpop.f32.mrb[0].mxu0
    %3980 = vmatprep.mubr.f32.mxu0 0.0
    %3981 = vmatmul.mubr.f32.gmra.mrb[0].mxu0 %v3802
    %v3982 = vpop.f32.mrb[0].mxu0
    %v3983 = vadd.f32 0.0, %v3982
    %v3984 = vpop.f32.mrb[0].mxu0
    %3985 = vmatprep.mubr.f32.mxu0 0.0
    %3986 = vmatmul.mubr.f32.gmra.mrb[0].mxu0 %v3804
    %v3987 = vpop.f32.mrb[0].mxu0
    %v3988 = vadd.f32 0.0, %v3987
    %v3989 = vpop.f32.mrb[0].mxu0
    %3990 = vmatprep.mubr.f32.mxu0 0.0
    %3991 = vmatmul.mubr.f32.gmra.mrb[0].mxu0 %v3806
    %v3992 = vpop.f32.mrb[0].mxu0
    %v3993 = vadd.f32 0.0, %v3992
    %v3994 = vpop.f32.mrb[0].mxu0
    %3995 = vmatprep.mubr.f32.mxu0 0.0
    %3996 = vmatmul.mubr.f32.gmra.mrb[0].mxu0 %v3808
    %v3997 = vpop.f32.mrb[0].mxu0
    %v3998 = vadd.f32 0.0, %v3997
    %v3999 = vpop.f32.mrb[0].mxu0
    %4000 = vmatprep.mubr.f32.mxu0 0.0
    %4001 = vmatmul.mubr.f32.gmra.mrb[0].mxu0 %v3810
    %v4002 = vpop.f32.mrb[0].mxu0
    %v4003 = vadd.f32 0.0, %v4002
    %v4004 = vpop.f32.mrb[0].mxu0
    %4005 = vmatprep.mubr.f32.mxu0 0.0
    %4006 = vmatmul.mubr.f32.gmra.mrb[0].mxu0 %v3812
    %v4007 = vpop.f32.mrb[0].mxu0
    %v4008 = vadd.f32 0.0, %v4007
    %v4009 = vpop.f32.mrb[0].mxu0
    %4010 = vmatprep.mubr.f32.mxu0 0.0
    %4011 = vmatmul.mubr.f32.gmra.mrb[0].mxu0 %v3814
    %v4012 = vpop.f32.mrb[0].mxu0
    %v4013 = vadd.f32 0.0, %v4012
    %v4014 = vpop.f32.mrb[0].mxu0
    %4015 = vmatprep.mubr.f32.mxu0 0.0
    %4016 = vmatmul.mubr.f32.gmra.mrb[0].mxu0 %v3816
    %v4017 = vpop.f32.mrb[0].mxu0
    %v4018 = vadd.f32 0.0, %v4017
    %v4019 = vpop.f32.mrb[0].mxu0
    %4020 = vmatprep.mubr.f32.mxu0 0.0
    %4021 = vmatmul.mubr.f32.gmra.mrb[0].mxu0 %v3818
    %v4022 = vpop.f32.mrb[0].mxu0
    %v4023 = vadd.f32 0.0, %v4022
    %v4024 = vpop.f32.mrb[0].mxu0
    %4025 = vmatprep.mubr.f32.mxu0 0.0
    %4026 = vmatmul.mubr.f32.gmra.mrb[0].mxu0 %v3820
    %v4027 = vpop.f32.mrb[0].mxu0
    %v4028 = vadd.f32 0.0, %v4027
    %v4029 = vpop.f32.mrb[0].mxu0
    %4030 = vmatprep.mubr.f32.mxu0 0.0
    %4031 = vmatmul.mubr.f32.gmra.mrb[0].mxu0 %v3822
    %v4032 = vpop.f32.mrb[0].mxu0
    %v4033 = vadd.f32 0.0, %v4032
    %v4034 = vpop.f32.mrb[0].mxu0
    %4035 = vmatprep.mubr.f32.mxu0 0.0
    %4036 = vmatmul.mubr.f32.gmra.mrb[0].mxu0 %v3824
    %v4037 = vpop.f32.mrb[0].mxu0
    %v4038 = vadd.f32 0.0, %v4037
    %v4039 = vpop.f32.mrb[0].mxu0
    %4040 = vmatprep.mubr.f32.mxu0 0.0
    %4041 = vmatmul.mubr.f32.gmra.mrb[0].mxu0 %v3826
    %v4042 = vpop.f32.mrb[0].mxu0
    %v4043 = vadd.f32 0.0, %v4042
    %v4044 = vpop.f32.mrb[0].mxu0
    %4045 = vmatprep.mubr.f32.mxu0 0.0
    %4046 = vmatmul.mubr.f32.gmra.mrb[0].mxu0 %v3828
    %v4047 = vpop.f32.mrb[0].mxu0
    %v4048 = vadd.f32 0.0, %v4047
    %v4049 = vpop.f32.mrb[0].mxu0
    %4050 = vmatprep.mubr.f32.mxu0 0.0
    %4051 = vmatmul.mubr.f32.gmra.mrb[0].mxu0 %v3830
    %v4052 = vpop.f32.mrb[0].mxu0
    %v4053 = vadd.f32 0.0, %v4052
    %v4054 = vpop.f32.mrb[0].mxu0
    %4055 = vmatprep.mubr.f32.mxu0 0.0
    %4056 = vmatmul.mubr.f32.gmra.mrb[0].mxu0 %v3832
    %v4057 = vpop.f32.mrb[0].mxu0
    %v4058 = vadd.f32 0.0, %v4057
    %v4059 = vpop.f32.mrb[0].mxu0
    %4060 = vmatprep.mubr.f32.mxu0 0.0
    %4061 = vmatmul.mubr.f32.gmra.mrb[0].mxu0 %v3834
    %v4062 = vpop.f32.mrb[0].mxu0
    %v4063 = vadd.f32 0.0, %v4062
    %v4064 = vpop.f32.mrb[0].mxu0
    %4065 = vmatprep.mubr.f32.mxu0 0.0
    %4066 = vmatmul.mubr.f32.gmra.mrb[0].mxu0 %v3836
    %v4067 = vpop.f32.mrb[0].mxu0
    %v4068 = vadd.f32 0.0, %v4067
    %v4069 = vpop.f32.mrb[0].mxu0
    %4070 = vmatprep.mubr.f32.mxu0 0.0
    %4071 = vmatmul.mubr.f32.gmra.mrb[0].mxu0 %v3838
    %v4072 = vpop.f32.mrb[0].mxu0
    %v4073 = vadd.f32 0.0, %v4072
    %v4074 = vpop.f32.mrb[0].mxu0
    %4075 = vmatprep.mubr.f32.mxu0 0.0
    %4076 = vmatmul.mubr.f32.gmra.mrb[0].mxu0 %v3840
    %v4077 = vpop.f32.mrb[0].mxu0
    %v4078 = vadd.f32 0.0, %v4077
    %v4079 = vpop.f32.mrb[0].mxu0
    %4080 = vmatprep.mubr.f32.mxu0 0.0
    %4081 = vmatmul.mubr.f32.gmra.mrb[0].mxu0 %v3842
    %v4082 = vpop.f32.mrb[0].mxu0
    %v4083 = vadd.f32 0.0, %v4082
    %v4084 = vpop.f32.mrb[0].mxu0
    %4085 = vmatprep.mubr.f32.mxu0 0.0
    %4086 = vmatmul.mubr.f32.gmra.mrb[0].mxu0 %v3844
    %v4087 = vpop.f32.mrb[0].mxu0
    %v4088 = vadd.f32 0.0, %v4087
    %v4089 = vpop.f32.mrb[0].mxu0
    %4090 = vmatprep.mubr.f32.mxu0 0.0
    %4091 = vmatmul.mubr.f32.gmra.mrb[0].mxu0 %v3846
    %v4092 = vpop.f32.mrb[0].mxu0
    %v4093 = vadd.f32 0.0, %v4092
    %v4094 = vpop.f32.mrb[0].mxu0
    %4095 = vmatprep.mubr.f32.mxu0 0.0
    %4096 = vmatmul.mubr.f32.gmra.mrb[0].mxu0 %v3848
    %v4097 = vpop.f32.mrb[0].mxu0
    %v4098 = vadd.f32 0.0, %v4097
    %v4099 = vpop.f32.mrb[0].mxu0
    %4100 = vmatprep.mubr.f32.mxu0 0.0
    %4101 = vmatmul.mubr.f32.gmra.mrb[0].mxu0 %v3850
    %v4102 = vpop.f32.mrb[0].mxu0
    %v4103 = vadd.f32 0.0, %v4102
    %v4104 = vpop.f32.mrb[0].mxu0
    %4105 = vmatprep.mubr.f32.mxu0 0.0
    %4106 = vmatmul.mubr.f32.gmra.mrb[0].mxu0 %v3852
    %v4107 = vpop.f32.mrb[0].mxu0
    %v4108 = vadd.f32 0.0, %v4107
    %v4109 = vpop.f32.mrb[0].mxu0
    %4110 = vmatprep.mubr.f32.mxu0 0.0
    %4111 = vmatmul.mubr.f32.gmra.mrb[0].mxu0 %v3854
    %v4112 = vpop.f32.mrb[0].mxu0
    %v4113 = vadd.f32 0.0, %v4112
    %v4114 = vpop.f32.mrb[0].mxu0
    %4115 = vmatprep.mubr.f32.mxu0 0.0
    %4116 = vmatmul.mubr.f32.gmra.mrb[0].mxu0 %v3856
    %v4117 = vpop.f32.mrb[0].mxu0
    %v4118 = vadd.f32 0.0, %v4117
    %v4119 = vpop.f32.mrb[0].mxu0
    %4120 = vmatprep.mubr.f32.mxu0 0.0
    %4121 = vmatmul.mubr.f32.gmra.mrb[0].mxu0 %v3858
    %v4122 = vpop.f32.mrb[0].mxu0
    %v4123 = vadd.f32 0.0, %v4122
    %v4124 = vpop.f32.mrb[0].mxu0
    %4125 = vmatprep.mubr.f32.mxu0 0.0
    %4126 = vmatmul.mubr.f32.gmra.mrb[0].mxu0 %v3860
    %v4127 = vpop.f32.mrb[0].mxu0
    %v4128 = vadd.f32 0.0, %v4127
    %v4129 = vpop.f32.mrb[0].mxu0
    %4130 = vmatprep.mubr.f32.mxu0 0.0
    %4131 = vmatmul.mubr.f32.gmra.mrb[0].mxu0 %v3862
    %v4132 = vpop.f32.mrb[0].mxu0
    %v4133 = vadd.f32 0.0, %v4132
    %v4134 = vpop.f32.mrb[0].mxu0
    %4135 = vmatprep.mubr.f32.mxu0 0.0
    %4136 = vmatmul.mubr.f32.gmra.mrb[0].mxu0 %v3864
    %v4137 = vpop.f32.mrb[0].mxu0
    %v4138 = vadd.f32 0.0, %v4137
    %v4139 = vpop.f32.mrb[0].mxu0
    %4140 = vmatprep.mubr.f32.mxu0 0.0
    %4141 = vmatmul.mubr.f32.gmra.mrb[0].mxu0 %v3866
    %v4142 = vpop.f32.mrb[0].mxu0
    %v4143 = vadd.f32 0.0, %v4142
    %v4144 = vpop.f32.mrb[0].mxu0
    %4145 = vmatprep.mubr.f32.mxu0 0.0
    %4146 = vmatmul.mubr.f32.gmra.mrb[0].mxu0 %v3868
    %v4147 = vpop.f32.mrb[0].mxu0
    %v4148 = vadd.f32 0.0, %v4147
    %v4149 = vpop.f32.mrb[0].mxu0
    %4150 = vmatprep.mubr.f32.mxu0 0.0
    %4151 = vmatmul.mubr.f32.gmra.mrb[0].mxu0 %v3870
    %v4152 = vpop.f32.mrb[0].mxu0
    %v4153 = vadd.f32 0.0, %v4152
    %v4154 = vpop.f32.mrb[0].mxu0
    %4155 = vmatprep.mubr.f32.mxu0 0.0
    %4156 = vmatmul.mubr.f32.gmra.mrb[0].mxu0 %v3872
    %v4157 = vpop.f32.mrb[0].mxu0
    %v4158 = vadd.f32 0.0, %v4157
    %v4159 = vpop.f32.mrb[0].mxu0
    %4160 = vmatprep.mubr.f32.mxu0 0.0
    %4161 = vmatmul.mubr.f32.gmra.mrb[0].mxu0 %v3874
    %v4162 = vpop.f32.mrb[0].mxu0
    %v4163 = vadd.f32 0.0, %v4162
    %v4164 = vpop.f32.mrb[0].mxu0
    %4165 = vmatprep.mubr.f32.mxu0 0.0
    %4166 = vmatmul.mubr.f32.gmra.mrb[0].mxu0 %v3876
    %v4167 = vpop.f32.mrb[0].mxu0
    %v4168 = vadd.f32 0.0, %v4167
    %v4169 = vpop.f32.mrb[0].mxu0
    %4170 = vmatprep.mubr.f32.mxu0 0.0
    %4171 = vmatmul.mubr.f32.gmra.mrb[0].mxu0 %v3878
    %v4172 = vpop.f32.mrb[0].mxu0
    %v4173 = vadd.f32 0.0, %v4172
    %v4174 = vpop.f32.mrb[0].mxu0
    %4175 = vmatprep.mubr.f32.mxu0 0.0
    %4176 = vmatmul.mubr.f32.gmra.mrb[0].mxu0 %v3880
    %v4177 = vpop.f32.mrb[0].mxu0
    %v4178 = vadd.f32 0.0, %v4177
    %v4179 = vpop.f32.mrb[0].mxu0
    %4180 = vmatprep.mubr.f32.mxu0 0.0
    %4181 = vmatmul.mubr.f32.gmra.mrb[0].mxu0 %v3882
    %v4182 = vpop.f32.mrb[0].mxu0
    %v4183 = vadd.f32 0.0, %v4182
    %v4184 = vpop.f32.mrb[0].mxu0
    %4185 = vmatprep.mubr.f32.mxu0 0.0
    %4186 = vmatmul.mubr.f32.gmra.mrb[0].mxu0 %v3884
    %v4187 = vpop.f32.mrb[0].mxu0
    %v4188 = vadd.f32 0.0, %v4187
    %v4189 = vpop.f32.mrb[0].mxu0
    %4190 = vdwg.mxu0
    %4239 = vrot.lane.b32.xlu0 %v793, 96
    %v4240 = vpop.permute.xlu0 %4239
    %4241 = vrot.lane.b32.xlu0 %v794, 96
    %v4242 = vpop.permute.xlu0 %4241
    %4243 = vrot.lane.b32.xlu0 %v795, 96
    %v4244 = vpop.permute.xlu0 %4243
    %4245 = vrot.lane.b32.xlu0 %v796, 96
    %v4246 = vpop.permute.xlu0 %4245
    %4247 = vrot.lane.b32.xlu0 %v797, 96
    %v4248 = vpop.permute.xlu0 %4247
    %4249 = vrot.lane.b32.xlu0 %v798, 96
    %v4250 = vpop.permute.xlu0 %4249
    %4251 = vrot.lane.b32.xlu0 %v799, 96
    %v4252 = vpop.permute.xlu0 %4251
    %4253 = vrot.lane.b32.xlu0 %v800, 96
    %v4254 = vpop.permute.xlu0 %4253
    %4255 = vrot.lane.b32.xlu0 %v801, 96
    %v4256 = vpop.permute.xlu0 %4255
    %4257 = vrot.lane.b32.xlu0 %v802, 96
    %v4258 = vpop.permute.xlu0 %4257
    %4259 = vrot.lane.b32.xlu0 %v803, 96
    %v4260 = vpop.permute.xlu0 %4259
    %4261 = vrot.lane.b32.xlu0 %v804, 96
    %v4262 = vpop.permute.xlu0 %4261
    %4263 = vrot.lane.b32.xlu0 %v805, 96
    %v4264 = vpop.permute.xlu0 %4263
    %4265 = vrot.lane.b32.xlu0 %v806, 96
    %v4266 = vpop.permute.xlu0 %4265
    %4267 = vrot.lane.b32.xlu0 %v807, 96
    %v4268 = vpop.permute.xlu0 %4267
    %4269 = vrot.lane.b32.xlu0 %v808, 96
    %v4270 = vpop.permute.xlu0 %4269
    %4271 = vrot.lane.b32.xlu0 %v809, 96
    %v4272 = vpop.permute.xlu0 %4271
    %4273 = vrot.lane.b32.xlu0 %v810, 96
    %v4274 = vpop.permute.xlu0 %4273
    %4275 = vrot.lane.b32.xlu0 %v811, 96
    %v4276 = vpop.permute.xlu0 %4275
    %4277 = vrot.lane.b32.xlu0 %v812, 96
    %v4278 = vpop.permute.xlu0 %4277
    %4279 = vrot.lane.b32.xlu0 %v813, 96
    %v4280 = vpop.permute.xlu0 %4279
    %4281 = vrot.lane.b32.xlu0 %v814, 96
    %v4282 = vpop.permute.xlu0 %4281
    %4283 = vrot.lane.b32.xlu0 %v815, 96
    %v4284 = vpop.permute.xlu0 %4283
    %4285 = vrot.lane.b32.xlu0 %v816, 96
    %v4286 = vpop.permute.xlu0 %4285
    %4287 = vrot.lane.b32.xlu0 %v817, 96
    %v4288 = vpop.permute.xlu0 %4287
    %4289 = vrot.lane.b32.xlu0 %v818, 96
    %v4290 = vpop.permute.xlu0 %4289
    %4291 = vrot.lane.b32.xlu0 %v819, 96
    %v4292 = vpop.permute.xlu0 %4291
    %4293 = vrot.lane.b32.xlu0 %v820, 96
    %v4294 = vpop.permute.xlu0 %4293
    %4295 = vrot.lane.b32.xlu0 %v821, 96
    %v4296 = vpop.permute.xlu0 %4295
    %4297 = vrot.lane.b32.xlu0 %v822, 96
    %v4298 = vpop.permute.xlu0 %4297
    %4299 = vrot.lane.b32.xlu0 %v823, 96
    %v4300 = vpop.permute.xlu0 %4299
    %4301 = vrot.lane.b32.xlu0 %v824, 96
    %v4302 = vpop.permute.xlu0 %4301
    %4303 = vrot.lane.b32.xlu0 %v825, 96
    %v4304 = vpop.permute.xlu0 %4303
    %4305 = vrot.lane.b32.xlu0 %v826, 96
    %v4306 = vpop.permute.xlu0 %4305
    %4307 = vrot.lane.b32.xlu0 %v827, 96
    %v4308 = vpop.permute.xlu0 %4307
    %4309 = vrot.lane.b32.xlu0 %v828, 96
    %v4310 = vpop.permute.xlu0 %4309
    %4311 = vrot.lane.b32.xlu0 %v829, 96
    %v4312 = vpop.permute.xlu0 %4311
    %4313 = vrot.lane.b32.xlu0 %v830, 96
    %v4314 = vpop.permute.xlu0 %4313
    %4315 = vrot.lane.b32.xlu0 %v831, 96
    %v4316 = vpop.permute.xlu0 %4315
    %4317 = vrot.lane.b32.xlu0 %v832, 96
    %v4318 = vpop.permute.xlu0 %4317
    %4319 = vrot.lane.b32.xlu0 %v833, 96
    %v4320 = vpop.permute.xlu0 %4319
    %4321 = vrot.lane.b32.xlu0 %v834, 96
    %v4322 = vpop.permute.xlu0 %4321
    %4323 = vrot.lane.b32.xlu0 %v835, 96
    %v4324 = vpop.permute.xlu0 %4323
    %4325 = vrot.lane.b32.xlu0 %v836, 96
    %v4326 = vpop.permute.xlu0 %4325
    %4327 = vrot.lane.b32.xlu0 %v837, 96
    %v4328 = vpop.permute.xlu0 %4327
    %4329 = vrot.lane.b32.xlu0 %v838, 96
    %v4330 = vpop.permute.xlu0 %4329
    %4331 = vrot.lane.b32.xlu0 %v839, 96
    %v4332 = vpop.permute.xlu0 %4331
    %4333 = vrot.lane.b32.xlu0 %v840, 96
    %v4334 = vpop.permute.xlu0 %4333
    %v4335 = vsel %vm343, %v4240, 0
    %v4337 = vsel %vm343, %v4242, 0
    %v4339 = vsel %vm343, %v4244, 0
    %v4341 = vsel %vm343, %v4246, 0
    %v4343 = vsel %vm343, %v4248, 0
    %v4345 = vsel %vm343, %v4250, 0
    %v4347 = vsel %vm343, %v4252, 0
    %v4349 = vsel %vm343, %v4254, 0
    %v4351 = vsel %vm343, %v4256, 0
    %v4353 = vsel %vm343, %v4258, 0
    %v4355 = vsel %vm343, %v4260, 0
    %v4357 = vsel %vm343, %v4262, 0
    %v4359 = vsel %vm343, %v4264, 0
    %v4361 = vsel %vm343, %v4266, 0
    %v4363 = vsel %vm343, %v4268, 0
    %v4365 = vsel %vm343, %v4270, 0
    %v4367 = vsel %vm343, %v4272, 0
    %v4369 = vsel %vm343, %v4274, 0
    %v4371 = vsel %vm343, %v4276, 0
    %v4373 = vsel %vm343, %v4278, 0
    %v4375 = vsel %vm343, %v4280, 0
    %v4377 = vsel %vm343, %v4282, 0
    %v4379 = vsel %vm343, %v4284, 0
    %v4381 = vsel %vm343, %v4286, 0
    %v4383 = vsel %vm343, %v4288, 0
    %v4385 = vsel %vm343, %v4290, 0
    %v4387 = vsel %vm343, %v4292, 0
    %v4389 = vsel %vm343, %v4294, 0
    %v4391 = vsel %vm343, %v4296, 0
    %v4393 = vsel %vm343, %v4298, 0
    %v4395 = vsel %vm343, %v4300, 0
    %v4397 = vsel %vm343, %v4302, 0
    %v4399 = vsel %vm343, %v4304, 0
    %v4401 = vsel %vm343, %v4306, 0
    %v4403 = vsel %vm343, %v4308, 0
    %v4405 = vsel %vm343, %v4310, 0
    %v4407 = vsel %vm343, %v4312, 0
    %v4409 = vsel %vm343, %v4314, 0
    %v4411 = vsel %vm343, %v4316, 0
    %v4413 = vsel %vm343, %v4318, 0
    %v4415 = vsel %vm343, %v4320, 0
    %v4417 = vsel %vm343, %v4322, 0
    %v4419 = vsel %vm343, %v4324, 0
    %v4421 = vsel %vm343, %v4326, 0
    %v4423 = vsel %vm343, %v4328, 0
    %v4425 = vsel %vm343, %v4330, 0
    %v4427 = vsel %vm343, %v4332, 0
    %v4429 = vsel %vm343, %v4334, 0
    %4431 = vmatprep.subr.mxu0 0.0
    %4432 = vmatpush1.msra.mxu0 %v3634
    %4433 = vmatprep.subr.mxu0 0.0
    %4434 = vmatpush1.msra.mxu0 %v3635
    %4435 = vmatprep.subr.mxu0 0.0
    %4436 = vmatpush1.msra.mxu0 %v3636
    %4437 = vmatprep.subr.mxu0 0.0
    %4438 = vmatpush1.msra.mxu0 %v3637
    %4439 = vmatprep.subr.mxu0 0.0
    %4440 = vmatpush1.msra.mxu0 0.0
    %4441 = vmatprep.subr.mxu0 0.0
    %4442 = vmatpush1.msra.mxu0 0.0
    %4443 = vmatprep.subr.mxu0 0.0
    %4444 = vmatpush1.msra.mxu0 0.0
    %4445 = vmatprep.subr.mxu0 0.0
    %4446 = vmatpush1.msra.mxu0 0.0
    %4447 = vmatprep.subr.mxu0 0.0
    %4448 = vmatpush1.msra.mxu0 0.0
    %4449 = vmatprep.subr.mxu0 0.0
    %4450 = vmatpush1.msra.mxu0 0.0
    %4451 = vmatprep.subr.mxu0 0.0
    %4452 = vmatpush1.msra.mxu0 0.0
    %4453 = vmatprep.subr.mxu0 0.0
    %4454 = vmatpush1.msra.mxu0 0.0
    %4455 = vmatprep.subr.mxu0 0.0
    %4456 = vmatpush1.msra.mxu0 0.0
    %4457 = vmatprep.subr.mxu0 0.0
    %4458 = vmatpush1.msra.mxu0 0.0
    %4459 = vmatprep.subr.mxu0 0.0
    %4460 = vmatpush1.msra.mxu0 0.0
    %4461 = vmatprep.subr.mxu0 0.0
    %4462 = vmatpush1.msra.mxu0 0.0
    %4463 = vmatprep.subr.mxu0 0.0
    %4464 = vmatpush1.msra.mxu0 0.0
    %4465 = vmatprep.subr.mxu0 0.0
    %4466 = vmatpush1.msra.mxu0 0.0
    %4467 = vmatprep.subr.mxu0 0.0
    %4468 = vmatpush1.msra.mxu0 0.0
    %4469 = vmatprep.subr.mxu0 0.0
    %4470 = vmatpush1.msra.mxu0 0.0
    %4471 = vmatprep.subr.mxu0 0.0
    %4472 = vmatpush1.msra.mxu0 0.0
    %4473 = vmatprep.subr.mxu0 0.0
    %4474 = vmatpush1.msra.mxu0 0.0
    %4475 = vmatprep.subr.mxu0 0.0
    %4476 = vmatpush1.msra.mxu0 0.0
    %4477 = vmatprep.subr.mxu0 0.0
    %4478 = vmatpush1.msra.mxu0 0.0
    %4479 = vmatprep.subr.mxu0 0.0
    %4480 = vmatpush1.msra.mxu0 0.0
    %4481 = vmatprep.subr.mxu0 0.0
    %4482 = vmatpush1.msra.mxu0 0.0
    %4483 = vmatprep.subr.mxu0 0.0
    %4484 = vmatpush1.msra.mxu0 0.0
    %4485 = vmatprep.subr.mxu0 0.0
    %4486 = vmatpush1.msra.mxu0 0.0
    %4487 = vmatprep.subr.mxu0 0.0
    %4488 = vmatpush1.msra.mxu0 0.0
    %4489 = vmatprep.subr.mxu0 0.0
    %4490 = vmatpush1.msra.mxu0 0.0
    %4491 = vmatprep.subr.mxu0 0.0
    %4492 = vmatpush1.msra.mxu0 0.0
    %4493 = vmatprep.subr.mxu0 0.0
    %4494 = vmatpush1.msra.mxu0 0.0
    %4495 = vmatprep.mubr.f32.mxu0 0.0
    %4496 = vmatmul.mubr.f32.gmra.mrb[0].mxu0 %v4335
    %v4497 = vpop.f32.mrb[0].mxu0
    %v4498 = vadd.f32 %v3953, %v4497
    %v4499 = vpop.f32.mrb[0].mxu0
    %4500 = vmatprep.mubr.f32.mxu0 0.0
    %4501 = vmatmul.mubr.f32.gmra.mrb[0].mxu0 %v4337
    %v4502 = vpop.f32.mrb[0].mxu0
    %v4503 = vadd.f32 %v3958, %v4502
    %v4504 = vpop.f32.mrb[0].mxu0
    %4505 = vmatprep.mubr.f32.mxu0 0.0
    %4506 = vmatmul.mubr.f32.gmra.mrb[0].mxu0 %v4339
    %v4507 = vpop.f32.mrb[0].mxu0
    %v4508 = vadd.f32 %v3963, %v4507
    %v4509 = vpop.f32.mrb[0].mxu0
    %4510 = vmatprep.mubr.f32.mxu0 0.0
    %4511 = vmatmul.mubr.f32.gmra.mrb[0].mxu0 %v4341
    %v4512 = vpop.f32.mrb[0].mxu0
    %v4513 = vadd.f32 %v3968, %v4512
    %v4514 = vpop.f32.mrb[0].mxu0
    %4515 = vmatprep.mubr.f32.mxu0 0.0
    %4516 = vmatmul.mubr.f32.gmra.mrb[0].mxu0 %v4343
    %v4517 = vpop.f32.mrb[0].mxu0
    %v4518 = vadd.f32 %v3973, %v4517
    %v4519 = vpop.f32.mrb[0].mxu0
    %4520 = vmatprep.mubr.f32.mxu0 0.0
    %4521 = vmatmul.mubr.f32.gmra.mrb[0].mxu0 %v4345
    %v4522 = vpop.f32.mrb[0].mxu0
    %v4523 = vadd.f32 %v3978, %v4522
    %v4524 = vpop.f32.mrb[0].mxu0
    %4525 = vmatprep.mubr.f32.mxu0 0.0
    %4526 = vmatmul.mubr.f32.gmra.mrb[0].mxu0 %v4347
    %v4527 = vpop.f32.mrb[0].mxu0
    %v4528 = vadd.f32 %v3983, %v4527
    %v4529 = vpop.f32.mrb[0].mxu0
    %4530 = vmatprep.mubr.f32.mxu0 0.0
    %4531 = vmatmul.mubr.f32.gmra.mrb[0].mxu0 %v4349
    %v4532 = vpop.f32.mrb[0].mxu0
    %v4533 = vadd.f32 %v3988, %v4532
    %v4534 = vpop.f32.mrb[0].mxu0
    %4535 = vmatprep.mubr.f32.mxu0 0.0
    %4536 = vmatmul.mubr.f32.gmra.mrb[0].mxu0 %v4351
    %v4537 = vpop.f32.mrb[0].mxu0
    %v4538 = vadd.f32 %v3993, %v4537
    %v4539 = vpop.f32.mrb[0].mxu0
    %4540 = vmatprep.mubr.f32.mxu0 0.0
    %4541 = vmatmul.mubr.f32.gmra.mrb[0].mxu0 %v4353
    %v4542 = vpop.f32.mrb[0].mxu0
    %v4543 = vadd.f32 %v3998, %v4542
    %v4544 = vpop.f32.mrb[0].mxu0
    %4545 = vmatprep.mubr.f32.mxu0 0.0
    %4546 = vmatmul.mubr.f32.gmra.mrb[0].mxu0 %v4355
    %v4547 = vpop.f32.mrb[0].mxu0
    %v4548 = vadd.f32 %v4003, %v4547
    %v4549 = vpop.f32.mrb[0].mxu0
    %4550 = vmatprep.mubr.f32.mxu0 0.0
    %4551 = vmatmul.mubr.f32.gmra.mrb[0].mxu0 %v4357
    %v4552 = vpop.f32.mrb[0].mxu0
    %v4553 = vadd.f32 %v4008, %v4552
    %v4554 = vpop.f32.mrb[0].mxu0
    %4555 = vmatprep.mubr.f32.mxu0 0.0
    %4556 = vmatmul.mubr.f32.gmra.mrb[0].mxu0 %v4359
    %v4557 = vpop.f32.mrb[0].mxu0
    %v4558 = vadd.f32 %v4013, %v4557
    %v4559 = vpop.f32.mrb[0].mxu0
    %4560 = vmatprep.mubr.f32.mxu0 0.0
    %4561 = vmatmul.mubr.f32.gmra.mrb[0].mxu0 %v4361
    %v4562 = vpop.f32.mrb[0].mxu0
    %v4563 = vadd.f32 %v4018, %v4562
    %v4564 = vpop.f32.mrb[0].mxu0
    %4565 = vmatprep.mubr.f32.mxu0 0.0
    %4566 = vmatmul.mubr.f32.gmra.mrb[0].mxu0 %v4363
    %v4567 = vpop.f32.mrb[0].mxu0
    %v4568 = vadd.f32 %v4023, %v4567
    %v4569 = vpop.f32.mrb[0].mxu0
    %4570 = vmatprep.mubr.f32.mxu0 0.0
    %4571 = vmatmul.mubr.f32.gmra.mrb[0].mxu0 %v4365
    %v4572 = vpop.f32.mrb[0].mxu0
    %v4573 = vadd.f32 %v4028, %v4572
    %v4574 = vpop.f32.mrb[0].mxu0
    %4575 = vmatprep.mubr.f32.mxu0 0.0
    %4576 = vmatmul.mubr.f32.gmra.mrb[0].mxu0 %v4367
    %v4577 = vpop.f32.mrb[0].mxu0
    %v4578 = vadd.f32 %v4033, %v4577
    %v4579 = vpop.f32.mrb[0].mxu0
    %4580 = vmatprep.mubr.f32.mxu0 0.0
    %4581 = vmatmul.mubr.f32.gmra.mrb[0].mxu0 %v4369
    %v4582 = vpop.f32.mrb[0].mxu0
    %v4583 = vadd.f32 %v4038, %v4582
    %v4584 = vpop.f32.mrb[0].mxu0
    %4585 = vmatprep.mubr.f32.mxu0 0.0
    %4586 = vmatmul.mubr.f32.gmra.mrb[0].mxu0 %v4371
    %v4587 = vpop.f32.mrb[0].mxu0
    %v4588 = vadd.f32 %v4043, %v4587
    %v4589 = vpop.f32.mrb[0].mxu0
    %4590 = vmatprep.mubr.f32.mxu0 0.0
    %4591 = vmatmul.mubr.f32.gmra.mrb[0].mxu0 %v4373
    %v4592 = vpop.f32.mrb[0].mxu0
    %v4593 = vadd.f32 %v4048, %v4592
    %v4594 = vpop.f32.mrb[0].mxu0
    %4595 = vmatprep.mubr.f32.mxu0 0.0
    %4596 = vmatmul.mubr.f32.gmra.mrb[0].mxu0 %v4375
    %v4597 = vpop.f32.mrb[0].mxu0
    %v4598 = vadd.f32 %v4053, %v4597
    %v4599 = vpop.f32.mrb[0].mxu0
    %4600 = vmatprep.mubr.f32.mxu0 0.0
    %4601 = vmatmul.mubr.f32.gmra.mrb[0].mxu0 %v4377
    %v4602 = vpop.f32.mrb[0].mxu0
    %v4603 = vadd.f32 %v4058, %v4602
    %v4604 = vpop.f32.mrb[0].mxu0
    %4605 = vmatprep.mubr.f32.mxu0 0.0
    %4606 = vmatmul.mubr.f32.gmra.mrb[0].mxu0 %v4379
    %v4607 = vpop.f32.mrb[0].mxu0
    %v4608 = vadd.f32 %v4063, %v4607
    %v4609 = vpop.f32.mrb[0].mxu0
    %4610 = vmatprep.mubr.f32.mxu0 0.0
    %4611 = vmatmul.mubr.f32.gmra.mrb[0].mxu0 %v4381
    %v4612 = vpop.f32.mrb[0].mxu0
    %v4613 = vadd.f32 %v4068, %v4612
    %v4614 = vpop.f32.mrb[0].mxu0
    %4615 = vmatprep.mubr.f32.mxu0 0.0
    %4616 = vmatmul.mubr.f32.gmra.mrb[0].mxu0 %v4383
    %v4617 = vpop.f32.mrb[0].mxu0
    %v4618 = vadd.f32 %v4073, %v4617
    %v4619 = vpop.f32.mrb[0].mxu0
    %4620 = vmatprep.mubr.f32.mxu0 0.0
    %4621 = vmatmul.mubr.f32.gmra.mrb[0].mxu0 %v4385
    %v4622 = vpop.f32.mrb[0].mxu0
    %v4623 = vadd.f32 %v4078, %v4622
    %v4624 = vpop.f32.mrb[0].mxu0
    %4625 = vmatprep.mubr.f32.mxu0 0.0
    %4626 = vmatmul.mubr.f32.gmra.mrb[0].mxu0 %v4387
    %v4627 = vpop.f32.mrb[0].mxu0
    %v4628 = vadd.f32 %v4083, %v4627
    %v4629 = vpop.f32.mrb[0].mxu0
    %4630 = vmatprep.mubr.f32.mxu0 0.0
    %4631 = vmatmul.mubr.f32.gmra.mrb[0].mxu0 %v4389
    %v4632 = vpop.f32.mrb[0].mxu0
    %v4633 = vadd.f32 %v4088, %v4632
    %v4634 = vpop.f32.mrb[0].mxu0
    %4635 = vmatprep.mubr.f32.mxu0 0.0
    %4636 = vmatmul.mubr.f32.gmra.mrb[0].mxu0 %v4391
    %v4637 = vpop.f32.mrb[0].mxu0
    %v4638 = vadd.f32 %v4093, %v4637
    %v4639 = vpop.f32.mrb[0].mxu0
    %4640 = vmatprep.mubr.f32.mxu0 0.0
    %4641 = vmatmul.mubr.f32.gmra.mrb[0].mxu0 %v4393
    %v4642 = vpop.f32.mrb[0].mxu0
    %v4643 = vadd.f32 %v4098, %v4642
    %v4644 = vpop.f32.mrb[0].mxu0
    %4645 = vmatprep.mubr.f32.mxu0 0.0
    %4646 = vmatmul.mubr.f32.gmra.mrb[0].mxu0 %v4395
    %v4647 = vpop.f32.mrb[0].mxu0
    %v4648 = vadd.f32 %v4103, %v4647
    %v4649 = vpop.f32.mrb[0].mxu0
    %4650 = vmatprep.mubr.f32.mxu0 0.0
    %4651 = vmatmul.mubr.f32.gmra.mrb[0].mxu0 %v4397
    %v4652 = vpop.f32.mrb[0].mxu0
    %v4653 = vadd.f32 %v4108, %v4652
    %v4654 = vpop.f32.mrb[0].mxu0
    %4655 = vmatprep.mubr.f32.mxu0 0.0
    %4656 = vmatmul.mubr.f32.gmra.mrb[0].mxu0 %v4399
    %v4657 = vpop.f32.mrb[0].mxu0
    %v4658 = vadd.f32 %v4113, %v4657
    %v4659 = vpop.f32.mrb[0].mxu0
    %4660 = vmatprep.mubr.f32.mxu0 0.0
    %4661 = vmatmul.mubr.f32.gmra.mrb[0].mxu0 %v4401
    %v4662 = vpop.f32.mrb[0].mxu0
    %v4663 = vadd.f32 %v4118, %v4662
    %v4664 = vpop.f32.mrb[0].mxu0
    %4665 = vmatprep.mubr.f32.mxu0 0.0
    %4666 = vmatmul.mubr.f32.gmra.mrb[0].mxu0 %v4403
    %v4667 = vpop.f32.mrb[0].mxu0
    %v4668 = vadd.f32 %v4123, %v4667
    %v4669 = vpop.f32.mrb[0].mxu0
    %4670 = vmatprep.mubr.f32.mxu0 0.0
    %4671 = vmatmul.mubr.f32.gmra.mrb[0].mxu0 %v4405
    %v4672 = vpop.f32.mrb[0].mxu0
    %v4673 = vadd.f32 %v4128, %v4672
    %v4674 = vpop.f32.mrb[0].mxu0
    %4675 = vmatprep.mubr.f32.mxu0 0.0
    %4676 = vmatmul.mubr.f32.gmra.mrb[0].mxu0 %v4407
    %v4677 = vpop.f32.mrb[0].mxu0
    %v4678 = vadd.f32 %v4133, %v4677
    %v4679 = vpop.f32.mrb[0].mxu0
    %4680 = vmatprep.mubr.f32.mxu0 0.0
    %4681 = vmatmul.mubr.f32.gmra.mrb[0].mxu0 %v4409
    %v4682 = vpop.f32.mrb[0].mxu0
    %v4683 = vadd.f32 %v4138, %v4682
    %v4684 = vpop.f32.mrb[0].mxu0
    %4685 = vmatprep.mubr.f32.mxu0 0.0
    %4686 = vmatmul.mubr.f32.gmra.mrb[0].mxu0 %v4411
    %v4687 = vpop.f32.mrb[0].mxu0
    %v4688 = vadd.f32 %v4143, %v4687
    %v4689 = vpop.f32.mrb[0].mxu0
    %4690 = vmatprep.mubr.f32.mxu0 0.0
    %4691 = vmatmul.mubr.f32.gmra.mrb[0].mxu0 %v4413
    %v4692 = vpop.f32.mrb[0].mxu0
    %v4693 = vadd.f32 %v4148, %v4692
    %v4694 = vpop.f32.mrb[0].mxu0
    %4695 = vmatprep.mubr.f32.mxu0 0.0
    %4696 = vmatmul.mubr.f32.gmra.mrb[0].mxu0 %v4415
    %v4697 = vpop.f32.mrb[0].mxu0
    %v4698 = vadd.f32 %v4153, %v4697
    %v4699 = vpop.f32.mrb[0].mxu0
    %4700 = vmatprep.mubr.f32.mxu0 0.0
    %4701 = vmatmul.mubr.f32.gmra.mrb[0].mxu0 %v4417
    %v4702 = vpop.f32.mrb[0].mxu0
    %v4703 = vadd.f32 %v4158, %v4702
    %v4704 = vpop.f32.mrb[0].mxu0
    %4705 = vmatprep.mubr.f32.mxu0 0.0
    %4706 = vmatmul.mubr.f32.gmra.mrb[0].mxu0 %v4419
    %v4707 = vpop.f32.mrb[0].mxu0
    %v4708 = vadd.f32 %v4163, %v4707
    %v4709 = vpop.f32.mrb[0].mxu0
    %4710 = vmatprep.mubr.f32.mxu0 0.0
    %4711 = vmatmul.mubr.f32.gmra.mrb[0].mxu0 %v4421
    %v4712 = vpop.f32.mrb[0].mxu0
    %v4713 = vadd.f32 %v4168, %v4712
    %v4714 = vpop.f32.mrb[0].mxu0
    %4715 = vmatprep.mubr.f32.mxu0 0.0
    %4716 = vmatmul.mubr.f32.gmra.mrb[0].mxu0 %v4423
    %v4717 = vpop.f32.mrb[0].mxu0
    %v4718 = vadd.f32 %v4173, %v4717
    %v4719 = vpop.f32.mrb[0].mxu0
    %4720 = vmatprep.mubr.f32.mxu0 0.0
    %4721 = vmatmul.mubr.f32.gmra.mrb[0].mxu0 %v4425
    %v4722 = vpop.f32.mrb[0].mxu0
    %v4723 = vadd.f32 %v4178, %v4722
    %v4724 = vpop.f32.mrb[0].mxu0
    %4725 = vmatprep.mubr.f32.mxu0 0.0
    %4726 = vmatmul.mubr.f32.gmra.mrb[0].mxu0 %v4427
    %v4727 = vpop.f32.mrb[0].mxu0
    %v4728 = vadd.f32 %v4183, %v4727
    %v4729 = vpop.f32.mrb[0].mxu0
    %4730 = vmatprep.mubr.f32.mxu0 0.0
    %4731 = vmatmul.mubr.f32.gmra.mrb[0].mxu0 %v4429
    %v4732 = vpop.f32.mrb[0].mxu0
    %v4733 = vadd.f32 %v4188, %v4732
    %v4734 = vpop.f32.mrb[0].mxu0
    %4735 = vdwg.mxu0
    %v4737 = vsel %vm343, %v3444, 0
    %v4740 = vsel %vm343, %v3447, 0
    %v4743 = vsel %vm343, %v3452, 0
    %v4746 = vsel %vm343, %v3455, 0
    %v4749 = vsel %vm343, %v3460, 0
    %v4752 = vsel %vm343, %v3463, 0
    %v4755 = vsel %vm343, %v3468, 0
    %v4758 = vsel %vm343, %v3471, 0
    %v4761 = vsel %vm343, %v3476, 0
    %v4764 = vsel %vm343, %v3479, 0
    %v4767 = vsel %vm343, %v3484, 0
    %v4770 = vsel %vm343, %v3487, 0
    %v4773 = vsel %vm343, %v3492, 0
    %v4776 = vsel %vm343, %v3495, 0
    %v4779 = vsel %vm343, %v3500, 0
    %v4782 = vsel %vm343, %v3503, 0
    %v4785 = vsel %vm343, %v3508, 0
    %v4788 = vsel %vm343, %v3511, 0
    %v4791 = vsel %vm343, %v3516, 0
    %v4794 = vsel %vm343, %v3519, 0
    %v4797 = vsel %vm343, %v3524, 0
    %v4800 = vsel %vm343, %v3527, 0
    %v4803 = vsel %vm343, %v3532, 0
    %v4806 = vsel %vm343, %v3535, 0
    %v4809 = vsel %vm343, %v3540, 0
    %v4812 = vsel %vm343, %v3543, 0
    %v4815 = vsel %vm343, %v3548, 0
    %v4818 = vsel %vm343, %v3551, 0
    %v4821 = vsel %vm343, %v3556, 0
    %v4824 = vsel %vm343, %v3559, 0
    %v4827 = vsel %vm343, %v3564, 0
    %v4830 = vsel %vm343, %v3567, 0
    %v4833 = vsel %vm343, %v3572, 0
    %v4836 = vsel %vm343, %v3575, 0
    %v4839 = vsel %vm343, %v3580, 0
    %v4842 = vsel %vm343, %v3583, 0
    %v4845 = vsel %vm343, %v3588, 0
    %v4848 = vsel %vm343, %v3591, 0
    %v4851 = vsel %vm343, %v3596, 0
    %v4854 = vsel %vm343, %v3599, 0
    %v4857 = vsel %vm343, %v3604, 0
    %v4860 = vsel %vm343, %v3607, 0
    %v4863 = vsel %vm343, %v3612, 0
    %v4866 = vsel %vm343, %v3615, 0
    %v4869 = vsel %vm343, %v3620, 0
    %v4872 = vsel %vm343, %v3623, 0
    %v4875 = vsel %vm343, %v3628, 0
    %v4878 = vsel %vm343, %v3631, 0
    %4880 = vmatprep.subr.mxu0 0.0
    %4881 = vmatpush1.msra.mxu0 %v3642
    %4882 = vmatprep.subr.mxu0 0.0
    %4883 = vmatpush1.msra.mxu0 %v3643
    %4884 = vmatprep.subr.mxu0 0.0
    %4885 = vmatpush1.msra.mxu0 %v3644
    %4886 = vmatprep.subr.mxu0 0.0
    %4887 = vmatpush1.msra.mxu0 %v3645
    %4888 = vmatprep.subr.mxu0 0.0
    %4889 = vmatpush1.msra.mxu0 0.0
    %4890 = vmatprep.subr.mxu0 0.0
    %4891 = vmatpush1.msra.mxu0 0.0
    %4892 = vmatprep.subr.mxu0 0.0
    %4893 = vmatpush1.msra.mxu0 0.0
    %4894 = vmatprep.subr.mxu0 0.0
    %4895 = vmatpush1.msra.mxu0 0.0
    %4896 = vmatprep.subr.mxu0 0.0
    %4897 = vmatpush1.msra.mxu0 0.0
    %4898 = vmatprep.subr.mxu0 0.0
    %4899 = vmatpush1.msra.mxu0 0.0
    %4900 = vmatprep.subr.mxu0 0.0
    %4901 = vmatpush1.msra.mxu0 0.0
    %4902 = vmatprep.subr.mxu0 0.0
    %4903 = vmatpush1.msra.mxu0 0.0
    %4904 = vmatprep.subr.mxu0 0.0
    %4905 = vmatpush1.msra.mxu0 0.0
    %4906 = vmatprep.subr.mxu0 0.0
    %4907 = vmatpush1.msra.mxu0 0.0
    %4908 = vmatprep.subr.mxu0 0.0
    %4909 = vmatpush1.msra.mxu0 0.0
    %4910 = vmatprep.subr.mxu0 0.0
    %4911 = vmatpush1.msra.mxu0 0.0
    %4912 = vmatprep.subr.mxu0 0.0
    %4913 = vmatpush1.msra.mxu0 0.0
    %4914 = vmatprep.subr.mxu0 0.0
    %4915 = vmatpush1.msra.mxu0 0.0
    %4916 = vmatprep.subr.mxu0 0.0
    %4917 = vmatpush1.msra.mxu0 0.0
    %4918 = vmatprep.subr.mxu0 0.0
    %4919 = vmatpush1.msra.mxu0 0.0
    %4920 = vmatprep.subr.mxu0 0.0
    %4921 = vmatpush1.msra.mxu0 0.0
    %4922 = vmatprep.subr.mxu0 0.0
    %4923 = vmatpush1.msra.mxu0 0.0
    %4924 = vmatprep.subr.mxu0 0.0
    %4925 = vmatpush1.msra.mxu0 0.0
    %4926 = vmatprep.subr.mxu0 0.0
    %4927 = vmatpush1.msra.mxu0 0.0
    %4928 = vmatprep.subr.mxu0 0.0
    %4929 = vmatpush1.msra.mxu0 0.0
    %4930 = vmatprep.subr.mxu0 0.0
    %4931 = vmatpush1.msra.mxu0 0.0
    %4932 = vmatprep.subr.mxu0 0.0
    %4933 = vmatpush1.msra.mxu0 0.0
    %4934 = vmatprep.subr.mxu0 0.0
    %4935 = vmatpush1.msra.mxu0 0.0
    %4936 = vmatprep.subr.mxu0 0.0
    %4937 = vmatpush1.msra.mxu0 0.0
    %4938 = vmatprep.subr.mxu0 0.0
    %4939 = vmatpush1.msra.mxu0 0.0
    %4940 = vmatprep.subr.mxu0 0.0
    %4941 = vmatpush1.msra.mxu0 0.0
    %4942 = vmatprep.subr.mxu0 0.0
    %4943 = vmatpush1.msra.mxu0 0.0
    %4944 = vmatprep.mubr.f32.mxu0 0.0
    %4945 = vmatmul.mubr.f32.gmra.mrb[0].mxu0 %v4737
    %v4946 = vpop.f32.mrb[0].mxu0
    %v4947 = vadd.f32 0.0, %v4946
    %v4948 = vpop.f32.mrb[0].mxu0
    %4949 = vmatprep.mubr.f32.mxu0 0.0
    %4950 = vmatmul.mubr.f32.gmra.mrb[0].mxu0 %v4740
    %v4951 = vpop.f32.mrb[0].mxu0
    %v4952 = vadd.f32 0.0, %v4951
    %v4953 = vpop.f32.mrb[0].mxu0
    %4954 = vmatprep.mubr.f32.mxu0 0.0
    %4955 = vmatmul.mubr.f32.gmra.mrb[0].mxu0 %v4743
    %v4956 = vpop.f32.mrb[0].mxu0
    %v4957 = vadd.f32 0.0, %v4956
    %v4958 = vpop.f32.mrb[0].mxu0
    %4959 = vmatprep.mubr.f32.mxu0 0.0
    %4960 = vmatmul.mubr.f32.gmra.mrb[0].mxu0 %v4746
    %v4961 = vpop.f32.mrb[0].mxu0
    %v4962 = vadd.f32 0.0, %v4961
    %v4963 = vpop.f32.mrb[0].mxu0
    %4964 = vmatprep.mubr.f32.mxu0 0.0
    %4965 = vmatmul.mubr.f32.gmra.mrb[0].mxu0 %v4749
    %v4966 = vpop.f32.mrb[0].mxu0
    %v4967 = vadd.f32 0.0, %v4966
    %v4968 = vpop.f32.mrb[0].mxu0
    %4969 = vmatprep.mubr.f32.mxu0 0.0
    %4970 = vmatmul.mubr.f32.gmra.mrb[0].mxu0 %v4752
    %v4971 = vpop.f32.mrb[0].mxu0
    %v4972 = vadd.f32 0.0, %v4971
    %v4973 = vpop.f32.mrb[0].mxu0
    %4974 = vmatprep.mubr.f32.mxu0 0.0
    %4975 = vmatmul.mubr.f32.gmra.mrb[0].mxu0 %v4755
    %v4976 = vpop.f32.mrb[0].mxu0
    %v4977 = vadd.f32 0.0, %v4976
    %v4978 = vpop.f32.mrb[0].mxu0
    %4979 = vmatprep.mubr.f32.mxu0 0.0
    %4980 = vmatmul.mubr.f32.gmra.mrb[0].mxu0 %v4758
    %v4981 = vpop.f32.mrb[0].mxu0
    %v4982 = vadd.f32 0.0, %v4981
    %v4983 = vpop.f32.mrb[0].mxu0
    %4984 = vmatprep.mubr.f32.mxu0 0.0
    %4985 = vmatmul.mubr.f32.gmra.mrb[0].mxu0 %v4761
    %v4986 = vpop.f32.mrb[0].mxu0
    %v4987 = vadd.f32 0.0, %v4986
    %v4988 = vpop.f32.mrb[0].mxu0
    %4989 = vmatprep.mubr.f32.mxu0 0.0
    %4990 = vmatmul.mubr.f32.gmra.mrb[0].mxu0 %v4764
    %v4991 = vpop.f32.mrb[0].mxu0
    %v4992 = vadd.f32 0.0, %v4991
    %v4993 = vpop.f32.mrb[0].mxu0
    %4994 = vmatprep.mubr.f32.mxu0 0.0
    %4995 = vmatmul.mubr.f32.gmra.mrb[0].mxu0 %v4767
    %v4996 = vpop.f32.mrb[0].mxu0
    %v4997 = vadd.f32 0.0, %v4996
    %v4998 = vpop.f32.mrb[0].mxu0
    %4999 = vmatprep.mubr.f32.mxu0 0.0
    %5000 = vmatmul.mubr.f32.gmra.mrb[0].mxu0 %v4770
    %v5001 = vpop.f32.mrb[0].mxu0
    %v5002 = vadd.f32 0.0, %v5001
    %v5003 = vpop.f32.mrb[0].mxu0
    %5004 = vmatprep.mubr.f32.mxu0 0.0
    %5005 = vmatmul.mubr.f32.gmra.mrb[0].mxu0 %v4773
    %v5006 = vpop.f32.mrb[0].mxu0
    %v5007 = vadd.f32 0.0, %v5006
    %v5008 = vpop.f32.mrb[0].mxu0
    %5009 = vmatprep.mubr.f32.mxu0 0.0
    %5010 = vmatmul.mubr.f32.gmra.mrb[0].mxu0 %v4776
    %v5011 = vpop.f32.mrb[0].mxu0
    %v5012 = vadd.f32 0.0, %v5011
    %v5013 = vpop.f32.mrb[0].mxu0
    %5014 = vmatprep.mubr.f32.mxu0 0.0
    %5015 = vmatmul.mubr.f32.gmra.mrb[0].mxu0 %v4779
    %v5016 = vpop.f32.mrb[0].mxu0
    %v5017 = vadd.f32 0.0, %v5016
    %v5018 = vpop.f32.mrb[0].mxu0
    %5019 = vmatprep.mubr.f32.mxu0 0.0
    %5020 = vmatmul.mubr.f32.gmra.mrb[0].mxu0 %v4782
    %v5021 = vpop.f32.mrb[0].mxu0
    %v5022 = vadd.f32 0.0, %v5021
    %v5023 = vpop.f32.mrb[0].mxu0
    %5024 = vmatprep.mubr.f32.mxu0 0.0
    %5025 = vmatmul.mubr.f32.gmra.mrb[0].mxu0 %v4785
    %v5026 = vpop.f32.mrb[0].mxu0
    %v5027 = vadd.f32 0.0, %v5026
    %v5028 = vpop.f32.mrb[0].mxu0
    %5029 = vmatprep.mubr.f32.mxu0 0.0
    %5030 = vmatmul.mubr.f32.gmra.mrb[0].mxu0 %v4788
    %v5031 = vpop.f32.mrb[0].mxu0
    %v5032 = vadd.f32 0.0, %v5031
    %v5033 = vpop.f32.mrb[0].mxu0
    %5034 = vmatprep.mubr.f32.mxu0 0.0
    %5035 = vmatmul.mubr.f32.gmra.mrb[0].mxu0 %v4791
    %v5036 = vpop.f32.mrb[0].mxu0
    %v5037 = vadd.f32 0.0, %v5036
    %v5038 = vpop.f32.mrb[0].mxu0
    %5039 = vmatprep.mubr.f32.mxu0 0.0
    %5040 = vmatmul.mubr.f32.gmra.mrb[0].mxu0 %v4794
    %v5041 = vpop.f32.mrb[0].mxu0
    %v5042 = vadd.f32 0.0, %v5041
    %v5043 = vpop.f32.mrb[0].mxu0
    %5044 = vmatprep.mubr.f32.mxu0 0.0
    %5045 = vmatmul.mubr.f32.gmra.mrb[0].mxu0 %v4797
    %v5046 = vpop.f32.mrb[0].mxu0
    %v5047 = vadd.f32 0.0, %v5046
    %v5048 = vpop.f32.mrb[0].mxu0
    %5049 = vmatprep.mubr.f32.mxu0 0.0
    %5050 = vmatmul.mubr.f32.gmra.mrb[0].mxu0 %v4800
    %v5051 = vpop.f32.mrb[0].mxu0
    %v5052 = vadd.f32 0.0, %v5051
    %v5053 = vpop.f32.mrb[0].mxu0
    %5054 = vmatprep.mubr.f32.mxu0 0.0
    %5055 = vmatmul.mubr.f32.gmra.mrb[0].mxu0 %v4803
    %v5056 = vpop.f32.mrb[0].mxu0
    %v5057 = vadd.f32 0.0, %v5056
    %v5058 = vpop.f32.mrb[0].mxu0
    %5059 = vmatprep.mubr.f32.mxu0 0.0
    %5060 = vmatmul.mubr.f32.gmra.mrb[0].mxu0 %v4806
    %v5061 = vpop.f32.mrb[0].mxu0
    %v5062 = vadd.f32 0.0, %v5061
    %v5063 = vpop.f32.mrb[0].mxu0
    %5064 = vmatprep.mubr.f32.mxu0 0.0
    %5065 = vmatmul.mubr.f32.gmra.mrb[0].mxu0 %v4809
    %v5066 = vpop.f32.mrb[0].mxu0
    %v5067 = vadd.f32 0.0, %v5066
    %v5068 = vpop.f32.mrb[0].mxu0
    %5069 = vmatprep.mubr.f32.mxu0 0.0
    %5070 = vmatmul.mubr.f32.gmra.mrb[0].mxu0 %v4812
    %v5071 = vpop.f32.mrb[0].mxu0
    %v5072 = vadd.f32 0.0, %v5071
    %v5073 = vpop.f32.mrb[0].mxu0
    %5074 = vmatprep.mubr.f32.mxu0 0.0
    %5075 = vmatmul.mubr.f32.gmra.mrb[0].mxu0 %v4815
    %v5076 = vpop.f32.mrb[0].mxu0
    %v5077 = vadd.f32 0.0, %v5076
    %v5078 = vpop.f32.mrb[0].mxu0
    %5079 = vmatprep.mubr.f32.mxu0 0.0
    %5080 = vmatmul.mubr.f32.gmra.mrb[0].mxu0 %v4818
    %v5081 = vpop.f32.mrb[0].mxu0
    %v5082 = vadd.f32 0.0, %v5081
    %v5083 = vpop.f32.mrb[0].mxu0
    %5084 = vmatprep.mubr.f32.mxu0 0.0
    %5085 = vmatmul.mubr.f32.gmra.mrb[0].mxu0 %v4821
    %v5086 = vpop.f32.mrb[0].mxu0
    %v5087 = vadd.f32 0.0, %v5086
    %v5088 = vpop.f32.mrb[0].mxu0
    %5089 = vmatprep.mubr.f32.mxu0 0.0
    %5090 = vmatmul.mubr.f32.gmra.mrb[0].mxu0 %v4824
    %v5091 = vpop.f32.mrb[0].mxu0
    %v5092 = vadd.f32 0.0, %v5091
    %v5093 = vpop.f32.mrb[0].mxu0
    %5094 = vmatprep.mubr.f32.mxu0 0.0
    %5095 = vmatmul.mubr.f32.gmra.mrb[0].mxu0 %v4827
    %v5096 = vpop.f32.mrb[0].mxu0
    %v5097 = vadd.f32 0.0, %v5096
    %v5098 = vpop.f32.mrb[0].mxu0
    %5099 = vmatprep.mubr.f32.mxu0 0.0
    %5100 = vmatmul.mubr.f32.gmra.mrb[0].mxu0 %v4830
    %v5101 = vpop.f32.mrb[0].mxu0
    %v5102 = vadd.f32 0.0, %v5101
    %v5103 = vpop.f32.mrb[0].mxu0
    %5104 = vmatprep.mubr.f32.mxu0 0.0
    %5105 = vmatmul.mubr.f32.gmra.mrb[0].mxu0 %v4833
    %v5106 = vpop.f32.mrb[0].mxu0
    %v5107 = vadd.f32 0.0, %v5106
    %v5108 = vpop.f32.mrb[0].mxu0
    %5109 = vmatprep.mubr.f32.mxu0 0.0
    %5110 = vmatmul.mubr.f32.gmra.mrb[0].mxu0 %v4836
    %v5111 = vpop.f32.mrb[0].mxu0
    %v5112 = vadd.f32 0.0, %v5111
    %v5113 = vpop.f32.mrb[0].mxu0
    %5114 = vmatprep.mubr.f32.mxu0 0.0
    %5115 = vmatmul.mubr.f32.gmra.mrb[0].mxu0 %v4839
    %v5116 = vpop.f32.mrb[0].mxu0
    %v5117 = vadd.f32 0.0, %v5116
    %v5118 = vpop.f32.mrb[0].mxu0
    %5119 = vmatprep.mubr.f32.mxu0 0.0
    %5120 = vmatmul.mubr.f32.gmra.mrb[0].mxu0 %v4842
    %v5121 = vpop.f32.mrb[0].mxu0
    %v5122 = vadd.f32 0.0, %v5121
    %v5123 = vpop.f32.mrb[0].mxu0
    %5124 = vmatprep.mubr.f32.mxu0 0.0
    %5125 = vmatmul.mubr.f32.gmra.mrb[0].mxu0 %v4845
    %v5126 = vpop.f32.mrb[0].mxu0
    %v5127 = vadd.f32 0.0, %v5126
    %v5128 = vpop.f32.mrb[0].mxu0
    %5129 = vmatprep.mubr.f32.mxu0 0.0
    %5130 = vmatmul.mubr.f32.gmra.mrb[0].mxu0 %v4848
    %v5131 = vpop.f32.mrb[0].mxu0
    %v5132 = vadd.f32 0.0, %v5131
    %v5133 = vpop.f32.mrb[0].mxu0
    %5134 = vmatprep.mubr.f32.mxu0 0.0
    %5135 = vmatmul.mubr.f32.gmra.mrb[0].mxu0 %v4851
    %v5136 = vpop.f32.mrb[0].mxu0
    %v5137 = vadd.f32 0.0, %v5136
    %v5138 = vpop.f32.mrb[0].mxu0
    %5139 = vmatprep.mubr.f32.mxu0 0.0
    %5140 = vmatmul.mubr.f32.gmra.mrb[0].mxu0 %v4854
    %v5141 = vpop.f32.mrb[0].mxu0
    %v5142 = vadd.f32 0.0, %v5141
    %v5143 = vpop.f32.mrb[0].mxu0
    %5144 = vmatprep.mubr.f32.mxu0 0.0
    %5145 = vmatmul.mubr.f32.gmra.mrb[0].mxu0 %v4857
    %v5146 = vpop.f32.mrb[0].mxu0
    %v5147 = vadd.f32 0.0, %v5146
    %v5148 = vpop.f32.mrb[0].mxu0
    %5149 = vmatprep.mubr.f32.mxu0 0.0
    %5150 = vmatmul.mubr.f32.gmra.mrb[0].mxu0 %v4860
    %v5151 = vpop.f32.mrb[0].mxu0
    %v5152 = vadd.f32 0.0, %v5151
    %v5153 = vpop.f32.mrb[0].mxu0
    %5154 = vmatprep.mubr.f32.mxu0 0.0
    %5155 = vmatmul.mubr.f32.gmra.mrb[0].mxu0 %v4863
    %v5156 = vpop.f32.mrb[0].mxu0
    %v5157 = vadd.f32 0.0, %v5156
    %v5158 = vpop.f32.mrb[0].mxu0
    %5159 = vmatprep.mubr.f32.mxu0 0.0
    %5160 = vmatmul.mubr.f32.gmra.mrb[0].mxu0 %v4866
    %v5161 = vpop.f32.mrb[0].mxu0
    %v5162 = vadd.f32 0.0, %v5161
    %v5163 = vpop.f32.mrb[0].mxu0
    %5164 = vmatprep.mubr.f32.mxu0 0.0
    %5165 = vmatmul.mubr.f32.gmra.mrb[0].mxu0 %v4869
    %v5166 = vpop.f32.mrb[0].mxu0
    %v5167 = vadd.f32 0.0, %v5166
    %v5168 = vpop.f32.mrb[0].mxu0
    %5169 = vmatprep.mubr.f32.mxu0 0.0
    %5170 = vmatmul.mubr.f32.gmra.mrb[0].mxu0 %v4872
    %v5171 = vpop.f32.mrb[0].mxu0
    %v5172 = vadd.f32 0.0, %v5171
    %v5173 = vpop.f32.mrb[0].mxu0
    %5174 = vmatprep.mubr.f32.mxu0 0.0
    %5175 = vmatmul.mubr.f32.gmra.mrb[0].mxu0 %v4875
    %v5176 = vpop.f32.mrb[0].mxu0
    %v5177 = vadd.f32 0.0, %v5176
    %v5178 = vpop.f32.mrb[0].mxu0
    %5179 = vmatprep.mubr.f32.mxu0 0.0
    %5180 = vmatmul.mubr.f32.gmra.mrb[0].mxu0 %v4878
    %v5181 = vpop.f32.mrb[0].mxu0
    %v5182 = vadd.f32 0.0, %v5181
    %v5183 = vpop.f32.mrb[0].mxu0
    %5184 = vdwg.mxu0
    %v5185 = vadd.f32 %v4498, %v4947
    %v5186 = vadd.f32 %v4503, %v4952
    %v5187 = vadd.f32 %v4508, %v4957
    %v5188 = vadd.f32 %v4513, %v4962
    %v5189 = vadd.f32 %v4518, %v4967
    %v5190 = vadd.f32 %v4523, %v4972
    %v5191 = vadd.f32 %v4528, %v4977
    %v5192 = vadd.f32 %v4533, %v4982
    %v5193 = vadd.f32 %v4538, %v4987
    %v5194 = vadd.f32 %v4543, %v4992
    %v5195 = vadd.f32 %v4548, %v4997
    %v5196 = vadd.f32 %v4553, %v5002
    %v5197 = vadd.f32 %v4558, %v5007
    %v5198 = vadd.f32 %v4563, %v5012
    %v5199 = vadd.f32 %v4568, %v5017
    %v5200 = vadd.f32 %v4573, %v5022
    %v5201 = vadd.f32 %v4578, %v5027
    %v5202 = vadd.f32 %v4583, %v5032
    %v5203 = vadd.f32 %v4588, %v5037
    %v5204 = vadd.f32 %v4593, %v5042
    %v5205 = vadd.f32 %v4598, %v5047
    %v5206 = vadd.f32 %v4603, %v5052
    %v5207 = vadd.f32 %v4608, %v5057
    %v5208 = vadd.f32 %v4613, %v5062
    %v5209 = vadd.f32 %v4618, %v5067
    %v5210 = vadd.f32 %v4623, %v5072
    %v5211 = vadd.f32 %v4628, %v5077
    %v5212 = vadd.f32 %v4633, %v5082
    %v5213 = vadd.f32 %v4638, %v5087
    %v5214 = vadd.f32 %v4643, %v5092
    %v5215 = vadd.f32 %v4648, %v5097
    %v5216 = vadd.f32 %v4653, %v5102
    %v5217 = vadd.f32 %v4658, %v5107
    %v5218 = vadd.f32 %v4663, %v5112
    %v5219 = vadd.f32 %v4668, %v5117
    %v5220 = vadd.f32 %v4673, %v5122
    %v5221 = vadd.f32 %v4678, %v5127
    %v5222 = vadd.f32 %v4683, %v5132
    %v5223 = vadd.f32 %v4688, %v5137
    %v5224 = vadd.f32 %v4693, %v5142
    %v5225 = vadd.f32 %v4698, %v5147
    %v5226 = vadd.f32 %v4703, %v5152
    %v5227 = vadd.f32 %v4708, %v5157
    %v5228 = vadd.f32 %v4713, %v5162
    %v5229 = vadd.f32 %v4718, %v5167
    %v5230 = vadd.f32 %v4723, %v5172
    %v5231 = vadd.f32 %v4728, %v5177
    %v5232 = vadd.f32 %v4733, %v5182
    %v5233 = vld [vmem:[%s8] sm:$0x1]
    %v5235 = vlaneseq
    %v5236 = vshrl.u32 %v5235, 7
    %v5237 = vsub.s32 0, %v5236
    %v5238 = vrot.slane %v5233, %v5237
    %v5240 = vadd.f32 %v5185, %v5238
    %v5241 = vadd.f32 %v5186, %v5238
    %v5242 = vadd.f32 %v5187, %v5238
    %v5243 = vadd.f32 %v5188, %v5238
    %v5244 = vadd.f32 %v5189, %v5238
    %v5245 = vadd.f32 %v5190, %v5238
    %v5246 = vadd.f32 %v5191, %v5238
    %v5247 = vadd.f32 %v5192, %v5238
    %v5248 = vadd.f32 %v5193, %v5238
    %v5249 = vadd.f32 %v5194, %v5238
    %v5250 = vadd.f32 %v5195, %v5238
    %v5251 = vadd.f32 %v5196, %v5238
    %v5252 = vadd.f32 %v5197, %v5238
    %v5253 = vadd.f32 %v5198, %v5238
    %v5254 = vadd.f32 %v5199, %v5238
    %v5255 = vadd.f32 %v5200, %v5238
    %v5256 = vadd.f32 %v5201, %v5238
    %v5257 = vadd.f32 %v5202, %v5238
    %v5258 = vadd.f32 %v5203, %v5238
    %v5259 = vadd.f32 %v5204, %v5238
    %v5260 = vadd.f32 %v5205, %v5238
    %v5261 = vadd.f32 %v5206, %v5238
    %v5262 = vadd.f32 %v5207, %v5238
    %v5263 = vadd.f32 %v5208, %v5238
    %v5264 = vadd.f32 %v5209, %v5238
    %v5265 = vadd.f32 %v5210, %v5238
    %v5266 = vadd.f32 %v5211, %v5238
    %v5267 = vadd.f32 %v5212, %v5238
    %v5268 = vadd.f32 %v5213, %v5238
    %v5269 = vadd.f32 %v5214, %v5238
    %v5270 = vadd.f32 %v5215, %v5238
    %v5271 = vadd.f32 %v5216, %v5238
    %v5272 = vadd.f32 %v5217, %v5238
    %v5273 = vadd.f32 %v5218, %v5238
    %v5274 = vadd.f32 %v5219, %v5238
    %v5275 = vadd.f32 %v5220, %v5238
    %v5276 = vadd.f32 %v5221, %v5238
    %v5277 = vadd.f32 %v5222, %v5238
    %v5278 = vadd.f32 %v5223, %v5238
    %v5279 = vadd.f32 %v5224, %v5238
    %v5280 = vadd.f32 %v5225, %v5238
    %v5281 = vadd.f32 %v5226, %v5238
    %v5282 = vadd.f32 %v5227, %v5238
    %v5283 = vadd.f32 %v5228, %v5238
    %v5284 = vadd.f32 %v5229, %v5238
    %v5285 = vadd.f32 %v5230, %v5238
    %v5286 = vadd.f32 %v5231, %v5238
    %v5287 = vadd.f32 %v5232, %v5238
    %v5288 = vmax.f32 %v5240, 0.0
    %v5289 = vmax.f32 %v5241, 0.0
    %v5290 = vmax.f32 %v5242, 0.0
    %v5291 = vmax.f32 %v5243, 0.0
    %v5292 = vmax.f32 %v5244, 0.0
    %v5293 = vmax.f32 %v5245, 0.0
    %v5294 = vmax.f32 %v5246, 0.0
    %v5295 = vmax.f32 %v5247, 0.0
    %v5296 = vmax.f32 %v5248, 0.0
    %v5297 = vmax.f32 %v5249, 0.0
    %v5298 = vmax.f32 %v5250, 0.0
    %v5299 = vmax.f32 %v5251, 0.0
    %v5300 = vmax.f32 %v5252, 0.0
    %v5301 = vmax.f32 %v5253, 0.0
    %v5302 = vmax.f32 %v5254, 0.0
    %v5303 = vmax.f32 %v5255, 0.0
    %v5304 = vmax.f32 %v5256, 0.0
    %v5305 = vmax.f32 %v5257, 0.0
    %v5306 = vmax.f32 %v5258, 0.0
    %v5307 = vmax.f32 %v5259, 0.0
    %v5308 = vmax.f32 %v5260, 0.0
    %v5309 = vmax.f32 %v5261, 0.0
    %v5310 = vmax.f32 %v5262, 0.0
    %v5311 = vmax.f32 %v5263, 0.0
    %v5312 = vmax.f32 %v5264, 0.0
    %v5313 = vmax.f32 %v5265, 0.0
    %v5314 = vmax.f32 %v5266, 0.0
    %v5315 = vmax.f32 %v5267, 0.0
    %v5316 = vmax.f32 %v5268, 0.0
    %v5317 = vmax.f32 %v5269, 0.0
    %v5318 = vmax.f32 %v5270, 0.0
    %v5319 = vmax.f32 %v5271, 0.0
    %v5320 = vmax.f32 %v5272, 0.0
    %v5321 = vmax.f32 %v5273, 0.0
    %v5322 = vmax.f32 %v5274, 0.0
    %v5323 = vmax.f32 %v5275, 0.0
    %v5324 = vmax.f32 %v5276, 0.0
    %v5325 = vmax.f32 %v5277, 0.0
    %v5326 = vmax.f32 %v5278, 0.0
    %v5327 = vmax.f32 %v5279, 0.0
    %v5328 = vmax.f32 %v5280, 0.0
    %v5329 = vmax.f32 %v5281, 0.0
    %v5330 = vmax.f32 %v5282, 0.0
    %v5331 = vmax.f32 %v5283, 0.0
    %v5332 = vmax.f32 %v5284, 0.0
    %v5333 = vmax.f32 %v5285, 0.0
    %v5334 = vmax.f32 %v5286, 0.0
    %v5335 = vmax.f32 %v5287, 0.0
    %v5336 = vld [vmem:[#allocation5] sm:$0xff]
    %v5337 = vld [vmem:[#allocation5 + $0x8] sm:$0xff]
    %v5338 = vld [vmem:[#allocation5 + $0x10] sm:$0xff]
    %v5339 = vld [vmem:[#allocation5 + $0x18] sm:$0xff]
    %v5340 = vld [vmem:[#allocation5 + $0x20] sm:$0xff]
    %v5341 = vld [vmem:[#allocation5 + $0x28] sm:$0xff]
    %v5342 = vld [vmem:[#allocation5 + $0x30] sm:$0xff]
    %v5343 = vld [vmem:[#allocation5 + $0x38] sm:$0xff]
    %v5345 = vsel %vm343, %v5288, 0
    %v5348 = vsel %vm343, %v5289, 0
    %v5351 = vsel %vm343, %v5290, 0
    %v5354 = vsel %vm343, %v5291, 0
    %v5357 = vsel %vm343, %v5292, 0
    %v5360 = vsel %vm343, %v5293, 0
    %v5363 = vsel %vm343, %v5294, 0
    %v5366 = vsel %vm343, %v5295, 0
    %v5369 = vsel %vm343, %v5296, 0
    %v5372 = vsel %vm343, %v5297, 0
    %v5375 = vsel %vm343, %v5298, 0
    %v5378 = vsel %vm343, %v5299, 0
    %v5381 = vsel %vm343, %v5300, 0
    %v5384 = vsel %vm343, %v5301, 0
    %v5387 = vsel %vm343, %v5302, 0
    %v5390 = vsel %vm343, %v5303, 0
    %v5393 = vsel %vm343, %v5304, 0
    %v5396 = vsel %vm343, %v5305, 0
    %v5399 = vsel %vm343, %v5306, 0
    %v5402 = vsel %vm343, %v5307, 0
    %v5405 = vsel %vm343, %v5308, 0
    %v5408 = vsel %vm343, %v5309, 0
    %v5411 = vsel %vm343, %v5310, 0
    %v5414 = vsel %vm343, %v5311, 0
    %v5417 = vsel %vm343, %v5312, 0
    %v5420 = vsel %vm343, %v5313, 0
    %v5423 = vsel %vm343, %v5314, 0
    %v5426 = vsel %vm343, %v5315, 0
    %v5429 = vsel %vm343, %v5316, 0
    %v5432 = vsel %vm343, %v5317, 0
    %v5435 = vsel %vm343, %v5318, 0
    %v5438 = vsel %vm343, %v5319, 0
    %v5441 = vsel %vm343, %v5320, 0
    %v5444 = vsel %vm343, %v5321, 0
    %v5447 = vsel %vm343, %v5322, 0
    %v5450 = vsel %vm343, %v5323, 0
    %v5453 = vsel %vm343, %v5324, 0
    %v5456 = vsel %vm343, %v5325, 0
    %v5459 = vsel %vm343, %v5326, 0
    %v5462 = vsel %vm343, %v5327, 0
    %v5465 = vsel %vm343, %v5328, 0
    %v5468 = vsel %vm343, %v5329, 0
    %v5471 = vsel %vm343, %v5330, 0
    %v5474 = vsel %vm343, %v5331, 0
    %v5477 = vsel %vm343, %v5332, 0
    %v5480 = vsel %vm343, %v5333, 0
    %v5483 = vsel %vm343, %v5334, 0
    %v5486 = vsel %vm343, %v5335, 0
    %5488 = vmatprep.subr.mxu0 0.0
    %5489 = vmatpush1.msra.mxu0 %v5340
    %5490 = vmatprep.subr.mxu0 0.0
    %5491 = vmatpush1.msra.mxu0 %v5341
    %5492 = vmatprep.subr.mxu0 0.0
    %5493 = vmatpush1.msra.mxu0 %v5342
    %5494 = vmatprep.subr.mxu0 0.0
    %5495 = vmatpush1.msra.mxu0 %v5343
    %5496 = vmatprep.subr.mxu0 0.0
    %5497 = vmatpush1.msra.mxu0 0.0
    %5498 = vmatprep.subr.mxu0 0.0
    %5499 = vmatpush1.msra.mxu0 0.0
    %5500 = vmatprep.subr.mxu0 0.0
    %5501 = vmatpush1.msra.mxu0 0.0
    %5502 = vmatprep.subr.mxu0 0.0
    %5503 = vmatpush1.msra.mxu0 0.0
    %5504 = vmatprep.subr.mxu0 0.0
    %5505 = vmatpush1.msra.mxu0 0.0
    %5506 = vmatprep.subr.mxu0 0.0
    %5507 = vmatpush1.msra.mxu0 0.0
    %5508 = vmatprep.subr.mxu0 0.0
    %5509 = vmatpush1.msra.mxu0 0.0
    %5510 = vmatprep.subr.mxu0 0.0
    %5511 = vmatpush1.msra.mxu0 0.0
    %5512 = vmatprep.subr.mxu0 0.0
    %5513 = vmatpush1.msra.mxu0 0.0
    %5514 = vmatprep.subr.mxu0 0.0
    %5515 = vmatpush1.msra.mxu0 0.0
    %5516 = vmatprep.subr.mxu0 0.0
    %5517 = vmatpush1.msra.mxu0 0.0
    %5518 = vmatprep.subr.mxu0 0.0
    %5519 = vmatpush1.msra.mxu0 0.0
    %5520 = vmatprep.subr.mxu0 0.0
    %5521 = vmatpush1.msra.mxu0 0.0
    %5522 = vmatprep.subr.mxu0 0.0
    %5523 = vmatpush1.msra.mxu0 0.0
    %5524 = vmatprep.subr.mxu0 0.0
    %5525 = vmatpush1.msra.mxu0 0.0
    %5526 = vmatprep.subr.mxu0 0.0
    %5527 = vmatpush1.msra.mxu0 0.0
    %5528 = vmatprep.subr.mxu0 0.0
    %5529 = vmatpush1.msra.mxu0 0.0
    %5530 = vmatprep.subr.mxu0 0.0
    %5531 = vmatpush1.msra.mxu0 0.0
    %5532 = vmatprep.subr.mxu0 0.0
    %5533 = vmatpush1.msra.mxu0 0.0
    %5534 = vmatprep.subr.mxu0 0.0
    %5535 = vmatpush1.msra.mxu0 0.0
    %5536 = vmatprep.subr.mxu0 0.0
    %5537 = vmatpush1.msra.mxu0 0.0
    %5538 = vmatprep.subr.mxu0 0.0
    %5539 = vmatpush1.msra.mxu0 0.0
    %5540 = vmatprep.subr.mxu0 0.0
    %5541 = vmatpush1.msra.mxu0 0.0
    %5542 = vmatprep.subr.mxu0 0.0
    %5543 = vmatpush1.msra.mxu0 0.0
    %5544 = vmatprep.subr.mxu0 0.0
    %5545 = vmatpush1.msra.mxu0 0.0
    %5546 = vmatprep.subr.mxu0 0.0
    %5547 = vmatpush1.msra.mxu0 0.0
    %5548 = vmatprep.subr.mxu0 0.0
    %5549 = vmatpush1.msra.mxu0 0.0
    %5550 = vmatprep.subr.mxu0 0.0
    %5551 = vmatpush1.msra.mxu0 0.0
    %5552 = vmatprep.mubr.f32.mxu0 0.0
    %5553 = vmatmul.mubr.f32.gmra.mrb[0].mxu0 %v5345
    %v5554 = vpop.f32.mrb[0].mxu0
    %v5555 = vadd.f32 0.0, %v5554
    %v5556 = vpop.f32.mrb[0].mxu0
    %5557 = vmatprep.mubr.f32.mxu0 0.0
    %5558 = vmatmul.mubr.f32.gmra.mrb[0].mxu0 %v5348
    %v5559 = vpop.f32.mrb[0].mxu0
    %v5560 = vadd.f32 0.0, %v5559
    %v5561 = vpop.f32.mrb[0].mxu0
    %5562 = vmatprep.mubr.f32.mxu0 0.0
    %5563 = vmatmul.mubr.f32.gmra.mrb[0].mxu0 %v5351
    %v5564 = vpop.f32.mrb[0].mxu0
    %v5565 = vadd.f32 0.0, %v5564
    %v5566 = vpop.f32.mrb[0].mxu0
    %5567 = vmatprep.mubr.f32.mxu0 0.0
    %5568 = vmatmul.mubr.f32.gmra.mrb[0].mxu0 %v5354
    %v5569 = vpop.f32.mrb[0].mxu0
    %v5570 = vadd.f32 0.0, %v5569
    %v5571 = vpop.f32.mrb[0].mxu0
    %5572 = vmatprep.mubr.f32.mxu0 0.0
    %5573 = vmatmul.mubr.f32.gmra.mrb[0].mxu0 %v5357
    %v5574 = vpop.f32.mrb[0].mxu0
    %v5575 = vadd.f32 0.0, %v5574
    %v5576 = vpop.f32.mrb[0].mxu0
    %5577 = vmatprep.mubr.f32.mxu0 0.0
    %5578 = vmatmul.mubr.f32.gmra.mrb[0].mxu0 %v5360
    %v5579 = vpop.f32.mrb[0].mxu0
    %v5580 = vadd.f32 0.0, %v5579
    %v5581 = vpop.f32.mrb[0].mxu0
    %5582 = vmatprep.mubr.f32.mxu0 0.0
    %5583 = vmatmul.mubr.f32.gmra.mrb[0].mxu0 %v5363
    %v5584 = vpop.f32.mrb[0].mxu0
    %v5585 = vadd.f32 0.0, %v5584
    %v5586 = vpop.f32.mrb[0].mxu0
    %5587 = vmatprep.mubr.f32.mxu0 0.0
    %5588 = vmatmul.mubr.f32.gmra.mrb[0].mxu0 %v5366
    %v5589 = vpop.f32.mrb[0].mxu0
    %v5590 = vadd.f32 0.0, %v5589
    %v5591 = vpop.f32.mrb[0].mxu0
    %5592 = vmatprep.mubr.f32.mxu0 0.0
    %5593 = vmatmul.mubr.f32.gmra.mrb[0].mxu0 %v5369
    %v5594 = vpop.f32.mrb[0].mxu0
    %v5595 = vadd.f32 0.0, %v5594
    %v5596 = vpop.f32.mrb[0].mxu0
    %5597 = vmatprep.mubr.f32.mxu0 0.0
    %5598 = vmatmul.mubr.f32.gmra.mrb[0].mxu0 %v5372
    %v5599 = vpop.f32.mrb[0].mxu0
    %v5600 = vadd.f32 0.0, %v5599
    %v5601 = vpop.f32.mrb[0].mxu0
    %5602 = vmatprep.mubr.f32.mxu0 0.0
    %5603 = vmatmul.mubr.f32.gmra.mrb[0].mxu0 %v5375
    %v5604 = vpop.f32.mrb[0].mxu0
    %v5605 = vadd.f32 0.0, %v5604
    %v5606 = vpop.f32.mrb[0].mxu0
    %5607 = vmatprep.mubr.f32.mxu0 0.0
    %5608 = vmatmul.mubr.f32.gmra.mrb[0].mxu0 %v5378
    %v5609 = vpop.f32.mrb[0].mxu0
    %v5610 = vadd.f32 0.0, %v5609
    %v5611 = vpop.f32.mrb[0].mxu0
    %5612 = vmatprep.mubr.f32.mxu0 0.0
    %5613 = vmatmul.mubr.f32.gmra.mrb[0].mxu0 %v5381
    %v5614 = vpop.f32.mrb[0].mxu0
    %v5615 = vadd.f32 0.0, %v5614
    %v5616 = vpop.f32.mrb[0].mxu0
    %5617 = vmatprep.mubr.f32.mxu0 0.0
    %5618 = vmatmul.mubr.f32.gmra.mrb[0].mxu0 %v5384
    %v5619 = vpop.f32.mrb[0].mxu0
    %v5620 = vadd.f32 0.0, %v5619
    %v5621 = vpop.f32.mrb[0].mxu0
    %5622 = vmatprep.mubr.f32.mxu0 0.0
    %5623 = vmatmul.mubr.f32.gmra.mrb[0].mxu0 %v5387
    %v5624 = vpop.f32.mrb[0].mxu0
    %v5625 = vadd.f32 0.0, %v5624
    %v5626 = vpop.f32.mrb[0].mxu0
    %5627 = vmatprep.mubr.f32.mxu0 0.0
    %5628 = vmatmul.mubr.f32.gmra.mrb[0].mxu0 %v5390
    %v5629 = vpop.f32.mrb[0].mxu0
    %v5630 = vadd.f32 0.0, %v5629
    %v5631 = vpop.f32.mrb[0].mxu0
    %5632 = vmatprep.mubr.f32.mxu0 0.0
    %5633 = vmatmul.mubr.f32.gmra.mrb[0].mxu0 %v5393
    %v5634 = vpop.f32.mrb[0].mxu0
    %v5635 = vadd.f32 0.0, %v5634
    %v5636 = vpop.f32.mrb[0].mxu0
    %5637 = vmatprep.mubr.f32.mxu0 0.0
    %5638 = vmatmul.mubr.f32.gmra.mrb[0].mxu0 %v5396
    %v5639 = vpop.f32.mrb[0].mxu0
    %v5640 = vadd.f32 0.0, %v5639
    %v5641 = vpop.f32.mrb[0].mxu0
    %5642 = vmatprep.mubr.f32.mxu0 0.0
    %5643 = vmatmul.mubr.f32.gmra.mrb[0].mxu0 %v5399
    %v5644 = vpop.f32.mrb[0].mxu0
    %v5645 = vadd.f32 0.0, %v5644
    %v5646 = vpop.f32.mrb[0].mxu0
    %5647 = vmatprep.mubr.f32.mxu0 0.0
    %5648 = vmatmul.mubr.f32.gmra.mrb[0].mxu0 %v5402
    %v5649 = vpop.f32.mrb[0].mxu0
    %v5650 = vadd.f32 0.0, %v5649
    %v5651 = vpop.f32.mrb[0].mxu0
    %5652 = vmatprep.mubr.f32.mxu0 0.0
    %5653 = vmatmul.mubr.f32.gmra.mrb[0].mxu0 %v5405
    %v5654 = vpop.f32.mrb[0].mxu0
    %v5655 = vadd.f32 0.0, %v5654
    %v5656 = vpop.f32.mrb[0].mxu0
    %5657 = vmatprep.mubr.f32.mxu0 0.0
    %5658 = vmatmul.mubr.f32.gmra.mrb[0].mxu0 %v5408
    %v5659 = vpop.f32.mrb[0].mxu0
    %v5660 = vadd.f32 0.0, %v5659
    %v5661 = vpop.f32.mrb[0].mxu0
    %5662 = vmatprep.mubr.f32.mxu0 0.0
    %5663 = vmatmul.mubr.f32.gmra.mrb[0].mxu0 %v5411
    %v5664 = vpop.f32.mrb[0].mxu0
    %v5665 = vadd.f32 0.0, %v5664
    %v5666 = vpop.f32.mrb[0].mxu0
    %5667 = vmatprep.mubr.f32.mxu0 0.0
    %5668 = vmatmul.mubr.f32.gmra.mrb[0].mxu0 %v5414
    %v5669 = vpop.f32.mrb[0].mxu0
    %v5670 = vadd.f32 0.0, %v5669
    %v5671 = vpop.f32.mrb[0].mxu0
    %5672 = vmatprep.mubr.f32.mxu0 0.0
    %5673 = vmatmul.mubr.f32.gmra.mrb[0].mxu0 %v5417
    %v5674 = vpop.f32.mrb[0].mxu0
    %v5675 = vadd.f32 0.0, %v5674
    %v5676 = vpop.f32.mrb[0].mxu0
    %5677 = vmatprep.mubr.f32.mxu0 0.0
    %5678 = vmatmul.mubr.f32.gmra.mrb[0].mxu0 %v5420
    %v5679 = vpop.f32.mrb[0].mxu0
    %v5680 = vadd.f32 0.0, %v5679
    %v5681 = vpop.f32.mrb[0].mxu0
    %5682 = vmatprep.mubr.f32.mxu0 0.0
    %5683 = vmatmul.mubr.f32.gmra.mrb[0].mxu0 %v5423
    %v5684 = vpop.f32.mrb[0].mxu0
    %v5685 = vadd.f32 0.0, %v5684
    %v5686 = vpop.f32.mrb[0].mxu0
    %5687 = vmatprep.mubr.f32.mxu0 0.0
    %5688 = vmatmul.mubr.f32.gmra.mrb[0].mxu0 %v5426
    %v5689 = vpop.f32.mrb[0].mxu0
    %v5690 = vadd.f32 0.0, %v5689
    %v5691 = vpop.f32.mrb[0].mxu0
    %5692 = vmatprep.mubr.f32.mxu0 0.0
    %5693 = vmatmul.mubr.f32.gmra.mrb[0].mxu0 %v5429
    %v5694 = vpop.f32.mrb[0].mxu0
    %v5695 = vadd.f32 0.0, %v5694
    %v5696 = vpop.f32.mrb[0].mxu0
    %5697 = vmatprep.mubr.f32.mxu0 0.0
    %5698 = vmatmul.mubr.f32.gmra.mrb[0].mxu0 %v5432
    %v5699 = vpop.f32.mrb[0].mxu0
    %v5700 = vadd.f32 0.0, %v5699
    %v5701 = vpop.f32.mrb[0].mxu0
    %5702 = vmatprep.mubr.f32.mxu0 0.0
    %5703 = vmatmul.mubr.f32.gmra.mrb[0].mxu0 %v5435
    %v5704 = vpop.f32.mrb[0].mxu0
    %v5705 = vadd.f32 0.0, %v5704
    %v5706 = vpop.f32.mrb[0].mxu0
    %5707 = vmatprep.mubr.f32.mxu0 0.0
    %5708 = vmatmul.mubr.f32.gmra.mrb[0].mxu0 %v5438
    %v5709 = vpop.f32.mrb[0].mxu0
    %v5710 = vadd.f32 0.0, %v5709
    %v5711 = vpop.f32.mrb[0].mxu0
    %5712 = vmatprep.mubr.f32.mxu0 0.0
    %5713 = vmatmul.mubr.f32.gmra.mrb[0].mxu0 %v5441
    %v5714 = vpop.f32.mrb[0].mxu0
    %v5715 = vadd.f32 0.0, %v5714
    %v5716 = vpop.f32.mrb[0].mxu0
    %5717 = vmatprep.mubr.f32.mxu0 0.0
    %5718 = vmatmul.mubr.f32.gmra.mrb[0].mxu0 %v5444
    %v5719 = vpop.f32.mrb[0].mxu0
    %v5720 = vadd.f32 0.0, %v5719
    %v5721 = vpop.f32.mrb[0].mxu0
    %5722 = vmatprep.mubr.f32.mxu0 0.0
    %5723 = vmatmul.mubr.f32.gmra.mrb[0].mxu0 %v5447
    %v5724 = vpop.f32.mrb[0].mxu0
    %v5725 = vadd.f32 0.0, %v5724
    %v5726 = vpop.f32.mrb[0].mxu0
    %5727 = vmatprep.mubr.f32.mxu0 0.0
    %5728 = vmatmul.mubr.f32.gmra.mrb[0].mxu0 %v5450
    %v5729 = vpop.f32.mrb[0].mxu0
    %v5730 = vadd.f32 0.0, %v5729
    %v5731 = vpop.f32.mrb[0].mxu0
    %5732 = vmatprep.mubr.f32.mxu0 0.0
    %5733 = vmatmul.mubr.f32.gmra.mrb[0].mxu0 %v5453
    %v5734 = vpop.f32.mrb[0].mxu0
    %v5735 = vadd.f32 0.0, %v5734
    %v5736 = vpop.f32.mrb[0].mxu0
    %5737 = vmatprep.mubr.f32.mxu0 0.0
    %5738 = vmatmul.mubr.f32.gmra.mrb[0].mxu0 %v5456
    %v5739 = vpop.f32.mrb[0].mxu0
    %v5740 = vadd.f32 0.0, %v5739
    %v5741 = vpop.f32.mrb[0].mxu0
    %5742 = vmatprep.mubr.f32.mxu0 0.0
    %5743 = vmatmul.mubr.f32.gmra.mrb[0].mxu0 %v5459
    %v5744 = vpop.f32.mrb[0].mxu0
    %v5745 = vadd.f32 0.0, %v5744
    %v5746 = vpop.f32.mrb[0].mxu0
    %5747 = vmatprep.mubr.f32.mxu0 0.0
    %5748 = vmatmul.mubr.f32.gmra.mrb[0].mxu0 %v5462
    %v5749 = vpop.f32.mrb[0].mxu0
    %v5750 = vadd.f32 0.0, %v5749
    %v5751 = vpop.f32.mrb[0].mxu0
    %5752 = vmatprep.mubr.f32.mxu0 0.0
    %5753 = vmatmul.mubr.f32.gmra.mrb[0].mxu0 %v5465
    %v5754 = vpop.f32.mrb[0].mxu0
    %v5755 = vadd.f32 0.0, %v5754
    %v5756 = vpop.f32.mrb[0].mxu0
    %5757 = vmatprep.mubr.f32.mxu0 0.0
    %5758 = vmatmul.mubr.f32.gmra.mrb[0].mxu0 %v5468
    %v5759 = vpop.f32.mrb[0].mxu0
    %v5760 = vadd.f32 0.0, %v5759
    %v5761 = vpop.f32.mrb[0].mxu0
    %5762 = vmatprep.mubr.f32.mxu0 0.0
    %5763 = vmatmul.mubr.f32.gmra.mrb[0].mxu0 %v5471
    %v5764 = vpop.f32.mrb[0].mxu0
    %v5765 = vadd.f32 0.0, %v5764
    %v5766 = vpop.f32.mrb[0].mxu0
    %5767 = vmatprep.mubr.f32.mxu0 0.0
    %5768 = vmatmul.mubr.f32.gmra.mrb[0].mxu0 %v5474
    %v5769 = vpop.f32.mrb[0].mxu0
    %v5770 = vadd.f32 0.0, %v5769
    %v5771 = vpop.f32.mrb[0].mxu0
    %5772 = vmatprep.mubr.f32.mxu0 0.0
    %5773 = vmatmul.mubr.f32.gmra.mrb[0].mxu0 %v5477
    %v5774 = vpop.f32.mrb[0].mxu0
    %v5775 = vadd.f32 0.0, %v5774
    %v5776 = vpop.f32.mrb[0].mxu0
    %5777 = vmatprep.mubr.f32.mxu0 0.0
    %5778 = vmatmul.mubr.f32.gmra.mrb[0].mxu0 %v5480
    %v5779 = vpop.f32.mrb[0].mxu0
    %v5780 = vadd.f32 0.0, %v5779
    %v5781 = vpop.f32.mrb[0].mxu0
    %5782 = vmatprep.mubr.f32.mxu0 0.0
    %5783 = vmatmul.mubr.f32.gmra.mrb[0].mxu0 %v5483
    %v5784 = vpop.f32.mrb[0].mxu0
    %v5785 = vadd.f32 0.0, %v5784
    %v5786 = vpop.f32.mrb[0].mxu0
    %5787 = vmatprep.mubr.f32.mxu0 0.0
    %5788 = vmatmul.mubr.f32.gmra.mrb[0].mxu0 %v5486
    %v5789 = vpop.f32.mrb[0].mxu0
    %v5790 = vadd.f32 0.0, %v5789
    %v5791 = vpop.f32.mrb[0].mxu0
    %5792 = vdwg.mxu0
    %v5794 = vsel %vm343, %v2898, 0
    %v5797 = vsel %vm343, %v2901, 0
    %v5800 = vsel %vm343, %v2906, 0
    %v5803 = vsel %vm343, %v2909, 0
    %v5806 = vsel %vm343, %v2914, 0
    %v5809 = vsel %vm343, %v2917, 0
    %v5812 = vsel %vm343, %v2922, 0
    %v5815 = vsel %vm343, %v2925, 0
    %v5818 = vsel %vm343, %v2930, 0
    %v5821 = vsel %vm343, %v2933, 0
    %v5824 = vsel %vm343, %v2938, 0
    %v5827 = vsel %vm343, %v2941, 0
    %v5830 = vsel %vm343, %v2946, 0
    %v5833 = vsel %vm343, %v2949, 0
    %v5836 = vsel %vm343, %v2954, 0
    %v5839 = vsel %vm343, %v2957, 0
    %v5842 = vsel %vm343, %v2962, 0
    %v5845 = vsel %vm343, %v2965, 0
    %v5848 = vsel %vm343, %v2970, 0
    %v5851 = vsel %vm343, %v2973, 0
    %v5854 = vsel %vm343, %v2978, 0
    %v5857 = vsel %vm343, %v2981, 0
    %v5860 = vsel %vm343, %v2986, 0
    %v5863 = vsel %vm343, %v2989, 0
    %v5866 = vsel %vm343, %v2994, 0
    %v5869 = vsel %vm343, %v2997, 0
    %v5872 = vsel %vm343, %v3002, 0
    %v5875 = vsel %vm343, %v3005, 0
    %v5878 = vsel %vm343, %v3010, 0
    %v5881 = vsel %vm343, %v3013, 0
    %v5884 = vsel %vm343, %v3018, 0
    %v5887 = vsel %vm343, %v3021, 0
    %v5890 = vsel %vm343, %v3026, 0
    %v5893 = vsel %vm343, %v3029, 0
    %v5896 = vsel %vm343, %v3034, 0
    %v5899 = vsel %vm343, %v3037, 0
    %v5902 = vsel %vm343, %v3042, 0
    %v5905 = vsel %vm343, %v3045, 0
    %v5908 = vsel %vm343, %v3050, 0
    %v5911 = vsel %vm343, %v3053, 0
    %v5914 = vsel %vm343, %v3058, 0
    %v5917 = vsel %vm343, %v3061, 0
    %v5920 = vsel %vm343, %v3066, 0
    %v5923 = vsel %vm343, %v3069, 0
    %v5926 = vsel %vm343, %v3074, 0
    %v5929 = vsel %vm343, %v3077, 0
    %v5932 = vsel %vm343, %v3082, 0
    %v5935 = vsel %vm343, %v3085, 0
    %5937 = vmatprep.subr.mxu0 0.0
    %5938 = vmatpush1.msra.mxu0 %v5336
    %5939 = vmatprep.subr.mxu0 0.0
    %5940 = vmatpush1.msra.mxu0 %v5337
    %5941 = vmatprep.subr.mxu0 0.0
    %5942 = vmatpush1.msra.mxu0 %v5338
    %5943 = vmatprep.subr.mxu0 0.0
    %5944 = vmatpush1.msra.mxu0 %v5339
    %5945 = vmatprep.subr.mxu0 0.0
    %5946 = vmatpush1.msra.mxu0 0.0
    %5947 = vmatprep.subr.mxu0 0.0
    %5948 = vmatpush1.msra.mxu0 0.0
    %5949 = vmatprep.subr.mxu0 0.0
    %5950 = vmatpush1.msra.mxu0 0.0
    %5951 = vmatprep.subr.mxu0 0.0
    %5952 = vmatpush1.msra.mxu0 0.0
    %5953 = vmatprep.subr.mxu0 0.0
    %5954 = vmatpush1.msra.mxu0 0.0
    %5955 = vmatprep.subr.mxu0 0.0
    %5956 = vmatpush1.msra.mxu0 0.0
    %5957 = vmatprep.subr.mxu0 0.0
    %5958 = vmatpush1.msra.mxu0 0.0
    %5959 = vmatprep.subr.mxu0 0.0
    %5960 = vmatpush1.msra.mxu0 0.0
    %5961 = vmatprep.subr.mxu0 0.0
    %5962 = vmatpush1.msra.mxu0 0.0
    %5963 = vmatprep.subr.mxu0 0.0
    %5964 = vmatpush1.msra.mxu0 0.0
    %5965 = vmatprep.subr.mxu0 0.0
    %5966 = vmatpush1.msra.mxu0 0.0
    %5967 = vmatprep.subr.mxu0 0.0
    %5968 = vmatpush1.msra.mxu0 0.0
    %5969 = vmatprep.subr.mxu0 0.0
    %5970 = vmatpush1.msra.mxu0 0.0
    %5971 = vmatprep.subr.mxu0 0.0
    %5972 = vmatpush1.msra.mxu0 0.0
    %5973 = vmatprep.subr.mxu0 0.0
    %5974 = vmatpush1.msra.mxu0 0.0
    %5975 = vmatprep.subr.mxu0 0.0
    %5976 = vmatpush1.msra.mxu0 0.0
    %5977 = vmatprep.subr.mxu0 0.0
    %5978 = vmatpush1.msra.mxu0 0.0
    %5979 = vmatprep.subr.mxu0 0.0
    %5980 = vmatpush1.msra.mxu0 0.0
    %5981 = vmatprep.subr.mxu0 0.0
    %5982 = vmatpush1.msra.mxu0 0.0
    %5983 = vmatprep.subr.mxu0 0.0
    %5984 = vmatpush1.msra.mxu0 0.0
    %5985 = vmatprep.subr.mxu0 0.0
    %5986 = vmatpush1.msra.mxu0 0.0
    %5987 = vmatprep.subr.mxu0 0.0
    %5988 = vmatpush1.msra.mxu0 0.0
    %5989 = vmatprep.subr.mxu0 0.0
    %5990 = vmatpush1.msra.mxu0 0.0
    %5991 = vmatprep.subr.mxu0 0.0
    %5992 = vmatpush1.msra.mxu0 0.0
    %5993 = vmatprep.subr.mxu0 0.0
    %5994 = vmatpush1.msra.mxu0 0.0
    %5995 = vmatprep.subr.mxu0 0.0
    %5996 = vmatpush1.msra.mxu0 0.0
    %5997 = vmatprep.subr.mxu0 0.0
    %5998 = vmatpush1.msra.mxu0 0.0
    %5999 = vmatprep.subr.mxu0 0.0
    %6000 = vmatpush1.msra.mxu0 0.0
    %6001 = vmatprep.mubr.f32.mxu0 0.0
    %6002 = vmatmul.mubr.f32.gmra.mrb[0].mxu0 %v5794
    %v6003 = vpop.f32.mrb[0].mxu0
    %v6004 = vadd.f32 %v5555, %v6003
    %v6005 = vpop.f32.mrb[0].mxu0
    %6006 = vmatprep.mubr.f32.mxu0 0.0
    %6007 = vmatmul.mubr.f32.gmra.mrb[0].mxu0 %v5797
    %v6008 = vpop.f32.mrb[0].mxu0
    %v6009 = vadd.f32 %v5560, %v6008
    %v6010 = vpop.f32.mrb[0].mxu0
    %6011 = vmatprep.mubr.f32.mxu0 0.0
    %6012 = vmatmul.mubr.f32.gmra.mrb[0].mxu0 %v5800
    %v6013 = vpop.f32.mrb[0].mxu0
    %v6014 = vadd.f32 %v5565, %v6013
    %v6015 = vpop.f32.mrb[0].mxu0
    %6016 = vmatprep.mubr.f32.mxu0 0.0
    %6017 = vmatmul.mubr.f32.gmra.mrb[0].mxu0 %v5803
    %v6018 = vpop.f32.mrb[0].mxu0
    %v6019 = vadd.f32 %v5570, %v6018
    %v6020 = vpop.f32.mrb[0].mxu0
    %6021 = vmatprep.mubr.f32.mxu0 0.0
    %6022 = vmatmul.mubr.f32.gmra.mrb[0].mxu0 %v5806
    %v6023 = vpop.f32.mrb[0].mxu0
    %v6024 = vadd.f32 %v5575, %v6023
    %v6025 = vpop.f32.mrb[0].mxu0
    %6026 = vmatprep.mubr.f32.mxu0 0.0
    %6027 = vmatmul.mubr.f32.gmra.mrb[0].mxu0 %v5809
    %v6028 = vpop.f32.mrb[0].mxu0
    %v6029 = vadd.f32 %v5580, %v6028
    %v6030 = vpop.f32.mrb[0].mxu0
    %6031 = vmatprep.mubr.f32.mxu0 0.0
    %6032 = vmatmul.mubr.f32.gmra.mrb[0].mxu0 %v5812
    %v6033 = vpop.f32.mrb[0].mxu0
    %v6034 = vadd.f32 %v5585, %v6033
    %v6035 = vpop.f32.mrb[0].mxu0
    %6036 = vmatprep.mubr.f32.mxu0 0.0
    %6037 = vmatmul.mubr.f32.gmra.mrb[0].mxu0 %v5815
    %v6038 = vpop.f32.mrb[0].mxu0
    %v6039 = vadd.f32 %v5590, %v6038
    %v6040 = vpop.f32.mrb[0].mxu0
    %6041 = vmatprep.mubr.f32.mxu0 0.0
    %6042 = vmatmul.mubr.f32.gmra.mrb[0].mxu0 %v5818
    %v6043 = vpop.f32.mrb[0].mxu0
    %v6044 = vadd.f32 %v5595, %v6043
    %v6045 = vpop.f32.mrb[0].mxu0
    %6046 = vmatprep.mubr.f32.mxu0 0.0
    %6047 = vmatmul.mubr.f32.gmra.mrb[0].mxu0 %v5821
    %v6048 = vpop.f32.mrb[0].mxu0
    %v6049 = vadd.f32 %v5600, %v6048
    %v6050 = vpop.f32.mrb[0].mxu0
    %6051 = vmatprep.mubr.f32.mxu0 0.0
    %6052 = vmatmul.mubr.f32.gmra.mrb[0].mxu0 %v5824
    %v6053 = vpop.f32.mrb[0].mxu0
    %v6054 = vadd.f32 %v5605, %v6053
    %v6055 = vpop.f32.mrb[0].mxu0
    %6056 = vmatprep.mubr.f32.mxu0 0.0
    %6057 = vmatmul.mubr.f32.gmra.mrb[0].mxu0 %v5827
    %v6058 = vpop.f32.mrb[0].mxu0
    %v6059 = vadd.f32 %v5610, %v6058
    %v6060 = vpop.f32.mrb[0].mxu0
    %6061 = vmatprep.mubr.f32.mxu0 0.0
    %6062 = vmatmul.mubr.f32.gmra.mrb[0].mxu0 %v5830
    %v6063 = vpop.f32.mrb[0].mxu0
    %v6064 = vadd.f32 %v5615, %v6063
    %v6065 = vpop.f32.mrb[0].mxu0
    %6066 = vmatprep.mubr.f32.mxu0 0.0
    %6067 = vmatmul.mubr.f32.gmra.mrb[0].mxu0 %v5833
    %v6068 = vpop.f32.mrb[0].mxu0
    %v6069 = vadd.f32 %v5620, %v6068
    %v6070 = vpop.f32.mrb[0].mxu0
    %6071 = vmatprep.mubr.f32.mxu0 0.0
    %6072 = vmatmul.mubr.f32.gmra.mrb[0].mxu0 %v5836
    %v6073 = vpop.f32.mrb[0].mxu0
    %v6074 = vadd.f32 %v5625, %v6073
    %v6075 = vpop.f32.mrb[0].mxu0
    %6076 = vmatprep.mubr.f32.mxu0 0.0
    %6077 = vmatmul.mubr.f32.gmra.mrb[0].mxu0 %v5839
    %v6078 = vpop.f32.mrb[0].mxu0
    %v6079 = vadd.f32 %v5630, %v6078
    %v6080 = vpop.f32.mrb[0].mxu0
    %6081 = vmatprep.mubr.f32.mxu0 0.0
    %6082 = vmatmul.mubr.f32.gmra.mrb[0].mxu0 %v5842
    %v6083 = vpop.f32.mrb[0].mxu0
    %v6084 = vadd.f32 %v5635, %v6083
    %v6085 = vpop.f32.mrb[0].mxu0
    %6086 = vmatprep.mubr.f32.mxu0 0.0
    %6087 = vmatmul.mubr.f32.gmra.mrb[0].mxu0 %v5845
    %v6088 = vpop.f32.mrb[0].mxu0
    %v6089 = vadd.f32 %v5640, %v6088
    %v6090 = vpop.f32.mrb[0].mxu0
    %6091 = vmatprep.mubr.f32.mxu0 0.0
    %6092 = vmatmul.mubr.f32.gmra.mrb[0].mxu0 %v5848
    %v6093 = vpop.f32.mrb[0].mxu0
    %v6094 = vadd.f32 %v5645, %v6093
    %v6095 = vpop.f32.mrb[0].mxu0
    %6096 = vmatprep.mubr.f32.mxu0 0.0
    %6097 = vmatmul.mubr.f32.gmra.mrb[0].mxu0 %v5851
    %v6098 = vpop.f32.mrb[0].mxu0
    %v6099 = vadd.f32 %v5650, %v6098
    %v6100 = vpop.f32.mrb[0].mxu0
    %6101 = vmatprep.mubr.f32.mxu0 0.0
    %6102 = vmatmul.mubr.f32.gmra.mrb[0].mxu0 %v5854
    %v6103 = vpop.f32.mrb[0].mxu0
    %v6104 = vadd.f32 %v5655, %v6103
    %v6105 = vpop.f32.mrb[0].mxu0
    %6106 = vmatprep.mubr.f32.mxu0 0.0
    %6107 = vmatmul.mubr.f32.gmra.mrb[0].mxu0 %v5857
    %v6108 = vpop.f32.mrb[0].mxu0
    %v6109 = vadd.f32 %v5660, %v6108
    %v6110 = vpop.f32.mrb[0].mxu0
    %6111 = vmatprep.mubr.f32.mxu0 0.0
    %6112 = vmatmul.mubr.f32.gmra.mrb[0].mxu0 %v5860
    %v6113 = vpop.f32.mrb[0].mxu0
    %v6114 = vadd.f32 %v5665, %v6113
    %v6115 = vpop.f32.mrb[0].mxu0
    %6116 = vmatprep.mubr.f32.mxu0 0.0
    %6117 = vmatmul.mubr.f32.gmra.mrb[0].mxu0 %v5863
    %v6118 = vpop.f32.mrb[0].mxu0
    %v6119 = vadd.f32 %v5670, %v6118
    %v6120 = vpop.f32.mrb[0].mxu0
    %6121 = vmatprep.mubr.f32.mxu0 0.0
    %6122 = vmatmul.mubr.f32.gmra.mrb[0].mxu0 %v5866
    %v6123 = vpop.f32.mrb[0].mxu0
    %v6124 = vadd.f32 %v5675, %v6123
    %v6125 = vpop.f32.mrb[0].mxu0
    %6126 = vmatprep.mubr.f32.mxu0 0.0
    %6127 = vmatmul.mubr.f32.gmra.mrb[0].mxu0 %v5869
    %v6128 = vpop.f32.mrb[0].mxu0
    %v6129 = vadd.f32 %v5680, %v6128
    %v6130 = vpop.f32.mrb[0].mxu0
    %6131 = vmatprep.mubr.f32.mxu0 0.0
    %6132 = vmatmul.mubr.f32.gmra.mrb[0].mxu0 %v5872
    %v6133 = vpop.f32.mrb[0].mxu0
    %v6134 = vadd.f32 %v5685, %v6133
    %v6135 = vpop.f32.mrb[0].mxu0
    %6136 = vmatprep.mubr.f32.mxu0 0.0
    %6137 = vmatmul.mubr.f32.gmra.mrb[0].mxu0 %v5875
    %v6138 = vpop.f32.mrb[0].mxu0
    %v6139 = vadd.f32 %v5690, %v6138
    %v6140 = vpop.f32.mrb[0].mxu0
    %6141 = vmatprep.mubr.f32.mxu0 0.0
    %6142 = vmatmul.mubr.f32.gmra.mrb[0].mxu0 %v5878
    %v6143 = vpop.f32.mrb[0].mxu0
    %v6144 = vadd.f32 %v5695, %v6143
    %v6145 = vpop.f32.mrb[0].mxu0
    %6146 = vmatprep.mubr.f32.mxu0 0.0
    %6147 = vmatmul.mubr.f32.gmra.mrb[0].mxu0 %v5881
    %v6148 = vpop.f32.mrb[0].mxu0
    %v6149 = vadd.f32 %v5700, %v6148
    %v6150 = vpop.f32.mrb[0].mxu0
    %6151 = vmatprep.mubr.f32.mxu0 0.0
    %6152 = vmatmul.mubr.f32.gmra.mrb[0].mxu0 %v5884
    %v6153 = vpop.f32.mrb[0].mxu0
    %v6154 = vadd.f32 %v5705, %v6153
    %v6155 = vpop.f32.mrb[0].mxu0
    %6156 = vmatprep.mubr.f32.mxu0 0.0
    %6157 = vmatmul.mubr.f32.gmra.mrb[0].mxu0 %v5887
    %v6158 = vpop.f32.mrb[0].mxu0
    %v6159 = vadd.f32 %v5710, %v6158
    %v6160 = vpop.f32.mrb[0].mxu0
    %6161 = vmatprep.mubr.f32.mxu0 0.0
    %6162 = vmatmul.mubr.f32.gmra.mrb[0].mxu0 %v5890
    %v6163 = vpop.f32.mrb[0].mxu0
    %v6164 = vadd.f32 %v5715, %v6163
    %v6165 = vpop.f32.mrb[0].mxu0
    %6166 = vmatprep.mubr.f32.mxu0 0.0
    %6167 = vmatmul.mubr.f32.gmra.mrb[0].mxu0 %v5893
    %v6168 = vpop.f32.mrb[0].mxu0
    %v6169 = vadd.f32 %v5720, %v6168
    %v6170 = vpop.f32.mrb[0].mxu0
    %6171 = vmatprep.mubr.f32.mxu0 0.0
    %6172 = vmatmul.mubr.f32.gmra.mrb[0].mxu0 %v5896
    %v6173 = vpop.f32.mrb[0].mxu0
    %v6174 = vadd.f32 %v5725, %v6173
    %v6175 = vpop.f32.mrb[0].mxu0
    %6176 = vmatprep.mubr.f32.mxu0 0.0
    %6177 = vmatmul.mubr.f32.gmra.mrb[0].mxu0 %v5899
    %v6178 = vpop.f32.mrb[0].mxu0
    %v6179 = vadd.f32 %v5730, %v6178
    %v6180 = vpop.f32.mrb[0].mxu0
    %6181 = vmatprep.mubr.f32.mxu0 0.0
    %6182 = vmatmul.mubr.f32.gmra.mrb[0].mxu0 %v5902
    %v6183 = vpop.f32.mrb[0].mxu0
    %v6184 = vadd.f32 %v5735, %v6183
    %v6185 = vpop.f32.mrb[0].mxu0
    %6186 = vmatprep.mubr.f32.mxu0 0.0
    %6187 = vmatmul.mubr.f32.gmra.mrb[0].mxu0 %v5905
    %v6188 = vpop.f32.mrb[0].mxu0
    %v6189 = vadd.f32 %v5740, %v6188
    %v6190 = vpop.f32.mrb[0].mxu0
    %6191 = vmatprep.mubr.f32.mxu0 0.0
    %6192 = vmatmul.mubr.f32.gmra.mrb[0].mxu0 %v5908
    %v6193 = vpop.f32.mrb[0].mxu0
    %v6194 = vadd.f32 %v5745, %v6193
    %v6195 = vpop.f32.mrb[0].mxu0
    %6196 = vmatprep.mubr.f32.mxu0 0.0
    %6197 = vmatmul.mubr.f32.gmra.mrb[0].mxu0 %v5911
    %v6198 = vpop.f32.mrb[0].mxu0
    %v6199 = vadd.f32 %v5750, %v6198
    %v6200 = vpop.f32.mrb[0].mxu0
    %6201 = vmatprep.mubr.f32.mxu0 0.0
    %6202 = vmatmul.mubr.f32.gmra.mrb[0].mxu0 %v5914
    %v6203 = vpop.f32.mrb[0].mxu0
    %v6204 = vadd.f32 %v5755, %v6203
    %v6205 = vpop.f32.mrb[0].mxu0
    %6206 = vmatprep.mubr.f32.mxu0 0.0
    %6207 = vmatmul.mubr.f32.gmra.mrb[0].mxu0 %v5917
    %v6208 = vpop.f32.mrb[0].mxu0
    %v6209 = vadd.f32 %v5760, %v6208
    %v6210 = vpop.f32.mrb[0].mxu0
    %6211 = vmatprep.mubr.f32.mxu0 0.0
    %6212 = vmatmul.mubr.f32.gmra.mrb[0].mxu0 %v5920
    %v6213 = vpop.f32.mrb[0].mxu0
    %v6214 = vadd.f32 %v5765, %v6213
    %v6215 = vpop.f32.mrb[0].mxu0
    %6216 = vmatprep.mubr.f32.mxu0 0.0
    %6217 = vmatmul.mubr.f32.gmra.mrb[0].mxu0 %v5923
    %v6218 = vpop.f32.mrb[0].mxu0
    %v6219 = vadd.f32 %v5770, %v6218
    %v6220 = vpop.f32.mrb[0].mxu0
    %6221 = vmatprep.mubr.f32.mxu0 0.0
    %6222 = vmatmul.mubr.f32.gmra.mrb[0].mxu0 %v5926
    %v6223 = vpop.f32.mrb[0].mxu0
    %v6224 = vadd.f32 %v5775, %v6223
    %v6225 = vpop.f32.mrb[0].mxu0
    %6226 = vmatprep.mubr.f32.mxu0 0.0
    %6227 = vmatmul.mubr.f32.gmra.mrb[0].mxu0 %v5929
    %v6228 = vpop.f32.mrb[0].mxu0
    %v6229 = vadd.f32 %v5780, %v6228
    %v6230 = vpop.f32.mrb[0].mxu0
    %6231 = vmatprep.mubr.f32.mxu0 0.0
    %6232 = vmatmul.mubr.f32.gmra.mrb[0].mxu0 %v5932
    %v6233 = vpop.f32.mrb[0].mxu0
    %v6234 = vadd.f32 %v5785, %v6233
    %v6235 = vpop.f32.mrb[0].mxu0
    %6236 = vmatprep.mubr.f32.mxu0 0.0
    %6237 = vmatmul.mubr.f32.gmra.mrb[0].mxu0 %v5935
    %v6238 = vpop.f32.mrb[0].mxu0
    %v6239 = vadd.f32 %v5790, %v6238
    %v6240 = vpop.f32.mrb[0].mxu0
    %6241 = vdwg.mxu0
    %v6242 = vld [vmem:[%s10] sm:$0x1]
    %v6244 = vlaneseq
    %v6245 = vshrl.u32 %v6244, 7
    %v6246 = vsub.s32 0, %v6245
    %v6247 = vrot.slane %v6242, %v6246
    %v6249 = vadd.f32 %v6004, %v6247
    %v6250 = vadd.f32 %v6009, %v6247
    %v6251 = vadd.f32 %v6014, %v6247
    %v6252 = vadd.f32 %v6019, %v6247
    %v6253 = vadd.f32 %v6024, %v6247
    %v6254 = vadd.f32 %v6029, %v6247
    %v6255 = vadd.f32 %v6034, %v6247
    %v6256 = vadd.f32 %v6039, %v6247
    %v6257 = vadd.f32 %v6044, %v6247
    %v6258 = vadd.f32 %v6049, %v6247
    %v6259 = vadd.f32 %v6054, %v6247
    %v6260 = vadd.f32 %v6059, %v6247
    %v6261 = vadd.f32 %v6064, %v6247
    %v6262 = vadd.f32 %v6069, %v6247
    %v6263 = vadd.f32 %v6074, %v6247
    %v6264 = vadd.f32 %v6079, %v6247
    %v6265 = vadd.f32 %v6084, %v6247
    %v6266 = vadd.f32 %v6089, %v6247
    %v6267 = vadd.f32 %v6094, %v6247
    %v6268 = vadd.f32 %v6099, %v6247
    %v6269 = vadd.f32 %v6104, %v6247
    %v6270 = vadd.f32 %v6109, %v6247
    %v6271 = vadd.f32 %v6114, %v6247
    %v6272 = vadd.f32 %v6119, %v6247
    %v6273 = vadd.f32 %v6124, %v6247
    %v6274 = vadd.f32 %v6129, %v6247
    %v6275 = vadd.f32 %v6134, %v6247
    %v6276 = vadd.f32 %v6139, %v6247
    %v6277 = vadd.f32 %v6144, %v6247
    %v6278 = vadd.f32 %v6149, %v6247
    %v6279 = vadd.f32 %v6154, %v6247
    %v6280 = vadd.f32 %v6159, %v6247
    %v6281 = vadd.f32 %v6164, %v6247
    %v6282 = vadd.f32 %v6169, %v6247
    %v6283 = vadd.f32 %v6174, %v6247
    %v6284 = vadd.f32 %v6179, %v6247
    %v6285 = vadd.f32 %v6184, %v6247
    %v6286 = vadd.f32 %v6189, %v6247
    %v6287 = vadd.f32 %v6194, %v6247
    %v6288 = vadd.f32 %v6199, %v6247
    %v6289 = vadd.f32 %v6204, %v6247
    %v6290 = vadd.f32 %v6209, %v6247
    %v6291 = vadd.f32 %v6214, %v6247
    %v6292 = vadd.f32 %v6219, %v6247
    %v6293 = vadd.f32 %v6224, %v6247
    %v6294 = vadd.f32 %v6229, %v6247
    %v6295 = vadd.f32 %v6234, %v6247
    %v6296 = vadd.f32 %v6239, %v6247
    %6297 = vst [vmem:[#allocation7] sm:$0xff] %v6249
    %6298 = vst [vmem:[#allocation7 + $0x8] sm:$0xff] %v6250
    %6299 = vst [vmem:[#allocation7 + $0x10] sm:$0xff] %v6251
    %6300 = vst [vmem:[#allocation7 + $0x18] sm:$0xff] %v6252
    %6301 = vst [vmem:[#allocation7 + $0x20] sm:$0xff] %v6253
    %6302 = vst [vmem:[#allocation7 + $0x28] sm:$0xff] %v6254
    %6303 = vst [vmem:[#allocation7 + $0x30] sm:$0xff] %v6255
    %6304 = vst [vmem:[#allocation7 + $0x38] sm:$0xff] %v6256
    %6305 = vst [vmem:[#allocation7 + $0x40] sm:$0xff] %v6257
    %6306 = vst [vmem:[#allocation7 + $0x48] sm:$0xff] %v6258
    %6307 = vst [vmem:[#allocation7 + $0x50] sm:$0xff] %v6259
    %6308 = vst [vmem:[#allocation7 + $0x58] sm:$0xff] %v6260
    %6309 = vst [vmem:[#allocation7 + $0x60] sm:$0xff] %v6261
    %6310 = vst [vmem:[#allocation7 + $0x68] sm:$0xff] %v6262
    %6311 = vst [vmem:[#allocation7 + $0x70] sm:$0xff] %v6263
    %6312 = vst [vmem:[#allocation7 + $0x78] sm:$0xff] %v6264
    %6313 = vst [vmem:[#allocation7 + $0x80] sm:$0xff] %v6265
    %6314 = vst [vmem:[#allocation7 + $0x88] sm:$0xff] %v6266
    %6315 = vst [vmem:[#allocation7 + $0x90] sm:$0xff] %v6267
    %6316 = vst [vmem:[#allocation7 + $0x98] sm:$0xff] %v6268
    %6317 = vst [vmem:[#allocation7 + $0xa0] sm:$0xff] %v6269
    %6318 = vst [vmem:[#allocation7 + $0xa8] sm:$0xff] %v6270
    %6319 = vst [vmem:[#allocation7 + $0xb0] sm:$0xff] %v6271
    %6320 = vst [vmem:[#allocation7 + $0xb8] sm:$0xff] %v6272
    %6321 = vst [vmem:[#allocation7 + $0xc0] sm:$0xff] %v6273
    %6322 = vst [vmem:[#allocation7 + $0xc8] sm:$0xff] %v6274
    %6323 = vst [vmem:[#allocation7 + $0xd0] sm:$0xff] %v6275
    %6324 = vst [vmem:[#allocation7 + $0xd8] sm:$0xff] %v6276
    %6325 = vst [vmem:[#allocation7 + $0xe0] sm:$0xff] %v6277
    %6326 = vst [vmem:[#allocation7 + $0xe8] sm:$0xff] %v6278
    %6327 = vst [vmem:[#allocation7 + $0xf0] sm:$0xff] %v6279
    %6328 = vst [vmem:[#allocation7 + $0xf8] sm:$0xff] %v6280
    %6329 = vst [vmem:[#allocation7 + $0x100] sm:$0xff] %v6281
    %6330 = vst [vmem:[#allocation7 + $0x108] sm:$0xff] %v6282
    %6331 = vst [vmem:[#allocation7 + $0x110] sm:$0xff] %v6283
    %6332 = vst [vmem:[#allocation7 + $0x118] sm:$0xff] %v6284
    %6333 = vst [vmem:[#allocation7 + $0x120] sm:$0xff] %v6285
    %6334 = vst [vmem:[#allocation7 + $0x128] sm:$0xff] %v6286
    %6335 = vst [vmem:[#allocation7 + $0x130] sm:$0xff] %v6287
    %6336 = vst [vmem:[#allocation7 + $0x138] sm:$0xff] %v6288
    %6337 = vst [vmem:[#allocation7 + $0x140] sm:$0xff] %v6289
    %6338 = vst [vmem:[#allocation7 + $0x148] sm:$0xff] %v6290
    %6339 = vst [vmem:[#allocation7 + $0x150] sm:$0xff] %v6291
    %6340 = vst [vmem:[#allocation7 + $0x158] sm:$0xff] %v6292
    %6341 = vst [vmem:[#allocation7 + $0x160] sm:$0xff] %v6293
    %6342 = vst [vmem:[#allocation7 + $0x168] sm:$0xff] %v6294
    %6343 = vst [vmem:[#allocation7 + $0x170] sm:$0xff] %v6295
    %6344 = vst [vmem:[#allocation7 + $0x178] sm:$0xff] %v6296
    // Predicated region
    $region54: #{tpu_custom_call.1} parent=1 // pred_check
      _
    $region55: #{tpu_custom_call.1} parent=1 // pred_check_branch
      %6346 = sbr.rel (0) target = $region57
    $region56: #{tpu_custom_call.1} parent=1 // pred_region
      %s6348 = ssub.s32 6144, 6144
      %6349 = vsyncadd [#allocation4], %s6348
      %s6350 = sshll.u32 [#allocation7], 4
      %s6351 = int_to_ptr.vmem [resolvable:$true] %s6350
      %6356 = dma.vmem_to_hbm [thread:$0]  %s6351, 6144, %s11, [#allocation4], 128, 128, 8
    $region57: #{tpu_custom_call.1} parent=1 // pred_fallthru
      _
    // Predicated region
    $region58: #{tpu_custom_call.1} parent=1 // pred_check
      _
    $region59: #{tpu_custom_call.1} parent=1 // pred_check_branch
      %6358 = sbr.rel (0) target = $region61
    $region60: #{tpu_custom_call.1} parent=1 // pred_region
      %6359 = dma.done [#allocation4], 6144
    $region61: #{tpu_custom_call.1} parent=1 // pred_fallthru
      _
    %6360 = vsyncpa [#allocation3], 1
    %6361 = vsyncpa [#allocation6], 1
    %6362 = vsyncpa [#allocation4], 1

// kernel: tpu_custom_call.1
$region0: #{tpu_custom_call.1}
  #allocation0 [shape = 'u32[]', space=smem, size = 0x4, offset = 0x4, fixed_abs, tag = 'smem constant byte address 0x4 - core index']
  #allocation1 [shape = 'u32[144,128]{1,0:T(1,128)}', space=vmem, size = 0x12000, scoped, tag = 'internal scratch']
  %s0 = inlined_call_operand.vmem [shape: f32[384,32], index: 0, kind: input, shape index: {}]
  %s1 = inlined_call_operand.vmem [shape: bf16[384,384], index: 1, kind: input, shape index: {}]
  %s2 = inlined_call_operand.hbm [shape: bf16[384,384], index: 2, kind: input, shape index: {}]
  %s3 = inlined_call_operand.vmem [shape: f32[32,64], index: 3, kind: input, shape index: {}]
  %s4 = inlined_call_operand.vmem [shape: f32[1,64], index: 4, kind: input, shape index: {}]
  %s5 = inlined_call_operand.hbm [shape: f32[64,64], index: 5, kind: input, shape index: {}]
  %s6 = inlined_call_operand.vmem [shape: f32[1,64], index: 6, kind: input, shape index: {}]
  %s7 = inlined_call_operand.vmem [shape: f32[96,32], index: 7, kind: input, shape index: {}]
  %s8 = inlined_call_operand.vmem [shape: f32[1,32], index: 8, kind: input, shape index: {}]
  %s9 = inlined_call_operand.hbm [shape: f32[64,128], index: 9, kind: input, shape index: {}]
  %s10 = inlined_call_operand.vmem [shape: f32[1,128], index: 10, kind: input, shape index: {}]
  %s11 = inlined_call_operand.hbm [shape: f32[384,128], index: 11, kind: output, shape index: {}]
  %s12 = sld [smem:[#allocation0]]
  $region66: #{tpu_custom_call.1} parent=0
    _
  %s14 = ssub.s32 1, %s12
  %s15 = scalar_select 0, %s14, %s12
  $region1: #{tpu_custom_call.1} parent=0
    #allocation2 [shape = 'u8[294912]{0}', space=vmem, size = 0x48000, scoped, tag = 'input window, operand 2, single buffered']
    #allocation3 [shape = 's32[1]{0}', space=sflag, size = 0x4, scoped, tag = 'scoped memory for tpu_custom_call.1']
    #allocation4 [shape = 's32[1]{0}', space=sflag, size = 0x4, scoped, tag = 'scoped memory for tpu_custom_call.1']
    #allocation5 [shape = 'u8[32768]{0}', space=vmem, size = 0x8000, scoped, tag = 'input window, operand 5, single buffered']
    #allocation6 [shape = 's32[1]{0}', space=sflag, size = 0x4, scoped, tag = 'scoped memory for tpu_custom_call.1']
    #allocation7 [shape = 'u8[32768]{0}', space=vmem, size = 0x8000, scoped, tag = 'input window, operand 9, single buffered']
    #allocation8 [shape = 'u8[196608]{0}', space=vmem, size = 0x30000, scoped, tag = 'output window, operand 0, single buffered']
    %16 = vsyncpa [#allocation3], 0
    %17 = vsyncpa [#allocation6], 0
    %18 = vsyncpa [#allocation4], 0
    // Predicated region
    $region2: #{tpu_custom_call.1} parent=1 // pred_check
      _
    $region3: #{tpu_custom_call.1} parent=1 // pred_check_branch
      %20 = sbr.rel (0) target = $region5
    $region4: #{tpu_custom_call.1} parent=1 // pred_region
      _
    $region5: #{tpu_custom_call.1} parent=1 // pred_fallthru
      _
    // Predicated region
    $region6: #{tpu_custom_call.1} parent=1 // pred_check
      _
    $region7: #{tpu_custom_call.1} parent=1 // pred_check_branch
      %22 = sbr.rel (0) target = $region9
    $region8: #{tpu_custom_call.1} parent=1 // pred_region
      _
    $region9: #{tpu_custom_call.1} parent=1 // pred_fallthru
      _
    // Predicated region
    $region10: #{tpu_custom_call.1} parent=1 // pred_check
      _
    $region11: #{tpu_custom_call.1} parent=1 // pred_check_branch
      %24 = sbr.rel (0) target = $region13
    $region12: #{tpu_custom_call.1} parent=1 // pred_region
      %s26 = ssub.s32 9216, 9216
      %27 = vsyncadd [#allocation3], %s26
      %s28 = sshll.u32 [#allocation2], 4
      %s29 = int_to_ptr.vmem [resolvable:$true] %s28
      %34 = dma.hbm_to_vmem [thread:$0]  %s2, 9216, %s29, [#allocation3], 192, 192, 12
    $region13: #{tpu_custom_call.1} parent=1 // pred_fallthru
      _
    // Predicated region
    $region14: #{tpu_custom_call.1} parent=1 // pred_check
      _
    $region15: #{tpu_custom_call.1} parent=1 // pred_check_branch
      %36 = sbr.rel (0) target = $region17
    $region16: #{tpu_custom_call.1} parent=1 // pred_region
      _
    $region17: #{tpu_custom_call.1} parent=1 // pred_fallthru
      _
    // Predicated region
    $region18: #{tpu_custom_call.1} parent=1 // pred_check
      _
    $region19: #{tpu_custom_call.1} parent=1 // pred_check_branch
      %38 = sbr.rel (0) target = $region21
    $region20: #{tpu_custom_call.1} parent=1 // pred_region
      _
    $region21: #{tpu_custom_call.1} parent=1 // pred_fallthru
      _
    // Predicated region
    $region22: #{tpu_custom_call.1} parent=1 // pred_check
      _
    $region23: #{tpu_custom_call.1} parent=1 // pred_check_branch
      %40 = sbr.rel (0) target = $region25
    $region24: #{tpu_custom_call.1} parent=1 // pred_region
      %s42 = ssub.s32 1024, 1024
      %43 = vsyncadd [#allocation6], %s42
      %s44 = sshll.u32 [#allocation5], 4
      %s45 = int_to_ptr.vmem [resolvable:$true] %s44
      %50 = dma.hbm_to_vmem [thread:$0]  %s5, 1024, %s45, [#allocation6], 128, 128, 8
    $region25: #{tpu_custom_call.1} parent=1 // pred_fallthru
      _
    // Predicated region
    $region26: #{tpu_custom_call.1} parent=1 // pred_check
      _
    $region27: #{tpu_custom_call.1} parent=1 // pred_check_branch
      %52 = sbr.rel (0) target = $region29
    $region28: #{tpu_custom_call.1} parent=1 // pred_region
      _
    $region29: #{tpu_custom_call.1} parent=1 // pred_fallthru
      _
    // Predicated region
    $region30: #{tpu_custom_call.1} parent=1 // pred_check
      _
    $region31: #{tpu_custom_call.1} parent=1 // pred_check_branch
      %54 = sbr.rel (0) target = $region33
    $region32: #{tpu_custom_call.1} parent=1 // pred_region
      _
    $region33: #{tpu_custom_call.1} parent=1 // pred_fallthru
      _
    // Predicated region
    $region34: #{tpu_custom_call.1} parent=1 // pred_check
      _
    $region35: #{tpu_custom_call.1} parent=1 // pred_check_branch
      %56 = sbr.rel (0) target = $region37
    $region36: #{tpu_custom_call.1} parent=1 // pred_region
      _
    $region37: #{tpu_custom_call.1} parent=1 // pred_fallthru
      _
    // Predicated region
    $region38: #{tpu_custom_call.1} parent=1 // pred_check
      _
    $region39: #{tpu_custom_call.1} parent=1 // pred_check_branch
      %58 = sbr.rel (0) target = $region41
    $region40: #{tpu_custom_call.1} parent=1 // pred_region
      %s60 = ssub.s32 1024, 1024
      %61 = vsyncadd [#allocation6], %s60
      %s62 = sshll.u32 [#allocation7], 4
      %s63 = int_to_ptr.vmem [resolvable:$true] %s62
      %68 = dma.hbm_to_vmem [thread:$0]  %s9, 1024, %s63, [#allocation6], 128, 128, 8
    $region41: #{tpu_custom_call.1} parent=1 // pred_fallthru
      _
    // Predicated region
    $region42: #{tpu_custom_call.1} parent=1 // pred_check
      _
    $region43: #{tpu_custom_call.1} parent=1 // pred_check_branch
      %70 = sbr.rel (0) target = $region45
    $region44: #{tpu_custom_call.1} parent=1 // pred_region
      _
    $region45: #{tpu_custom_call.1} parent=1 // pred_fallthru
      _
    // Predicated region
    $region46: #{tpu_custom_call.1} parent=1 // pred_check
      _
    $region47: #{tpu_custom_call.1} parent=1 // pred_check_branch
      %72 = sbr.rel (0) target = $region49
    $region48: #{tpu_custom_call.1} parent=1 // pred_region
      %73 = dma.done [#allocation3], 9216
    $region49: #{tpu_custom_call.1} parent=1 // pred_fallthru
      _
    // Predicated region
    $region50: #{tpu_custom_call.1} parent=1 // pred_check
      _
    $region51: #{tpu_custom_call.1} parent=1 // pred_check_branch
      %75 = sbr.rel (0) target = $region53
    $region52: #{tpu_custom_call.1} parent=1 // pred_region
      %76 = dma.done [#allocation6], 1024
    $region53: #{tpu_custom_call.1} parent=1 // pred_fallthru
      _
    // Predicated region
    $region54: #{tpu_custom_call.1} parent=1 // pred_check
      _
    $region55: #{tpu_custom_call.1} parent=1 // pred_check_branch
      %78 = sbr.rel (0) target = $region57
    $region56: #{tpu_custom_call.1} parent=1 // pred_region
      %79 = dma.done [#allocation6], 1024
    $region57: #{tpu_custom_call.1} parent=1 // pred_fallthru
      _
    %v81 = vld [vmem:[%s1] sm:$0xff]
    %v82 = vld [vmem:[%s1 + $0x8] sm:$0xf]
    %v83 = vld [vmem:[%s1 + $0xc] sm:$0xff]
    %v84 = vld [vmem:[%s1 + $0x14] sm:$0xf]
    %v85 = vld [vmem:[%s1 + $0x18] sm:$0xff]
    %v86 = vld [vmem:[%s1 + $0x20] sm:$0xf]
    %v87 = vld [vmem:[%s1 + $0x24] sm:$0xff]
    %v88 = vld [vmem:[%s1 + $0x2c] sm:$0xf]
    %v89 = vld [vmem:[%s1 + $0x30] sm:$0xff]
    %v90 = vld [vmem:[%s1 + $0x38] sm:$0xf]
    %v91 = vld [vmem:[%s1 + $0x3c] sm:$0xff]
    %v92 = vld [vmem:[%s1 + $0x44] sm:$0xf]
    %v93 = vld [vmem:[%s1 + $0x48] sm:$0xff]
    %v94 = vld [vmem:[%s1 + $0x50] sm:$0xf]
    %v95 = vld [vmem:[%s1 + $0x54] sm:$0xff]
    %v96 = vld [vmem:[%s1 + $0x5c] sm:$0xf]
    %v97 = vld [vmem:[%s1 + $0x60] sm:$0xff]
    %v98 = vld [vmem:[%s1 + $0x68] sm:$0xf]
    %v99 = vld [vmem:[%s1 + $0x6c] sm:$0xff]
    %v100 = vld [vmem:[%s1 + $0x74] sm:$0xf]
    %v101 = vld [vmem:[%s1 + $0x78] sm:$0xff]
    %v102 = vld [vmem:[%s1 + $0x80] sm:$0xf]
    %v103 = vld [vmem:[%s1 + $0x84] sm:$0xff]
    %v104 = vld [vmem:[%s1 + $0x8c] sm:$0xf]
    %v105 = vld [vmem:[%s1 + $0x90] sm:$0xff]
    %v106 = vld [vmem:[%s1 + $0x98] sm:$0xf]
    %v107 = vld [vmem:[%s1 + $0x9c] sm:$0xff]
    %v108 = vld [vmem:[%s1 + $0xa4] sm:$0xf]
    %v109 = vld [vmem:[%s1 + $0xa8] sm:$0xff]
    %v110 = vld [vmem:[%s1 + $0xb0] sm:$0xf]
    %v111 = vld [vmem:[%s1 + $0xb4] sm:$0xff]
    %v112 = vld [vmem:[%s1 + $0xbc] sm:$0xf]
    %v113 = vld [vmem:[%s1 + $0xc0] sm:$0xff]
    %v114 = vld [vmem:[%s1 + $0xc8] sm:$0xf]
    %v115 = vld [vmem:[%s1 + $0xcc] sm:$0xff]
    %v116 = vld [vmem:[%s1 + $0xd4] sm:$0xf]
    %v117 = vld [vmem:[%s1 + $0xd8] sm:$0xff]
    %v118 = vld [vmem:[%s1 + $0xe0] sm:$0xf]
    %v119 = vld [vmem:[%s1 + $0xe4] sm:$0xff]
    %v120 = vld [vmem:[%s1 + $0xec] sm:$0xf]
    %v121 = vld [vmem:[%s1 + $0xf0] sm:$0xff]
    %v122 = vld [vmem:[%s1 + $0xf8] sm:$0xf]
    %v123 = vld [vmem:[%s1 + $0xfc] sm:$0xff]
    %v124 = vld [vmem:[%s1 + $0x104] sm:$0xf]
    %v125 = vld [vmem:[%s1 + $0x108] sm:$0xff]
    %v126 = vld [vmem:[%s1 + $0x110] sm:$0xf]
    %v127 = vld [vmem:[%s1 + $0x114] sm:$0xff]
    %v128 = vld [vmem:[%s1 + $0x11c] sm:$0xf]
    %v129 = vld [vmem:[%s1 + $0x120] sm:$0xff]
    %v130 = vld [vmem:[%s1 + $0x128] sm:$0xf]
    %v131 = vld [vmem:[%s1 + $0x12c] sm:$0xff]
    %v132 = vld [vmem:[%s1 + $0x134] sm:$0xf]
    %v133 = vld [vmem:[%s1 + $0x138] sm:$0xff]
    %v134 = vld [vmem:[%s1 + $0x140] sm:$0xf]
    %v135 = vld [vmem:[%s1 + $0x144] sm:$0xff]
    %v136 = vld [vmem:[%s1 + $0x14c] sm:$0xf]
    %v137 = vld [vmem:[%s1 + $0x150] sm:$0xff]
    %v138 = vld [vmem:[%s1 + $0x158] sm:$0xf]
    %v139 = vld [vmem:[%s1 + $0x15c] sm:$0xff]
    %v140 = vld [vmem:[%s1 + $0x164] sm:$0xf]
    %v141 = vld [vmem:[%s1 + $0x168] sm:$0xff]
    %v142 = vld [vmem:[%s1 + $0x170] sm:$0xf]
    %v143 = vld [vmem:[%s1 + $0x174] sm:$0xff]
    %v144 = vld [vmem:[%s1 + $0x17c] sm:$0xf]
    %v145 = vld [vmem:[%s1 + $0x180] sm:$0xff]
    %v146 = vld [vmem:[%s1 + $0x188] sm:$0xf]
    %v147 = vld [vmem:[%s1 + $0x18c] sm:$0xff]
    %v148 = vld [vmem:[%s1 + $0x194] sm:$0xf]
    %v149 = vld [vmem:[%s1 + $0x198] sm:$0xff]
    %v150 = vld [vmem:[%s1 + $0x1a0] sm:$0xf]
    %v151 = vld [vmem:[%s1 + $0x1a4] sm:$0xff]
    %v152 = vld [vmem:[%s1 + $0x1ac] sm:$0xf]
    %v153 = vld [vmem:[%s1 + $0x1b0] sm:$0xff]
    %v154 = vld [vmem:[%s1 + $0x1b8] sm:$0xf]
    %v155 = vld [vmem:[%s1 + $0x1bc] sm:$0xff]
    %v156 = vld [vmem:[%s1 + $0x1c4] sm:$0xf]
    %v157 = vld [vmem:[%s1 + $0x1c8] sm:$0xff]
    %v158 = vld [vmem:[%s1 + $0x1d0] sm:$0xf]
    %v159 = vld [vmem:[%s1 + $0x1d4] sm:$0xff]
    %v160 = vld [vmem:[%s1 + $0x1dc] sm:$0xf]
    %v161 = vld [vmem:[%s1 + $0x1e0] sm:$0xff]
    %v162 = vld [vmem:[%s1 + $0x1e8] sm:$0xf]
    %v163 = vld [vmem:[%s1 + $0x1ec] sm:$0xff]
    %v164 = vld [vmem:[%s1 + $0x1f4] sm:$0xf]
    %v165 = vld [vmem:[%s1 + $0x1f8] sm:$0xff]
    %v166 = vld [vmem:[%s1 + $0x200] sm:$0xf]
    %v167 = vld [vmem:[%s1 + $0x204] sm:$0xff]
    %v168 = vld [vmem:[%s1 + $0x20c] sm:$0xf]
    %v169 = vld [vmem:[%s1 + $0x210] sm:$0xff]
    %v170 = vld [vmem:[%s1 + $0x218] sm:$0xf]
    %v171 = vld [vmem:[%s1 + $0x21c] sm:$0xff]
    %v172 = vld [vmem:[%s1 + $0x224] sm:$0xf]
    %v173 = vld [vmem:[%s1 + $0x228] sm:$0xff]
    %v174 = vld [vmem:[%s1 + $0x230] sm:$0xf]
    %v175 = vld [vmem:[%s1 + $0x234] sm:$0xff]
    %v176 = vld [vmem:[%s1 + $0x23c] sm:$0xf]
    %v177 = vld [vmem:[#allocation2] sm:$0xff]
    %v178 = vld [vmem:[#allocation2 + $0x8] sm:$0xf]
    %v179 = vld [vmem:[#allocation2 + $0xc] sm:$0xff]
    %v180 = vld [vmem:[#allocation2 + $0x14] sm:$0xf]
    %v181 = vld [vmem:[#allocation2 + $0x18] sm:$0xff]
    %v182 = vld [vmem:[#allocation2 + $0x20] sm:$0xf]
    %v183 = vld [vmem:[#allocation2 + $0x24] sm:$0xff]
    %v184 = vld [vmem:[#allocation2 + $0x2c] sm:$0xf]
    %v185 = vld [vmem:[#allocation2 + $0x30] sm:$0xff]
    %v186 = vld [vmem:[#allocation2 + $0x38] sm:$0xf]
    %v187 = vld [vmem:[#allocation2 + $0x3c] sm:$0xff]
    %v188 = vld [vmem:[#allocation2 + $0x44] sm:$0xf]
    %v189 = vld [vmem:[#allocation2 + $0x48] sm:$0xff]
    %v190 = vld [vmem:[#allocation2 + $0x50] sm:$0xf]
    %v191 = vld [vmem:[#allocation2 + $0x54] sm:$0xff]
    %v192 = vld [vmem:[#allocation2 + $0x5c] sm:$0xf]
    %v193 = vld [vmem:[#allocation2 + $0x60] sm:$0xff]
    %v194 = vld [vmem:[#allocation2 + $0x68] sm:$0xf]
    %v195 = vld [vmem:[#allocation2 + $0x6c] sm:$0xff]
    %v196 = vld [vmem:[#allocation2 + $0x74] sm:$0xf]
    %v197 = vld [vmem:[#allocation2 + $0x78] sm:$0xff]
    %v198 = vld [vmem:[#allocation2 + $0x80] sm:$0xf]
    %v199 = vld [vmem:[#allocation2 + $0x84] sm:$0xff]
    %v200 = vld [vmem:[#allocation2 + $0x8c] sm:$0xf]
    %v201 = vld [vmem:[#allocation2 + $0x90] sm:$0xff]
    %v202 = vld [vmem:[#allocation2 + $0x98] sm:$0xf]
    %v203 = vld [vmem:[#allocation2 + $0x9c] sm:$0xff]
    %v204 = vld [vmem:[#allocation2 + $0xa4] sm:$0xf]
    %v205 = vld [vmem:[#allocation2 + $0xa8] sm:$0xff]
    %v206 = vld [vmem:[#allocation2 + $0xb0] sm:$0xf]
    %v207 = vld [vmem:[#allocation2 + $0xb4] sm:$0xff]
    %v208 = vld [vmem:[#allocation2 + $0xbc] sm:$0xf]
    %v209 = vld [vmem:[#allocation2 + $0xc0] sm:$0xff]
    %v210 = vld [vmem:[#allocation2 + $0xc8] sm:$0xf]
    %v211 = vld [vmem:[#allocation2 + $0xcc] sm:$0xff]
    %v212 = vld [vmem:[#allocation2 + $0xd4] sm:$0xf]
    %v213 = vld [vmem:[#allocation2 + $0xd8] sm:$0xff]
    %v214 = vld [vmem:[#allocation2 + $0xe0] sm:$0xf]
    %v215 = vld [vmem:[#allocation2 + $0xe4] sm:$0xff]
    %v216 = vld [vmem:[#allocation2 + $0xec] sm:$0xf]
    %v217 = vld [vmem:[#allocation2 + $0xf0] sm:$0xff]
    %v218 = vld [vmem:[#allocation2 + $0xf8] sm:$0xf]
    %v219 = vld [vmem:[#allocation2 + $0xfc] sm:$0xff]
    %v220 = vld [vmem:[#allocation2 + $0x104] sm:$0xf]
    %v221 = vld [vmem:[#allocation2 + $0x108] sm:$0xff]
    %v222 = vld [vmem:[#allocation2 + $0x110] sm:$0xf]
    %v223 = vld [vmem:[#allocation2 + $0x114] sm:$0xff]
    %v224 = vld [vmem:[#allocation2 + $0x11c] sm:$0xf]
    %v225 = vld [vmem:[#allocation2 + $0x120] sm:$0xff]
    %v226 = vld [vmem:[#allocation2 + $0x128] sm:$0xf]
    %v227 = vld [vmem:[#allocation2 + $0x12c] sm:$0xff]
    %v228 = vld [vmem:[#allocation2 + $0x134] sm:$0xf]
    %v229 = vld [vmem:[#allocation2 + $0x138] sm:$0xff]
    %v230 = vld [vmem:[#allocation2 + $0x140] sm:$0xf]
    %v231 = vld [vmem:[#allocation2 + $0x144] sm:$0xff]
    %v232 = vld [vmem:[#allocation2 + $0x14c] sm:$0xf]
    %v233 = vld [vmem:[#allocation2 + $0x150] sm:$0xff]
    %v234 = vld [vmem:[#allocation2 + $0x158] sm:$0xf]
    %v235 = vld [vmem:[#allocation2 + $0x15c] sm:$0xff]
    %v236 = vld [vmem:[#allocation2 + $0x164] sm:$0xf]
    %v237 = vld [vmem:[#allocation2 + $0x168] sm:$0xff]
    %v238 = vld [vmem:[#allocation2 + $0x170] sm:$0xf]
    %v239 = vld [vmem:[#allocation2 + $0x174] sm:$0xff]
    %v240 = vld [vmem:[#allocation2 + $0x17c] sm:$0xf]
    %v241 = vld [vmem:[#allocation2 + $0x180] sm:$0xff]
    %v242 = vld [vmem:[#allocation2 + $0x188] sm:$0xf]
    %v243 = vld [vmem:[#allocation2 + $0x18c] sm:$0xff]
    %v244 = vld [vmem:[#allocation2 + $0x194] sm:$0xf]
    %v245 = vld [vmem:[#allocation2 + $0x198] sm:$0xff]
    %v246 = vld [vmem:[#allocation2 + $0x1a0] sm:$0xf]
    %v247 = vld [vmem:[#allocation2 + $0x1a4] sm:$0xff]
    %v248 = vld [vmem:[#allocation2 + $0x1ac] sm:$0xf]
    %v249 = vld [vmem:[#allocation2 + $0x1b0] sm:$0xff]
    %v250 = vld [vmem:[#allocation2 + $0x1b8] sm:$0xf]
    %v251 = vld [vmem:[#allocation2 + $0x1bc] sm:$0xff]
    %v252 = vld [vmem:[#allocation2 + $0x1c4] sm:$0xf]
    %v253 = vld [vmem:[#allocation2 + $0x1c8] sm:$0xff]
    %v254 = vld [vmem:[#allocation2 + $0x1d0] sm:$0xf]
    %v255 = vld [vmem:[#allocation2 + $0x1d4] sm:$0xff]
    %v256 = vld [vmem:[#allocation2 + $0x1dc] sm:$0xf]
    %v257 = vld [vmem:[#allocation2 + $0x1e0] sm:$0xff]
    %v258 = vld [vmem:[#allocation2 + $0x1e8] sm:$0xf]
    %v259 = vld [vmem:[#allocation2 + $0x1ec] sm:$0xff]
    %v260 = vld [vmem:[#allocation2 + $0x1f4] sm:$0xf]
    %v261 = vld [vmem:[#allocation2 + $0x1f8] sm:$0xff]
    %v262 = vld [vmem:[#allocation2 + $0x200] sm:$0xf]
    %v263 = vld [vmem:[#allocation2 + $0x204] sm:$0xff]
    %v264 = vld [vmem:[#allocation2 + $0x20c] sm:$0xf]
    %v265 = vld [vmem:[#allocation2 + $0x210] sm:$0xff]
    %v266 = vld [vmem:[#allocation2 + $0x218] sm:$0xf]
    %v267 = vld [vmem:[#allocation2 + $0x21c] sm:$0xff]
    %v268 = vld [vmem:[#allocation2 + $0x224] sm:$0xf]
    %v269 = vld [vmem:[#allocation2 + $0x228] sm:$0xff]
    %v270 = vld [vmem:[#allocation2 + $0x230] sm:$0xf]
    %v271 = vld [vmem:[#allocation2 + $0x234] sm:$0xff]
    %v272 = vld [vmem:[#allocation2 + $0x23c] sm:$0xf]
    %v273 = vld [vmem:[%s0] sm:$0xff]
    %v274 = vld [vmem:[%s0 + $0x8] sm:$0xff]
    %v275 = vld [vmem:[%s0 + $0x10] sm:$0xff]
    %v276 = vld [vmem:[%s0 + $0x18] sm:$0xff]
    %v277 = vld [vmem:[%s0 + $0x20] sm:$0xff]
    %v278 = vld [vmem:[%s0 + $0x28] sm:$0xff]
    %v279 = vld [vmem:[%s0 + $0x30] sm:$0xff]
    %v280 = vld [vmem:[%s0 + $0x38] sm:$0xff]
    %v281 = vld [vmem:[%s0 + $0x40] sm:$0xff]
    %v282 = vld [vmem:[%s0 + $0x48] sm:$0xff]
    %v283 = vld [vmem:[%s0 + $0x50] sm:$0xff]
    %v284 = vld [vmem:[%s0 + $0x58] sm:$0xff]
    %v285 = vld [vmem:[%s0 + $0x60] sm:$0xff]
    %v286 = vld [vmem:[%s0 + $0x68] sm:$0xff]
    %v287 = vld [vmem:[%s0 + $0x70] sm:$0xff]
    %v288 = vld [vmem:[%s0 + $0x78] sm:$0xff]
    %v289 = vld [vmem:[%s0 + $0x80] sm:$0xff]
    %v290 = vld [vmem:[%s0 + $0x88] sm:$0xff]
    %v291 = vld [vmem:[%s0 + $0x90] sm:$0xff]
    %v292 = vld [vmem:[%s0 + $0x98] sm:$0xff]
    %v293 = vld [vmem:[%s0 + $0xa0] sm:$0xff]
    %v294 = vld [vmem:[%s0 + $0xa8] sm:$0xff]
    %v295 = vld [vmem:[%s0 + $0xb0] sm:$0xff]
    %v296 = vld [vmem:[%s0 + $0xb8] sm:$0xff]
    %v297 = vld [vmem:[%s0 + $0xc0] sm:$0xff]
    %v298 = vld [vmem:[%s0 + $0xc8] sm:$0xff]
    %v299 = vld [vmem:[%s0 + $0xd0] sm:$0xff]
    %v300 = vld [vmem:[%s0 + $0xd8] sm:$0xff]
    %v301 = vld [vmem:[%s0 + $0xe0] sm:$0xff]
    %v302 = vld [vmem:[%s0 + $0xe8] sm:$0xff]
    %v303 = vld [vmem:[%s0 + $0xf0] sm:$0xff]
    %v304 = vld [vmem:[%s0 + $0xf8] sm:$0xff]
    %v305 = vld [vmem:[%s0 + $0x100] sm:$0xff]
    %v306 = vld [vmem:[%s0 + $0x108] sm:$0xff]
    %v307 = vld [vmem:[%s0 + $0x110] sm:$0xff]
    %v308 = vld [vmem:[%s0 + $0x118] sm:$0xff]
    %v309 = vld [vmem:[%s0 + $0x120] sm:$0xff]
    %v310 = vld [vmem:[%s0 + $0x128] sm:$0xff]
    %v311 = vld [vmem:[%s0 + $0x130] sm:$0xff]
    %v312 = vld [vmem:[%s0 + $0x138] sm:$0xff]
    %v313 = vld [vmem:[%s0 + $0x140] sm:$0xff]
    %v314 = vld [vmem:[%s0 + $0x148] sm:$0xff]
    %v315 = vld [vmem:[%s0 + $0x150] sm:$0xff]
    %v316 = vld [vmem:[%s0 + $0x158] sm:$0xff]
    %v317 = vld [vmem:[%s0 + $0x160] sm:$0xff]
    %v318 = vld [vmem:[%s0 + $0x168] sm:$0xff]
    %v319 = vld [vmem:[%s0 + $0x170] sm:$0xff]
    %v320 = vld [vmem:[%s0 + $0x178] sm:$0xff]
    %v321 = vld [vmem:[%s3] sm:$0xff]
    %v322 = vld [vmem:[%s3 + $0x8] sm:$0xff]
    %v323 = vld [vmem:[%s3 + $0x10] sm:$0xff]
    %v324 = vld [vmem:[%s3 + $0x18] sm:$0xff]
    %v325 = vld [vmem:[%s4] sm:$0x1]
    %v327 = vlaneseq
    %v328 = vshrl.u32 %v327, 7
    %v329 = vsub.s32 0, %v328
    %v330 = vrot.slane %v325, %v329
    %vm332 = vcmask 261120
    %v334 = vsel %vm332, %v273, 0
    %v337 = vsel %vm332, %v274, 0
    %v340 = vsel %vm332, %v275, 0
    %v343 = vsel %vm332, %v276, 0
    %v346 = vsel %vm332, %v277, 0
    %v349 = vsel %vm332, %v278, 0
    %v352 = vsel %vm332, %v279, 0
    %v355 = vsel %vm332, %v280, 0
    %v358 = vsel %vm332, %v281, 0
    %v361 = vsel %vm332, %v282, 0
    %v364 = vsel %vm332, %v283, 0
    %v367 = vsel %vm332, %v284, 0
    %v370 = vsel %vm332, %v285, 0
    %v373 = vsel %vm332, %v286, 0
    %v376 = vsel %vm332, %v287, 0
    %v379 = vsel %vm332, %v288, 0
    %v382 = vsel %vm332, %v289, 0
    %v385 = vsel %vm332, %v290, 0
    %v388 = vsel %vm332, %v291, 0
    %v391 = vsel %vm332, %v292, 0
    %v394 = vsel %vm332, %v293, 0
    %v397 = vsel %vm332, %v294, 0
    %v400 = vsel %vm332, %v295, 0
    %v403 = vsel %vm332, %v296, 0
    %v406 = vsel %vm332, %v297, 0
    %v409 = vsel %vm332, %v298, 0
    %v412 = vsel %vm332, %v299, 0
    %v415 = vsel %vm332, %v300, 0
    %v418 = vsel %vm332, %v301, 0
    %v421 = vsel %vm332, %v302, 0
    %v424 = vsel %vm332, %v303, 0
    %v427 = vsel %vm332, %v304, 0
    %v430 = vsel %vm332, %v305, 0
    %v433 = vsel %vm332, %v306, 0
    %v436 = vsel %vm332, %v307, 0
    %v439 = vsel %vm332, %v308, 0
    %v442 = vsel %vm332, %v309, 0
    %v445 = vsel %vm332, %v310, 0
    %v448 = vsel %vm332, %v311, 0
    %v451 = vsel %vm332, %v312, 0
    %v454 = vsel %vm332, %v313, 0
    %v457 = vsel %vm332, %v314, 0
    %v460 = vsel %vm332, %v315, 0
    %v463 = vsel %vm332, %v316, 0
    %v466 = vsel %vm332, %v317, 0
    %v469 = vsel %vm332, %v318, 0
    %v472 = vsel %vm332, %v319, 0
    %v475 = vsel %vm332, %v320, 0
    %477 = vmatprep.subr.mxu0 0.0
    %478 = vmatpush1.msra.mxu0 %v321
    %479 = vmatprep.subr.mxu0 0.0
    %480 = vmatpush1.msra.mxu0 %v322
    %481 = vmatprep.subr.mxu0 0.0
    %482 = vmatpush1.msra.mxu0 %v323
    %483 = vmatprep.subr.mxu0 0.0
    %484 = vmatpush1.msra.mxu0 %v324
    %485 = vmatprep.subr.mxu0 0.0
    %486 = vmatpush1.msra.mxu0 0.0
    %487 = vmatprep.subr.mxu0 0.0
    %488 = vmatpush1.msra.mxu0 0.0
    %489 = vmatprep.subr.mxu0 0.0
    %490 = vmatpush1.msra.mxu0 0.0
    %491 = vmatprep.subr.mxu0 0.0
    %492 = vmatpush1.msra.mxu0 0.0
    %493 = vmatprep.subr.mxu0 0.0
    %494 = vmatpush1.msra.mxu0 0.0
    %495 = vmatprep.subr.mxu0 0.0
    %496 = vmatpush1.msra.mxu0 0.0
    %497 = vmatprep.subr.mxu0 0.0
    %498 = vmatpush1.msra.mxu0 0.0
    %499 = vmatprep.subr.mxu0 0.0
    %500 = vmatpush1.msra.mxu0 0.0
    %501 = vmatprep.subr.mxu0 0.0
    %502 = vmatpush1.msra.mxu0 0.0
    %503 = vmatprep.subr.mxu0 0.0
    %504 = vmatpush1.msra.mxu0 0.0
    %505 = vmatprep.subr.mxu0 0.0
    %506 = vmatpush1.msra.mxu0 0.0
    %507 = vmatprep.subr.mxu0 0.0
    %508 = vmatpush1.msra.mxu0 0.0
    %509 = vmatprep.subr.mxu0 0.0
    %510 = vmatpush1.msra.mxu0 0.0
    %511 = vmatprep.subr.mxu0 0.0
    %512 = vmatpush1.msra.mxu0 0.0
    %513 = vmatprep.subr.mxu0 0.0
    %514 = vmatpush1.msra.mxu0 0.0
    %515 = vmatprep.subr.mxu0 0.0
    %516 = vmatpush1.msra.mxu0 0.0
    %517 = vmatprep.subr.mxu0 0.0
    %518 = vmatpush1.msra.mxu0 0.0
    %519 = vmatprep.subr.mxu0 0.0
    %520 = vmatpush1.msra.mxu0 0.0
    %521 = vmatprep.subr.mxu0 0.0
    %522 = vmatpush1.msra.mxu0 0.0
    %523 = vmatprep.subr.mxu0 0.0
    %524 = vmatpush1.msra.mxu0 0.0
    %525 = vmatprep.subr.mxu0 0.0
    %526 = vmatpush1.msra.mxu0 0.0
    %527 = vmatprep.subr.mxu0 0.0
    %528 = vmatpush1.msra.mxu0 0.0
    %529 = vmatprep.subr.mxu0 0.0
    %530 = vmatpush1.msra.mxu0 0.0
    %531 = vmatprep.subr.mxu0 0.0
    %532 = vmatpush1.msra.mxu0 0.0
    %533 = vmatprep.subr.mxu0 0.0
    %534 = vmatpush1.msra.mxu0 0.0
    %535 = vmatprep.subr.mxu0 0.0
    %536 = vmatpush1.msra.mxu0 0.0
    %537 = vmatprep.subr.mxu0 0.0
    %538 = vmatpush1.msra.mxu0 0.0
    %539 = vmatprep.subr.mxu0 0.0
    %540 = vmatpush1.msra.mxu0 0.0
    %541 = vmatprep.mubr.f32.mxu0 0.0
    %542 = vmatmul.mubr.f32.gmra.mrb[0].mxu0 %v334
    %v543 = vpop.f32.mrb[0].mxu0
    %v544 = vadd.f32 %v330, %v543
    %v545 = vpop.f32.mrb[0].mxu0
    %546 = vmatprep.mubr.f32.mxu0 0.0
    %547 = vmatmul.mubr.f32.gmra.mrb[0].mxu0 %v337
    %v548 = vpop.f32.mrb[0].mxu0
    %v549 = vadd.f32 %v330, %v548
    %v550 = vpop.f32.mrb[0].mxu0
    %551 = vmatprep.mubr.f32.mxu0 0.0
    %552 = vmatmul.mubr.f32.gmra.mrb[0].mxu0 %v340
    %v553 = vpop.f32.mrb[0].mxu0
    %v554 = vadd.f32 %v330, %v553
    %v555 = vpop.f32.mrb[0].mxu0
    %556 = vmatprep.mubr.f32.mxu0 0.0
    %557 = vmatmul.mubr.f32.gmra.mrb[0].mxu0 %v343
    %v558 = vpop.f32.mrb[0].mxu0
    %v559 = vadd.f32 %v330, %v558
    %v560 = vpop.f32.mrb[0].mxu0
    %561 = vmatprep.mubr.f32.mxu0 0.0
    %562 = vmatmul.mubr.f32.gmra.mrb[0].mxu0 %v346
    %v563 = vpop.f32.mrb[0].mxu0
    %v564 = vadd.f32 %v330, %v563
    %v565 = vpop.f32.mrb[0].mxu0
    %566 = vmatprep.mubr.f32.mxu0 0.0
    %567 = vmatmul.mubr.f32.gmra.mrb[0].mxu0 %v349
    %v568 = vpop.f32.mrb[0].mxu0
    %v569 = vadd.f32 %v330, %v568
    %v570 = vpop.f32.mrb[0].mxu0
    %571 = vmatprep.mubr.f32.mxu0 0.0
    %572 = vmatmul.mubr.f32.gmra.mrb[0].mxu0 %v352
    %v573 = vpop.f32.mrb[0].mxu0
    %v574 = vadd.f32 %v330, %v573
    %v575 = vpop.f32.mrb[0].mxu0
    %576 = vmatprep.mubr.f32.mxu0 0.0
    %577 = vmatmul.mubr.f32.gmra.mrb[0].mxu0 %v355
    %v578 = vpop.f32.mrb[0].mxu0
    %v579 = vadd.f32 %v330, %v578
    %v580 = vpop.f32.mrb[0].mxu0
    %581 = vmatprep.mubr.f32.mxu0 0.0
    %582 = vmatmul.mubr.f32.gmra.mrb[0].mxu0 %v358
    %v583 = vpop.f32.mrb[0].mxu0
    %v584 = vadd.f32 %v330, %v583
    %v585 = vpop.f32.mrb[0].mxu0
    %586 = vmatprep.mubr.f32.mxu0 0.0
    %587 = vmatmul.mubr.f32.gmra.mrb[0].mxu0 %v361
    %v588 = vpop.f32.mrb[0].mxu0
    %v589 = vadd.f32 %v330, %v588
    %v590 = vpop.f32.mrb[0].mxu0
    %591 = vmatprep.mubr.f32.mxu0 0.0
    %592 = vmatmul.mubr.f32.gmra.mrb[0].mxu0 %v364
    %v593 = vpop.f32.mrb[0].mxu0
    %v594 = vadd.f32 %v330, %v593
    %v595 = vpop.f32.mrb[0].mxu0
    %596 = vmatprep.mubr.f32.mxu0 0.0
    %597 = vmatmul.mubr.f32.gmra.mrb[0].mxu0 %v367
    %v598 = vpop.f32.mrb[0].mxu0
    %v599 = vadd.f32 %v330, %v598
    %v600 = vpop.f32.mrb[0].mxu0
    %601 = vmatprep.mubr.f32.mxu0 0.0
    %602 = vmatmul.mubr.f32.gmra.mrb[0].mxu0 %v370
    %v603 = vpop.f32.mrb[0].mxu0
    %v604 = vadd.f32 %v330, %v603
    %v605 = vpop.f32.mrb[0].mxu0
    %606 = vmatprep.mubr.f32.mxu0 0.0
    %607 = vmatmul.mubr.f32.gmra.mrb[0].mxu0 %v373
    %v608 = vpop.f32.mrb[0].mxu0
    %v609 = vadd.f32 %v330, %v608
    %v610 = vpop.f32.mrb[0].mxu0
    %611 = vmatprep.mubr.f32.mxu0 0.0
    %612 = vmatmul.mubr.f32.gmra.mrb[0].mxu0 %v376
    %v613 = vpop.f32.mrb[0].mxu0
    %v614 = vadd.f32 %v330, %v613
    %v615 = vpop.f32.mrb[0].mxu0
    %616 = vmatprep.mubr.f32.mxu0 0.0
    %617 = vmatmul.mubr.f32.gmra.mrb[0].mxu0 %v379
    %v618 = vpop.f32.mrb[0].mxu0
    %v619 = vadd.f32 %v330, %v618
    %v620 = vpop.f32.mrb[0].mxu0
    %621 = vmatprep.mubr.f32.mxu0 0.0
    %622 = vmatmul.mubr.f32.gmra.mrb[0].mxu0 %v382
    %v623 = vpop.f32.mrb[0].mxu0
    %v624 = vadd.f32 %v330, %v623
    %v625 = vpop.f32.mrb[0].mxu0
    %626 = vmatprep.mubr.f32.mxu0 0.0
    %627 = vmatmul.mubr.f32.gmra.mrb[0].mxu0 %v385
    %v628 = vpop.f32.mrb[0].mxu0
    %v629 = vadd.f32 %v330, %v628
    %v630 = vpop.f32.mrb[0].mxu0
    %631 = vmatprep.mubr.f32.mxu0 0.0
    %632 = vmatmul.mubr.f32.gmra.mrb[0].mxu0 %v388
    %v633 = vpop.f32.mrb[0].mxu0
    %v634 = vadd.f32 %v330, %v633
    %v635 = vpop.f32.mrb[0].mxu0
    %636 = vmatprep.mubr.f32.mxu0 0.0
    %637 = vmatmul.mubr.f32.gmra.mrb[0].mxu0 %v391
    %v638 = vpop.f32.mrb[0].mxu0
    %v639 = vadd.f32 %v330, %v638
    %v640 = vpop.f32.mrb[0].mxu0
    %641 = vmatprep.mubr.f32.mxu0 0.0
    %642 = vmatmul.mubr.f32.gmra.mrb[0].mxu0 %v394
    %v643 = vpop.f32.mrb[0].mxu0
    %v644 = vadd.f32 %v330, %v643
    %v645 = vpop.f32.mrb[0].mxu0
    %646 = vmatprep.mubr.f32.mxu0 0.0
    %647 = vmatmul.mubr.f32.gmra.mrb[0].mxu0 %v397
    %v648 = vpop.f32.mrb[0].mxu0
    %v649 = vadd.f32 %v330, %v648
    %v650 = vpop.f32.mrb[0].mxu0
    %651 = vmatprep.mubr.f32.mxu0 0.0
    %652 = vmatmul.mubr.f32.gmra.mrb[0].mxu0 %v400
    %v653 = vpop.f32.mrb[0].mxu0
    %v654 = vadd.f32 %v330, %v653
    %v655 = vpop.f32.mrb[0].mxu0
    %656 = vmatprep.mubr.f32.mxu0 0.0
    %657 = vmatmul.mubr.f32.gmra.mrb[0].mxu0 %v403
    %v658 = vpop.f32.mrb[0].mxu0
    %v659 = vadd.f32 %v330, %v658
    %v660 = vpop.f32.mrb[0].mxu0
    %661 = vmatprep.mubr.f32.mxu0 0.0
    %662 = vmatmul.mubr.f32.gmra.mrb[0].mxu0 %v406
    %v663 = vpop.f32.mrb[0].mxu0
    %v664 = vadd.f32 %v330, %v663
    %v665 = vpop.f32.mrb[0].mxu0
    %666 = vmatprep.mubr.f32.mxu0 0.0
    %667 = vmatmul.mubr.f32.gmra.mrb[0].mxu0 %v409
    %v668 = vpop.f32.mrb[0].mxu0
    %v669 = vadd.f32 %v330, %v668
    %v670 = vpop.f32.mrb[0].mxu0
    %671 = vmatprep.mubr.f32.mxu0 0.0
    %672 = vmatmul.mubr.f32.gmra.mrb[0].mxu0 %v412
    %v673 = vpop.f32.mrb[0].mxu0
    %v674 = vadd.f32 %v330, %v673
    %v675 = vpop.f32.mrb[0].mxu0
    %676 = vmatprep.mubr.f32.mxu0 0.0
    %677 = vmatmul.mubr.f32.gmra.mrb[0].mxu0 %v415
    %v678 = vpop.f32.mrb[0].mxu0
    %v679 = vadd.f32 %v330, %v678
    %v680 = vpop.f32.mrb[0].mxu0
    %681 = vmatprep.mubr.f32.mxu0 0.0
    %682 = vmatmul.mubr.f32.gmra.mrb[0].mxu0 %v418
    %v683 = vpop.f32.mrb[0].mxu0
    %v684 = vadd.f32 %v330, %v683
    %v685 = vpop.f32.mrb[0].mxu0
    %686 = vmatprep.mubr.f32.mxu0 0.0
    %687 = vmatmul.mubr.f32.gmra.mrb[0].mxu0 %v421
    %v688 = vpop.f32.mrb[0].mxu0
    %v689 = vadd.f32 %v330, %v688
    %v690 = vpop.f32.mrb[0].mxu0
    %691 = vmatprep.mubr.f32.mxu0 0.0
    %692 = vmatmul.mubr.f32.gmra.mrb[0].mxu0 %v424
    %v693 = vpop.f32.mrb[0].mxu0
    %v694 = vadd.f32 %v330, %v693
    %v695 = vpop.f32.mrb[0].mxu0
    %696 = vmatprep.mubr.f32.mxu0 0.0
    %697 = vmatmul.mubr.f32.gmra.mrb[0].mxu0 %v427
    %v698 = vpop.f32.mrb[0].mxu0
    %v699 = vadd.f32 %v330, %v698
    %v700 = vpop.f32.mrb[0].mxu0
    %701 = vmatprep.mubr.f32.mxu0 0.0
    %702 = vmatmul.mubr.f32.gmra.mrb[0].mxu0 %v430
    %v703 = vpop.f32.mrb[0].mxu0
    %v704 = vadd.f32 %v330, %v703
    %v705 = vpop.f32.mrb[0].mxu0
    %706 = vmatprep.mubr.f32.mxu0 0.0
    %707 = vmatmul.mubr.f32.gmra.mrb[0].mxu0 %v433
    %v708 = vpop.f32.mrb[0].mxu0
    %v709 = vadd.f32 %v330, %v708
    %v710 = vpop.f32.mrb[0].mxu0
    %711 = vmatprep.mubr.f32.mxu0 0.0
    %712 = vmatmul.mubr.f32.gmra.mrb[0].mxu0 %v436
    %v713 = vpop.f32.mrb[0].mxu0
    %v714 = vadd.f32 %v330, %v713
    %v715 = vpop.f32.mrb[0].mxu0
    %716 = vmatprep.mubr.f32.mxu0 0.0
    %717 = vmatmul.mubr.f32.gmra.mrb[0].mxu0 %v439
    %v718 = vpop.f32.mrb[0].mxu0
    %v719 = vadd.f32 %v330, %v718
    %v720 = vpop.f32.mrb[0].mxu0
    %721 = vmatprep.mubr.f32.mxu0 0.0
    %722 = vmatmul.mubr.f32.gmra.mrb[0].mxu0 %v442
    %v723 = vpop.f32.mrb[0].mxu0
    %v724 = vadd.f32 %v330, %v723
    %v725 = vpop.f32.mrb[0].mxu0
    %726 = vmatprep.mubr.f32.mxu0 0.0
    %727 = vmatmul.mubr.f32.gmra.mrb[0].mxu0 %v445
    %v728 = vpop.f32.mrb[0].mxu0
    %v729 = vadd.f32 %v330, %v728
    %v730 = vpop.f32.mrb[0].mxu0
    %731 = vmatprep.mubr.f32.mxu0 0.0
    %732 = vmatmul.mubr.f32.gmra.mrb[0].mxu0 %v448
    %v733 = vpop.f32.mrb[0].mxu0
    %v734 = vadd.f32 %v330, %v733
    %v735 = vpop.f32.mrb[0].mxu0
    %736 = vmatprep.mubr.f32.mxu0 0.0
    %737 = vmatmul.mubr.f32.gmra.mrb[0].mxu0 %v451
    %v738 = vpop.f32.mrb[0].mxu0
    %v739 = vadd.f32 %v330, %v738
    %v740 = vpop.f32.mrb[0].mxu0
    %741 = vmatprep.mubr.f32.mxu0 0.0
    %742 = vmatmul.mubr.f32.gmra.mrb[0].mxu0 %v454
    %v743 = vpop.f32.mrb[0].mxu0
    %v744 = vadd.f32 %v330, %v743
    %v745 = vpop.f32.mrb[0].mxu0
    %746 = vmatprep.mubr.f32.mxu0 0.0
    %747 = vmatmul.mubr.f32.gmra.mrb[0].mxu0 %v457
    %v748 = vpop.f32.mrb[0].mxu0
    %v749 = vadd.f32 %v330, %v748
    %v750 = vpop.f32.mrb[0].mxu0
    %751 = vmatprep.mubr.f32.mxu0 0.0
    %752 = vmatmul.mubr.f32.gmra.mrb[0].mxu0 %v460
    %v753 = vpop.f32.mrb[0].mxu0
    %v754 = vadd.f32 %v330, %v753
    %v755 = vpop.f32.mrb[0].mxu0
    %756 = vmatprep.mubr.f32.mxu0 0.0
    %757 = vmatmul.mubr.f32.gmra.mrb[0].mxu0 %v463
    %v758 = vpop.f32.mrb[0].mxu0
    %v759 = vadd.f32 %v330, %v758
    %v760 = vpop.f32.mrb[0].mxu0
    %761 = vmatprep.mubr.f32.mxu0 0.0
    %762 = vmatmul.mubr.f32.gmra.mrb[0].mxu0 %v466
    %v763 = vpop.f32.mrb[0].mxu0
    %v764 = vadd.f32 %v330, %v763
    %v765 = vpop.f32.mrb[0].mxu0
    %766 = vmatprep.mubr.f32.mxu0 0.0
    %767 = vmatmul.mubr.f32.gmra.mrb[0].mxu0 %v469
    %v768 = vpop.f32.mrb[0].mxu0
    %v769 = vadd.f32 %v330, %v768
    %v770 = vpop.f32.mrb[0].mxu0
    %771 = vmatprep.mubr.f32.mxu0 0.0
    %772 = vmatmul.mubr.f32.gmra.mrb[0].mxu0 %v472
    %v773 = vpop.f32.mrb[0].mxu0
    %v774 = vadd.f32 %v330, %v773
    %v775 = vpop.f32.mrb[0].mxu0
    %776 = vmatprep.mubr.f32.mxu0 0.0
    %777 = vmatmul.mubr.f32.gmra.mrb[0].mxu0 %v475
    %v778 = vpop.f32.mrb[0].mxu0
    %v779 = vadd.f32 %v330, %v778
    %v780 = vpop.f32.mrb[0].mxu0
    %781 = vdwg.mxu0
    %v782 = vmax.f32 %v544, 0.0
    %v783 = vmax.f32 %v549, 0.0
    %v784 = vmax.f32 %v554, 0.0
    %v785 = vmax.f32 %v559, 0.0
    %v786 = vmax.f32 %v564, 0.0
    %v787 = vmax.f32 %v569, 0.0
    %v788 = vmax.f32 %v574, 0.0
    %v789 = vmax.f32 %v579, 0.0
    %v790 = vmax.f32 %v584, 0.0
    %v791 = vmax.f32 %v589, 0.0
    %v792 = vmax.f32 %v594, 0.0
    %v793 = vmax.f32 %v599, 0.0
    %v794 = vmax.f32 %v604, 0.0
    %v795 = vmax.f32 %v609, 0.0
    %v796 = vmax.f32 %v614, 0.0
    %v797 = vmax.f32 %v619, 0.0
    %v798 = vmax.f32 %v624, 0.0
    %v799 = vmax.f32 %v629, 0.0
    %v800 = vmax.f32 %v634, 0.0
    %v801 = vmax.f32 %v639, 0.0
    %v802 = vmax.f32 %v644, 0.0
    %v803 = vmax.f32 %v649, 0.0
    %v804 = vmax.f32 %v654, 0.0
    %v805 = vmax.f32 %v659, 0.0
    %v806 = vmax.f32 %v664, 0.0
    %v807 = vmax.f32 %v669, 0.0
    %v808 = vmax.f32 %v674, 0.0
    %v809 = vmax.f32 %v679, 0.0
    %v810 = vmax.f32 %v684, 0.0
    %v811 = vmax.f32 %v689, 0.0
    %v812 = vmax.f32 %v694, 0.0
    %v813 = vmax.f32 %v699, 0.0
    %v814 = vmax.f32 %v704, 0.0
    %v815 = vmax.f32 %v709, 0.0
    %v816 = vmax.f32 %v714, 0.0
    %v817 = vmax.f32 %v719, 0.0
    %v818 = vmax.f32 %v724, 0.0
    %v819 = vmax.f32 %v729, 0.0
    %v820 = vmax.f32 %v734, 0.0
    %v821 = vmax.f32 %v739, 0.0
    %v822 = vmax.f32 %v744, 0.0
    %v823 = vmax.f32 %v749, 0.0
    %v824 = vmax.f32 %v754, 0.0
    %v825 = vmax.f32 %v759, 0.0
    %v826 = vmax.f32 %v764, 0.0
    %v827 = vmax.f32 %v769, 0.0
    %v828 = vmax.f32 %v774, 0.0
    %v829 = vmax.f32 %v779, 0.0
    %v830 = vpack.c.bf16 %v783, %v782
    %v831 = vpack.c.bf16 %v785, %v784
    %v832 = vpack.c.bf16 %v787, %v786
    %v833 = vpack.c.bf16 %v789, %v788
    %v834 = vpack.c.bf16 %v791, %v790
    %v835 = vpack.c.bf16 %v793, %v792
    %v836 = vpack.c.bf16 %v795, %v794
    %v837 = vpack.c.bf16 %v797, %v796
    %v838 = vpack.c.bf16 %v799, %v798
    %v839 = vpack.c.bf16 %v801, %v800
    %v840 = vpack.c.bf16 %v803, %v802
    %v841 = vpack.c.bf16 %v805, %v804
    %v842 = vpack.c.bf16 %v807, %v806
    %v843 = vpack.c.bf16 %v809, %v808
    %v844 = vpack.c.bf16 %v811, %v810
    %v845 = vpack.c.bf16 %v813, %v812
    %v846 = vpack.c.bf16 %v815, %v814
    %v847 = vpack.c.bf16 %v817, %v816
    %v848 = vpack.c.bf16 %v819, %v818
    %v849 = vpack.c.bf16 %v821, %v820
    %v850 = vpack.c.bf16 %v823, %v822
    %v851 = vpack.c.bf16 %v825, %v824
    %v852 = vpack.c.bf16 %v827, %v826
    %v853 = vpack.c.bf16 %v829, %v828
    %v950 = vunpack.c.l.b16 %v81
    %v951 = vunpack.c.h.b16 %v81
    %v952 = vunpack.c.l.b16 %v82
    %v953 = vunpack.c.l.b16 %v83
    %v954 = vunpack.c.h.b16 %v83
    %v955 = vunpack.c.l.b16 %v84
    %v956 = vunpack.c.l.b16 %v85
    %v957 = vunpack.c.h.b16 %v85
    %v958 = vunpack.c.l.b16 %v86
    %v959 = vunpack.c.l.b16 %v87
    %v960 = vunpack.c.h.b16 %v87
    %v961 = vunpack.c.l.b16 %v88
    %v962 = vunpack.c.l.b16 %v89
    %v963 = vunpack.c.h.b16 %v89
    %v964 = vunpack.c.l.b16 %v90
    %v965 = vunpack.c.l.b16 %v91
    %v966 = vunpack.c.h.b16 %v91
    %v967 = vunpack.c.l.b16 %v92
    %v968 = vunpack.c.l.b16 %v93
    %v969 = vunpack.c.h.b16 %v93
    %v970 = vunpack.c.l.b16 %v94
    %v971 = vunpack.c.l.b16 %v95
    %v972 = vunpack.c.h.b16 %v95
    %v973 = vunpack.c.l.b16 %v96
    %v974 = vunpack.c.l.b16 %v97
    %v975 = vunpack.c.h.b16 %v97
    %v976 = vunpack.c.l.b16 %v98
    %v977 = vunpack.c.l.b16 %v99
    %v978 = vunpack.c.h.b16 %v99
    %v979 = vunpack.c.l.b16 %v100
    %v980 = vunpack.c.l.b16 %v101
    %v981 = vunpack.c.h.b16 %v101
    %v982 = vunpack.c.l.b16 %v102
    %v983 = vunpack.c.l.b16 %v103
    %v984 = vunpack.c.h.b16 %v103
    %v985 = vunpack.c.l.b16 %v104
    %v986 = vunpack.c.l.b16 %v105
    %v987 = vunpack.c.h.b16 %v105
    %v988 = vunpack.c.l.b16 %v106
    %v989 = vunpack.c.l.b16 %v107
    %v990 = vunpack.c.h.b16 %v107
    %v991 = vunpack.c.l.b16 %v108
    %v992 = vunpack.c.l.b16 %v109
    %v993 = vunpack.c.h.b16 %v109
    %v994 = vunpack.c.l.b16 %v110
    %v995 = vunpack.c.l.b16 %v111
    %v996 = vunpack.c.h.b16 %v111
    %v997 = vunpack.c.l.b16 %v112
    %v998 = vunpack.c.l.b16 %v113
    %v999 = vunpack.c.h.b16 %v113
    %v1000 = vunpack.c.l.b16 %v114
    %v1001 = vunpack.c.l.b16 %v115
    %v1002 = vunpack.c.h.b16 %v115
    %v1003 = vunpack.c.l.b16 %v116
    %v1004 = vunpack.c.l.b16 %v117
    %v1005 = vunpack.c.h.b16 %v117
    %v1006 = vunpack.c.l.b16 %v118
    %v1007 = vunpack.c.l.b16 %v119
    %v1008 = vunpack.c.h.b16 %v119
    %v1009 = vunpack.c.l.b16 %v120
    %v1010 = vunpack.c.l.b16 %v121
    %v1011 = vunpack.c.h.b16 %v121
    %v1012 = vunpack.c.l.b16 %v122
    %v1013 = vunpack.c.l.b16 %v123
    %v1014 = vunpack.c.h.b16 %v123
    %v1015 = vunpack.c.l.b16 %v124
    %v1016 = vunpack.c.l.b16 %v125
    %v1017 = vunpack.c.h.b16 %v125
    %v1018 = vunpack.c.l.b16 %v126
    %v1019 = vunpack.c.l.b16 %v127
    %v1020 = vunpack.c.h.b16 %v127
    %v1021 = vunpack.c.l.b16 %v128
    %v1022 = vunpack.c.l.b16 %v129
    %v1023 = vunpack.c.h.b16 %v129
    %v1024 = vunpack.c.l.b16 %v130
    %v1025 = vunpack.c.l.b16 %v131
    %v1026 = vunpack.c.h.b16 %v131
    %v1027 = vunpack.c.l.b16 %v132
    %v1028 = vunpack.c.l.b16 %v133
    %v1029 = vunpack.c.h.b16 %v133
    %v1030 = vunpack.c.l.b16 %v134
    %v1031 = vunpack.c.l.b16 %v135
    %v1032 = vunpack.c.h.b16 %v135
    %v1033 = vunpack.c.l.b16 %v136
    %v1034 = vunpack.c.l.b16 %v137
    %v1035 = vunpack.c.h.b16 %v137
    %v1036 = vunpack.c.l.b16 %v138
    %v1037 = vunpack.c.l.b16 %v139
    %v1038 = vunpack.c.h.b16 %v139
    %v1039 = vunpack.c.l.b16 %v140
    %v1040 = vunpack.c.l.b16 %v141
    %v1041 = vunpack.c.h.b16 %v141
    %v1042 = vunpack.c.l.b16 %v142
    %v1043 = vunpack.c.l.b16 %v143
    %v1044 = vunpack.c.h.b16 %v143
    %v1045 = vunpack.c.l.b16 %v144
    %v1046 = vunpack.c.l.b16 %v145
    %v1047 = vunpack.c.h.b16 %v145
    %v1048 = vunpack.c.l.b16 %v146
    %v1049 = vunpack.c.l.b16 %v147
    %v1050 = vunpack.c.h.b16 %v147
    %v1051 = vunpack.c.l.b16 %v148
    %v1052 = vunpack.c.l.b16 %v149
    %v1053 = vunpack.c.h.b16 %v149
    %v1054 = vunpack.c.l.b16 %v150
    %v1055 = vunpack.c.l.b16 %v151
    %v1056 = vunpack.c.h.b16 %v151
    %v1057 = vunpack.c.l.b16 %v152
    %v1058 = vunpack.c.l.b16 %v153
    %v1059 = vunpack.c.h.b16 %v153
    %v1060 = vunpack.c.l.b16 %v154
    %v1061 = vunpack.c.l.b16 %v155
    %v1062 = vunpack.c.h.b16 %v155
    %v1063 = vunpack.c.l.b16 %v156
    %v1064 = vunpack.c.l.b16 %v157
    %v1065 = vunpack.c.h.b16 %v157
    %v1066 = vunpack.c.l.b16 %v158
    %v1067 = vunpack.c.l.b16 %v159
    %v1068 = vunpack.c.h.b16 %v159
    %v1069 = vunpack.c.l.b16 %v160
    %v1070 = vunpack.c.l.b16 %v161
    %v1071 = vunpack.c.h.b16 %v161
    %v1072 = vunpack.c.l.b16 %v162
    %v1073 = vunpack.c.l.b16 %v163
    %v1074 = vunpack.c.h.b16 %v163
    %v1075 = vunpack.c.l.b16 %v164
    %v1076 = vunpack.c.l.b16 %v165
    %v1077 = vunpack.c.h.b16 %v165
    %v1078 = vunpack.c.l.b16 %v166
    %v1079 = vunpack.c.l.b16 %v167
    %v1080 = vunpack.c.h.b16 %v167
    %v1081 = vunpack.c.l.b16 %v168
    %v1082 = vunpack.c.l.b16 %v169
    %v1083 = vunpack.c.h.b16 %v169
    %v1084 = vunpack.c.l.b16 %v170
    %v1085 = vunpack.c.l.b16 %v171
    %v1086 = vunpack.c.h.b16 %v171
    %v1087 = vunpack.c.l.b16 %v172
    %v1088 = vunpack.c.l.b16 %v173
    %v1089 = vunpack.c.h.b16 %v173
    %v1090 = vunpack.c.l.b16 %v174
    %v1091 = vunpack.c.l.b16 %v175
    %v1092 = vunpack.c.h.b16 %v175
    %v1093 = vunpack.c.l.b16 %v176
    %v1094 = vpack.c.b16 %v953, %v950
    %v1095 = vpack.c.b16 %v954, %v951
    %v1096 = vpack.c.b16 %v955, %v952
    %v1097 = vpack.c.b16 %v959, %v956
    %v1098 = vpack.c.b16 %v960, %v957
    %v1099 = vpack.c.b16 %v961, %v958
    %v1100 = vpack.c.b16 %v965, %v962
    %v1101 = vpack.c.b16 %v966, %v963
    %v1102 = vpack.c.b16 %v967, %v964
    %v1103 = vpack.c.b16 %v971, %v968
    %v1104 = vpack.c.b16 %v972, %v969
    %v1105 = vpack.c.b16 %v973, %v970
    %v1106 = vpack.c.b16 %v977, %v974
    %v1107 = vpack.c.b16 %v978, %v975
    %v1108 = vpack.c.b16 %v979, %v976
    %v1109 = vpack.c.b16 %v983, %v980
    %v1110 = vpack.c.b16 %v984, %v981
    %v1111 = vpack.c.b16 %v985, %v982
    %v1112 = vpack.c.b16 %v989, %v986
    %v1113 = vpack.c.b16 %v990, %v987
    %v1114 = vpack.c.b16 %v991, %v988
    %v1115 = vpack.c.b16 %v995, %v992
    %v1116 = vpack.c.b16 %v996, %v993
    %v1117 = vpack.c.b16 %v997, %v994
    %v1118 = vpack.c.b16 %v1001, %v998
    %v1119 = vpack.c.b16 %v1002, %v999
    %v1120 = vpack.c.b16 %v1003, %v1000
    %v1121 = vpack.c.b16 %v1007, %v1004
    %v1122 = vpack.c.b16 %v1008, %v1005
    %v1123 = vpack.c.b16 %v1009, %v1006
    %v1124 = vpack.c.b16 %v1013, %v1010
    %v1125 = vpack.c.b16 %v1014, %v1011
    %v1126 = vpack.c.b16 %v1015, %v1012
    %v1127 = vpack.c.b16 %v1019, %v1016
    %v1128 = vpack.c.b16 %v1020, %v1017
    %v1129 = vpack.c.b16 %v1021, %v1018
    %v1130 = vpack.c.b16 %v1025, %v1022
    %v1131 = vpack.c.b16 %v1026, %v1023
    %v1132 = vpack.c.b16 %v1027, %v1024
    %v1133 = vpack.c.b16 %v1031, %v1028
    %v1134 = vpack.c.b16 %v1032, %v1029
    %v1135 = vpack.c.b16 %v1033, %v1030
    %v1136 = vpack.c.b16 %v1037, %v1034
    %v1137 = vpack.c.b16 %v1038, %v1035
    %v1138 = vpack.c.b16 %v1039, %v1036
    %v1139 = vpack.c.b16 %v1043, %v1040
    %v1140 = vpack.c.b16 %v1044, %v1041
    %v1141 = vpack.c.b16 %v1045, %v1042
    %v1142 = vpack.c.b16 %v1049, %v1046
    %v1143 = vpack.c.b16 %v1050, %v1047
    %v1144 = vpack.c.b16 %v1051, %v1048
    %v1145 = vpack.c.b16 %v1055, %v1052
    %v1146 = vpack.c.b16 %v1056, %v1053
    %v1147 = vpack.c.b16 %v1057, %v1054
    %v1148 = vpack.c.b16 %v1061, %v1058
    %v1149 = vpack.c.b16 %v1062, %v1059
    %v1150 = vpack.c.b16 %v1063, %v1060
    %v1151 = vpack.c.b16 %v1067, %v1064
    %v1152 = vpack.c.b16 %v1068, %v1065
    %v1153 = vpack.c.b16 %v1069, %v1066
    %v1154 = vpack.c.b16 %v1073, %v1070
    %v1155 = vpack.c.b16 %v1074, %v1071
    %v1156 = vpack.c.b16 %v1075, %v1072
    %v1157 = vpack.c.b16 %v1079, %v1076
    %v1158 = vpack.c.b16 %v1080, %v1077
    %v1159 = vpack.c.b16 %v1081, %v1078
    %v1160 = vpack.c.b16 %v1085, %v1082
    %v1161 = vpack.c.b16 %v1086, %v1083
    %v1162 = vpack.c.b16 %v1087, %v1084
    %v1163 = vpack.c.b16 %v1091, %v1088
    %v1164 = vpack.c.b16 %v1092, %v1089
    %v1165 = vpack.c.b16 %v1093, %v1090
    %1238 = vmatprep.subr.bf16.mxu0 0
    %1239 = vmatpush1.bf16.msra.mxu0 %v830
    %1240 = vmatprep.subr.bf16.mxu0 0
    %1241 = vmatpush1.bf16.msra.mxu0 %v831
    %1242 = vmatprep.subr.bf16.mxu0 0
    %1243 = vmatpush1.bf16.msra.mxu0 %v832
    %1244 = vmatprep.subr.bf16.mxu0 0
    %1245 = vmatpush1.bf16.msra.mxu0 %v833
    %1246 = vmatprep.subr.bf16.mxu0 0
    %1247 = vmatpush1.bf16.msra.mxu0 %v834
    %1248 = vmatprep.subr.bf16.mxu0 0
    %1249 = vmatpush1.bf16.msra.mxu0 %v835
    %1250 = vmatprep.subr.bf16.mxu0 0
    %1251 = vmatpush1.bf16.msra.mxu0 %v836
    %1252 = vmatprep.subr.bf16.mxu0 0
    %1253 = vmatpush1.bf16.msra.mxu0 %v837
    %1254 = vmatprep.subr.bf16.mxu0 0
    %1255 = vmatpush1.bf16.msra.mxu0 %v838
    %1256 = vmatprep.subr.bf16.mxu0 0
    %1257 = vmatpush1.bf16.msra.mxu0 %v839
    %1258 = vmatprep.subr.bf16.mxu0 0
    %1259 = vmatpush1.bf16.msra.mxu0 %v840
    %1260 = vmatprep.subr.bf16.mxu0 0
    %1261 = vmatpush1.bf16.msra.mxu0 %v841
    %1262 = vmatprep.subr.bf16.mxu0 0
    %1263 = vmatpush1.bf16.msra.mxu0 %v842
    %1264 = vmatprep.subr.bf16.mxu0 0
    %1265 = vmatpush1.bf16.msra.mxu0 %v843
    %1266 = vmatprep.subr.bf16.mxu0 0
    %1267 = vmatpush1.bf16.msra.mxu0 %v844
    %1268 = vmatprep.subr.bf16.mxu0 0
    %1269 = vmatpush1.bf16.msra.mxu0 %v845
    %1270 = vmatprep.mubr.bf16.mxu0 %v1095
    %1271 = vmatmul.mubr.bf16.gmra.mrb[0].mxu0 %v1094
    %v1272 = vpop.f32.mrb[0].mxu0
    %v1273 = vadd.f32 0.0, %v1272
    %v1274 = vpop.f32.mrb[0].mxu0
    %v1275 = vpop.f32.mrb[0].mxu0
    %v1276 = vadd.f32 0.0, %v1275
    %v1277 = vpop.f32.mrb[0].mxu0
    %1278 = vmatprep.mubr.bf16.mxu0 %v1098
    %1279 = vmatmul.mubr.bf16.gmra.mrb[0].mxu0 %v1097
    %v1280 = vpop.f32.mrb[0].mxu0
    %v1281 = vadd.f32 0.0, %v1280
    %v1282 = vpop.f32.mrb[0].mxu0
    %v1283 = vpop.f32.mrb[0].mxu0
    %v1284 = vadd.f32 0.0, %v1283
    %v1285 = vpop.f32.mrb[0].mxu0
    %1286 = vmatprep.mubr.bf16.mxu0 %v1101
    %1287 = vmatmul.mubr.bf16.gmra.mrb[0].mxu0 %v1100
    %v1288 = vpop.f32.mrb[0].mxu0
    %v1289 = vadd.f32 0.0, %v1288
    %v1290 = vpop.f32.mrb[0].mxu0
    %v1291 = vpop.f32.mrb[0].mxu0
    %v1292 = vadd.f32 0.0, %v1291
    %v1293 = vpop.f32.mrb[0].mxu0
    %1294 = vmatprep.mubr.bf16.mxu0 %v1104
    %1295 = vmatmul.mubr.bf16.gmra.mrb[0].mxu0 %v1103
    %v1296 = vpop.f32.mrb[0].mxu0
    %v1297 = vadd.f32 0.0, %v1296
    %v1298 = vpop.f32.mrb[0].mxu0
    %v1299 = vpop.f32.mrb[0].mxu0
    %v1300 = vadd.f32 0.0, %v1299
    %v1301 = vpop.f32.mrb[0].mxu0
    %1302 = vmatprep.mubr.bf16.mxu0 %v1107
    %1303 = vmatmul.mubr.bf16.gmra.mrb[0].mxu0 %v1106
    %v1304 = vpop.f32.mrb[0].mxu0
    %v1305 = vadd.f32 0.0, %v1304
    %v1306 = vpop.f32.mrb[0].mxu0
    %v1307 = vpop.f32.mrb[0].mxu0
    %v1308 = vadd.f32 0.0, %v1307
    %v1309 = vpop.f32.mrb[0].mxu0
    %1310 = vmatprep.mubr.bf16.mxu0 %v1110
    %1311 = vmatmul.mubr.bf16.gmra.mrb[0].mxu0 %v1109
    %v1312 = vpop.f32.mrb[0].mxu0
    %v1313 = vadd.f32 0.0, %v1312
    %v1314 = vpop.f32.mrb[0].mxu0
    %v1315 = vpop.f32.mrb[0].mxu0
    %v1316 = vadd.f32 0.0, %v1315
    %v1317 = vpop.f32.mrb[0].mxu0
    %1318 = vmatprep.mubr.bf16.mxu0 %v1113
    %1319 = vmatmul.mubr.bf16.gmra.mrb[0].mxu0 %v1112
    %v1320 = vpop.f32.mrb[0].mxu0
    %v1321 = vadd.f32 0.0, %v1320
    %v1322 = vpop.f32.mrb[0].mxu0
    %v1323 = vpop.f32.mrb[0].mxu0
    %v1324 = vadd.f32 0.0, %v1323
    %v1325 = vpop.f32.mrb[0].mxu0
    %1326 = vmatprep.mubr.bf16.mxu0 %v1116
    %1327 = vmatmul.mubr.bf16.gmra.mrb[0].mxu0 %v1115
    %v1328 = vpop.f32.mrb[0].mxu0
    %v1329 = vadd.f32 0.0, %v1328
    %v1330 = vpop.f32.mrb[0].mxu0
    %v1331 = vpop.f32.mrb[0].mxu0
    %v1332 = vadd.f32 0.0, %v1331
    %v1333 = vpop.f32.mrb[0].mxu0
    %1334 = vmatprep.mubr.bf16.mxu0 %v1119
    %1335 = vmatmul.mubr.bf16.gmra.mrb[0].mxu0 %v1118
    %v1336 = vpop.f32.mrb[0].mxu0
    %v1337 = vadd.f32 0.0, %v1336
    %v1338 = vpop.f32.mrb[0].mxu0
    %v1339 = vpop.f32.mrb[0].mxu0
    %v1340 = vadd.f32 0.0, %v1339
    %v1341 = vpop.f32.mrb[0].mxu0
    %1342 = vmatprep.mubr.bf16.mxu0 %v1122
    %1343 = vmatmul.mubr.bf16.gmra.mrb[0].mxu0 %v1121
    %v1344 = vpop.f32.mrb[0].mxu0
    %v1345 = vadd.f32 0.0, %v1344
    %v1346 = vpop.f32.mrb[0].mxu0
    %v1347 = vpop.f32.mrb[0].mxu0
    %v1348 = vadd.f32 0.0, %v1347
    %v1349 = vpop.f32.mrb[0].mxu0
    %1350 = vmatprep.mubr.bf16.mxu0 %v1125
    %1351 = vmatmul.mubr.bf16.gmra.mrb[0].mxu0 %v1124
    %v1352 = vpop.f32.mrb[0].mxu0
    %v1353 = vadd.f32 0.0, %v1352
    %v1354 = vpop.f32.mrb[0].mxu0
    %v1355 = vpop.f32.mrb[0].mxu0
    %v1356 = vadd.f32 0.0, %v1355
    %v1357 = vpop.f32.mrb[0].mxu0
    %1358 = vmatprep.mubr.bf16.mxu0 %v1128
    %1359 = vmatmul.mubr.bf16.gmra.mrb[0].mxu0 %v1127
    %v1360 = vpop.f32.mrb[0].mxu0
    %v1361 = vadd.f32 0.0, %v1360
    %v1362 = vpop.f32.mrb[0].mxu0
    %v1363 = vpop.f32.mrb[0].mxu0
    %v1364 = vadd.f32 0.0, %v1363
    %v1365 = vpop.f32.mrb[0].mxu0
    %1366 = vmatprep.mubr.bf16.mxu0 %v1131
    %1367 = vmatmul.mubr.bf16.gmra.mrb[0].mxu0 %v1130
    %v1368 = vpop.f32.mrb[0].mxu0
    %v1369 = vadd.f32 0.0, %v1368
    %v1370 = vpop.f32.mrb[0].mxu0
    %v1371 = vpop.f32.mrb[0].mxu0
    %v1372 = vadd.f32 0.0, %v1371
    %v1373 = vpop.f32.mrb[0].mxu0
    %1374 = vmatprep.mubr.bf16.mxu0 %v1134
    %1375 = vmatmul.mubr.bf16.gmra.mrb[0].mxu0 %v1133
    %v1376 = vpop.f32.mrb[0].mxu0
    %v1377 = vadd.f32 0.0, %v1376
    %v1378 = vpop.f32.mrb[0].mxu0
    %v1379 = vpop.f32.mrb[0].mxu0
    %v1380 = vadd.f32 0.0, %v1379
    %v1381 = vpop.f32.mrb[0].mxu0
    %1382 = vmatprep.mubr.bf16.mxu0 %v1137
    %1383 = vmatmul.mubr.bf16.gmra.mrb[0].mxu0 %v1136
    %v1384 = vpop.f32.mrb[0].mxu0
    %v1385 = vadd.f32 0.0, %v1384
    %v1386 = vpop.f32.mrb[0].mxu0
    %v1387 = vpop.f32.mrb[0].mxu0
    %v1388 = vadd.f32 0.0, %v1387
    %v1389 = vpop.f32.mrb[0].mxu0
    %1390 = vmatprep.mubr.bf16.mxu0 %v1140
    %1391 = vmatmul.mubr.bf16.gmra.mrb[0].mxu0 %v1139
    %v1392 = vpop.f32.mrb[0].mxu0
    %v1393 = vadd.f32 0.0, %v1392
    %v1394 = vpop.f32.mrb[0].mxu0
    %v1395 = vpop.f32.mrb[0].mxu0
    %v1396 = vadd.f32 0.0, %v1395
    %v1397 = vpop.f32.mrb[0].mxu0
    %1398 = vmatprep.mubr.bf16.mxu0 %v1143
    %1399 = vmatmul.mubr.bf16.gmra.mrb[0].mxu0 %v1142
    %v1400 = vpop.f32.mrb[0].mxu0
    %v1401 = vadd.f32 0.0, %v1400
    %v1402 = vpop.f32.mrb[0].mxu0
    %v1403 = vpop.f32.mrb[0].mxu0
    %v1404 = vadd.f32 0.0, %v1403
    %v1405 = vpop.f32.mrb[0].mxu0
    %1406 = vmatprep.mubr.bf16.mxu0 %v1146
    %1407 = vmatmul.mubr.bf16.gmra.mrb[0].mxu0 %v1145
    %v1408 = vpop.f32.mrb[0].mxu0
    %v1409 = vadd.f32 0.0, %v1408
    %v1410 = vpop.f32.mrb[0].mxu0
    %v1411 = vpop.f32.mrb[0].mxu0
    %v1412 = vadd.f32 0.0, %v1411
    %v1413 = vpop.f32.mrb[0].mxu0
    %1414 = vmatprep.mubr.bf16.mxu0 %v1149
    %1415 = vmatmul.mubr.bf16.gmra.mrb[0].mxu0 %v1148
    %v1416 = vpop.f32.mrb[0].mxu0
    %v1417 = vadd.f32 0.0, %v1416
    %v1418 = vpop.f32.mrb[0].mxu0
    %v1419 = vpop.f32.mrb[0].mxu0
    %v1420 = vadd.f32 0.0, %v1419
    %v1421 = vpop.f32.mrb[0].mxu0
    %1422 = vmatprep.mubr.bf16.mxu0 %v1152
    %1423 = vmatmul.mubr.bf16.gmra.mrb[0].mxu0 %v1151
    %v1424 = vpop.f32.mrb[0].mxu0
    %v1425 = vadd.f32 0.0, %v1424
    %v1426 = vpop.f32.mrb[0].mxu0
    %v1427 = vpop.f32.mrb[0].mxu0
    %v1428 = vadd.f32 0.0, %v1427
    %v1429 = vpop.f32.mrb[0].mxu0
    %1430 = vmatprep.mubr.bf16.mxu0 %v1155
    %1431 = vmatmul.mubr.bf16.gmra.mrb[0].mxu0 %v1154
    %v1432 = vpop.f32.mrb[0].mxu0
    %v1433 = vadd.f32 0.0, %v1432
    %v1434 = vpop.f32.mrb[0].mxu0
    %v1435 = vpop.f32.mrb[0].mxu0
    %v1436 = vadd.f32 0.0, %v1435
    %v1437 = vpop.f32.mrb[0].mxu0
    %1438 = vmatprep.mubr.bf16.mxu0 %v1158
    %1439 = vmatmul.mubr.bf16.gmra.mrb[0].mxu0 %v1157
    %v1440 = vpop.f32.mrb[0].mxu0
    %v1441 = vadd.f32 0.0, %v1440
    %v1442 = vpop.f32.mrb[0].mxu0
    %v1443 = vpop.f32.mrb[0].mxu0
    %v1444 = vadd.f32 0.0, %v1443
    %v1445 = vpop.f32.mrb[0].mxu0
    %1446 = vmatprep.mubr.bf16.mxu0 %v1161
    %1447 = vmatmul.mubr.bf16.gmra.mrb[0].mxu0 %v1160
    %v1448 = vpop.f32.mrb[0].mxu0
    %v1449 = vadd.f32 0.0, %v1448
    %v1450 = vpop.f32.mrb[0].mxu0
    %v1451 = vpop.f32.mrb[0].mxu0
    %v1452 = vadd.f32 0.0, %v1451
    %v1453 = vpop.f32.mrb[0].mxu0
    %1454 = vmatprep.mubr.bf16.mxu0 %v1164
    %1455 = vmatmul.mubr.bf16.gmra.mrb[0].mxu0 %v1163
    %v1456 = vpop.f32.mrb[0].mxu0
    %v1457 = vadd.f32 0.0, %v1456
    %v1458 = vpop.f32.mrb[0].mxu0
    %v1459 = vpop.f32.mrb[0].mxu0
    %v1460 = vadd.f32 0.0, %v1459
    %v1461 = vpop.f32.mrb[0].mxu0
    %1462 = vdwg.mxu0
    %1463 = vmatprep.subr.bf16.mxu0 0
    %1464 = vmatpush1.bf16.msra.mxu0 %v846
    %1465 = vmatprep.subr.bf16.mxu0 0
    %1466 = vmatpush1.bf16.msra.mxu0 %v847
    %1467 = vmatprep.subr.bf16.mxu0 0
    %1468 = vmatpush1.bf16.msra.mxu0 %v848
    %1469 = vmatprep.subr.bf16.mxu0 0
    %1470 = vmatpush1.bf16.msra.mxu0 %v849
    %1471 = vmatprep.subr.bf16.mxu0 0
    %1472 = vmatpush1.bf16.msra.mxu0 %v850
    %1473 = vmatprep.subr.bf16.mxu0 0
    %1474 = vmatpush1.bf16.msra.mxu0 %v851
    %1475 = vmatprep.subr.bf16.mxu0 0
    %1476 = vmatpush1.bf16.msra.mxu0 %v852
    %1477 = vmatprep.subr.bf16.mxu0 0
    %1478 = vmatpush1.bf16.msra.mxu0 %v853
    %1479 = vmatprep.subr.bf16.mxu0 0
    %1480 = vmatpush1.bf16.msra.mxu0 0
    %1481 = vmatprep.subr.bf16.mxu0 0
    %1482 = vmatpush1.bf16.msra.mxu0 0
    %1483 = vmatprep.subr.bf16.mxu0 0
    %1484 = vmatpush1.bf16.msra.mxu0 0
    %1485 = vmatprep.subr.bf16.mxu0 0
    %1486 = vmatpush1.bf16.msra.mxu0 0
    %1487 = vmatprep.subr.bf16.mxu0 0
    %1488 = vmatpush1.bf16.msra.mxu0 0
    %1489 = vmatprep.subr.bf16.mxu0 0
    %1490 = vmatpush1.bf16.msra.mxu0 0
    %1491 = vmatprep.subr.bf16.mxu0 0
    %1492 = vmatpush1.bf16.msra.mxu0 0
    %1493 = vmatprep.subr.bf16.mxu0 0
    %1494 = vmatpush1.bf16.msra.mxu0 0
    %1495 = vmatprep.mubr.bf16.mxu0 0
    %1496 = vmatmul.mubr.bf16.gmra.mrb[0].mxu0 %v1096
    %v1497 = vpop.f32.mrb[0].mxu0
    %v1498 = vadd.f32 %v1273, %v1497
    %v1499 = vpop.f32.mrb[0].mxu0
    %v1500 = vpop.f32.mrb[0].mxu0
    %v1501 = vadd.f32 %v1276, %v1500
    %v1502 = vpop.f32.mrb[0].mxu0
    %1503 = vmatprep.mubr.bf16.mxu0 0
    %1504 = vmatmul.mubr.bf16.gmra.mrb[0].mxu0 %v1099
    %v1505 = vpop.f32.mrb[0].mxu0
    %v1506 = vadd.f32 %v1281, %v1505
    %v1507 = vpop.f32.mrb[0].mxu0
    %v1508 = vpop.f32.mrb[0].mxu0
    %v1509 = vadd.f32 %v1284, %v1508
    %v1510 = vpop.f32.mrb[0].mxu0
    %1511 = vmatprep.mubr.bf16.mxu0 0
    %1512 = vmatmul.mubr.bf16.gmra.mrb[0].mxu0 %v1102
    %v1513 = vpop.f32.mrb[0].mxu0
    %v1514 = vadd.f32 %v1289, %v1513
    %v1515 = vpop.f32.mrb[0].mxu0
    %v1516 = vpop.f32.mrb[0].mxu0
    %v1517 = vadd.f32 %v1292, %v1516
    %v1518 = vpop.f32.mrb[0].mxu0
    %1519 = vmatprep.mubr.bf16.mxu0 0
    %1520 = vmatmul.mubr.bf16.gmra.mrb[0].mxu0 %v1105
    %v1521 = vpop.f32.mrb[0].mxu0
    %v1522 = vadd.f32 %v1297, %v1521
    %v1523 = vpop.f32.mrb[0].mxu0
    %v1524 = vpop.f32.mrb[0].mxu0
    %v1525 = vadd.f32 %v1300, %v1524
    %v1526 = vpop.f32.mrb[0].mxu0
    %1527 = vmatprep.mubr.bf16.mxu0 0
    %1528 = vmatmul.mubr.bf16.gmra.mrb[0].mxu0 %v1108
    %v1529 = vpop.f32.mrb[0].mxu0
    %v1530 = vadd.f32 %v1305, %v1529
    %v1531 = vpop.f32.mrb[0].mxu0
    %v1532 = vpop.f32.mrb[0].mxu0
    %v1533 = vadd.f32 %v1308, %v1532
    %v1534 = vpop.f32.mrb[0].mxu0
    %1535 = vmatprep.mubr.bf16.mxu0 0
    %1536 = vmatmul.mubr.bf16.gmra.mrb[0].mxu0 %v1111
    %v1537 = vpop.f32.mrb[0].mxu0
    %v1538 = vadd.f32 %v1313, %v1537
    %v1539 = vpop.f32.mrb[0].mxu0
    %v1540 = vpop.f32.mrb[0].mxu0
    %v1541 = vadd.f32 %v1316, %v1540
    %v1542 = vpop.f32.mrb[0].mxu0
    %1543 = vmatprep.mubr.bf16.mxu0 0
    %1544 = vmatmul.mubr.bf16.gmra.mrb[0].mxu0 %v1114
    %v1545 = vpop.f32.mrb[0].mxu0
    %v1546 = vadd.f32 %v1321, %v1545
    %v1547 = vpop.f32.mrb[0].mxu0
    %v1548 = vpop.f32.mrb[0].mxu0
    %v1549 = vadd.f32 %v1324, %v1548
    %v1550 = vpop.f32.mrb[0].mxu0
    %1551 = vmatprep.mubr.bf16.mxu0 0
    %1552 = vmatmul.mubr.bf16.gmra.mrb[0].mxu0 %v1117
    %v1553 = vpop.f32.mrb[0].mxu0
    %v1554 = vadd.f32 %v1329, %v1553
    %v1555 = vpop.f32.mrb[0].mxu0
    %v1556 = vpop.f32.mrb[0].mxu0
    %v1557 = vadd.f32 %v1332, %v1556
    %v1558 = vpop.f32.mrb[0].mxu0
    %1559 = vmatprep.mubr.bf16.mxu0 0
    %1560 = vmatmul.mubr.bf16.gmra.mrb[0].mxu0 %v1120
    %v1561 = vpop.f32.mrb[0].mxu0
    %v1562 = vadd.f32 %v1337, %v1561
    %v1563 = vpop.f32.mrb[0].mxu0
    %v1564 = vpop.f32.mrb[0].mxu0
    %v1565 = vadd.f32 %v1340, %v1564
    %v1566 = vpop.f32.mrb[0].mxu0
    %1567 = vmatprep.mubr.bf16.mxu0 0
    %1568 = vmatmul.mubr.bf16.gmra.mrb[0].mxu0 %v1123
    %v1569 = vpop.f32.mrb[0].mxu0
    %v1570 = vadd.f32 %v1345, %v1569
    %v1571 = vpop.f32.mrb[0].mxu0
    %v1572 = vpop.f32.mrb[0].mxu0
    %v1573 = vadd.f32 %v1348, %v1572
    %v1574 = vpop.f32.mrb[0].mxu0
    %1575 = vmatprep.mubr.bf16.mxu0 0
    %1576 = vmatmul.mubr.bf16.gmra.mrb[0].mxu0 %v1126
    %v1577 = vpop.f32.mrb[0].mxu0
    %v1578 = vadd.f32 %v1353, %v1577
    %v1579 = vpop.f32.mrb[0].mxu0
    %v1580 = vpop.f32.mrb[0].mxu0
    %v1581 = vadd.f32 %v1356, %v1580
    %v1582 = vpop.f32.mrb[0].mxu0
    %1583 = vmatprep.mubr.bf16.mxu0 0
    %1584 = vmatmul.mubr.bf16.gmra.mrb[0].mxu0 %v1129
    %v1585 = vpop.f32.mrb[0].mxu0
    %v1586 = vadd.f32 %v1361, %v1585
    %v1587 = vpop.f32.mrb[0].mxu0
    %v1588 = vpop.f32.mrb[0].mxu0
    %v1589 = vadd.f32 %v1364, %v1588
    %v1590 = vpop.f32.mrb[0].mxu0
    %1591 = vmatprep.mubr.bf16.mxu0 0
    %1592 = vmatmul.mubr.bf16.gmra.mrb[0].mxu0 %v1132
    %v1593 = vpop.f32.mrb[0].mxu0
    %v1594 = vadd.f32 %v1369, %v1593
    %v1595 = vpop.f32.mrb[0].mxu0
    %v1596 = vpop.f32.mrb[0].mxu0
    %v1597 = vadd.f32 %v1372, %v1596
    %v1598 = vpop.f32.mrb[0].mxu0
    %1599 = vmatprep.mubr.bf16.mxu0 0
    %1600 = vmatmul.mubr.bf16.gmra.mrb[0].mxu0 %v1135
    %v1601 = vpop.f32.mrb[0].mxu0
    %v1602 = vadd.f32 %v1377, %v1601
    %v1603 = vpop.f32.mrb[0].mxu0
    %v1604 = vpop.f32.mrb[0].mxu0
    %v1605 = vadd.f32 %v1380, %v1604
    %v1606 = vpop.f32.mrb[0].mxu0
    %1607 = vmatprep.mubr.bf16.mxu0 0
    %1608 = vmatmul.mubr.bf16.gmra.mrb[0].mxu0 %v1138
    %v1609 = vpop.f32.mrb[0].mxu0
    %v1610 = vadd.f32 %v1385, %v1609
    %v1611 = vpop.f32.mrb[0].mxu0
    %v1612 = vpop.f32.mrb[0].mxu0
    %v1613 = vadd.f32 %v1388, %v1612
    %v1614 = vpop.f32.mrb[0].mxu0
    %1615 = vmatprep.mubr.bf16.mxu0 0
    %1616 = vmatmul.mubr.bf16.gmra.mrb[0].mxu0 %v1141
    %v1617 = vpop.f32.mrb[0].mxu0
    %v1618 = vadd.f32 %v1393, %v1617
    %v1619 = vpop.f32.mrb[0].mxu0
    %v1620 = vpop.f32.mrb[0].mxu0
    %v1621 = vadd.f32 %v1396, %v1620
    %v1622 = vpop.f32.mrb[0].mxu0
    %1623 = vmatprep.mubr.bf16.mxu0 0
    %1624 = vmatmul.mubr.bf16.gmra.mrb[0].mxu0 %v1144
    %v1625 = vpop.f32.mrb[0].mxu0
    %v1626 = vadd.f32 %v1401, %v1625
    %v1627 = vpop.f32.mrb[0].mxu0
    %v1628 = vpop.f32.mrb[0].mxu0
    %v1629 = vadd.f32 %v1404, %v1628
    %v1630 = vpop.f32.mrb[0].mxu0
    %1631 = vmatprep.mubr.bf16.mxu0 0
    %1632 = vmatmul.mubr.bf16.gmra.mrb[0].mxu0 %v1147
    %v1633 = vpop.f32.mrb[0].mxu0
    %v1634 = vadd.f32 %v1409, %v1633
    %v1635 = vpop.f32.mrb[0].mxu0
    %v1636 = vpop.f32.mrb[0].mxu0
    %v1637 = vadd.f32 %v1412, %v1636
    %v1638 = vpop.f32.mrb[0].mxu0
    %1639 = vmatprep.mubr.bf16.mxu0 0
    %1640 = vmatmul.mubr.bf16.gmra.mrb[0].mxu0 %v1150
    %v1641 = vpop.f32.mrb[0].mxu0
    %v1642 = vadd.f32 %v1417, %v1641
    %v1643 = vpop.f32.mrb[0].mxu0
    %v1644 = vpop.f32.mrb[0].mxu0
    %v1645 = vadd.f32 %v1420, %v1644
    %v1646 = vpop.f32.mrb[0].mxu0
    %1647 = vmatprep.mubr.bf16.mxu0 0
    %1648 = vmatmul.mubr.bf16.gmra.mrb[0].mxu0 %v1153
    %v1649 = vpop.f32.mrb[0].mxu0
    %v1650 = vadd.f32 %v1425, %v1649
    %v1651 = vpop.f32.mrb[0].mxu0
    %v1652 = vpop.f32.mrb[0].mxu0
    %v1653 = vadd.f32 %v1428, %v1652
    %v1654 = vpop.f32.mrb[0].mxu0
    %1655 = vmatprep.mubr.bf16.mxu0 0
    %1656 = vmatmul.mubr.bf16.gmra.mrb[0].mxu0 %v1156
    %v1657 = vpop.f32.mrb[0].mxu0
    %v1658 = vadd.f32 %v1433, %v1657
    %v1659 = vpop.f32.mrb[0].mxu0
    %v1660 = vpop.f32.mrb[0].mxu0
    %v1661 = vadd.f32 %v1436, %v1660
    %v1662 = vpop.f32.mrb[0].mxu0
    %1663 = vmatprep.mubr.bf16.mxu0 0
    %1664 = vmatmul.mubr.bf16.gmra.mrb[0].mxu0 %v1159
    %v1665 = vpop.f32.mrb[0].mxu0
    %v1666 = vadd.f32 %v1441, %v1665
    %v1667 = vpop.f32.mrb[0].mxu0
    %v1668 = vpop.f32.mrb[0].mxu0
    %v1669 = vadd.f32 %v1444, %v1668
    %v1670 = vpop.f32.mrb[0].mxu0
    %1671 = vmatprep.mubr.bf16.mxu0 0
    %1672 = vmatmul.mubr.bf16.gmra.mrb[0].mxu0 %v1162
    %v1673 = vpop.f32.mrb[0].mxu0
    %v1674 = vadd.f32 %v1449, %v1673
    %v1675 = vpop.f32.mrb[0].mxu0
    %v1676 = vpop.f32.mrb[0].mxu0
    %v1677 = vadd.f32 %v1452, %v1676
    %v1678 = vpop.f32.mrb[0].mxu0
    %1679 = vmatprep.mubr.bf16.mxu0 0
    %1680 = vmatmul.mubr.bf16.gmra.mrb[0].mxu0 %v1165
    %v1681 = vpop.f32.mrb[0].mxu0
    %v1682 = vadd.f32 %v1457, %v1681
    %v1683 = vpop.f32.mrb[0].mxu0
    %v1684 = vpop.f32.mrb[0].mxu0
    %v1685 = vadd.f32 %v1460, %v1684
    %v1686 = vpop.f32.mrb[0].mxu0
    %1687 = vdwg.mxu0
    %v1784 = vunpack.c.l.b16 %v177
    %v1785 = vunpack.c.h.b16 %v177
    %v1786 = vunpack.c.l.b16 %v178
    %v1787 = vunpack.c.l.b16 %v179
    %v1788 = vunpack.c.h.b16 %v179
    %v1789 = vunpack.c.l.b16 %v180
    %v1790 = vunpack.c.l.b16 %v181
    %v1791 = vunpack.c.h.b16 %v181
    %v1792 = vunpack.c.l.b16 %v182
    %v1793 = vunpack.c.l.b16 %v183
    %v1794 = vunpack.c.h.b16 %v183
    %v1795 = vunpack.c.l.b16 %v184
    %v1796 = vunpack.c.l.b16 %v185
    %v1797 = vunpack.c.h.b16 %v185
    %v1798 = vunpack.c.l.b16 %v186
    %v1799 = vunpack.c.l.b16 %v187
    %v1800 = vunpack.c.h.b16 %v187
    %v1801 = vunpack.c.l.b16 %v188
    %v1802 = vunpack.c.l.b16 %v189
    %v1803 = vunpack.c.h.b16 %v189
    %v1804 = vunpack.c.l.b16 %v190
    %v1805 = vunpack.c.l.b16 %v191
    %v1806 = vunpack.c.h.b16 %v191
    %v1807 = vunpack.c.l.b16 %v192
    %v1808 = vunpack.c.l.b16 %v193
    %v1809 = vunpack.c.h.b16 %v193
    %v1810 = vunpack.c.l.b16 %v194
    %v1811 = vunpack.c.l.b16 %v195
    %v1812 = vunpack.c.h.b16 %v195
    %v1813 = vunpack.c.l.b16 %v196
    %v1814 = vunpack.c.l.b16 %v197
    %v1815 = vunpack.c.h.b16 %v197
    %v1816 = vunpack.c.l.b16 %v198
    %v1817 = vunpack.c.l.b16 %v199
    %v1818 = vunpack.c.h.b16 %v199
    %v1819 = vunpack.c.l.b16 %v200
    %v1820 = vunpack.c.l.b16 %v201
    %v1821 = vunpack.c.h.b16 %v201
    %v1822 = vunpack.c.l.b16 %v202
    %v1823 = vunpack.c.l.b16 %v203
    %v1824 = vunpack.c.h.b16 %v203
    %v1825 = vunpack.c.l.b16 %v204
    %v1826 = vunpack.c.l.b16 %v205
    %v1827 = vunpack.c.h.b16 %v205
    %v1828 = vunpack.c.l.b16 %v206
    %v1829 = vunpack.c.l.b16 %v207
    %v1830 = vunpack.c.h.b16 %v207
    %v1831 = vunpack.c.l.b16 %v208
    %v1832 = vunpack.c.l.b16 %v209
    %v1833 = vunpack.c.h.b16 %v209
    %v1834 = vunpack.c.l.b16 %v210
    %v1835 = vunpack.c.l.b16 %v211
    %v1836 = vunpack.c.h.b16 %v211
    %v1837 = vunpack.c.l.b16 %v212
    %v1838 = vunpack.c.l.b16 %v213
    %v1839 = vunpack.c.h.b16 %v213
    %v1840 = vunpack.c.l.b16 %v214
    %v1841 = vunpack.c.l.b16 %v215
    %v1842 = vunpack.c.h.b16 %v215
    %v1843 = vunpack.c.l.b16 %v216
    %v1844 = vunpack.c.l.b16 %v217
    %v1845 = vunpack.c.h.b16 %v217
    %v1846 = vunpack.c.l.b16 %v218
    %v1847 = vunpack.c.l.b16 %v219
    %v1848 = vunpack.c.h.b16 %v219
    %v1849 = vunpack.c.l.b16 %v220
    %v1850 = vunpack.c.l.b16 %v221
    %v1851 = vunpack.c.h.b16 %v221
    %v1852 = vunpack.c.l.b16 %v222
    %v1853 = vunpack.c.l.b16 %v223
    %v1854 = vunpack.c.h.b16 %v223
    %v1855 = vunpack.c.l.b16 %v224
    %v1856 = vunpack.c.l.b16 %v225
    %v1857 = vunpack.c.h.b16 %v225
    %v1858 = vunpack.c.l.b16 %v226
    %v1859 = vunpack.c.l.b16 %v227
    %v1860 = vunpack.c.h.b16 %v227
    %v1861 = vunpack.c.l.b16 %v228
    %v1862 = vunpack.c.l.b16 %v229
    %v1863 = vunpack.c.h.b16 %v229
    %v1864 = vunpack.c.l.b16 %v230
    %v1865 = vunpack.c.l.b16 %v231
    %v1866 = vunpack.c.h.b16 %v231
    %v1867 = vunpack.c.l.b16 %v232
    %v1868 = vunpack.c.l.b16 %v233
    %v1869 = vunpack.c.h.b16 %v233
    %v1870 = vunpack.c.l.b16 %v234
    %v1871 = vunpack.c.l.b16 %v235
    %v1872 = vunpack.c.h.b16 %v235
    %v1873 = vunpack.c.l.b16 %v236
    %v1874 = vunpack.c.l.b16 %v237
    %v1875 = vunpack.c.h.b16 %v237
    %v1876 = vunpack.c.l.b16 %v238
    %v1877 = vunpack.c.l.b16 %v239
    %v1878 = vunpack.c.h.b16 %v239
    %v1879 = vunpack.c.l.b16 %v240
    %v1880 = vunpack.c.l.b16 %v241
    %v1881 = vunpack.c.h.b16 %v241
    %v1882 = vunpack.c.l.b16 %v242
    %v1883 = vunpack.c.l.b16 %v243
    %v1884 = vunpack.c.h.b16 %v243
    %v1885 = vunpack.c.l.b16 %v244
    %v1886 = vunpack.c.l.b16 %v245
    %v1887 = vunpack.c.h.b16 %v245
    %v1888 = vunpack.c.l.b16 %v246
    %v1889 = vunpack.c.l.b16 %v247
    %v1890 = vunpack.c.h.b16 %v247
    %v1891 = vunpack.c.l.b16 %v248
    %v1892 = vunpack.c.l.b16 %v249
    %v1893 = vunpack.c.h.b16 %v249
    %v1894 = vunpack.c.l.b16 %v250
    %v1895 = vunpack.c.l.b16 %v251
    %v1896 = vunpack.c.h.b16 %v251
    %v1897 = vunpack.c.l.b16 %v252
    %v1898 = vunpack.c.l.b16 %v253
    %v1899 = vunpack.c.h.b16 %v253
    %v1900 = vunpack.c.l.b16 %v254
    %v1901 = vunpack.c.l.b16 %v255
    %v1902 = vunpack.c.h.b16 %v255
    %v1903 = vunpack.c.l.b16 %v256
    %v1904 = vunpack.c.l.b16 %v257
    %v1905 = vunpack.c.h.b16 %v257
    %v1906 = vunpack.c.l.b16 %v258
    %v1907 = vunpack.c.l.b16 %v259
    %v1908 = vunpack.c.h.b16 %v259
    %v1909 = vunpack.c.l.b16 %v260
    %v1910 = vunpack.c.l.b16 %v261
    %v1911 = vunpack.c.h.b16 %v261
    %v1912 = vunpack.c.l.b16 %v262
    %v1913 = vunpack.c.l.b16 %v263
    %v1914 = vunpack.c.h.b16 %v263
    %v1915 = vunpack.c.l.b16 %v264
    %v1916 = vunpack.c.l.b16 %v265
    %v1917 = vunpack.c.h.b16 %v265
    %v1918 = vunpack.c.l.b16 %v266
    %v1919 = vunpack.c.l.b16 %v267
    %v1920 = vunpack.c.h.b16 %v267
    %v1921 = vunpack.c.l.b16 %v268
    %v1922 = vunpack.c.l.b16 %v269
    %v1923 = vunpack.c.h.b16 %v269
    %v1924 = vunpack.c.l.b16 %v270
    %v1925 = vunpack.c.l.b16 %v271
    %v1926 = vunpack.c.h.b16 %v271
    %v1927 = vunpack.c.l.b16 %v272
    %v1928 = vpack.c.b16 %v1787, %v1784
    %v1929 = vpack.c.b16 %v1788, %v1785
    %v1930 = vpack.c.b16 %v1789, %v1786
    %v1931 = vpack.c.b16 %v1793, %v1790
    %v1932 = vpack.c.b16 %v1794, %v1791
    %v1933 = vpack.c.b16 %v1795, %v1792
    %v1934 = vpack.c.b16 %v1799, %v1796
    %v1935 = vpack.c.b16 %v1800, %v1797
    %v1936 = vpack.c.b16 %v1801, %v1798
    %v1937 = vpack.c.b16 %v1805, %v1802
    %v1938 = vpack.c.b16 %v1806, %v1803
    %v1939 = vpack.c.b16 %v1807, %v1804
    %v1940 = vpack.c.b16 %v1811, %v1808
    %v1941 = vpack.c.b16 %v1812, %v1809
    %v1942 = vpack.c.b16 %v1813, %v1810
    %v1943 = vpack.c.b16 %v1817, %v1814
    %v1944 = vpack.c.b16 %v1818, %v1815
    %v1945 = vpack.c.b16 %v1819, %v1816
    %v1946 = vpack.c.b16 %v1823, %v1820
    %v1947 = vpack.c.b16 %v1824, %v1821
    %v1948 = vpack.c.b16 %v1825, %v1822
    %v1949 = vpack.c.b16 %v1829, %v1826
    %v1950 = vpack.c.b16 %v1830, %v1827
    %v1951 = vpack.c.b16 %v1831, %v1828
    %v1952 = vpack.c.b16 %v1835, %v1832
    %v1953 = vpack.c.b16 %v1836, %v1833
    %v1954 = vpack.c.b16 %v1837, %v1834
    %v1955 = vpack.c.b16 %v1841, %v1838
    %v1956 = vpack.c.b16 %v1842, %v1839
    %v1957 = vpack.c.b16 %v1843, %v1840
    %v1958 = vpack.c.b16 %v1847, %v1844
    %v1959 = vpack.c.b16 %v1848, %v1845
    %v1960 = vpack.c.b16 %v1849, %v1846
    %v1961 = vpack.c.b16 %v1853, %v1850
    %v1962 = vpack.c.b16 %v1854, %v1851
    %v1963 = vpack.c.b16 %v1855, %v1852
    %v1964 = vpack.c.b16 %v1859, %v1856
    %v1965 = vpack.c.b16 %v1860, %v1857
    %v1966 = vpack.c.b16 %v1861, %v1858
    %v1967 = vpack.c.b16 %v1865, %v1862
    %v1968 = vpack.c.b16 %v1866, %v1863
    %v1969 = vpack.c.b16 %v1867, %v1864
    %v1970 = vpack.c.b16 %v1871, %v1868
    %v1971 = vpack.c.b16 %v1872, %v1869
    %v1972 = vpack.c.b16 %v1873, %v1870
    %v1973 = vpack.c.b16 %v1877, %v1874
    %v1974 = vpack.c.b16 %v1878, %v1875
    %v1975 = vpack.c.b16 %v1879, %v1876
    %v1976 = vpack.c.b16 %v1883, %v1880
    %v1977 = vpack.c.b16 %v1884, %v1881
    %v1978 = vpack.c.b16 %v1885, %v1882
    %v1979 = vpack.c.b16 %v1889, %v1886
    %v1980 = vpack.c.b16 %v1890, %v1887
    %v1981 = vpack.c.b16 %v1891, %v1888
    %v1982 = vpack.c.b16 %v1895, %v1892
    %v1983 = vpack.c.b16 %v1896, %v1893
    %v1984 = vpack.c.b16 %v1897, %v1894
    %v1985 = vpack.c.b16 %v1901, %v1898
    %v1986 = vpack.c.b16 %v1902, %v1899
    %v1987 = vpack.c.b16 %v1903, %v1900
    %v1988 = vpack.c.b16 %v1907, %v1904
    %v1989 = vpack.c.b16 %v1908, %v1905
    %v1990 = vpack.c.b16 %v1909, %v1906
    %v1991 = vpack.c.b16 %v1913, %v1910
    %v1992 = vpack.c.b16 %v1914, %v1911
    %v1993 = vpack.c.b16 %v1915, %v1912
    %v1994 = vpack.c.b16 %v1919, %v1916
    %v1995 = vpack.c.b16 %v1920, %v1917
    %v1996 = vpack.c.b16 %v1921, %v1918
    %v1997 = vpack.c.b16 %v1925, %v1922
    %v1998 = vpack.c.b16 %v1926, %v1923
    %v1999 = vpack.c.b16 %v1927, %v1924
    %2096 = vrot.lane.b32.xlu0 %v830, 96
    %v2097 = vpop.permute.xlu0 %2096
    %2098 = vrot.lane.b32.xlu0 %v831, 96
    %v2099 = vpop.permute.xlu0 %2098
    %2100 = vrot.lane.b32.xlu0 %v832, 96
    %v2101 = vpop.permute.xlu0 %2100
    %2102 = vrot.lane.b32.xlu0 %v833, 96
    %v2103 = vpop.permute.xlu0 %2102
    %2104 = vrot.lane.b32.xlu0 %v834, 96
    %v2105 = vpop.permute.xlu0 %2104
    %2106 = vrot.lane.b32.xlu0 %v835, 96
    %v2107 = vpop.permute.xlu0 %2106
    %2108 = vrot.lane.b32.xlu0 %v836, 96
    %v2109 = vpop.permute.xlu0 %2108
    %2110 = vrot.lane.b32.xlu0 %v837, 96
    %v2111 = vpop.permute.xlu0 %2110
    %2112 = vrot.lane.b32.xlu0 %v838, 96
    %v2113 = vpop.permute.xlu0 %2112
    %2114 = vrot.lane.b32.xlu0 %v839, 96
    %v2115 = vpop.permute.xlu0 %2114
    %2116 = vrot.lane.b32.xlu0 %v840, 96
    %v2117 = vpop.permute.xlu0 %2116
    %2118 = vrot.lane.b32.xlu0 %v841, 96
    %v2119 = vpop.permute.xlu0 %2118
    %2120 = vrot.lane.b32.xlu0 %v842, 96
    %v2121 = vpop.permute.xlu0 %2120
    %2122 = vrot.lane.b32.xlu0 %v843, 96
    %v2123 = vpop.permute.xlu0 %2122
    %2124 = vrot.lane.b32.xlu0 %v844, 96
    %v2125 = vpop.permute.xlu0 %2124
    %2126 = vrot.lane.b32.xlu0 %v845, 96
    %v2127 = vpop.permute.xlu0 %2126
    %2128 = vrot.lane.b32.xlu0 %v846, 96
    %v2129 = vpop.permute.xlu0 %2128
    %2130 = vrot.lane.b32.xlu0 %v847, 96
    %v2131 = vpop.permute.xlu0 %2130
    %2132 = vrot.lane.b32.xlu0 %v848, 96
    %v2133 = vpop.permute.xlu0 %2132
    %2134 = vrot.lane.b32.xlu0 %v849, 96
    %v2135 = vpop.permute.xlu0 %2134
    %2136 = vrot.lane.b32.xlu0 %v850, 96
    %v2137 = vpop.permute.xlu0 %2136
    %2138 = vrot.lane.b32.xlu0 %v851, 96
    %v2139 = vpop.permute.xlu0 %2138
    %2140 = vrot.lane.b32.xlu0 %v852, 96
    %v2141 = vpop.permute.xlu0 %2140
    %2142 = vrot.lane.b32.xlu0 %v853, 96
    %v2143 = vpop.permute.xlu0 %2142
    %2168 = vmatprep.subr.bf16.mxu0 0
    %2169 = vmatpush1.bf16.msra.mxu0 %v2097
    %2170 = vmatprep.subr.bf16.mxu0 0
    %2171 = vmatpush1.bf16.msra.mxu0 %v2099
    %2172 = vmatprep.subr.bf16.mxu0 0
    %2173 = vmatpush1.bf16.msra.mxu0 %v2101
    %2174 = vmatprep.subr.bf16.mxu0 0
    %2175 = vmatpush1.bf16.msra.mxu0 %v2103
    %2176 = vmatprep.subr.bf16.mxu0 0
    %2177 = vmatpush1.bf16.msra.mxu0 %v2105
    %2178 = vmatprep.subr.bf16.mxu0 0
    %2179 = vmatpush1.bf16.msra.mxu0 %v2107
    %2180 = vmatprep.subr.bf16.mxu0 0
    %2181 = vmatpush1.bf16.msra.mxu0 %v2109
    %2182 = vmatprep.subr.bf16.mxu0 0
    %2183 = vmatpush1.bf16.msra.mxu0 %v2111
    %2184 = vmatprep.subr.bf16.mxu0 0
    %2185 = vmatpush1.bf16.msra.mxu0 %v2113
    %2186 = vmatprep.subr.bf16.mxu0 0
    %2187 = vmatpush1.bf16.msra.mxu0 %v2115
    %2188 = vmatprep.subr.bf16.mxu0 0
    %2189 = vmatpush1.bf16.msra.mxu0 %v2117
    %2190 = vmatprep.subr.bf16.mxu0 0
    %2191 = vmatpush1.bf16.msra.mxu0 %v2119
    %2192 = vmatprep.subr.bf16.mxu0 0
    %2193 = vmatpush1.bf16.msra.mxu0 %v2121
    %2194 = vmatprep.subr.bf16.mxu0 0
    %2195 = vmatpush1.bf16.msra.mxu0 %v2123
    %2196 = vmatprep.subr.bf16.mxu0 0
    %2197 = vmatpush1.bf16.msra.mxu0 %v2125
    %2198 = vmatprep.subr.bf16.mxu0 0
    %2199 = vmatpush1.bf16.msra.mxu0 %v2127
    %2200 = vmatprep.mubr.bf16.mxu0 %v1929
    %2201 = vmatmul.mubr.bf16.gmra.mrb[0].mxu0 %v1928
    %v2202 = vpop.f32.mrb[0].mxu0
    %v2203 = vadd.f32 0.0, %v2202
    %v2204 = vpop.f32.mrb[0].mxu0
    %v2205 = vpop.f32.mrb[0].mxu0
    %v2206 = vadd.f32 0.0, %v2205
    %v2207 = vpop.f32.mrb[0].mxu0
    %2208 = vmatprep.mubr.bf16.mxu0 %v1932
    %2209 = vmatmul.mubr.bf16.gmra.mrb[0].mxu0 %v1931
    %v2210 = vpop.f32.mrb[0].mxu0
    %v2211 = vadd.f32 0.0, %v2210
    %v2212 = vpop.f32.mrb[0].mxu0
    %v2213 = vpop.f32.mrb[0].mxu0
    %v2214 = vadd.f32 0.0, %v2213
    %v2215 = vpop.f32.mrb[0].mxu0
    %2216 = vmatprep.mubr.bf16.mxu0 %v1935
    %2217 = vmatmul.mubr.bf16.gmra.mrb[0].mxu0 %v1934
    %v2218 = vpop.f32.mrb[0].mxu0
    %v2219 = vadd.f32 0.0, %v2218
    %v2220 = vpop.f32.mrb[0].mxu0
    %v2221 = vpop.f32.mrb[0].mxu0
    %v2222 = vadd.f32 0.0, %v2221
    %v2223 = vpop.f32.mrb[0].mxu0
    %2224 = vmatprep.mubr.bf16.mxu0 %v1938
    %2225 = vmatmul.mubr.bf16.gmra.mrb[0].mxu0 %v1937
    %v2226 = vpop.f32.mrb[0].mxu0
    %v2227 = vadd.f32 0.0, %v2226
    %v2228 = vpop.f32.mrb[0].mxu0
    %v2229 = vpop.f32.mrb[0].mxu0
    %v2230 = vadd.f32 0.0, %v2229
    %v2231 = vpop.f32.mrb[0].mxu0
    %2232 = vmatprep.mubr.bf16.mxu0 %v1941
    %2233 = vmatmul.mubr.bf16.gmra.mrb[0].mxu0 %v1940
    %v2234 = vpop.f32.mrb[0].mxu0
    %v2235 = vadd.f32 0.0, %v2234
    %v2236 = vpop.f32.mrb[0].mxu0
    %v2237 = vpop.f32.mrb[0].mxu0
    %v2238 = vadd.f32 0.0, %v2237
    %v2239 = vpop.f32.mrb[0].mxu0
    %2240 = vmatprep.mubr.bf16.mxu0 %v1944
    %2241 = vmatmul.mubr.bf16.gmra.mrb[0].mxu0 %v1943
    %v2242 = vpop.f32.mrb[0].mxu0
    %v2243 = vadd.f32 0.0, %v2242
    %v2244 = vpop.f32.mrb[0].mxu0
    %v2245 = vpop.f32.mrb[0].mxu0
    %v2246 = vadd.f32 0.0, %v2245
    %v2247 = vpop.f32.mrb[0].mxu0
    %2248 = vmatprep.mubr.bf16.mxu0 %v1947
    %2249 = vmatmul.mubr.bf16.gmra.mrb[0].mxu0 %v1946
    %v2250 = vpop.f32.mrb[0].mxu0
    %v2251 = vadd.f32 0.0, %v2250
    %v2252 = vpop.f32.mrb[0].mxu0
    %v2253 = vpop.f32.mrb[0].mxu0
    %v2254 = vadd.f32 0.0, %v2253
    %v2255 = vpop.f32.mrb[0].mxu0
    %2256 = vmatprep.mubr.bf16.mxu0 %v1950
    %2257 = vmatmul.mubr.bf16.gmra.mrb[0].mxu0 %v1949
    %v2258 = vpop.f32.mrb[0].mxu0
    %v2259 = vadd.f32 0.0, %v2258
    %v2260 = vpop.f32.mrb[0].mxu0
    %v2261 = vpop.f32.mrb[0].mxu0
    %v2262 = vadd.f32 0.0, %v2261
    %v2263 = vpop.f32.mrb[0].mxu0
    %2264 = vmatprep.mubr.bf16.mxu0 %v1953
    %2265 = vmatmul.mubr.bf16.gmra.mrb[0].mxu0 %v1952
    %v2266 = vpop.f32.mrb[0].mxu0
    %v2267 = vadd.f32 0.0, %v2266
    %v2268 = vpop.f32.mrb[0].mxu0
    %v2269 = vpop.f32.mrb[0].mxu0
    %v2270 = vadd.f32 0.0, %v2269
    %v2271 = vpop.f32.mrb[0].mxu0
    %2272 = vmatprep.mubr.bf16.mxu0 %v1956
    %2273 = vmatmul.mubr.bf16.gmra.mrb[0].mxu0 %v1955
    %v2274 = vpop.f32.mrb[0].mxu0
    %v2275 = vadd.f32 0.0, %v2274
    %v2276 = vpop.f32.mrb[0].mxu0
    %v2277 = vpop.f32.mrb[0].mxu0
    %v2278 = vadd.f32 0.0, %v2277
    %v2279 = vpop.f32.mrb[0].mxu0
    %2280 = vmatprep.mubr.bf16.mxu0 %v1959
    %2281 = vmatmul.mubr.bf16.gmra.mrb[0].mxu0 %v1958
    %v2282 = vpop.f32.mrb[0].mxu0
    %v2283 = vadd.f32 0.0, %v2282
    %v2284 = vpop.f32.mrb[0].mxu0
    %v2285 = vpop.f32.mrb[0].mxu0
    %v2286 = vadd.f32 0.0, %v2285
    %v2287 = vpop.f32.mrb[0].mxu0
    %2288 = vmatprep.mubr.bf16.mxu0 %v1962
    %2289 = vmatmul.mubr.bf16.gmra.mrb[0].mxu0 %v1961
    %v2290 = vpop.f32.mrb[0].mxu0
    %v2291 = vadd.f32 0.0, %v2290
    %v2292 = vpop.f32.mrb[0].mxu0
    %v2293 = vpop.f32.mrb[0].mxu0
    %v2294 = vadd.f32 0.0, %v2293
    %v2295 = vpop.f32.mrb[0].mxu0
    %2296 = vmatprep.mubr.bf16.mxu0 %v1965
    %2297 = vmatmul.mubr.bf16.gmra.mrb[0].mxu0 %v1964
    %v2298 = vpop.f32.mrb[0].mxu0
    %v2299 = vadd.f32 0.0, %v2298
    %v2300 = vpop.f32.mrb[0].mxu0
    %v2301 = vpop.f32.mrb[0].mxu0
    %v2302 = vadd.f32 0.0, %v2301
    %v2303 = vpop.f32.mrb[0].mxu0
    %2304 = vmatprep.mubr.bf16.mxu0 %v1968
    %2305 = vmatmul.mubr.bf16.gmra.mrb[0].mxu0 %v1967
    %v2306 = vpop.f32.mrb[0].mxu0
    %v2307 = vadd.f32 0.0, %v2306
    %v2308 = vpop.f32.mrb[0].mxu0
    %v2309 = vpop.f32.mrb[0].mxu0
    %v2310 = vadd.f32 0.0, %v2309
    %v2311 = vpop.f32.mrb[0].mxu0
    %2312 = vmatprep.mubr.bf16.mxu0 %v1971
    %2313 = vmatmul.mubr.bf16.gmra.mrb[0].mxu0 %v1970
    %v2314 = vpop.f32.mrb[0].mxu0
    %v2315 = vadd.f32 0.0, %v2314
    %v2316 = vpop.f32.mrb[0].mxu0
    %v2317 = vpop.f32.mrb[0].mxu0
    %v2318 = vadd.f32 0.0, %v2317
    %v2319 = vpop.f32.mrb[0].mxu0
    %2320 = vmatprep.mubr.bf16.mxu0 %v1974
    %2321 = vmatmul.mubr.bf16.gmra.mrb[0].mxu0 %v1973
    %v2322 = vpop.f32.mrb[0].mxu0
    %v2323 = vadd.f32 0.0, %v2322
    %v2324 = vpop.f32.mrb[0].mxu0
    %v2325 = vpop.f32.mrb[0].mxu0
    %v2326 = vadd.f32 0.0, %v2325
    %v2327 = vpop.f32.mrb[0].mxu0
    %2328 = vmatprep.mubr.bf16.mxu0 %v1977
    %2329 = vmatmul.mubr.bf16.gmra.mrb[0].mxu0 %v1976
    %v2330 = vpop.f32.mrb[0].mxu0
    %v2331 = vadd.f32 0.0, %v2330
    %v2332 = vpop.f32.mrb[0].mxu0
    %v2333 = vpop.f32.mrb[0].mxu0
    %v2334 = vadd.f32 0.0, %v2333
    %v2335 = vpop.f32.mrb[0].mxu0
    %2336 = vmatprep.mubr.bf16.mxu0 %v1980
    %2337 = vmatmul.mubr.bf16.gmra.mrb[0].mxu0 %v1979
    %v2338 = vpop.f32.mrb[0].mxu0
    %v2339 = vadd.f32 0.0, %v2338
    %v2340 = vpop.f32.mrb[0].mxu0
    %v2341 = vpop.f32.mrb[0].mxu0
    %v2342 = vadd.f32 0.0, %v2341
    %v2343 = vpop.f32.mrb[0].mxu0
    %2344 = vmatprep.mubr.bf16.mxu0 %v1983
    %2345 = vmatmul.mubr.bf16.gmra.mrb[0].mxu0 %v1982
    %v2346 = vpop.f32.mrb[0].mxu0
    %v2347 = vadd.f32 0.0, %v2346
    %v2348 = vpop.f32.mrb[0].mxu0
    %v2349 = vpop.f32.mrb[0].mxu0
    %v2350 = vadd.f32 0.0, %v2349
    %v2351 = vpop.f32.mrb[0].mxu0
    %2352 = vmatprep.mubr.bf16.mxu0 %v1986
    %2353 = vmatmul.mubr.bf16.gmra.mrb[0].mxu0 %v1985
    %v2354 = vpop.f32.mrb[0].mxu0
    %v2355 = vadd.f32 0.0, %v2354
    %v2356 = vpop.f32.mrb[0].mxu0
    %v2357 = vpop.f32.mrb[0].mxu0
    %v2358 = vadd.f32 0.0, %v2357
    %v2359 = vpop.f32.mrb[0].mxu0
    %2360 = vmatprep.mubr.bf16.mxu0 %v1989
    %2361 = vmatmul.mubr.bf16.gmra.mrb[0].mxu0 %v1988
    %v2362 = vpop.f32.mrb[0].mxu0
    %v2363 = vadd.f32 0.0, %v2362
    %v2364 = vpop.f32.mrb[0].mxu0
    %v2365 = vpop.f32.mrb[0].mxu0
    %v2366 = vadd.f32 0.0, %v2365
    %v2367 = vpop.f32.mrb[0].mxu0
    %2368 = vmatprep.mubr.bf16.mxu0 %v1992
    %2369 = vmatmul.mubr.bf16.gmra.mrb[0].mxu0 %v1991
    %v2370 = vpop.f32.mrb[0].mxu0
    %v2371 = vadd.f32 0.0, %v2370
    %v2372 = vpop.f32.mrb[0].mxu0
    %v2373 = vpop.f32.mrb[0].mxu0
    %v2374 = vadd.f32 0.0, %v2373
    %v2375 = vpop.f32.mrb[0].mxu0
    %2376 = vmatprep.mubr.bf16.mxu0 %v1995
    %2377 = vmatmul.mubr.bf16.gmra.mrb[0].mxu0 %v1994
    %v2378 = vpop.f32.mrb[0].mxu0
    %v2379 = vadd.f32 0.0, %v2378
    %v2380 = vpop.f32.mrb[0].mxu0
    %v2381 = vpop.f32.mrb[0].mxu0
    %v2382 = vadd.f32 0.0, %v2381
    %v2383 = vpop.f32.mrb[0].mxu0
    %2384 = vmatprep.mubr.bf16.mxu0 %v1998
    %2385 = vmatmul.mubr.bf16.gmra.mrb[0].mxu0 %v1997
    %v2386 = vpop.f32.mrb[0].mxu0
    %v2387 = vadd.f32 0.0, %v2386
    %v2388 = vpop.f32.mrb[0].mxu0
    %v2389 = vpop.f32.mrb[0].mxu0
    %v2390 = vadd.f32 0.0, %v2389
    %v2391 = vpop.f32.mrb[0].mxu0
    %2392 = vdwg.mxu0
    %2393 = vmatprep.subr.bf16.mxu0 0
    %2394 = vmatpush1.bf16.msra.mxu0 %v2129
    %2395 = vmatprep.subr.bf16.mxu0 0
    %2396 = vmatpush1.bf16.msra.mxu0 %v2131
    %2397 = vmatprep.subr.bf16.mxu0 0
    %2398 = vmatpush1.bf16.msra.mxu0 %v2133
    %2399 = vmatprep.subr.bf16.mxu0 0
    %2400 = vmatpush1.bf16.msra.mxu0 %v2135
    %2401 = vmatprep.subr.bf16.mxu0 0
    %2402 = vmatpush1.bf16.msra.mxu0 %v2137
    %2403 = vmatprep.subr.bf16.mxu0 0
    %2404 = vmatpush1.bf16.msra.mxu0 %v2139
    %2405 = vmatprep.subr.bf16.mxu0 0
    %2406 = vmatpush1.bf16.msra.mxu0 %v2141
    %2407 = vmatprep.subr.bf16.mxu0 0
    %2408 = vmatpush1.bf16.msra.mxu0 %v2143
    %2409 = vmatprep.subr.bf16.mxu0 0
    %2410 = vmatpush1.bf16.msra.mxu0 0
    %2411 = vmatprep.subr.bf16.mxu0 0
    %2412 = vmatpush1.bf16.msra.mxu0 0
    %2413 = vmatprep.subr.bf16.mxu0 0
    %2414 = vmatpush1.bf16.msra.mxu0 0
    %2415 = vmatprep.subr.bf16.mxu0 0
    %2416 = vmatpush1.bf16.msra.mxu0 0
    %2417 = vmatprep.subr.bf16.mxu0 0
    %2418 = vmatpush1.bf16.msra.mxu0 0
    %2419 = vmatprep.subr.bf16.mxu0 0
    %2420 = vmatpush1.bf16.msra.mxu0 0
    %2421 = vmatprep.subr.bf16.mxu0 0
    %2422 = vmatpush1.bf16.msra.mxu0 0
    %2423 = vmatprep.subr.bf16.mxu0 0
    %2424 = vmatpush1.bf16.msra.mxu0 0
    %2425 = vmatprep.mubr.bf16.mxu0 0
    %2426 = vmatmul.mubr.bf16.gmra.mrb[0].mxu0 %v1930
    %v2427 = vpop.f32.mrb[0].mxu0
    %v2428 = vadd.f32 %v2203, %v2427
    %v2429 = vpop.f32.mrb[0].mxu0
    %v2430 = vpop.f32.mrb[0].mxu0
    %v2431 = vadd.f32 %v2206, %v2430
    %v2432 = vpop.f32.mrb[0].mxu0
    %2433 = vmatprep.mubr.bf16.mxu0 0
    %2434 = vmatmul.mubr.bf16.gmra.mrb[0].mxu0 %v1933
    %v2435 = vpop.f32.mrb[0].mxu0
    %v2436 = vadd.f32 %v2211, %v2435
    %v2437 = vpop.f32.mrb[0].mxu0
    %v2438 = vpop.f32.mrb[0].mxu0
    %v2439 = vadd.f32 %v2214, %v2438
    %v2440 = vpop.f32.mrb[0].mxu0
    %2441 = vmatprep.mubr.bf16.mxu0 0
    %2442 = vmatmul.mubr.bf16.gmra.mrb[0].mxu0 %v1936
    %v2443 = vpop.f32.mrb[0].mxu0
    %v2444 = vadd.f32 %v2219, %v2443
    %v2445 = vpop.f32.mrb[0].mxu0
    %v2446 = vpop.f32.mrb[0].mxu0
    %v2447 = vadd.f32 %v2222, %v2446
    %v2448 = vpop.f32.mrb[0].mxu0
    %2449 = vmatprep.mubr.bf16.mxu0 0
    %2450 = vmatmul.mubr.bf16.gmra.mrb[0].mxu0 %v1939
    %v2451 = vpop.f32.mrb[0].mxu0
    %v2452 = vadd.f32 %v2227, %v2451
    %v2453 = vpop.f32.mrb[0].mxu0
    %v2454 = vpop.f32.mrb[0].mxu0
    %v2455 = vadd.f32 %v2230, %v2454
    %v2456 = vpop.f32.mrb[0].mxu0
    %2457 = vmatprep.mubr.bf16.mxu0 0
    %2458 = vmatmul.mubr.bf16.gmra.mrb[0].mxu0 %v1942
    %v2459 = vpop.f32.mrb[0].mxu0
    %v2460 = vadd.f32 %v2235, %v2459
    %v2461 = vpop.f32.mrb[0].mxu0
    %v2462 = vpop.f32.mrb[0].mxu0
    %v2463 = vadd.f32 %v2238, %v2462
    %v2464 = vpop.f32.mrb[0].mxu0
    %2465 = vmatprep.mubr.bf16.mxu0 0
    %2466 = vmatmul.mubr.bf16.gmra.mrb[0].mxu0 %v1945
    %v2467 = vpop.f32.mrb[0].mxu0
    %v2468 = vadd.f32 %v2243, %v2467
    %v2469 = vpop.f32.mrb[0].mxu0
    %v2470 = vpop.f32.mrb[0].mxu0
    %v2471 = vadd.f32 %v2246, %v2470
    %v2472 = vpop.f32.mrb[0].mxu0
    %2473 = vmatprep.mubr.bf16.mxu0 0
    %2474 = vmatmul.mubr.bf16.gmra.mrb[0].mxu0 %v1948
    %v2475 = vpop.f32.mrb[0].mxu0
    %v2476 = vadd.f32 %v2251, %v2475
    %v2477 = vpop.f32.mrb[0].mxu0
    %v2478 = vpop.f32.mrb[0].mxu0
    %v2479 = vadd.f32 %v2254, %v2478
    %v2480 = vpop.f32.mrb[0].mxu0
    %2481 = vmatprep.mubr.bf16.mxu0 0
    %2482 = vmatmul.mubr.bf16.gmra.mrb[0].mxu0 %v1951
    %v2483 = vpop.f32.mrb[0].mxu0
    %v2484 = vadd.f32 %v2259, %v2483
    %v2485 = vpop.f32.mrb[0].mxu0
    %v2486 = vpop.f32.mrb[0].mxu0
    %v2487 = vadd.f32 %v2262, %v2486
    %v2488 = vpop.f32.mrb[0].mxu0
    %2489 = vmatprep.mubr.bf16.mxu0 0
    %2490 = vmatmul.mubr.bf16.gmra.mrb[0].mxu0 %v1954
    %v2491 = vpop.f32.mrb[0].mxu0
    %v2492 = vadd.f32 %v2267, %v2491
    %v2493 = vpop.f32.mrb[0].mxu0
    %v2494 = vpop.f32.mrb[0].mxu0
    %v2495 = vadd.f32 %v2270, %v2494
    %v2496 = vpop.f32.mrb[0].mxu0
    %2497 = vmatprep.mubr.bf16.mxu0 0
    %2498 = vmatmul.mubr.bf16.gmra.mrb[0].mxu0 %v1957
    %v2499 = vpop.f32.mrb[0].mxu0
    %v2500 = vadd.f32 %v2275, %v2499
    %v2501 = vpop.f32.mrb[0].mxu0
    %v2502 = vpop.f32.mrb[0].mxu0
    %v2503 = vadd.f32 %v2278, %v2502
    %v2504 = vpop.f32.mrb[0].mxu0
    %2505 = vmatprep.mubr.bf16.mxu0 0
    %2506 = vmatmul.mubr.bf16.gmra.mrb[0].mxu0 %v1960
    %v2507 = vpop.f32.mrb[0].mxu0
    %v2508 = vadd.f32 %v2283, %v2507
    %v2509 = vpop.f32.mrb[0].mxu0
    %v2510 = vpop.f32.mrb[0].mxu0
    %v2511 = vadd.f32 %v2286, %v2510
    %v2512 = vpop.f32.mrb[0].mxu0
    %2513 = vmatprep.mubr.bf16.mxu0 0
    %2514 = vmatmul.mubr.bf16.gmra.mrb[0].mxu0 %v1963
    %v2515 = vpop.f32.mrb[0].mxu0
    %v2516 = vadd.f32 %v2291, %v2515
    %v2517 = vpop.f32.mrb[0].mxu0
    %v2518 = vpop.f32.mrb[0].mxu0
    %v2519 = vadd.f32 %v2294, %v2518
    %v2520 = vpop.f32.mrb[0].mxu0
    %2521 = vmatprep.mubr.bf16.mxu0 0
    %2522 = vmatmul.mubr.bf16.gmra.mrb[0].mxu0 %v1966
    %v2523 = vpop.f32.mrb[0].mxu0
    %v2524 = vadd.f32 %v2299, %v2523
    %v2525 = vpop.f32.mrb[0].mxu0
    %v2526 = vpop.f32.mrb[0].mxu0
    %v2527 = vadd.f32 %v2302, %v2526
    %v2528 = vpop.f32.mrb[0].mxu0
    %2529 = vmatprep.mubr.bf16.mxu0 0
    %2530 = vmatmul.mubr.bf16.gmra.mrb[0].mxu0 %v1969
    %v2531 = vpop.f32.mrb[0].mxu0
    %v2532 = vadd.f32 %v2307, %v2531
    %v2533 = vpop.f32.mrb[0].mxu0
    %v2534 = vpop.f32.mrb[0].mxu0
    %v2535 = vadd.f32 %v2310, %v2534
    %v2536 = vpop.f32.mrb[0].mxu0
    %2537 = vmatprep.mubr.bf16.mxu0 0
    %2538 = vmatmul.mubr.bf16.gmra.mrb[0].mxu0 %v1972
    %v2539 = vpop.f32.mrb[0].mxu0
    %v2540 = vadd.f32 %v2315, %v2539
    %v2541 = vpop.f32.mrb[0].mxu0
    %v2542 = vpop.f32.mrb[0].mxu0
    %v2543 = vadd.f32 %v2318, %v2542
    %v2544 = vpop.f32.mrb[0].mxu0
    %2545 = vmatprep.mubr.bf16.mxu0 0
    %2546 = vmatmul.mubr.bf16.gmra.mrb[0].mxu0 %v1975
    %v2547 = vpop.f32.mrb[0].mxu0
    %v2548 = vadd.f32 %v2323, %v2547
    %v2549 = vpop.f32.mrb[0].mxu0
    %v2550 = vpop.f32.mrb[0].mxu0
    %v2551 = vadd.f32 %v2326, %v2550
    %v2552 = vpop.f32.mrb[0].mxu0
    %2553 = vmatprep.mubr.bf16.mxu0 0
    %2554 = vmatmul.mubr.bf16.gmra.mrb[0].mxu0 %v1978
    %v2555 = vpop.f32.mrb[0].mxu0
    %v2556 = vadd.f32 %v2331, %v2555
    %v2557 = vpop.f32.mrb[0].mxu0
    %v2558 = vpop.f32.mrb[0].mxu0
    %v2559 = vadd.f32 %v2334, %v2558
    %v2560 = vpop.f32.mrb[0].mxu0
    %2561 = vmatprep.mubr.bf16.mxu0 0
    %2562 = vmatmul.mubr.bf16.gmra.mrb[0].mxu0 %v1981
    %v2563 = vpop.f32.mrb[0].mxu0
    %v2564 = vadd.f32 %v2339, %v2563
    %v2565 = vpop.f32.mrb[0].mxu0
    %v2566 = vpop.f32.mrb[0].mxu0
    %v2567 = vadd.f32 %v2342, %v2566
    %v2568 = vpop.f32.mrb[0].mxu0
    %2569 = vmatprep.mubr.bf16.mxu0 0
    %2570 = vmatmul.mubr.bf16.gmra.mrb[0].mxu0 %v1984
    %v2571 = vpop.f32.mrb[0].mxu0
    %v2572 = vadd.f32 %v2347, %v2571
    %v2573 = vpop.f32.mrb[0].mxu0
    %v2574 = vpop.f32.mrb[0].mxu0
    %v2575 = vadd.f32 %v2350, %v2574
    %v2576 = vpop.f32.mrb[0].mxu0
    %2577 = vmatprep.mubr.bf16.mxu0 0
    %2578 = vmatmul.mubr.bf16.gmra.mrb[0].mxu0 %v1987
    %v2579 = vpop.f32.mrb[0].mxu0
    %v2580 = vadd.f32 %v2355, %v2579
    %v2581 = vpop.f32.mrb[0].mxu0
    %v2582 = vpop.f32.mrb[0].mxu0
    %v2583 = vadd.f32 %v2358, %v2582
    %v2584 = vpop.f32.mrb[0].mxu0
    %2585 = vmatprep.mubr.bf16.mxu0 0
    %2586 = vmatmul.mubr.bf16.gmra.mrb[0].mxu0 %v1990
    %v2587 = vpop.f32.mrb[0].mxu0
    %v2588 = vadd.f32 %v2363, %v2587
    %v2589 = vpop.f32.mrb[0].mxu0
    %v2590 = vpop.f32.mrb[0].mxu0
    %v2591 = vadd.f32 %v2366, %v2590
    %v2592 = vpop.f32.mrb[0].mxu0
    %2593 = vmatprep.mubr.bf16.mxu0 0
    %2594 = vmatmul.mubr.bf16.gmra.mrb[0].mxu0 %v1993
    %v2595 = vpop.f32.mrb[0].mxu0
    %v2596 = vadd.f32 %v2371, %v2595
    %v2597 = vpop.f32.mrb[0].mxu0
    %v2598 = vpop.f32.mrb[0].mxu0
    %v2599 = vadd.f32 %v2374, %v2598
    %v2600 = vpop.f32.mrb[0].mxu0
    %2601 = vmatprep.mubr.bf16.mxu0 0
    %2602 = vmatmul.mubr.bf16.gmra.mrb[0].mxu0 %v1996
    %v2603 = vpop.f32.mrb[0].mxu0
    %v2604 = vadd.f32 %v2379, %v2603
    %v2605 = vpop.f32.mrb[0].mxu0
    %v2606 = vpop.f32.mrb[0].mxu0
    %v2607 = vadd.f32 %v2382, %v2606
    %v2608 = vpop.f32.mrb[0].mxu0
    %2609 = vmatprep.mubr.bf16.mxu0 0
    %2610 = vmatmul.mubr.bf16.gmra.mrb[0].mxu0 %v1999
    %v2611 = vpop.f32.mrb[0].mxu0
    %v2612 = vadd.f32 %v2387, %v2611
    %v2613 = vpop.f32.mrb[0].mxu0
    %v2614 = vpop.f32.mrb[0].mxu0
    %v2615 = vadd.f32 %v2390, %v2614
    %v2616 = vpop.f32.mrb[0].mxu0
    %2617 = vdwg.mxu0
    %2666 = vrot.lane.b32.xlu0 %v2428, 32
    %v2667 = vpop.permute.xlu0 %2666
    %2668 = vrot.lane.b32.xlu0 %v2431, 32
    %v2669 = vpop.permute.xlu0 %2668
    %2670 = vrot.lane.b32.xlu0 %v2436, 32
    %v2671 = vpop.permute.xlu0 %2670
    %2672 = vrot.lane.b32.xlu0 %v2439, 32
    %v2673 = vpop.permute.xlu0 %2672
    %2674 = vrot.lane.b32.xlu0 %v2444, 32
    %v2675 = vpop.permute.xlu0 %2674
    %2676 = vrot.lane.b32.xlu0 %v2447, 32
    %v2677 = vpop.permute.xlu0 %2676
    %2678 = vrot.lane.b32.xlu0 %v2452, 32
    %v2679 = vpop.permute.xlu0 %2678
    %2680 = vrot.lane.b32.xlu0 %v2455, 32
    %v2681 = vpop.permute.xlu0 %2680
    %2682 = vrot.lane.b32.xlu0 %v2460, 32
    %v2683 = vpop.permute.xlu0 %2682
    %2684 = vrot.lane.b32.xlu0 %v2463, 32
    %v2685 = vpop.permute.xlu0 %2684
    %2686 = vrot.lane.b32.xlu0 %v2468, 32
    %v2687 = vpop.permute.xlu0 %2686
    %2688 = vrot.lane.b32.xlu0 %v2471, 32
    %v2689 = vpop.permute.xlu0 %2688
    %2690 = vrot.lane.b32.xlu0 %v2476, 32
    %v2691 = vpop.permute.xlu0 %2690
    %2692 = vrot.lane.b32.xlu0 %v2479, 32
    %v2693 = vpop.permute.xlu0 %2692
    %2694 = vrot.lane.b32.xlu0 %v2484, 32
    %v2695 = vpop.permute.xlu0 %2694
    %2696 = vrot.lane.b32.xlu0 %v2487, 32
    %v2697 = vpop.permute.xlu0 %2696
    %2698 = vrot.lane.b32.xlu0 %v2492, 32
    %v2699 = vpop.permute.xlu0 %2698
    %2700 = vrot.lane.b32.xlu0 %v2495, 32
    %v2701 = vpop.permute.xlu0 %2700
    %2702 = vrot.lane.b32.xlu0 %v2500, 32
    %v2703 = vpop.permute.xlu0 %2702
    %2704 = vrot.lane.b32.xlu0 %v2503, 32
    %v2705 = vpop.permute.xlu0 %2704
    %2706 = vrot.lane.b32.xlu0 %v2508, 32
    %v2707 = vpop.permute.xlu0 %2706
    %2708 = vrot.lane.b32.xlu0 %v2511, 32
    %v2709 = vpop.permute.xlu0 %2708
    %2710 = vrot.lane.b32.xlu0 %v2516, 32
    %v2711 = vpop.permute.xlu0 %2710
    %2712 = vrot.lane.b32.xlu0 %v2519, 32
    %v2713 = vpop.permute.xlu0 %2712
    %2714 = vrot.lane.b32.xlu0 %v2524, 32
    %v2715 = vpop.permute.xlu0 %2714
    %2716 = vrot.lane.b32.xlu0 %v2527, 32
    %v2717 = vpop.permute.xlu0 %2716
    %2718 = vrot.lane.b32.xlu0 %v2532, 32
    %v2719 = vpop.permute.xlu0 %2718
    %2720 = vrot.lane.b32.xlu0 %v2535, 32
    %v2721 = vpop.permute.xlu0 %2720
    %2722 = vrot.lane.b32.xlu0 %v2540, 32
    %v2723 = vpop.permute.xlu0 %2722
    %2724 = vrot.lane.b32.xlu0 %v2543, 32
    %v2725 = vpop.permute.xlu0 %2724
    %2726 = vrot.lane.b32.xlu0 %v2548, 32
    %v2727 = vpop.permute.xlu0 %2726
    %2728 = vrot.lane.b32.xlu0 %v2551, 32
    %v2729 = vpop.permute.xlu0 %2728
    %2730 = vrot.lane.b32.xlu0 %v2556, 32
    %v2731 = vpop.permute.xlu0 %2730
    %2732 = vrot.lane.b32.xlu0 %v2559, 32
    %v2733 = vpop.permute.xlu0 %2732
    %2734 = vrot.lane.b32.xlu0 %v2564, 32
    %v2735 = vpop.permute.xlu0 %2734
    %2736 = vrot.lane.b32.xlu0 %v2567, 32
    %v2737 = vpop.permute.xlu0 %2736
    %2738 = vrot.lane.b32.xlu0 %v2572, 32
    %v2739 = vpop.permute.xlu0 %2738
    %2740 = vrot.lane.b32.xlu0 %v2575, 32
    %v2741 = vpop.permute.xlu0 %2740
    %2742 = vrot.lane.b32.xlu0 %v2580, 32
    %v2743 = vpop.permute.xlu0 %2742
    %2744 = vrot.lane.b32.xlu0 %v2583, 32
    %v2745 = vpop.permute.xlu0 %2744
    %2746 = vrot.lane.b32.xlu0 %v2588, 32
    %v2747 = vpop.permute.xlu0 %2746
    %2748 = vrot.lane.b32.xlu0 %v2591, 32
    %v2749 = vpop.permute.xlu0 %2748
    %2750 = vrot.lane.b32.xlu0 %v2596, 32
    %v2751 = vpop.permute.xlu0 %2750
    %2752 = vrot.lane.b32.xlu0 %v2599, 32
    %v2753 = vpop.permute.xlu0 %2752
    %2754 = vrot.lane.b32.xlu0 %v2604, 32
    %v2755 = vpop.permute.xlu0 %2754
    %2756 = vrot.lane.b32.xlu0 %v2607, 32
    %v2757 = vpop.permute.xlu0 %2756
    %2758 = vrot.lane.b32.xlu0 %v2612, 32
    %v2759 = vpop.permute.xlu0 %2758
    %2760 = vrot.lane.b32.xlu0 %v2615, 32
    %v2761 = vpop.permute.xlu0 %2760
    %v2810 = vsel %vm332, %v1498, %v2667
    %v2811 = vsel %vm332, %v1501, %v2669
    %v2812 = vsel %vm332, %v1506, %v2671
    %v2813 = vsel %vm332, %v1509, %v2673
    %v2814 = vsel %vm332, %v1514, %v2675
    %v2815 = vsel %vm332, %v1517, %v2677
    %v2816 = vsel %vm332, %v1522, %v2679
    %v2817 = vsel %vm332, %v1525, %v2681
    %v2818 = vsel %vm332, %v1530, %v2683
    %v2819 = vsel %vm332, %v1533, %v2685
    %v2820 = vsel %vm332, %v1538, %v2687
    %v2821 = vsel %vm332, %v1541, %v2689
    %v2822 = vsel %vm332, %v1546, %v2691
    %v2823 = vsel %vm332, %v1549, %v2693
    %v2824 = vsel %vm332, %v1554, %v2695
    %v2825 = vsel %vm332, %v1557, %v2697
    %v2826 = vsel %vm332, %v1562, %v2699
    %v2827 = vsel %vm332, %v1565, %v2701
    %v2828 = vsel %vm332, %v1570, %v2703
    %v2829 = vsel %vm332, %v1573, %v2705
    %v2830 = vsel %vm332, %v1578, %v2707
    %v2831 = vsel %vm332, %v1581, %v2709
    %v2832 = vsel %vm332, %v1586, %v2711
    %v2833 = vsel %vm332, %v1589, %v2713
    %v2834 = vsel %vm332, %v1594, %v2715
    %v2835 = vsel %vm332, %v1597, %v2717
    %v2836 = vsel %vm332, %v1602, %v2719
    %v2837 = vsel %vm332, %v1605, %v2721
    %v2838 = vsel %vm332, %v1610, %v2723
    %v2839 = vsel %vm332, %v1613, %v2725
    %v2840 = vsel %vm332, %v1618, %v2727
    %v2841 = vsel %vm332, %v1621, %v2729
    %v2842 = vsel %vm332, %v1626, %v2731
    %v2843 = vsel %vm332, %v1629, %v2733
    %v2844 = vsel %vm332, %v1634, %v2735
    %v2845 = vsel %vm332, %v1637, %v2737
    %v2846 = vsel %vm332, %v1642, %v2739
    %v2847 = vsel %vm332, %v1645, %v2741
    %v2848 = vsel %vm332, %v1650, %v2743
    %v2849 = vsel %vm332, %v1653, %v2745
    %v2850 = vsel %vm332, %v1658, %v2747
    %v2851 = vsel %vm332, %v1661, %v2749
    %v2852 = vsel %vm332, %v1666, %v2751
    %v2853 = vsel %vm332, %v1669, %v2753
    %v2854 = vsel %vm332, %v1674, %v2755
    %v2855 = vsel %vm332, %v1677, %v2757
    %v2856 = vsel %vm332, %v1682, %v2759
    %v2857 = vsel %vm332, %v1685, %v2761
    %v2858 = vld [vmem:[#allocation5] sm:$0xff]
    %v2859 = vld [vmem:[#allocation5 + $0x8] sm:$0xff]
    %v2860 = vld [vmem:[#allocation5 + $0x10] sm:$0xff]
    %v2861 = vld [vmem:[#allocation5 + $0x18] sm:$0xff]
    %v2862 = vld [vmem:[#allocation5 + $0x20] sm:$0xff]
    %v2863 = vld [vmem:[#allocation5 + $0x28] sm:$0xff]
    %v2864 = vld [vmem:[#allocation5 + $0x30] sm:$0xff]
    %v2865 = vld [vmem:[#allocation5 + $0x38] sm:$0xff]
    %v2866 = vld [vmem:[%s6] sm:$0x1]
    %v2868 = vlaneseq
    %v2869 = vshrl.u32 %v2868, 7
    %v2870 = vsub.s32 0, %v2869
    %v2871 = vrot.slane %v2866, %v2870
    %vm2873 = vcmask 523264
    %v2875 = vsel %vm2873, %v2810, 0
    %v2878 = vsel %vm2873, %v2811, 0
    %v2881 = vsel %vm2873, %v2812, 0
    %v2884 = vsel %vm2873, %v2813, 0
    %v2887 = vsel %vm2873, %v2814, 0
    %v2890 = vsel %vm2873, %v2815, 0
    %v2893 = vsel %vm2873, %v2816, 0
    %v2896 = vsel %vm2873, %v2817, 0
    %v2899 = vsel %vm2873, %v2818, 0
    %v2902 = vsel %vm2873, %v2819, 0
    %v2905 = vsel %vm2873, %v2820, 0
    %v2908 = vsel %vm2873, %v2821, 0
    %v2911 = vsel %vm2873, %v2822, 0
    %v2914 = vsel %vm2873, %v2823, 0
    %v2917 = vsel %vm2873, %v2824, 0
    %v2920 = vsel %vm2873, %v2825, 0
    %v2923 = vsel %vm2873, %v2826, 0
    %v2926 = vsel %vm2873, %v2827, 0
    %v2929 = vsel %vm2873, %v2828, 0
    %v2932 = vsel %vm2873, %v2829, 0
    %v2935 = vsel %vm2873, %v2830, 0
    %v2938 = vsel %vm2873, %v2831, 0
    %v2941 = vsel %vm2873, %v2832, 0
    %v2944 = vsel %vm2873, %v2833, 0
    %v2947 = vsel %vm2873, %v2834, 0
    %v2950 = vsel %vm2873, %v2835, 0
    %v2953 = vsel %vm2873, %v2836, 0
    %v2956 = vsel %vm2873, %v2837, 0
    %v2959 = vsel %vm2873, %v2838, 0
    %v2962 = vsel %vm2873, %v2839, 0
    %v2965 = vsel %vm2873, %v2840, 0
    %v2968 = vsel %vm2873, %v2841, 0
    %v2971 = vsel %vm2873, %v2842, 0
    %v2974 = vsel %vm2873, %v2843, 0
    %v2977 = vsel %vm2873, %v2844, 0
    %v2980 = vsel %vm2873, %v2845, 0
    %v2983 = vsel %vm2873, %v2846, 0
    %v2986 = vsel %vm2873, %v2847, 0
    %v2989 = vsel %vm2873, %v2848, 0
    %v2992 = vsel %vm2873, %v2849, 0
    %v2995 = vsel %vm2873, %v2850, 0
    %v2998 = vsel %vm2873, %v2851, 0
    %v3001 = vsel %vm2873, %v2852, 0
    %v3004 = vsel %vm2873, %v2853, 0
    %v3007 = vsel %vm2873, %v2854, 0
    %v3010 = vsel %vm2873, %v2855, 0
    %v3013 = vsel %vm2873, %v2856, 0
    %v3016 = vsel %vm2873, %v2857, 0
    %3018 = vmatprep.subr.mxu0 0.0
    %3019 = vmatpush1.msra.mxu0 %v2858
    %3020 = vmatprep.subr.mxu0 0.0
    %3021 = vmatpush1.msra.mxu0 %v2859
    %3022 = vmatprep.subr.mxu0 0.0
    %3023 = vmatpush1.msra.mxu0 %v2860
    %3024 = vmatprep.subr.mxu0 0.0
    %3025 = vmatpush1.msra.mxu0 %v2861
    %3026 = vmatprep.subr.mxu0 0.0
    %3027 = vmatpush1.msra.mxu0 %v2862
    %3028 = vmatprep.subr.mxu0 0.0
    %3029 = vmatpush1.msra.mxu0 %v2863
    %3030 = vmatprep.subr.mxu0 0.0
    %3031 = vmatpush1.msra.mxu0 %v2864
    %3032 = vmatprep.subr.mxu0 0.0
    %3033 = vmatpush1.msra.mxu0 %v2865
    %3034 = vmatprep.subr.mxu0 0.0
    %3035 = vmatpush1.msra.mxu0 0.0
    %3036 = vmatprep.subr.mxu0 0.0
    %3037 = vmatpush1.msra.mxu0 0.0
    %3038 = vmatprep.subr.mxu0 0.0
    %3039 = vmatpush1.msra.mxu0 0.0
    %3040 = vmatprep.subr.mxu0 0.0
    %3041 = vmatpush1.msra.mxu0 0.0
    %3042 = vmatprep.subr.mxu0 0.0
    %3043 = vmatpush1.msra.mxu0 0.0
    %3044 = vmatprep.subr.mxu0 0.0
    %3045 = vmatpush1.msra.mxu0 0.0
    %3046 = vmatprep.subr.mxu0 0.0
    %3047 = vmatpush1.msra.mxu0 0.0
    %3048 = vmatprep.subr.mxu0 0.0
    %3049 = vmatpush1.msra.mxu0 0.0
    %3050 = vmatprep.subr.mxu0 0.0
    %3051 = vmatpush1.msra.mxu0 0.0
    %3052 = vmatprep.subr.mxu0 0.0
    %3053 = vmatpush1.msra.mxu0 0.0
    %3054 = vmatprep.subr.mxu0 0.0
    %3055 = vmatpush1.msra.mxu0 0.0
    %3056 = vmatprep.subr.mxu0 0.0
    %3057 = vmatpush1.msra.mxu0 0.0
    %3058 = vmatprep.subr.mxu0 0.0
    %3059 = vmatpush1.msra.mxu0 0.0
    %3060 = vmatprep.subr.mxu0 0.0
    %3061 = vmatpush1.msra.mxu0 0.0
    %3062 = vmatprep.subr.mxu0 0.0
    %3063 = vmatpush1.msra.mxu0 0.0
    %3064 = vmatprep.subr.mxu0 0.0
    %3065 = vmatpush1.msra.mxu0 0.0
    %3066 = vmatprep.subr.mxu0 0.0
    %3067 = vmatpush1.msra.mxu0 0.0
    %3068 = vmatprep.subr.mxu0 0.0
    %3069 = vmatpush1.msra.mxu0 0.0
    %3070 = vmatprep.subr.mxu0 0.0
    %3071 = vmatpush1.msra.mxu0 0.0
    %3072 = vmatprep.subr.mxu0 0.0
    %3073 = vmatpush1.msra.mxu0 0.0
    %3074 = vmatprep.subr.mxu0 0.0
    %3075 = vmatpush1.msra.mxu0 0.0
    %3076 = vmatprep.subr.mxu0 0.0
    %3077 = vmatpush1.msra.mxu0 0.0
    %3078 = vmatprep.subr.mxu0 0.0
    %3079 = vmatpush1.msra.mxu0 0.0
    %3080 = vmatprep.subr.mxu0 0.0
    %3081 = vmatpush1.msra.mxu0 0.0
    %3082 = vmatprep.mubr.f32.mxu0 0.0
    %3083 = vmatmul.mubr.f32.gmra.mrb[0].mxu0 %v2875
    %v3084 = vpop.f32.mrb[0].mxu0
    %v3085 = vadd.f32 %v2871, %v3084
    %v3086 = vpop.f32.mrb[0].mxu0
    %3087 = vmatprep.mubr.f32.mxu0 0.0
    %3088 = vmatmul.mubr.f32.gmra.mrb[0].mxu0 %v2878
    %v3089 = vpop.f32.mrb[0].mxu0
    %v3090 = vadd.f32 %v2871, %v3089
    %v3091 = vpop.f32.mrb[0].mxu0
    %3092 = vmatprep.mubr.f32.mxu0 0.0
    %3093 = vmatmul.mubr.f32.gmra.mrb[0].mxu0 %v2881
    %v3094 = vpop.f32.mrb[0].mxu0
    %v3095 = vadd.f32 %v2871, %v3094
    %v3096 = vpop.f32.mrb[0].mxu0
    %3097 = vmatprep.mubr.f32.mxu0 0.0
    %3098 = vmatmul.mubr.f32.gmra.mrb[0].mxu0 %v2884
    %v3099 = vpop.f32.mrb[0].mxu0
    %v3100 = vadd.f32 %v2871, %v3099
    %v3101 = vpop.f32.mrb[0].mxu0
    %3102 = vmatprep.mubr.f32.mxu0 0.0
    %3103 = vmatmul.mubr.f32.gmra.mrb[0].mxu0 %v2887
    %v3104 = vpop.f32.mrb[0].mxu0
    %v3105 = vadd.f32 %v2871, %v3104
    %v3106 = vpop.f32.mrb[0].mxu0
    %3107 = vmatprep.mubr.f32.mxu0 0.0
    %3108 = vmatmul.mubr.f32.gmra.mrb[0].mxu0 %v2890
    %v3109 = vpop.f32.mrb[0].mxu0
    %v3110 = vadd.f32 %v2871, %v3109
    %v3111 = vpop.f32.mrb[0].mxu0
    %3112 = vmatprep.mubr.f32.mxu0 0.0
    %3113 = vmatmul.mubr.f32.gmra.mrb[0].mxu0 %v2893
    %v3114 = vpop.f32.mrb[0].mxu0
    %v3115 = vadd.f32 %v2871, %v3114
    %v3116 = vpop.f32.mrb[0].mxu0
    %3117 = vmatprep.mubr.f32.mxu0 0.0
    %3118 = vmatmul.mubr.f32.gmra.mrb[0].mxu0 %v2896
    %v3119 = vpop.f32.mrb[0].mxu0
    %v3120 = vadd.f32 %v2871, %v3119
    %v3121 = vpop.f32.mrb[0].mxu0
    %3122 = vmatprep.mubr.f32.mxu0 0.0
    %3123 = vmatmul.mubr.f32.gmra.mrb[0].mxu0 %v2899
    %v3124 = vpop.f32.mrb[0].mxu0
    %v3125 = vadd.f32 %v2871, %v3124
    %v3126 = vpop.f32.mrb[0].mxu0
    %3127 = vmatprep.mubr.f32.mxu0 0.0
    %3128 = vmatmul.mubr.f32.gmra.mrb[0].mxu0 %v2902
    %v3129 = vpop.f32.mrb[0].mxu0
    %v3130 = vadd.f32 %v2871, %v3129
    %v3131 = vpop.f32.mrb[0].mxu0
    %3132 = vmatprep.mubr.f32.mxu0 0.0
    %3133 = vmatmul.mubr.f32.gmra.mrb[0].mxu0 %v2905
    %v3134 = vpop.f32.mrb[0].mxu0
    %v3135 = vadd.f32 %v2871, %v3134
    %v3136 = vpop.f32.mrb[0].mxu0
    %3137 = vmatprep.mubr.f32.mxu0 0.0
    %3138 = vmatmul.mubr.f32.gmra.mrb[0].mxu0 %v2908
    %v3139 = vpop.f32.mrb[0].mxu0
    %v3140 = vadd.f32 %v2871, %v3139
    %v3141 = vpop.f32.mrb[0].mxu0
    %3142 = vmatprep.mubr.f32.mxu0 0.0
    %3143 = vmatmul.mubr.f32.gmra.mrb[0].mxu0 %v2911
    %v3144 = vpop.f32.mrb[0].mxu0
    %v3145 = vadd.f32 %v2871, %v3144
    %v3146 = vpop.f32.mrb[0].mxu0
    %3147 = vmatprep.mubr.f32.mxu0 0.0
    %3148 = vmatmul.mubr.f32.gmra.mrb[0].mxu0 %v2914
    %v3149 = vpop.f32.mrb[0].mxu0
    %v3150 = vadd.f32 %v2871, %v3149
    %v3151 = vpop.f32.mrb[0].mxu0
    %3152 = vmatprep.mubr.f32.mxu0 0.0
    %3153 = vmatmul.mubr.f32.gmra.mrb[0].mxu0 %v2917
    %v3154 = vpop.f32.mrb[0].mxu0
    %v3155 = vadd.f32 %v2871, %v3154
    %v3156 = vpop.f32.mrb[0].mxu0
    %3157 = vmatprep.mubr.f32.mxu0 0.0
    %3158 = vmatmul.mubr.f32.gmra.mrb[0].mxu0 %v2920
    %v3159 = vpop.f32.mrb[0].mxu0
    %v3160 = vadd.f32 %v2871, %v3159
    %v3161 = vpop.f32.mrb[0].mxu0
    %3162 = vmatprep.mubr.f32.mxu0 0.0
    %3163 = vmatmul.mubr.f32.gmra.mrb[0].mxu0 %v2923
    %v3164 = vpop.f32.mrb[0].mxu0
    %v3165 = vadd.f32 %v2871, %v3164
    %v3166 = vpop.f32.mrb[0].mxu0
    %3167 = vmatprep.mubr.f32.mxu0 0.0
    %3168 = vmatmul.mubr.f32.gmra.mrb[0].mxu0 %v2926
    %v3169 = vpop.f32.mrb[0].mxu0
    %v3170 = vadd.f32 %v2871, %v3169
    %v3171 = vpop.f32.mrb[0].mxu0
    %3172 = vmatprep.mubr.f32.mxu0 0.0
    %3173 = vmatmul.mubr.f32.gmra.mrb[0].mxu0 %v2929
    %v3174 = vpop.f32.mrb[0].mxu0
    %v3175 = vadd.f32 %v2871, %v3174
    %v3176 = vpop.f32.mrb[0].mxu0
    %3177 = vmatprep.mubr.f32.mxu0 0.0
    %3178 = vmatmul.mubr.f32.gmra.mrb[0].mxu0 %v2932
    %v3179 = vpop.f32.mrb[0].mxu0
    %v3180 = vadd.f32 %v2871, %v3179
    %v3181 = vpop.f32.mrb[0].mxu0
    %3182 = vmatprep.mubr.f32.mxu0 0.0
    %3183 = vmatmul.mubr.f32.gmra.mrb[0].mxu0 %v2935
    %v3184 = vpop.f32.mrb[0].mxu0
    %v3185 = vadd.f32 %v2871, %v3184
    %v3186 = vpop.f32.mrb[0].mxu0
    %3187 = vmatprep.mubr.f32.mxu0 0.0
    %3188 = vmatmul.mubr.f32.gmra.mrb[0].mxu0 %v2938
    %v3189 = vpop.f32.mrb[0].mxu0
    %v3190 = vadd.f32 %v2871, %v3189
    %v3191 = vpop.f32.mrb[0].mxu0
    %3192 = vmatprep.mubr.f32.mxu0 0.0
    %3193 = vmatmul.mubr.f32.gmra.mrb[0].mxu0 %v2941
    %v3194 = vpop.f32.mrb[0].mxu0
    %v3195 = vadd.f32 %v2871, %v3194
    %v3196 = vpop.f32.mrb[0].mxu0
    %3197 = vmatprep.mubr.f32.mxu0 0.0
    %3198 = vmatmul.mubr.f32.gmra.mrb[0].mxu0 %v2944
    %v3199 = vpop.f32.mrb[0].mxu0
    %v3200 = vadd.f32 %v2871, %v3199
    %v3201 = vpop.f32.mrb[0].mxu0
    %3202 = vmatprep.mubr.f32.mxu0 0.0
    %3203 = vmatmul.mubr.f32.gmra.mrb[0].mxu0 %v2947
    %v3204 = vpop.f32.mrb[0].mxu0
    %v3205 = vadd.f32 %v2871, %v3204
    %v3206 = vpop.f32.mrb[0].mxu0
    %3207 = vmatprep.mubr.f32.mxu0 0.0
    %3208 = vmatmul.mubr.f32.gmra.mrb[0].mxu0 %v2950
    %v3209 = vpop.f32.mrb[0].mxu0
    %v3210 = vadd.f32 %v2871, %v3209
    %v3211 = vpop.f32.mrb[0].mxu0
    %3212 = vmatprep.mubr.f32.mxu0 0.0
    %3213 = vmatmul.mubr.f32.gmra.mrb[0].mxu0 %v2953
    %v3214 = vpop.f32.mrb[0].mxu0
    %v3215 = vadd.f32 %v2871, %v3214
    %v3216 = vpop.f32.mrb[0].mxu0
    %3217 = vmatprep.mubr.f32.mxu0 0.0
    %3218 = vmatmul.mubr.f32.gmra.mrb[0].mxu0 %v2956
    %v3219 = vpop.f32.mrb[0].mxu0
    %v3220 = vadd.f32 %v2871, %v3219
    %v3221 = vpop.f32.mrb[0].mxu0
    %3222 = vmatprep.mubr.f32.mxu0 0.0
    %3223 = vmatmul.mubr.f32.gmra.mrb[0].mxu0 %v2959
    %v3224 = vpop.f32.mrb[0].mxu0
    %v3225 = vadd.f32 %v2871, %v3224
    %v3226 = vpop.f32.mrb[0].mxu0
    %3227 = vmatprep.mubr.f32.mxu0 0.0
    %3228 = vmatmul.mubr.f32.gmra.mrb[0].mxu0 %v2962
    %v3229 = vpop.f32.mrb[0].mxu0
    %v3230 = vadd.f32 %v2871, %v3229
    %v3231 = vpop.f32.mrb[0].mxu0
    %3232 = vmatprep.mubr.f32.mxu0 0.0
    %3233 = vmatmul.mubr.f32.gmra.mrb[0].mxu0 %v2965
    %v3234 = vpop.f32.mrb[0].mxu0
    %v3235 = vadd.f32 %v2871, %v3234
    %v3236 = vpop.f32.mrb[0].mxu0
    %3237 = vmatprep.mubr.f32.mxu0 0.0
    %3238 = vmatmul.mubr.f32.gmra.mrb[0].mxu0 %v2968
    %v3239 = vpop.f32.mrb[0].mxu0
    %v3240 = vadd.f32 %v2871, %v3239
    %v3241 = vpop.f32.mrb[0].mxu0
    %3242 = vmatprep.mubr.f32.mxu0 0.0
    %3243 = vmatmul.mubr.f32.gmra.mrb[0].mxu0 %v2971
    %v3244 = vpop.f32.mrb[0].mxu0
    %v3245 = vadd.f32 %v2871, %v3244
    %v3246 = vpop.f32.mrb[0].mxu0
    %3247 = vmatprep.mubr.f32.mxu0 0.0
    %3248 = vmatmul.mubr.f32.gmra.mrb[0].mxu0 %v2974
    %v3249 = vpop.f32.mrb[0].mxu0
    %v3250 = vadd.f32 %v2871, %v3249
    %v3251 = vpop.f32.mrb[0].mxu0
    %3252 = vmatprep.mubr.f32.mxu0 0.0
    %3253 = vmatmul.mubr.f32.gmra.mrb[0].mxu0 %v2977
    %v3254 = vpop.f32.mrb[0].mxu0
    %v3255 = vadd.f32 %v2871, %v3254
    %v3256 = vpop.f32.mrb[0].mxu0
    %3257 = vmatprep.mubr.f32.mxu0 0.0
    %3258 = vmatmul.mubr.f32.gmra.mrb[0].mxu0 %v2980
    %v3259 = vpop.f32.mrb[0].mxu0
    %v3260 = vadd.f32 %v2871, %v3259
    %v3261 = vpop.f32.mrb[0].mxu0
    %3262 = vmatprep.mubr.f32.mxu0 0.0
    %3263 = vmatmul.mubr.f32.gmra.mrb[0].mxu0 %v2983
    %v3264 = vpop.f32.mrb[0].mxu0
    %v3265 = vadd.f32 %v2871, %v3264
    %v3266 = vpop.f32.mrb[0].mxu0
    %3267 = vmatprep.mubr.f32.mxu0 0.0
    %3268 = vmatmul.mubr.f32.gmra.mrb[0].mxu0 %v2986
    %v3269 = vpop.f32.mrb[0].mxu0
    %v3270 = vadd.f32 %v2871, %v3269
    %v3271 = vpop.f32.mrb[0].mxu0
    %3272 = vmatprep.mubr.f32.mxu0 0.0
    %3273 = vmatmul.mubr.f32.gmra.mrb[0].mxu0 %v2989
    %v3274 = vpop.f32.mrb[0].mxu0
    %v3275 = vadd.f32 %v2871, %v3274
    %v3276 = vpop.f32.mrb[0].mxu0
    %3277 = vmatprep.mubr.f32.mxu0 0.0
    %3278 = vmatmul.mubr.f32.gmra.mrb[0].mxu0 %v2992
    %v3279 = vpop.f32.mrb[0].mxu0
    %v3280 = vadd.f32 %v2871, %v3279
    %v3281 = vpop.f32.mrb[0].mxu0
    %3282 = vmatprep.mubr.f32.mxu0 0.0
    %3283 = vmatmul.mubr.f32.gmra.mrb[0].mxu0 %v2995
    %v3284 = vpop.f32.mrb[0].mxu0
    %v3285 = vadd.f32 %v2871, %v3284
    %v3286 = vpop.f32.mrb[0].mxu0
    %3287 = vmatprep.mubr.f32.mxu0 0.0
    %3288 = vmatmul.mubr.f32.gmra.mrb[0].mxu0 %v2998
    %v3289 = vpop.f32.mrb[0].mxu0
    %v3290 = vadd.f32 %v2871, %v3289
    %v3291 = vpop.f32.mrb[0].mxu0
    %3292 = vmatprep.mubr.f32.mxu0 0.0
    %3293 = vmatmul.mubr.f32.gmra.mrb[0].mxu0 %v3001
    %v3294 = vpop.f32.mrb[0].mxu0
    %v3295 = vadd.f32 %v2871, %v3294
    %v3296 = vpop.f32.mrb[0].mxu0
    %3297 = vmatprep.mubr.f32.mxu0 0.0
    %3298 = vmatmul.mubr.f32.gmra.mrb[0].mxu0 %v3004
    %v3299 = vpop.f32.mrb[0].mxu0
    %v3300 = vadd.f32 %v2871, %v3299
    %v3301 = vpop.f32.mrb[0].mxu0
    %3302 = vmatprep.mubr.f32.mxu0 0.0
    %3303 = vmatmul.mubr.f32.gmra.mrb[0].mxu0 %v3007
    %v3304 = vpop.f32.mrb[0].mxu0
    %v3305 = vadd.f32 %v2871, %v3304
    %v3306 = vpop.f32.mrb[0].mxu0
    %3307 = vmatprep.mubr.f32.mxu0 0.0
    %3308 = vmatmul.mubr.f32.gmra.mrb[0].mxu0 %v3010
    %v3309 = vpop.f32.mrb[0].mxu0
    %v3310 = vadd.f32 %v2871, %v3309
    %v3311 = vpop.f32.mrb[0].mxu0
    %3312 = vmatprep.mubr.f32.mxu0 0.0
    %3313 = vmatmul.mubr.f32.gmra.mrb[0].mxu0 %v3013
    %v3314 = vpop.f32.mrb[0].mxu0
    %v3315 = vadd.f32 %v2871, %v3314
    %v3316 = vpop.f32.mrb[0].mxu0
    %3317 = vmatprep.mubr.f32.mxu0 0.0
    %3318 = vmatmul.mubr.f32.gmra.mrb[0].mxu0 %v3016
    %v3319 = vpop.f32.mrb[0].mxu0
    %v3320 = vadd.f32 %v2871, %v3319
    %v3321 = vpop.f32.mrb[0].mxu0
    %3322 = vdwg.mxu0
    %v3323 = vmax.f32 %v3085, 0.0
    %v3324 = vmax.f32 %v3090, 0.0
    %v3325 = vmax.f32 %v3095, 0.0
    %v3326 = vmax.f32 %v3100, 0.0
    %v3327 = vmax.f32 %v3105, 0.0
    %v3328 = vmax.f32 %v3110, 0.0
    %v3329 = vmax.f32 %v3115, 0.0
    %v3330 = vmax.f32 %v3120, 0.0
    %v3331 = vmax.f32 %v3125, 0.0
    %v3332 = vmax.f32 %v3130, 0.0
    %v3333 = vmax.f32 %v3135, 0.0
    %v3334 = vmax.f32 %v3140, 0.0
    %v3335 = vmax.f32 %v3145, 0.0
    %v3336 = vmax.f32 %v3150, 0.0
    %v3337 = vmax.f32 %v3155, 0.0
    %v3338 = vmax.f32 %v3160, 0.0
    %v3339 = vmax.f32 %v3165, 0.0
    %v3340 = vmax.f32 %v3170, 0.0
    %v3341 = vmax.f32 %v3175, 0.0
    %v3342 = vmax.f32 %v3180, 0.0
    %v3343 = vmax.f32 %v3185, 0.0
    %v3344 = vmax.f32 %v3190, 0.0
    %v3345 = vmax.f32 %v3195, 0.0
    %v3346 = vmax.f32 %v3200, 0.0
    %v3347 = vmax.f32 %v3205, 0.0
    %v3348 = vmax.f32 %v3210, 0.0
    %v3349 = vmax.f32 %v3215, 0.0
    %v3350 = vmax.f32 %v3220, 0.0
    %v3351 = vmax.f32 %v3225, 0.0
    %v3352 = vmax.f32 %v3230, 0.0
    %v3353 = vmax.f32 %v3235, 0.0
    %v3354 = vmax.f32 %v3240, 0.0
    %v3355 = vmax.f32 %v3245, 0.0
    %v3356 = vmax.f32 %v3250, 0.0
    %v3357 = vmax.f32 %v3255, 0.0
    %v3358 = vmax.f32 %v3260, 0.0
    %v3359 = vmax.f32 %v3265, 0.0
    %v3360 = vmax.f32 %v3270, 0.0
    %v3361 = vmax.f32 %v3275, 0.0
    %v3362 = vmax.f32 %v3280, 0.0
    %v3363 = vmax.f32 %v3285, 0.0
    %v3364 = vmax.f32 %v3290, 0.0
    %v3365 = vmax.f32 %v3295, 0.0
    %v3366 = vmax.f32 %v3300, 0.0
    %v3367 = vmax.f32 %v3305, 0.0
    %v3368 = vmax.f32 %v3310, 0.0
    %v3369 = vmax.f32 %v3315, 0.0
    %v3370 = vmax.f32 %v3320, 0.0
    %v3371 = vpack.c.bf16 %v3324, %v3323
    %v3372 = vpack.c.bf16 %v3326, %v3325
    %v3373 = vpack.c.bf16 %v3328, %v3327
    %v3374 = vpack.c.bf16 %v3330, %v3329
    %v3375 = vpack.c.bf16 %v3332, %v3331
    %v3376 = vpack.c.bf16 %v3334, %v3333
    %v3377 = vpack.c.bf16 %v3336, %v3335
    %v3378 = vpack.c.bf16 %v3338, %v3337
    %v3379 = vpack.c.bf16 %v3340, %v3339
    %v3380 = vpack.c.bf16 %v3342, %v3341
    %v3381 = vpack.c.bf16 %v3344, %v3343
    %v3382 = vpack.c.bf16 %v3346, %v3345
    %v3383 = vpack.c.bf16 %v3348, %v3347
    %v3384 = vpack.c.bf16 %v3350, %v3349
    %v3385 = vpack.c.bf16 %v3352, %v3351
    %v3386 = vpack.c.bf16 %v3354, %v3353
    %v3387 = vpack.c.bf16 %v3356, %v3355
    %v3388 = vpack.c.bf16 %v3358, %v3357
    %v3389 = vpack.c.bf16 %v3360, %v3359
    %v3390 = vpack.c.bf16 %v3362, %v3361
    %v3391 = vpack.c.bf16 %v3364, %v3363
    %v3392 = vpack.c.bf16 %v3366, %v3365
    %v3393 = vpack.c.bf16 %v3368, %v3367
    %v3394 = vpack.c.bf16 %v3370, %v3369
    %3395 = vmatprep.subr.bf16.mxu0 0
    %3396 = vmatpush1.bf16.msra.mxu0 %v3371
    %3397 = vmatprep.subr.bf16.mxu0 0
    %3398 = vmatpush1.bf16.msra.mxu0 %v3372
    %3399 = vmatprep.subr.bf16.mxu0 0
    %3400 = vmatpush1.bf16.msra.mxu0 %v3373
    %3401 = vmatprep.subr.bf16.mxu0 0
    %3402 = vmatpush1.bf16.msra.mxu0 %v3374
    %3403 = vmatprep.subr.bf16.mxu0 0
    %3404 = vmatpush1.bf16.msra.mxu0 %v3375
    %3405 = vmatprep.subr.bf16.mxu0 0
    %3406 = vmatpush1.bf16.msra.mxu0 %v3376
    %3407 = vmatprep.subr.bf16.mxu0 0
    %3408 = vmatpush1.bf16.msra.mxu0 %v3377
    %3409 = vmatprep.subr.bf16.mxu0 0
    %3410 = vmatpush1.bf16.msra.mxu0 %v3378
    %3411 = vmatprep.subr.bf16.mxu0 0
    %3412 = vmatpush1.bf16.msra.mxu0 %v3379
    %3413 = vmatprep.subr.bf16.mxu0 0
    %3414 = vmatpush1.bf16.msra.mxu0 %v3380
    %3415 = vmatprep.subr.bf16.mxu0 0
    %3416 = vmatpush1.bf16.msra.mxu0 %v3381
    %3417 = vmatprep.subr.bf16.mxu0 0
    %3418 = vmatpush1.bf16.msra.mxu0 %v3382
    %3419 = vmatprep.subr.bf16.mxu0 0
    %3420 = vmatpush1.bf16.msra.mxu0 %v3383
    %3421 = vmatprep.subr.bf16.mxu0 0
    %3422 = vmatpush1.bf16.msra.mxu0 %v3384
    %3423 = vmatprep.subr.bf16.mxu0 0
    %3424 = vmatpush1.bf16.msra.mxu0 %v3385
    %3425 = vmatprep.subr.bf16.mxu0 0
    %3426 = vmatpush1.bf16.msra.mxu0 %v3386
    %3427 = vmatprep.mubr.bf16.mxu0 %v1095
    %3428 = vmatmul.mubr.bf16.gmra.mrb[0].mxu0 %v1094
    %v3429 = vpop.f32.mrb[0].mxu0
    %v3430 = vadd.f32 0.0, %v3429
    %v3431 = vpop.f32.mrb[0].mxu0
    %v3432 = vpop.f32.mrb[0].mxu0
    %v3433 = vadd.f32 0.0, %v3432
    %v3434 = vpop.f32.mrb[0].mxu0
    %3435 = vmatprep.mubr.bf16.mxu0 %v1098
    %3436 = vmatmul.mubr.bf16.gmra.mrb[0].mxu0 %v1097
    %v3437 = vpop.f32.mrb[0].mxu0
    %v3438 = vadd.f32 0.0, %v3437
    %v3439 = vpop.f32.mrb[0].mxu0
    %v3440 = vpop.f32.mrb[0].mxu0
    %v3441 = vadd.f32 0.0, %v3440
    %v3442 = vpop.f32.mrb[0].mxu0
    %3443 = vmatprep.mubr.bf16.mxu0 %v1101
    %3444 = vmatmul.mubr.bf16.gmra.mrb[0].mxu0 %v1100
    %v3445 = vpop.f32.mrb[0].mxu0
    %v3446 = vadd.f32 0.0, %v3445
    %v3447 = vpop.f32.mrb[0].mxu0
    %v3448 = vpop.f32.mrb[0].mxu0
    %v3449 = vadd.f32 0.0, %v3448
    %v3450 = vpop.f32.mrb[0].mxu0
    %3451 = vmatprep.mubr.bf16.mxu0 %v1104
    %3452 = vmatmul.mubr.bf16.gmra.mrb[0].mxu0 %v1103
    %v3453 = vpop.f32.mrb[0].mxu0
    %v3454 = vadd.f32 0.0, %v3453
    %v3455 = vpop.f32.mrb[0].mxu0
    %v3456 = vpop.f32.mrb[0].mxu0
    %v3457 = vadd.f32 0.0, %v3456
    %v3458 = vpop.f32.mrb[0].mxu0
    %3459 = vmatprep.mubr.bf16.mxu0 %v1107
    %3460 = vmatmul.mubr.bf16.gmra.mrb[0].mxu0 %v1106
    %v3461 = vpop.f32.mrb[0].mxu0
    %v3462 = vadd.f32 0.0, %v3461
    %v3463 = vpop.f32.mrb[0].mxu0
    %v3464 = vpop.f32.mrb[0].mxu0
    %v3465 = vadd.f32 0.0, %v3464
    %v3466 = vpop.f32.mrb[0].mxu0
    %3467 = vmatprep.mubr.bf16.mxu0 %v1110
    %3468 = vmatmul.mubr.bf16.gmra.mrb[0].mxu0 %v1109
    %v3469 = vpop.f32.mrb[0].mxu0
    %v3470 = vadd.f32 0.0, %v3469
    %v3471 = vpop.f32.mrb[0].mxu0
    %v3472 = vpop.f32.mrb[0].mxu0
    %v3473 = vadd.f32 0.0, %v3472
    %v3474 = vpop.f32.mrb[0].mxu0
    %3475 = vmatprep.mubr.bf16.mxu0 %v1113
    %3476 = vmatmul.mubr.bf16.gmra.mrb[0].mxu0 %v1112
    %v3477 = vpop.f32.mrb[0].mxu0
    %v3478 = vadd.f32 0.0, %v3477
    %v3479 = vpop.f32.mrb[0].mxu0
    %v3480 = vpop.f32.mrb[0].mxu0
    %v3481 = vadd.f32 0.0, %v3480
    %v3482 = vpop.f32.mrb[0].mxu0
    %3483 = vmatprep.mubr.bf16.mxu0 %v1116
    %3484 = vmatmul.mubr.bf16.gmra.mrb[0].mxu0 %v1115
    %v3485 = vpop.f32.mrb[0].mxu0
    %v3486 = vadd.f32 0.0, %v3485
    %v3487 = vpop.f32.mrb[0].mxu0
    %v3488 = vpop.f32.mrb[0].mxu0
    %v3489 = vadd.f32 0.0, %v3488
    %v3490 = vpop.f32.mrb[0].mxu0
    %3491 = vmatprep.mubr.bf16.mxu0 %v1119
    %3492 = vmatmul.mubr.bf16.gmra.mrb[0].mxu0 %v1118
    %v3493 = vpop.f32.mrb[0].mxu0
    %v3494 = vadd.f32 0.0, %v3493
    %v3495 = vpop.f32.mrb[0].mxu0
    %v3496 = vpop.f32.mrb[0].mxu0
    %v3497 = vadd.f32 0.0, %v3496
    %v3498 = vpop.f32.mrb[0].mxu0
    %3499 = vmatprep.mubr.bf16.mxu0 %v1122
    %3500 = vmatmul.mubr.bf16.gmra.mrb[0].mxu0 %v1121
    %v3501 = vpop.f32.mrb[0].mxu0
    %v3502 = vadd.f32 0.0, %v3501
    %v3503 = vpop.f32.mrb[0].mxu0
    %v3504 = vpop.f32.mrb[0].mxu0
    %v3505 = vadd.f32 0.0, %v3504
    %v3506 = vpop.f32.mrb[0].mxu0
    %3507 = vmatprep.mubr.bf16.mxu0 %v1125
    %3508 = vmatmul.mubr.bf16.gmra.mrb[0].mxu0 %v1124
    %v3509 = vpop.f32.mrb[0].mxu0
    %v3510 = vadd.f32 0.0, %v3509
    %v3511 = vpop.f32.mrb[0].mxu0
    %v3512 = vpop.f32.mrb[0].mxu0
    %v3513 = vadd.f32 0.0, %v3512
    %v3514 = vpop.f32.mrb[0].mxu0
    %3515 = vmatprep.mubr.bf16.mxu0 %v1128
    %3516 = vmatmul.mubr.bf16.gmra.mrb[0].mxu0 %v1127
    %v3517 = vpop.f32.mrb[0].mxu0
    %v3518 = vadd.f32 0.0, %v3517
    %v3519 = vpop.f32.mrb[0].mxu0
    %v3520 = vpop.f32.mrb[0].mxu0
    %v3521 = vadd.f32 0.0, %v3520
    %v3522 = vpop.f32.mrb[0].mxu0
    %3523 = vmatprep.mubr.bf16.mxu0 %v1131
    %3524 = vmatmul.mubr.bf16.gmra.mrb[0].mxu0 %v1130
    %v3525 = vpop.f32.mrb[0].mxu0
    %v3526 = vadd.f32 0.0, %v3525
    %v3527 = vpop.f32.mrb[0].mxu0
    %v3528 = vpop.f32.mrb[0].mxu0
    %v3529 = vadd.f32 0.0, %v3528
    %v3530 = vpop.f32.mrb[0].mxu0
    %3531 = vmatprep.mubr.bf16.mxu0 %v1134
    %3532 = vmatmul.mubr.bf16.gmra.mrb[0].mxu0 %v1133
    %v3533 = vpop.f32.mrb[0].mxu0
    %v3534 = vadd.f32 0.0, %v3533
    %v3535 = vpop.f32.mrb[0].mxu0
    %v3536 = vpop.f32.mrb[0].mxu0
    %v3537 = vadd.f32 0.0, %v3536
    %v3538 = vpop.f32.mrb[0].mxu0
    %3539 = vmatprep.mubr.bf16.mxu0 %v1137
    %3540 = vmatmul.mubr.bf16.gmra.mrb[0].mxu0 %v1136
    %v3541 = vpop.f32.mrb[0].mxu0
    %v3542 = vadd.f32 0.0, %v3541
    %v3543 = vpop.f32.mrb[0].mxu0
    %v3544 = vpop.f32.mrb[0].mxu0
    %v3545 = vadd.f32 0.0, %v3544
    %v3546 = vpop.f32.mrb[0].mxu0
    %3547 = vmatprep.mubr.bf16.mxu0 %v1140
    %3548 = vmatmul.mubr.bf16.gmra.mrb[0].mxu0 %v1139
    %v3549 = vpop.f32.mrb[0].mxu0
    %v3550 = vadd.f32 0.0, %v3549
    %v3551 = vpop.f32.mrb[0].mxu0
    %v3552 = vpop.f32.mrb[0].mxu0
    %v3553 = vadd.f32 0.0, %v3552
    %v3554 = vpop.f32.mrb[0].mxu0
    %3555 = vmatprep.mubr.bf16.mxu0 %v1143
    %3556 = vmatmul.mubr.bf16.gmra.mrb[0].mxu0 %v1142
    %v3557 = vpop.f32.mrb[0].mxu0
    %v3558 = vadd.f32 0.0, %v3557
    %v3559 = vpop.f32.mrb[0].mxu0
    %v3560 = vpop.f32.mrb[0].mxu0
    %v3561 = vadd.f32 0.0, %v3560
    %v3562 = vpop.f32.mrb[0].mxu0
    %3563 = vmatprep.mubr.bf16.mxu0 %v1146
    %3564 = vmatmul.mubr.bf16.gmra.mrb[0].mxu0 %v1145
    %v3565 = vpop.f32.mrb[0].mxu0
    %v3566 = vadd.f32 0.0, %v3565
    %v3567 = vpop.f32.mrb[0].mxu0
    %v3568 = vpop.f32.mrb[0].mxu0
    %v3569 = vadd.f32 0.0, %v3568
    %v3570 = vpop.f32.mrb[0].mxu0
    %3571 = vmatprep.mubr.bf16.mxu0 %v1149
    %3572 = vmatmul.mubr.bf16.gmra.mrb[0].mxu0 %v1148
    %v3573 = vpop.f32.mrb[0].mxu0
    %v3574 = vadd.f32 0.0, %v3573
    %v3575 = vpop.f32.mrb[0].mxu0
    %v3576 = vpop.f32.mrb[0].mxu0
    %v3577 = vadd.f32 0.0, %v3576
    %v3578 = vpop.f32.mrb[0].mxu0
    %3579 = vmatprep.mubr.bf16.mxu0 %v1152
    %3580 = vmatmul.mubr.bf16.gmra.mrb[0].mxu0 %v1151
    %v3581 = vpop.f32.mrb[0].mxu0
    %v3582 = vadd.f32 0.0, %v3581
    %v3583 = vpop.f32.mrb[0].mxu0
    %v3584 = vpop.f32.mrb[0].mxu0
    %v3585 = vadd.f32 0.0, %v3584
    %v3586 = vpop.f32.mrb[0].mxu0
    %3587 = vmatprep.mubr.bf16.mxu0 %v1155
    %3588 = vmatmul.mubr.bf16.gmra.mrb[0].mxu0 %v1154
    %v3589 = vpop.f32.mrb[0].mxu0
    %v3590 = vadd.f32 0.0, %v3589
    %v3591 = vpop.f32.mrb[0].mxu0
    %v3592 = vpop.f32.mrb[0].mxu0
    %v3593 = vadd.f32 0.0, %v3592
    %v3594 = vpop.f32.mrb[0].mxu0
    %3595 = vmatprep.mubr.bf16.mxu0 %v1158
    %3596 = vmatmul.mubr.bf16.gmra.mrb[0].mxu0 %v1157
    %v3597 = vpop.f32.mrb[0].mxu0
    %v3598 = vadd.f32 0.0, %v3597
    %v3599 = vpop.f32.mrb[0].mxu0
    %v3600 = vpop.f32.mrb[0].mxu0
    %v3601 = vadd.f32 0.0, %v3600
    %v3602 = vpop.f32.mrb[0].mxu0
    %3603 = vmatprep.mubr.bf16.mxu0 %v1161
    %3604 = vmatmul.mubr.bf16.gmra.mrb[0].mxu0 %v1160
    %v3605 = vpop.f32.mrb[0].mxu0
    %v3606 = vadd.f32 0.0, %v3605
    %v3607 = vpop.f32.mrb[0].mxu0
    %v3608 = vpop.f32.mrb[0].mxu0
    %v3609 = vadd.f32 0.0, %v3608
    %v3610 = vpop.f32.mrb[0].mxu0
    %3611 = vmatprep.mubr.bf16.mxu0 %v1164
    %3612 = vmatmul.mubr.bf16.gmra.mrb[0].mxu0 %v1163
    %v3613 = vpop.f32.mrb[0].mxu0
    %v3614 = vadd.f32 0.0, %v3613
    %v3615 = vpop.f32.mrb[0].mxu0
    %v3616 = vpop.f32.mrb[0].mxu0
    %v3617 = vadd.f32 0.0, %v3616
    %v3618 = vpop.f32.mrb[0].mxu0
    %3619 = vdwg.mxu0
    %3620 = vmatprep.subr.bf16.mxu0 0
    %3621 = vmatpush1.bf16.msra.mxu0 %v3387
    %3622 = vmatprep.subr.bf16.mxu0 0
    %3623 = vmatpush1.bf16.msra.mxu0 %v3388
    %3624 = vmatprep.subr.bf16.mxu0 0
    %3625 = vmatpush1.bf16.msra.mxu0 %v3389
    %3626 = vmatprep.subr.bf16.mxu0 0
    %3627 = vmatpush1.bf16.msra.mxu0 %v3390
    %3628 = vmatprep.subr.bf16.mxu0 0
    %3629 = vmatpush1.bf16.msra.mxu0 %v3391
    %3630 = vmatprep.subr.bf16.mxu0 0
    %3631 = vmatpush1.bf16.msra.mxu0 %v3392
    %3632 = vmatprep.subr.bf16.mxu0 0
    %3633 = vmatpush1.bf16.msra.mxu0 %v3393
    %3634 = vmatprep.subr.bf16.mxu0 0
    %3635 = vmatpush1.bf16.msra.mxu0 %v3394
    %3636 = vmatprep.subr.bf16.mxu0 0
    %3637 = vmatpush1.bf16.msra.mxu0 0
    %3638 = vmatprep.subr.bf16.mxu0 0
    %3639 = vmatpush1.bf16.msra.mxu0 0
    %3640 = vmatprep.subr.bf16.mxu0 0
    %3641 = vmatpush1.bf16.msra.mxu0 0
    %3642 = vmatprep.subr.bf16.mxu0 0
    %3643 = vmatpush1.bf16.msra.mxu0 0
    %3644 = vmatprep.subr.bf16.mxu0 0
    %3645 = vmatpush1.bf16.msra.mxu0 0
    %3646 = vmatprep.subr.bf16.mxu0 0
    %3647 = vmatpush1.bf16.msra.mxu0 0
    %3648 = vmatprep.subr.bf16.mxu0 0
    %3649 = vmatpush1.bf16.msra.mxu0 0
    %3650 = vmatprep.subr.bf16.mxu0 0
    %3651 = vmatpush1.bf16.msra.mxu0 0
    %3652 = vmatprep.mubr.bf16.mxu0 0
    %3653 = vmatmul.mubr.bf16.gmra.mrb[0].mxu0 %v1096
    %v3654 = vpop.f32.mrb[0].mxu0
    %v3655 = vadd.f32 %v3430, %v3654
    %v3656 = vpop.f32.mrb[0].mxu0
    %v3657 = vpop.f32.mrb[0].mxu0
    %v3658 = vadd.f32 %v3433, %v3657
    %v3659 = vpop.f32.mrb[0].mxu0
    %3660 = vmatprep.mubr.bf16.mxu0 0
    %3661 = vmatmul.mubr.bf16.gmra.mrb[0].mxu0 %v1099
    %v3662 = vpop.f32.mrb[0].mxu0
    %v3663 = vadd.f32 %v3438, %v3662
    %v3664 = vpop.f32.mrb[0].mxu0
    %v3665 = vpop.f32.mrb[0].mxu0
    %v3666 = vadd.f32 %v3441, %v3665
    %v3667 = vpop.f32.mrb[0].mxu0
    %3668 = vmatprep.mubr.bf16.mxu0 0
    %3669 = vmatmul.mubr.bf16.gmra.mrb[0].mxu0 %v1102
    %v3670 = vpop.f32.mrb[0].mxu0
    %v3671 = vadd.f32 %v3446, %v3670
    %v3672 = vpop.f32.mrb[0].mxu0
    %v3673 = vpop.f32.mrb[0].mxu0
    %v3674 = vadd.f32 %v3449, %v3673
    %v3675 = vpop.f32.mrb[0].mxu0
    %3676 = vmatprep.mubr.bf16.mxu0 0
    %3677 = vmatmul.mubr.bf16.gmra.mrb[0].mxu0 %v1105
    %v3678 = vpop.f32.mrb[0].mxu0
    %v3679 = vadd.f32 %v3454, %v3678
    %v3680 = vpop.f32.mrb[0].mxu0
    %v3681 = vpop.f32.mrb[0].mxu0
    %v3682 = vadd.f32 %v3457, %v3681
    %v3683 = vpop.f32.mrb[0].mxu0
    %3684 = vmatprep.mubr.bf16.mxu0 0
    %3685 = vmatmul.mubr.bf16.gmra.mrb[0].mxu0 %v1108
    %v3686 = vpop.f32.mrb[0].mxu0
    %v3687 = vadd.f32 %v3462, %v3686
    %v3688 = vpop.f32.mrb[0].mxu0
    %v3689 = vpop.f32.mrb[0].mxu0
    %v3690 = vadd.f32 %v3465, %v3689
    %v3691 = vpop.f32.mrb[0].mxu0
    %3692 = vmatprep.mubr.bf16.mxu0 0
    %3693 = vmatmul.mubr.bf16.gmra.mrb[0].mxu0 %v1111
    %v3694 = vpop.f32.mrb[0].mxu0
    %v3695 = vadd.f32 %v3470, %v3694
    %v3696 = vpop.f32.mrb[0].mxu0
    %v3697 = vpop.f32.mrb[0].mxu0
    %v3698 = vadd.f32 %v3473, %v3697
    %v3699 = vpop.f32.mrb[0].mxu0
    %3700 = vmatprep.mubr.bf16.mxu0 0
    %3701 = vmatmul.mubr.bf16.gmra.mrb[0].mxu0 %v1114
    %v3702 = vpop.f32.mrb[0].mxu0
    %v3703 = vadd.f32 %v3478, %v3702
    %v3704 = vpop.f32.mrb[0].mxu0
    %v3705 = vpop.f32.mrb[0].mxu0
    %v3706 = vadd.f32 %v3481, %v3705
    %v3707 = vpop.f32.mrb[0].mxu0
    %3708 = vmatprep.mubr.bf16.mxu0 0
    %3709 = vmatmul.mubr.bf16.gmra.mrb[0].mxu0 %v1117
    %v3710 = vpop.f32.mrb[0].mxu0
    %v3711 = vadd.f32 %v3486, %v3710
    %v3712 = vpop.f32.mrb[0].mxu0
    %v3713 = vpop.f32.mrb[0].mxu0
    %v3714 = vadd.f32 %v3489, %v3713
    %v3715 = vpop.f32.mrb[0].mxu0
    %3716 = vmatprep.mubr.bf16.mxu0 0
    %3717 = vmatmul.mubr.bf16.gmra.mrb[0].mxu0 %v1120
    %v3718 = vpop.f32.mrb[0].mxu0
    %v3719 = vadd.f32 %v3494, %v3718
    %v3720 = vpop.f32.mrb[0].mxu0
    %v3721 = vpop.f32.mrb[0].mxu0
    %v3722 = vadd.f32 %v3497, %v3721
    %v3723 = vpop.f32.mrb[0].mxu0
    %3724 = vmatprep.mubr.bf16.mxu0 0
    %3725 = vmatmul.mubr.bf16.gmra.mrb[0].mxu0 %v1123
    %v3726 = vpop.f32.mrb[0].mxu0
    %v3727 = vadd.f32 %v3502, %v3726
    %v3728 = vpop.f32.mrb[0].mxu0
    %v3729 = vpop.f32.mrb[0].mxu0
    %v3730 = vadd.f32 %v3505, %v3729
    %v3731 = vpop.f32.mrb[0].mxu0
    %3732 = vmatprep.mubr.bf16.mxu0 0
    %3733 = vmatmul.mubr.bf16.gmra.mrb[0].mxu0 %v1126
    %v3734 = vpop.f32.mrb[0].mxu0
    %v3735 = vadd.f32 %v3510, %v3734
    %v3736 = vpop.f32.mrb[0].mxu0
    %v3737 = vpop.f32.mrb[0].mxu0
    %v3738 = vadd.f32 %v3513, %v3737
    %v3739 = vpop.f32.mrb[0].mxu0
    %3740 = vmatprep.mubr.bf16.mxu0 0
    %3741 = vmatmul.mubr.bf16.gmra.mrb[0].mxu0 %v1129
    %v3742 = vpop.f32.mrb[0].mxu0
    %v3743 = vadd.f32 %v3518, %v3742
    %v3744 = vpop.f32.mrb[0].mxu0
    %v3745 = vpop.f32.mrb[0].mxu0
    %v3746 = vadd.f32 %v3521, %v3745
    %v3747 = vpop.f32.mrb[0].mxu0
    %3748 = vmatprep.mubr.bf16.mxu0 0
    %3749 = vmatmul.mubr.bf16.gmra.mrb[0].mxu0 %v1132
    %v3750 = vpop.f32.mrb[0].mxu0
    %v3751 = vadd.f32 %v3526, %v3750
    %v3752 = vpop.f32.mrb[0].mxu0
    %v3753 = vpop.f32.mrb[0].mxu0
    %v3754 = vadd.f32 %v3529, %v3753
    %v3755 = vpop.f32.mrb[0].mxu0
    %3756 = vmatprep.mubr.bf16.mxu0 0
    %3757 = vmatmul.mubr.bf16.gmra.mrb[0].mxu0 %v1135
    %v3758 = vpop.f32.mrb[0].mxu0
    %v3759 = vadd.f32 %v3534, %v3758
    %v3760 = vpop.f32.mrb[0].mxu0
    %v3761 = vpop.f32.mrb[0].mxu0
    %v3762 = vadd.f32 %v3537, %v3761
    %v3763 = vpop.f32.mrb[0].mxu0
    %3764 = vmatprep.mubr.bf16.mxu0 0
    %3765 = vmatmul.mubr.bf16.gmra.mrb[0].mxu0 %v1138
    %v3766 = vpop.f32.mrb[0].mxu0
    %v3767 = vadd.f32 %v3542, %v3766
    %v3768 = vpop.f32.mrb[0].mxu0
    %v3769 = vpop.f32.mrb[0].mxu0
    %v3770 = vadd.f32 %v3545, %v3769
    %v3771 = vpop.f32.mrb[0].mxu0
    %3772 = vmatprep.mubr.bf16.mxu0 0
    %3773 = vmatmul.mubr.bf16.gmra.mrb[0].mxu0 %v1141
    %v3774 = vpop.f32.mrb[0].mxu0
    %v3775 = vadd.f32 %v3550, %v3774
    %v3776 = vpop.f32.mrb[0].mxu0
    %v3777 = vpop.f32.mrb[0].mxu0
    %v3778 = vadd.f32 %v3553, %v3777
    %v3779 = vpop.f32.mrb[0].mxu0
    %3780 = vmatprep.mubr.bf16.mxu0 0
    %3781 = vmatmul.mubr.bf16.gmra.mrb[0].mxu0 %v1144
    %v3782 = vpop.f32.mrb[0].mxu0
    %v3783 = vadd.f32 %v3558, %v3782
    %v3784 = vpop.f32.mrb[0].mxu0
    %v3785 = vpop.f32.mrb[0].mxu0
    %v3786 = vadd.f32 %v3561, %v3785
    %v3787 = vpop.f32.mrb[0].mxu0
    %3788 = vmatprep.mubr.bf16.mxu0 0
    %3789 = vmatmul.mubr.bf16.gmra.mrb[0].mxu0 %v1147
    %v3790 = vpop.f32.mrb[0].mxu0
    %v3791 = vadd.f32 %v3566, %v3790
    %v3792 = vpop.f32.mrb[0].mxu0
    %v3793 = vpop.f32.mrb[0].mxu0
    %v3794 = vadd.f32 %v3569, %v3793
    %v3795 = vpop.f32.mrb[0].mxu0
    %3796 = vmatprep.mubr.bf16.mxu0 0
    %3797 = vmatmul.mubr.bf16.gmra.mrb[0].mxu0 %v1150
    %v3798 = vpop.f32.mrb[0].mxu0
    %v3799 = vadd.f32 %v3574, %v3798
    %v3800 = vpop.f32.mrb[0].mxu0
    %v3801 = vpop.f32.mrb[0].mxu0
    %v3802 = vadd.f32 %v3577, %v3801
    %v3803 = vpop.f32.mrb[0].mxu0
    %3804 = vmatprep.mubr.bf16.mxu0 0
    %3805 = vmatmul.mubr.bf16.gmra.mrb[0].mxu0 %v1153
    %v3806 = vpop.f32.mrb[0].mxu0
    %v3807 = vadd.f32 %v3582, %v3806
    %v3808 = vpop.f32.mrb[0].mxu0
    %v3809 = vpop.f32.mrb[0].mxu0
    %v3810 = vadd.f32 %v3585, %v3809
    %v3811 = vpop.f32.mrb[0].mxu0
    %3812 = vmatprep.mubr.bf16.mxu0 0
    %3813 = vmatmul.mubr.bf16.gmra.mrb[0].mxu0 %v1156
    %v3814 = vpop.f32.mrb[0].mxu0
    %v3815 = vadd.f32 %v3590, %v3814
    %v3816 = vpop.f32.mrb[0].mxu0
    %v3817 = vpop.f32.mrb[0].mxu0
    %v3818 = vadd.f32 %v3593, %v3817
    %v3819 = vpop.f32.mrb[0].mxu0
    %3820 = vmatprep.mubr.bf16.mxu0 0
    %3821 = vmatmul.mubr.bf16.gmra.mrb[0].mxu0 %v1159
    %v3822 = vpop.f32.mrb[0].mxu0
    %v3823 = vadd.f32 %v3598, %v3822
    %v3824 = vpop.f32.mrb[0].mxu0
    %v3825 = vpop.f32.mrb[0].mxu0
    %v3826 = vadd.f32 %v3601, %v3825
    %v3827 = vpop.f32.mrb[0].mxu0
    %3828 = vmatprep.mubr.bf16.mxu0 0
    %3829 = vmatmul.mubr.bf16.gmra.mrb[0].mxu0 %v1162
    %v3830 = vpop.f32.mrb[0].mxu0
    %v3831 = vadd.f32 %v3606, %v3830
    %v3832 = vpop.f32.mrb[0].mxu0
    %v3833 = vpop.f32.mrb[0].mxu0
    %v3834 = vadd.f32 %v3609, %v3833
    %v3835 = vpop.f32.mrb[0].mxu0
    %3836 = vmatprep.mubr.bf16.mxu0 0
    %3837 = vmatmul.mubr.bf16.gmra.mrb[0].mxu0 %v1165
    %v3838 = vpop.f32.mrb[0].mxu0
    %v3839 = vadd.f32 %v3614, %v3838
    %v3840 = vpop.f32.mrb[0].mxu0
    %v3841 = vpop.f32.mrb[0].mxu0
    %v3842 = vadd.f32 %v3617, %v3841
    %v3843 = vpop.f32.mrb[0].mxu0
    %3844 = vdwg.mxu0
    %3869 = vrot.lane.b32.xlu0 %v3371, 96
    %v3870 = vpop.permute.xlu0 %3869
    %3871 = vrot.lane.b32.xlu0 %v3372, 96
    %v3872 = vpop.permute.xlu0 %3871
    %3873 = vrot.lane.b32.xlu0 %v3373, 96
    %v3874 = vpop.permute.xlu0 %3873
    %3875 = vrot.lane.b32.xlu0 %v3374, 96
    %v3876 = vpop.permute.xlu0 %3875
    %3877 = vrot.lane.b32.xlu0 %v3375, 96
    %v3878 = vpop.permute.xlu0 %3877
    %3879 = vrot.lane.b32.xlu0 %v3376, 96
    %v3880 = vpop.permute.xlu0 %3879
    %3881 = vrot.lane.b32.xlu0 %v3377, 96
    %v3882 = vpop.permute.xlu0 %3881
    %3883 = vrot.lane.b32.xlu0 %v3378, 96
    %v3884 = vpop.permute.xlu0 %3883
    %3885 = vrot.lane.b32.xlu0 %v3379, 96
    %v3886 = vpop.permute.xlu0 %3885
    %3887 = vrot.lane.b32.xlu0 %v3380, 96
    %v3888 = vpop.permute.xlu0 %3887
    %3889 = vrot.lane.b32.xlu0 %v3381, 96
    %v3890 = vpop.permute.xlu0 %3889
    %3891 = vrot.lane.b32.xlu0 %v3382, 96
    %v3892 = vpop.permute.xlu0 %3891
    %3893 = vrot.lane.b32.xlu0 %v3383, 96
    %v3894 = vpop.permute.xlu0 %3893
    %3895 = vrot.lane.b32.xlu0 %v3384, 96
    %v3896 = vpop.permute.xlu0 %3895
    %3897 = vrot.lane.b32.xlu0 %v3385, 96
    %v3898 = vpop.permute.xlu0 %3897
    %3899 = vrot.lane.b32.xlu0 %v3386, 96
    %v3900 = vpop.permute.xlu0 %3899
    %3901 = vrot.lane.b32.xlu0 %v3387, 96
    %v3902 = vpop.permute.xlu0 %3901
    %3903 = vrot.lane.b32.xlu0 %v3388, 96
    %v3904 = vpop.permute.xlu0 %3903
    %3905 = vrot.lane.b32.xlu0 %v3389, 96
    %v3906 = vpop.permute.xlu0 %3905
    %3907 = vrot.lane.b32.xlu0 %v3390, 96
    %v3908 = vpop.permute.xlu0 %3907
    %3909 = vrot.lane.b32.xlu0 %v3391, 96
    %v3910 = vpop.permute.xlu0 %3909
    %3911 = vrot.lane.b32.xlu0 %v3392, 96
    %v3912 = vpop.permute.xlu0 %3911
    %3913 = vrot.lane.b32.xlu0 %v3393, 96
    %v3914 = vpop.permute.xlu0 %3913
    %3915 = vrot.lane.b32.xlu0 %v3394, 96
    %v3916 = vpop.permute.xlu0 %3915
    %3941 = vmatprep.subr.bf16.mxu0 0
    %3942 = vmatpush1.bf16.msra.mxu0 %v3870
    %3943 = vmatprep.subr.bf16.mxu0 0
    %3944 = vmatpush1.bf16.msra.mxu0 %v3872
    %3945 = vmatprep.subr.bf16.mxu0 0
    %3946 = vmatpush1.bf16.msra.mxu0 %v3874
    %3947 = vmatprep.subr.bf16.mxu0 0
    %3948 = vmatpush1.bf16.msra.mxu0 %v3876
    %3949 = vmatprep.subr.bf16.mxu0 0
    %3950 = vmatpush1.bf16.msra.mxu0 %v3878
    %3951 = vmatprep.subr.bf16.mxu0 0
    %3952 = vmatpush1.bf16.msra.mxu0 %v3880
    %3953 = vmatprep.subr.bf16.mxu0 0
    %3954 = vmatpush1.bf16.msra.mxu0 %v3882
    %3955 = vmatprep.subr.bf16.mxu0 0
    %3956 = vmatpush1.bf16.msra.mxu0 %v3884
    %3957 = vmatprep.subr.bf16.mxu0 0
    %3958 = vmatpush1.bf16.msra.mxu0 %v3886
    %3959 = vmatprep.subr.bf16.mxu0 0
    %3960 = vmatpush1.bf16.msra.mxu0 %v3888
    %3961 = vmatprep.subr.bf16.mxu0 0
    %3962 = vmatpush1.bf16.msra.mxu0 %v3890
    %3963 = vmatprep.subr.bf16.mxu0 0
    %3964 = vmatpush1.bf16.msra.mxu0 %v3892
    %3965 = vmatprep.subr.bf16.mxu0 0
    %3966 = vmatpush1.bf16.msra.mxu0 %v3894
    %3967 = vmatprep.subr.bf16.mxu0 0
    %3968 = vmatpush1.bf16.msra.mxu0 %v3896
    %3969 = vmatprep.subr.bf16.mxu0 0
    %3970 = vmatpush1.bf16.msra.mxu0 %v3898
    %3971 = vmatprep.subr.bf16.mxu0 0
    %3972 = vmatpush1.bf16.msra.mxu0 %v3900
    %3973 = vmatprep.mubr.bf16.mxu0 %v1929
    %3974 = vmatmul.mubr.bf16.gmra.mrb[0].mxu0 %v1928
    %v3975 = vpop.f32.mrb[0].mxu0
    %v3976 = vadd.f32 0.0, %v3975
    %v3977 = vpop.f32.mrb[0].mxu0
    %v3978 = vpop.f32.mrb[0].mxu0
    %v3979 = vadd.f32 0.0, %v3978
    %v3980 = vpop.f32.mrb[0].mxu0
    %3981 = vmatprep.mubr.bf16.mxu0 %v1932
    %3982 = vmatmul.mubr.bf16.gmra.mrb[0].mxu0 %v1931
    %v3983 = vpop.f32.mrb[0].mxu0
    %v3984 = vadd.f32 0.0, %v3983
    %v3985 = vpop.f32.mrb[0].mxu0
    %v3986 = vpop.f32.mrb[0].mxu0
    %v3987 = vadd.f32 0.0, %v3986
    %v3988 = vpop.f32.mrb[0].mxu0
    %3989 = vmatprep.mubr.bf16.mxu0 %v1935
    %3990 = vmatmul.mubr.bf16.gmra.mrb[0].mxu0 %v1934
    %v3991 = vpop.f32.mrb[0].mxu0
    %v3992 = vadd.f32 0.0, %v3991
    %v3993 = vpop.f32.mrb[0].mxu0
    %v3994 = vpop.f32.mrb[0].mxu0
    %v3995 = vadd.f32 0.0, %v3994
    %v3996 = vpop.f32.mrb[0].mxu0
    %3997 = vmatprep.mubr.bf16.mxu0 %v1938
    %3998 = vmatmul.mubr.bf16.gmra.mrb[0].mxu0 %v1937
    %v3999 = vpop.f32.mrb[0].mxu0
    %v4000 = vadd.f32 0.0, %v3999
    %v4001 = vpop.f32.mrb[0].mxu0
    %v4002 = vpop.f32.mrb[0].mxu0
    %v4003 = vadd.f32 0.0, %v4002
    %v4004 = vpop.f32.mrb[0].mxu0
    %4005 = vmatprep.mubr.bf16.mxu0 %v1941
    %4006 = vmatmul.mubr.bf16.gmra.mrb[0].mxu0 %v1940
    %v4007 = vpop.f32.mrb[0].mxu0
    %v4008 = vadd.f32 0.0, %v4007
    %v4009 = vpop.f32.mrb[0].mxu0
    %v4010 = vpop.f32.mrb[0].mxu0
    %v4011 = vadd.f32 0.0, %v4010
    %v4012 = vpop.f32.mrb[0].mxu0
    %4013 = vmatprep.mubr.bf16.mxu0 %v1944
    %4014 = vmatmul.mubr.bf16.gmra.mrb[0].mxu0 %v1943
    %v4015 = vpop.f32.mrb[0].mxu0
    %v4016 = vadd.f32 0.0, %v4015
    %v4017 = vpop.f32.mrb[0].mxu0
    %v4018 = vpop.f32.mrb[0].mxu0
    %v4019 = vadd.f32 0.0, %v4018
    %v4020 = vpop.f32.mrb[0].mxu0
    %4021 = vmatprep.mubr.bf16.mxu0 %v1947
    %4022 = vmatmul.mubr.bf16.gmra.mrb[0].mxu0 %v1946
    %v4023 = vpop.f32.mrb[0].mxu0
    %v4024 = vadd.f32 0.0, %v4023
    %v4025 = vpop.f32.mrb[0].mxu0
    %v4026 = vpop.f32.mrb[0].mxu0
    %v4027 = vadd.f32 0.0, %v4026
    %v4028 = vpop.f32.mrb[0].mxu0
    %4029 = vmatprep.mubr.bf16.mxu0 %v1950
    %4030 = vmatmul.mubr.bf16.gmra.mrb[0].mxu0 %v1949
    %v4031 = vpop.f32.mrb[0].mxu0
    %v4032 = vadd.f32 0.0, %v4031
    %v4033 = vpop.f32.mrb[0].mxu0
    %v4034 = vpop.f32.mrb[0].mxu0
    %v4035 = vadd.f32 0.0, %v4034
    %v4036 = vpop.f32.mrb[0].mxu0
    %4037 = vmatprep.mubr.bf16.mxu0 %v1953
    %4038 = vmatmul.mubr.bf16.gmra.mrb[0].mxu0 %v1952
    %v4039 = vpop.f32.mrb[0].mxu0
    %v4040 = vadd.f32 0.0, %v4039
    %v4041 = vpop.f32.mrb[0].mxu0
    %v4042 = vpop.f32.mrb[0].mxu0
    %v4043 = vadd.f32 0.0, %v4042
    %v4044 = vpop.f32.mrb[0].mxu0
    %4045 = vmatprep.mubr.bf16.mxu0 %v1956
    %4046 = vmatmul.mubr.bf16.gmra.mrb[0].mxu0 %v1955
    %v4047 = vpop.f32.mrb[0].mxu0
    %v4048 = vadd.f32 0.0, %v4047
    %v4049 = vpop.f32.mrb[0].mxu0
    %v4050 = vpop.f32.mrb[0].mxu0
    %v4051 = vadd.f32 0.0, %v4050
    %v4052 = vpop.f32.mrb[0].mxu0
    %4053 = vmatprep.mubr.bf16.mxu0 %v1959
    %4054 = vmatmul.mubr.bf16.gmra.mrb[0].mxu0 %v1958
    %v4055 = vpop.f32.mrb[0].mxu0
    %v4056 = vadd.f32 0.0, %v4055
    %v4057 = vpop.f32.mrb[0].mxu0
    %v4058 = vpop.f32.mrb[0].mxu0
    %v4059 = vadd.f32 0.0, %v4058
    %v4060 = vpop.f32.mrb[0].mxu0
    %4061 = vmatprep.mubr.bf16.mxu0 %v1962
    %4062 = vmatmul.mubr.bf16.gmra.mrb[0].mxu0 %v1961
    %v4063 = vpop.f32.mrb[0].mxu0
    %v4064 = vadd.f32 0.0, %v4063
    %v4065 = vpop.f32.mrb[0].mxu0
    %v4066 = vpop.f32.mrb[0].mxu0
    %v4067 = vadd.f32 0.0, %v4066
    %v4068 = vpop.f32.mrb[0].mxu0
    %4069 = vmatprep.mubr.bf16.mxu0 %v1965
    %4070 = vmatmul.mubr.bf16.gmra.mrb[0].mxu0 %v1964
    %v4071 = vpop.f32.mrb[0].mxu0
    %v4072 = vadd.f32 0.0, %v4071
    %v4073 = vpop.f32.mrb[0].mxu0
    %v4074 = vpop.f32.mrb[0].mxu0
    %v4075 = vadd.f32 0.0, %v4074
    %v4076 = vpop.f32.mrb[0].mxu0
    %4077 = vmatprep.mubr.bf16.mxu0 %v1968
    %4078 = vmatmul.mubr.bf16.gmra.mrb[0].mxu0 %v1967
    %v4079 = vpop.f32.mrb[0].mxu0
    %v4080 = vadd.f32 0.0, %v4079
    %v4081 = vpop.f32.mrb[0].mxu0
    %v4082 = vpop.f32.mrb[0].mxu0
    %v4083 = vadd.f32 0.0, %v4082
    %v4084 = vpop.f32.mrb[0].mxu0
    %4085 = vmatprep.mubr.bf16.mxu0 %v1971
    %4086 = vmatmul.mubr.bf16.gmra.mrb[0].mxu0 %v1970
    %v4087 = vpop.f32.mrb[0].mxu0
    %v4088 = vadd.f32 0.0, %v4087
    %v4089 = vpop.f32.mrb[0].mxu0
    %v4090 = vpop.f32.mrb[0].mxu0
    %v4091 = vadd.f32 0.0, %v4090
    %v4092 = vpop.f32.mrb[0].mxu0
    %4093 = vmatprep.mubr.bf16.mxu0 %v1974
    %4094 = vmatmul.mubr.bf16.gmra.mrb[0].mxu0 %v1973
    %v4095 = vpop.f32.mrb[0].mxu0
    %v4096 = vadd.f32 0.0, %v4095
    %v4097 = vpop.f32.mrb[0].mxu0
    %v4098 = vpop.f32.mrb[0].mxu0
    %v4099 = vadd.f32 0.0, %v4098
    %v4100 = vpop.f32.mrb[0].mxu0
    %4101 = vmatprep.mubr.bf16.mxu0 %v1977
    %4102 = vmatmul.mubr.bf16.gmra.mrb[0].mxu0 %v1976
    %v4103 = vpop.f32.mrb[0].mxu0
    %v4104 = vadd.f32 0.0, %v4103
    %v4105 = vpop.f32.mrb[0].mxu0
    %v4106 = vpop.f32.mrb[0].mxu0
    %v4107 = vadd.f32 0.0, %v4106
    %v4108 = vpop.f32.mrb[0].mxu0
    %4109 = vmatprep.mubr.bf16.mxu0 %v1980
    %4110 = vmatmul.mubr.bf16.gmra.mrb[0].mxu0 %v1979
    %v4111 = vpop.f32.mrb[0].mxu0
    %v4112 = vadd.f32 0.0, %v4111
    %v4113 = vpop.f32.mrb[0].mxu0
    %v4114 = vpop.f32.mrb[0].mxu0
    %v4115 = vadd.f32 0.0, %v4114
    %v4116 = vpop.f32.mrb[0].mxu0
    %4117 = vmatprep.mubr.bf16.mxu0 %v1983
    %4118 = vmatmul.mubr.bf16.gmra.mrb[0].mxu0 %v1982
    %v4119 = vpop.f32.mrb[0].mxu0
    %v4120 = vadd.f32 0.0, %v4119
    %v4121 = vpop.f32.mrb[0].mxu0
    %v4122 = vpop.f32.mrb[0].mxu0
    %v4123 = vadd.f32 0.0, %v4122
    %v4124 = vpop.f32.mrb[0].mxu0
    %4125 = vmatprep.mubr.bf16.mxu0 %v1986
    %4126 = vmatmul.mubr.bf16.gmra.mrb[0].mxu0 %v1985
    %v4127 = vpop.f32.mrb[0].mxu0
    %v4128 = vadd.f32 0.0, %v4127
    %v4129 = vpop.f32.mrb[0].mxu0
    %v4130 = vpop.f32.mrb[0].mxu0
    %v4131 = vadd.f32 0.0, %v4130
    %v4132 = vpop.f32.mrb[0].mxu0
    %4133 = vmatprep.mubr.bf16.mxu0 %v1989
    %4134 = vmatmul.mubr.bf16.gmra.mrb[0].mxu0 %v1988
    %v4135 = vpop.f32.mrb[0].mxu0
    %v4136 = vadd.f32 0.0, %v4135
    %v4137 = vpop.f32.mrb[0].mxu0
    %v4138 = vpop.f32.mrb[0].mxu0
    %v4139 = vadd.f32 0.0, %v4138
    %v4140 = vpop.f32.mrb[0].mxu0
    %4141 = vmatprep.mubr.bf16.mxu0 %v1992
    %4142 = vmatmul.mubr.bf16.gmra.mrb[0].mxu0 %v1991
    %v4143 = vpop.f32.mrb[0].mxu0
    %v4144 = vadd.f32 0.0, %v4143
    %v4145 = vpop.f32.mrb[0].mxu0
    %v4146 = vpop.f32.mrb[0].mxu0
    %v4147 = vadd.f32 0.0, %v4146
    %v4148 = vpop.f32.mrb[0].mxu0
    %4149 = vmatprep.mubr.bf16.mxu0 %v1995
    %4150 = vmatmul.mubr.bf16.gmra.mrb[0].mxu0 %v1994
    %v4151 = vpop.f32.mrb[0].mxu0
    %v4152 = vadd.f32 0.0, %v4151
    %v4153 = vpop.f32.mrb[0].mxu0
    %v4154 = vpop.f32.mrb[0].mxu0
    %v4155 = vadd.f32 0.0, %v4154
    %v4156 = vpop.f32.mrb[0].mxu0
    %4157 = vmatprep.mubr.bf16.mxu0 %v1998
    %4158 = vmatmul.mubr.bf16.gmra.mrb[0].mxu0 %v1997
    %v4159 = vpop.f32.mrb[0].mxu0
    %v4160 = vadd.f32 0.0, %v4159
    %v4161 = vpop.f32.mrb[0].mxu0
    %v4162 = vpop.f32.mrb[0].mxu0
    %v4163 = vadd.f32 0.0, %v4162
    %v4164 = vpop.f32.mrb[0].mxu0
    %4165 = vdwg.mxu0
    %4166 = vmatprep.subr.bf16.mxu0 0
    %4167 = vmatpush1.bf16.msra.mxu0 %v3902
    %4168 = vmatprep.subr.bf16.mxu0 0
    %4169 = vmatpush1.bf16.msra.mxu0 %v3904
    %4170 = vmatprep.subr.bf16.mxu0 0
    %4171 = vmatpush1.bf16.msra.mxu0 %v3906
    %4172 = vmatprep.subr.bf16.mxu0 0
    %4173 = vmatpush1.bf16.msra.mxu0 %v3908
    %4174 = vmatprep.subr.bf16.mxu0 0
    %4175 = vmatpush1.bf16.msra.mxu0 %v3910
    %4176 = vmatprep.subr.bf16.mxu0 0
    %4177 = vmatpush1.bf16.msra.mxu0 %v3912
    %4178 = vmatprep.subr.bf16.mxu0 0
    %4179 = vmatpush1.bf16.msra.mxu0 %v3914
    %4180 = vmatprep.subr.bf16.mxu0 0
    %4181 = vmatpush1.bf16.msra.mxu0 %v3916
    %4182 = vmatprep.subr.bf16.mxu0 0
    %4183 = vmatpush1.bf16.msra.mxu0 0
    %4184 = vmatprep.subr.bf16.mxu0 0
    %4185 = vmatpush1.bf16.msra.mxu0 0
    %4186 = vmatprep.subr.bf16.mxu0 0
    %4187 = vmatpush1.bf16.msra.mxu0 0
    %4188 = vmatprep.subr.bf16.mxu0 0
    %4189 = vmatpush1.bf16.msra.mxu0 0
    %4190 = vmatprep.subr.bf16.mxu0 0
    %4191 = vmatpush1.bf16.msra.mxu0 0
    %4192 = vmatprep.subr.bf16.mxu0 0
    %4193 = vmatpush1.bf16.msra.mxu0 0
    %4194 = vmatprep.subr.bf16.mxu0 0
    %4195 = vmatpush1.bf16.msra.mxu0 0
    %4196 = vmatprep.subr.bf16.mxu0 0
    %4197 = vmatpush1.bf16.msra.mxu0 0
    %4198 = vmatprep.mubr.bf16.mxu0 0
    %4199 = vmatmul.mubr.bf16.gmra.mrb[0].mxu0 %v1930
    %v4200 = vpop.f32.mrb[0].mxu0
    %v4201 = vadd.f32 %v3976, %v4200
    %v4202 = vpop.f32.mrb[0].mxu0
    %v4203 = vpop.f32.mrb[0].mxu0
    %v4204 = vadd.f32 %v3979, %v4203
    %v4205 = vpop.f32.mrb[0].mxu0
    %4206 = vmatprep.mubr.bf16.mxu0 0
    %4207 = vmatmul.mubr.bf16.gmra.mrb[0].mxu0 %v1933
    %v4208 = vpop.f32.mrb[0].mxu0
    %v4209 = vadd.f32 %v3984, %v4208
    %v4210 = vpop.f32.mrb[0].mxu0
    %v4211 = vpop.f32.mrb[0].mxu0
    %v4212 = vadd.f32 %v3987, %v4211
    %v4213 = vpop.f32.mrb[0].mxu0
    %4214 = vmatprep.mubr.bf16.mxu0 0
    %4215 = vmatmul.mubr.bf16.gmra.mrb[0].mxu0 %v1936
    %v4216 = vpop.f32.mrb[0].mxu0
    %v4217 = vadd.f32 %v3992, %v4216
    %v4218 = vpop.f32.mrb[0].mxu0
    %v4219 = vpop.f32.mrb[0].mxu0
    %v4220 = vadd.f32 %v3995, %v4219
    %v4221 = vpop.f32.mrb[0].mxu0
    %4222 = vmatprep.mubr.bf16.mxu0 0
    %4223 = vmatmul.mubr.bf16.gmra.mrb[0].mxu0 %v1939
    %v4224 = vpop.f32.mrb[0].mxu0
    %v4225 = vadd.f32 %v4000, %v4224
    %v4226 = vpop.f32.mrb[0].mxu0
    %v4227 = vpop.f32.mrb[0].mxu0
    %v4228 = vadd.f32 %v4003, %v4227
    %v4229 = vpop.f32.mrb[0].mxu0
    %4230 = vmatprep.mubr.bf16.mxu0 0
    %4231 = vmatmul.mubr.bf16.gmra.mrb[0].mxu0 %v1942
    %v4232 = vpop.f32.mrb[0].mxu0
    %v4233 = vadd.f32 %v4008, %v4232
    %v4234 = vpop.f32.mrb[0].mxu0
    %v4235 = vpop.f32.mrb[0].mxu0
    %v4236 = vadd.f32 %v4011, %v4235
    %v4237 = vpop.f32.mrb[0].mxu0
    %4238 = vmatprep.mubr.bf16.mxu0 0
    %4239 = vmatmul.mubr.bf16.gmra.mrb[0].mxu0 %v1945
    %v4240 = vpop.f32.mrb[0].mxu0
    %v4241 = vadd.f32 %v4016, %v4240
    %v4242 = vpop.f32.mrb[0].mxu0
    %v4243 = vpop.f32.mrb[0].mxu0
    %v4244 = vadd.f32 %v4019, %v4243
    %v4245 = vpop.f32.mrb[0].mxu0
    %4246 = vmatprep.mubr.bf16.mxu0 0
    %4247 = vmatmul.mubr.bf16.gmra.mrb[0].mxu0 %v1948
    %v4248 = vpop.f32.mrb[0].mxu0
    %v4249 = vadd.f32 %v4024, %v4248
    %v4250 = vpop.f32.mrb[0].mxu0
    %v4251 = vpop.f32.mrb[0].mxu0
    %v4252 = vadd.f32 %v4027, %v4251
    %v4253 = vpop.f32.mrb[0].mxu0
    %4254 = vmatprep.mubr.bf16.mxu0 0
    %4255 = vmatmul.mubr.bf16.gmra.mrb[0].mxu0 %v1951
    %v4256 = vpop.f32.mrb[0].mxu0
    %v4257 = vadd.f32 %v4032, %v4256
    %v4258 = vpop.f32.mrb[0].mxu0
    %v4259 = vpop.f32.mrb[0].mxu0
    %v4260 = vadd.f32 %v4035, %v4259
    %v4261 = vpop.f32.mrb[0].mxu0
    %4262 = vmatprep.mubr.bf16.mxu0 0
    %4263 = vmatmul.mubr.bf16.gmra.mrb[0].mxu0 %v1954
    %v4264 = vpop.f32.mrb[0].mxu0
    %v4265 = vadd.f32 %v4040, %v4264
    %v4266 = vpop.f32.mrb[0].mxu0
    %v4267 = vpop.f32.mrb[0].mxu0
    %v4268 = vadd.f32 %v4043, %v4267
    %v4269 = vpop.f32.mrb[0].mxu0
    %4270 = vmatprep.mubr.bf16.mxu0 0
    %4271 = vmatmul.mubr.bf16.gmra.mrb[0].mxu0 %v1957
    %v4272 = vpop.f32.mrb[0].mxu0
    %v4273 = vadd.f32 %v4048, %v4272
    %v4274 = vpop.f32.mrb[0].mxu0
    %v4275 = vpop.f32.mrb[0].mxu0
    %v4276 = vadd.f32 %v4051, %v4275
    %v4277 = vpop.f32.mrb[0].mxu0
    %4278 = vmatprep.mubr.bf16.mxu0 0
    %4279 = vmatmul.mubr.bf16.gmra.mrb[0].mxu0 %v1960
    %v4280 = vpop.f32.mrb[0].mxu0
    %v4281 = vadd.f32 %v4056, %v4280
    %v4282 = vpop.f32.mrb[0].mxu0
    %v4283 = vpop.f32.mrb[0].mxu0
    %v4284 = vadd.f32 %v4059, %v4283
    %v4285 = vpop.f32.mrb[0].mxu0
    %4286 = vmatprep.mubr.bf16.mxu0 0
    %4287 = vmatmul.mubr.bf16.gmra.mrb[0].mxu0 %v1963
    %v4288 = vpop.f32.mrb[0].mxu0
    %v4289 = vadd.f32 %v4064, %v4288
    %v4290 = vpop.f32.mrb[0].mxu0
    %v4291 = vpop.f32.mrb[0].mxu0
    %v4292 = vadd.f32 %v4067, %v4291
    %v4293 = vpop.f32.mrb[0].mxu0
    %4294 = vmatprep.mubr.bf16.mxu0 0
    %4295 = vmatmul.mubr.bf16.gmra.mrb[0].mxu0 %v1966
    %v4296 = vpop.f32.mrb[0].mxu0
    %v4297 = vadd.f32 %v4072, %v4296
    %v4298 = vpop.f32.mrb[0].mxu0
    %v4299 = vpop.f32.mrb[0].mxu0
    %v4300 = vadd.f32 %v4075, %v4299
    %v4301 = vpop.f32.mrb[0].mxu0
    %4302 = vmatprep.mubr.bf16.mxu0 0
    %4303 = vmatmul.mubr.bf16.gmra.mrb[0].mxu0 %v1969
    %v4304 = vpop.f32.mrb[0].mxu0
    %v4305 = vadd.f32 %v4080, %v4304
    %v4306 = vpop.f32.mrb[0].mxu0
    %v4307 = vpop.f32.mrb[0].mxu0
    %v4308 = vadd.f32 %v4083, %v4307
    %v4309 = vpop.f32.mrb[0].mxu0
    %4310 = vmatprep.mubr.bf16.mxu0 0
    %4311 = vmatmul.mubr.bf16.gmra.mrb[0].mxu0 %v1972
    %v4312 = vpop.f32.mrb[0].mxu0
    %v4313 = vadd.f32 %v4088, %v4312
    %v4314 = vpop.f32.mrb[0].mxu0
    %v4315 = vpop.f32.mrb[0].mxu0
    %v4316 = vadd.f32 %v4091, %v4315
    %v4317 = vpop.f32.mrb[0].mxu0
    %4318 = vmatprep.mubr.bf16.mxu0 0
    %4319 = vmatmul.mubr.bf16.gmra.mrb[0].mxu0 %v1975
    %v4320 = vpop.f32.mrb[0].mxu0
    %v4321 = vadd.f32 %v4096, %v4320
    %v4322 = vpop.f32.mrb[0].mxu0
    %v4323 = vpop.f32.mrb[0].mxu0
    %v4324 = vadd.f32 %v4099, %v4323
    %v4325 = vpop.f32.mrb[0].mxu0
    %4326 = vmatprep.mubr.bf16.mxu0 0
    %4327 = vmatmul.mubr.bf16.gmra.mrb[0].mxu0 %v1978
    %v4328 = vpop.f32.mrb[0].mxu0
    %v4329 = vadd.f32 %v4104, %v4328
    %v4330 = vpop.f32.mrb[0].mxu0
    %v4331 = vpop.f32.mrb[0].mxu0
    %v4332 = vadd.f32 %v4107, %v4331
    %v4333 = vpop.f32.mrb[0].mxu0
    %4334 = vmatprep.mubr.bf16.mxu0 0
    %4335 = vmatmul.mubr.bf16.gmra.mrb[0].mxu0 %v1981
    %v4336 = vpop.f32.mrb[0].mxu0
    %v4337 = vadd.f32 %v4112, %v4336
    %v4338 = vpop.f32.mrb[0].mxu0
    %v4339 = vpop.f32.mrb[0].mxu0
    %v4340 = vadd.f32 %v4115, %v4339
    %v4341 = vpop.f32.mrb[0].mxu0
    %4342 = vmatprep.mubr.bf16.mxu0 0
    %4343 = vmatmul.mubr.bf16.gmra.mrb[0].mxu0 %v1984
    %v4344 = vpop.f32.mrb[0].mxu0
    %v4345 = vadd.f32 %v4120, %v4344
    %v4346 = vpop.f32.mrb[0].mxu0
    %v4347 = vpop.f32.mrb[0].mxu0
    %v4348 = vadd.f32 %v4123, %v4347
    %v4349 = vpop.f32.mrb[0].mxu0
    %4350 = vmatprep.mubr.bf16.mxu0 0
    %4351 = vmatmul.mubr.bf16.gmra.mrb[0].mxu0 %v1987
    %v4352 = vpop.f32.mrb[0].mxu0
    %v4353 = vadd.f32 %v4128, %v4352
    %v4354 = vpop.f32.mrb[0].mxu0
    %v4355 = vpop.f32.mrb[0].mxu0
    %v4356 = vadd.f32 %v4131, %v4355
    %v4357 = vpop.f32.mrb[0].mxu0
    %4358 = vmatprep.mubr.bf16.mxu0 0
    %4359 = vmatmul.mubr.bf16.gmra.mrb[0].mxu0 %v1990
    %v4360 = vpop.f32.mrb[0].mxu0
    %v4361 = vadd.f32 %v4136, %v4360
    %v4362 = vpop.f32.mrb[0].mxu0
    %v4363 = vpop.f32.mrb[0].mxu0
    %v4364 = vadd.f32 %v4139, %v4363
    %v4365 = vpop.f32.mrb[0].mxu0
    %4366 = vmatprep.mubr.bf16.mxu0 0
    %4367 = vmatmul.mubr.bf16.gmra.mrb[0].mxu0 %v1993
    %v4368 = vpop.f32.mrb[0].mxu0
    %v4369 = vadd.f32 %v4144, %v4368
    %v4370 = vpop.f32.mrb[0].mxu0
    %v4371 = vpop.f32.mrb[0].mxu0
    %v4372 = vadd.f32 %v4147, %v4371
    %v4373 = vpop.f32.mrb[0].mxu0
    %4374 = vmatprep.mubr.bf16.mxu0 0
    %4375 = vmatmul.mubr.bf16.gmra.mrb[0].mxu0 %v1996
    %v4376 = vpop.f32.mrb[0].mxu0
    %v4377 = vadd.f32 %v4152, %v4376
    %v4378 = vpop.f32.mrb[0].mxu0
    %v4379 = vpop.f32.mrb[0].mxu0
    %v4380 = vadd.f32 %v4155, %v4379
    %v4381 = vpop.f32.mrb[0].mxu0
    %4382 = vmatprep.mubr.bf16.mxu0 0
    %4383 = vmatmul.mubr.bf16.gmra.mrb[0].mxu0 %v1999
    %v4384 = vpop.f32.mrb[0].mxu0
    %v4385 = vadd.f32 %v4160, %v4384
    %v4386 = vpop.f32.mrb[0].mxu0
    %v4387 = vpop.f32.mrb[0].mxu0
    %v4388 = vadd.f32 %v4163, %v4387
    %v4389 = vpop.f32.mrb[0].mxu0
    %4390 = vdwg.mxu0
    %v4391 = vld [vmem:[%s7] sm:$0xff]
    %v4392 = vld [vmem:[%s7 + $0x8] sm:$0xff]
    %v4393 = vld [vmem:[%s7 + $0x10] sm:$0xff]
    %v4394 = vld [vmem:[%s7 + $0x18] sm:$0xff]
    %v4395 = vld [vmem:[%s7 + $0x20] sm:$0xff]
    %v4396 = vld [vmem:[%s7 + $0x28] sm:$0xff]
    %v4397 = vld [vmem:[%s7 + $0x30] sm:$0xff]
    %v4398 = vld [vmem:[%s7 + $0x38] sm:$0xff]
    %v4399 = vld [vmem:[%s7 + $0x40] sm:$0xff]
    %v4400 = vld [vmem:[%s7 + $0x48] sm:$0xff]
    %v4401 = vld [vmem:[%s7 + $0x50] sm:$0xff]
    %v4402 = vld [vmem:[%s7 + $0x58] sm:$0xff]
    %4451 = vrot.lane.b32.xlu0 %v3323, 96
    %v4452 = vpop.permute.xlu0 %4451
    %4453 = vrot.lane.b32.xlu0 %v3324, 96
    %v4454 = vpop.permute.xlu0 %4453
    %4455 = vrot.lane.b32.xlu0 %v3325, 96
    %v4456 = vpop.permute.xlu0 %4455
    %4457 = vrot.lane.b32.xlu0 %v3326, 96
    %v4458 = vpop.permute.xlu0 %4457
    %4459 = vrot.lane.b32.xlu0 %v3327, 96
    %v4460 = vpop.permute.xlu0 %4459
    %4461 = vrot.lane.b32.xlu0 %v3328, 96
    %v4462 = vpop.permute.xlu0 %4461
    %4463 = vrot.lane.b32.xlu0 %v3329, 96
    %v4464 = vpop.permute.xlu0 %4463
    %4465 = vrot.lane.b32.xlu0 %v3330, 96
    %v4466 = vpop.permute.xlu0 %4465
    %4467 = vrot.lane.b32.xlu0 %v3331, 96
    %v4468 = vpop.permute.xlu0 %4467
    %4469 = vrot.lane.b32.xlu0 %v3332, 96
    %v4470 = vpop.permute.xlu0 %4469
    %4471 = vrot.lane.b32.xlu0 %v3333, 96
    %v4472 = vpop.permute.xlu0 %4471
    %4473 = vrot.lane.b32.xlu0 %v3334, 96
    %v4474 = vpop.permute.xlu0 %4473
    %4475 = vrot.lane.b32.xlu0 %v3335, 96
    %v4476 = vpop.permute.xlu0 %4475
    %4477 = vrot.lane.b32.xlu0 %v3336, 96
    %v4478 = vpop.permute.xlu0 %4477
    %4479 = vrot.lane.b32.xlu0 %v3337, 96
    %v4480 = vpop.permute.xlu0 %4479
    %4481 = vrot.lane.b32.xlu0 %v3338, 96
    %v4482 = vpop.permute.xlu0 %4481
    %4483 = vrot.lane.b32.xlu0 %v3339, 96
    %v4484 = vpop.permute.xlu0 %4483
    %4485 = vrot.lane.b32.xlu0 %v3340, 96
    %v4486 = vpop.permute.xlu0 %4485
    %4487 = vrot.lane.b32.xlu0 %v3341, 96
    %v4488 = vpop.permute.xlu0 %4487
    %4489 = vrot.lane.b32.xlu0 %v3342, 96
    %v4490 = vpop.permute.xlu0 %4489
    %4491 = vrot.lane.b32.xlu0 %v3343, 96
    %v4492 = vpop.permute.xlu0 %4491
    %4493 = vrot.lane.b32.xlu0 %v3344, 96
    %v4494 = vpop.permute.xlu0 %4493
    %4495 = vrot.lane.b32.xlu0 %v3345, 96
    %v4496 = vpop.permute.xlu0 %4495
    %4497 = vrot.lane.b32.xlu0 %v3346, 96
    %v4498 = vpop.permute.xlu0 %4497
    %4499 = vrot.lane.b32.xlu0 %v3347, 96
    %v4500 = vpop.permute.xlu0 %4499
    %4501 = vrot.lane.b32.xlu0 %v3348, 96
    %v4502 = vpop.permute.xlu0 %4501
    %4503 = vrot.lane.b32.xlu0 %v3349, 96
    %v4504 = vpop.permute.xlu0 %4503
    %4505 = vrot.lane.b32.xlu0 %v3350, 96
    %v4506 = vpop.permute.xlu0 %4505
    %4507 = vrot.lane.b32.xlu0 %v3351, 96
    %v4508 = vpop.permute.xlu0 %4507
    %4509 = vrot.lane.b32.xlu0 %v3352, 96
    %v4510 = vpop.permute.xlu0 %4509
    %4511 = vrot.lane.b32.xlu0 %v3353, 96
    %v4512 = vpop.permute.xlu0 %4511
    %4513 = vrot.lane.b32.xlu0 %v3354, 96
    %v4514 = vpop.permute.xlu0 %4513
    %4515 = vrot.lane.b32.xlu0 %v3355, 96
    %v4516 = vpop.permute.xlu0 %4515
    %4517 = vrot.lane.b32.xlu0 %v3356, 96
    %v4518 = vpop.permute.xlu0 %4517
    %4519 = vrot.lane.b32.xlu0 %v3357, 96
    %v4520 = vpop.permute.xlu0 %4519
    %4521 = vrot.lane.b32.xlu0 %v3358, 96
    %v4522 = vpop.permute.xlu0 %4521
    %4523 = vrot.lane.b32.xlu0 %v3359, 96
    %v4524 = vpop.permute.xlu0 %4523
    %4525 = vrot.lane.b32.xlu0 %v3360, 96
    %v4526 = vpop.permute.xlu0 %4525
    %4527 = vrot.lane.b32.xlu0 %v3361, 96
    %v4528 = vpop.permute.xlu0 %4527
    %4529 = vrot.lane.b32.xlu0 %v3362, 96
    %v4530 = vpop.permute.xlu0 %4529
    %4531 = vrot.lane.b32.xlu0 %v3363, 96
    %v4532 = vpop.permute.xlu0 %4531
    %4533 = vrot.lane.b32.xlu0 %v3364, 96
    %v4534 = vpop.permute.xlu0 %4533
    %4535 = vrot.lane.b32.xlu0 %v3365, 96
    %v4536 = vpop.permute.xlu0 %4535
    %4537 = vrot.lane.b32.xlu0 %v3366, 96
    %v4538 = vpop.permute.xlu0 %4537
    %4539 = vrot.lane.b32.xlu0 %v3367, 96
    %v4540 = vpop.permute.xlu0 %4539
    %4541 = vrot.lane.b32.xlu0 %v3368, 96
    %v4542 = vpop.permute.xlu0 %4541
    %4543 = vrot.lane.b32.xlu0 %v3369, 96
    %v4544 = vpop.permute.xlu0 %4543
    %4545 = vrot.lane.b32.xlu0 %v3370, 96
    %v4546 = vpop.permute.xlu0 %4545
    %v4547 = vsel %vm332, %v4452, 0
    %v4549 = vsel %vm332, %v4454, 0
    %v4551 = vsel %vm332, %v4456, 0
    %v4553 = vsel %vm332, %v4458, 0
    %v4555 = vsel %vm332, %v4460, 0
    %v4557 = vsel %vm332, %v4462, 0
    %v4559 = vsel %vm332, %v4464, 0
    %v4561 = vsel %vm332, %v4466, 0
    %v4563 = vsel %vm332, %v4468, 0
    %v4565 = vsel %vm332, %v4470, 0
    %v4567 = vsel %vm332, %v4472, 0
    %v4569 = vsel %vm332, %v4474, 0
    %v4571 = vsel %vm332, %v4476, 0
    %v4573 = vsel %vm332, %v4478, 0
    %v4575 = vsel %vm332, %v4480, 0
    %v4577 = vsel %vm332, %v4482, 0
    %v4579 = vsel %vm332, %v4484, 0
    %v4581 = vsel %vm332, %v4486, 0
    %v4583 = vsel %vm332, %v4488, 0
    %v4585 = vsel %vm332, %v4490, 0
    %v4587 = vsel %vm332, %v4492, 0
    %v4589 = vsel %vm332, %v4494, 0
    %v4591 = vsel %vm332, %v4496, 0
    %v4593 = vsel %vm332, %v4498, 0
    %v4595 = vsel %vm332, %v4500, 0
    %v4597 = vsel %vm332, %v4502, 0
    %v4599 = vsel %vm332, %v4504, 0
    %v4601 = vsel %vm332, %v4506, 0
    %v4603 = vsel %vm332, %v4508, 0
    %v4605 = vsel %vm332, %v4510, 0
    %v4607 = vsel %vm332, %v4512, 0
    %v4609 = vsel %vm332, %v4514, 0
    %v4611 = vsel %vm332, %v4516, 0
    %v4613 = vsel %vm332, %v4518, 0
    %v4615 = vsel %vm332, %v4520, 0
    %v4617 = vsel %vm332, %v4522, 0
    %v4619 = vsel %vm332, %v4524, 0
    %v4621 = vsel %vm332, %v4526, 0
    %v4623 = vsel %vm332, %v4528, 0
    %v4625 = vsel %vm332, %v4530, 0
    %v4627 = vsel %vm332, %v4532, 0
    %v4629 = vsel %vm332, %v4534, 0
    %v4631 = vsel %vm332, %v4536, 0
    %v4633 = vsel %vm332, %v4538, 0
    %v4635 = vsel %vm332, %v4540, 0
    %v4637 = vsel %vm332, %v4542, 0
    %v4639 = vsel %vm332, %v4544, 0
    %v4641 = vsel %vm332, %v4546, 0
    %4643 = vmatprep.subr.mxu0 0.0
    %4644 = vmatpush1.msra.mxu0 %v4395
    %4645 = vmatprep.subr.mxu0 0.0
    %4646 = vmatpush1.msra.mxu0 %v4396
    %4647 = vmatprep.subr.mxu0 0.0
    %4648 = vmatpush1.msra.mxu0 %v4397
    %4649 = vmatprep.subr.mxu0 0.0
    %4650 = vmatpush1.msra.mxu0 %v4398
    %4651 = vmatprep.subr.mxu0 0.0
    %4652 = vmatpush1.msra.mxu0 0.0
    %4653 = vmatprep.subr.mxu0 0.0
    %4654 = vmatpush1.msra.mxu0 0.0
    %4655 = vmatprep.subr.mxu0 0.0
    %4656 = vmatpush1.msra.mxu0 0.0
    %4657 = vmatprep.subr.mxu0 0.0
    %4658 = vmatpush1.msra.mxu0 0.0
    %4659 = vmatprep.subr.mxu0 0.0
    %4660 = vmatpush1.msra.mxu0 0.0
    %4661 = vmatprep.subr.mxu0 0.0
    %4662 = vmatpush1.msra.mxu0 0.0
    %4663 = vmatprep.subr.mxu0 0.0
    %4664 = vmatpush1.msra.mxu0 0.0
    %4665 = vmatprep.subr.mxu0 0.0
    %4666 = vmatpush1.msra.mxu0 0.0
    %4667 = vmatprep.subr.mxu0 0.0
    %4668 = vmatpush1.msra.mxu0 0.0
    %4669 = vmatprep.subr.mxu0 0.0
    %4670 = vmatpush1.msra.mxu0 0.0
    %4671 = vmatprep.subr.mxu0 0.0
    %4672 = vmatpush1.msra.mxu0 0.0
    %4673 = vmatprep.subr.mxu0 0.0
    %4674 = vmatpush1.msra.mxu0 0.0
    %4675 = vmatprep.subr.mxu0 0.0
    %4676 = vmatpush1.msra.mxu0 0.0
    %4677 = vmatprep.subr.mxu0 0.0
    %4678 = vmatpush1.msra.mxu0 0.0
    %4679 = vmatprep.subr.mxu0 0.0
    %4680 = vmatpush1.msra.mxu0 0.0
    %4681 = vmatprep.subr.mxu0 0.0
    %4682 = vmatpush1.msra.mxu0 0.0
    %4683 = vmatprep.subr.mxu0 0.0
    %4684 = vmatpush1.msra.mxu0 0.0
    %4685 = vmatprep.subr.mxu0 0.0
    %4686 = vmatpush1.msra.mxu0 0.0
    %4687 = vmatprep.subr.mxu0 0.0
    %4688 = vmatpush1.msra.mxu0 0.0
    %4689 = vmatprep.subr.mxu0 0.0
    %4690 = vmatpush1.msra.mxu0 0.0
    %4691 = vmatprep.subr.mxu0 0.0
    %4692 = vmatpush1.msra.mxu0 0.0
    %4693 = vmatprep.subr.mxu0 0.0
    %4694 = vmatpush1.msra.mxu0 0.0
    %4695 = vmatprep.subr.mxu0 0.0
    %4696 = vmatpush1.msra.mxu0 0.0
    %4697 = vmatprep.subr.mxu0 0.0
    %4698 = vmatpush1.msra.mxu0 0.0
    %4699 = vmatprep.subr.mxu0 0.0
    %4700 = vmatpush1.msra.mxu0 0.0
    %4701 = vmatprep.subr.mxu0 0.0
    %4702 = vmatpush1.msra.mxu0 0.0
    %4703 = vmatprep.subr.mxu0 0.0
    %4704 = vmatpush1.msra.mxu0 0.0
    %4705 = vmatprep.subr.mxu0 0.0
    %4706 = vmatpush1.msra.mxu0 0.0
    %4707 = vmatprep.mubr.f32.mxu0 0.0
    %4708 = vmatmul.mubr.f32.gmra.mrb[0].mxu0 %v4547
    %v4709 = vpop.f32.mrb[0].mxu0
    %v4710 = vadd.f32 0.0, %v4709
    %v4711 = vpop.f32.mrb[0].mxu0
    %4712 = vmatprep.mubr.f32.mxu0 0.0
    %4713 = vmatmul.mubr.f32.gmra.mrb[0].mxu0 %v4549
    %v4714 = vpop.f32.mrb[0].mxu0
    %v4715 = vadd.f32 0.0, %v4714
    %v4716 = vpop.f32.mrb[0].mxu0
    %4717 = vmatprep.mubr.f32.mxu0 0.0
    %4718 = vmatmul.mubr.f32.gmra.mrb[0].mxu0 %v4551
    %v4719 = vpop.f32.mrb[0].mxu0
    %v4720 = vadd.f32 0.0, %v4719
    %v4721 = vpop.f32.mrb[0].mxu0
    %4722 = vmatprep.mubr.f32.mxu0 0.0
    %4723 = vmatmul.mubr.f32.gmra.mrb[0].mxu0 %v4553
    %v4724 = vpop.f32.mrb[0].mxu0
    %v4725 = vadd.f32 0.0, %v4724
    %v4726 = vpop.f32.mrb[0].mxu0
    %4727 = vmatprep.mubr.f32.mxu0 0.0
    %4728 = vmatmul.mubr.f32.gmra.mrb[0].mxu0 %v4555
    %v4729 = vpop.f32.mrb[0].mxu0
    %v4730 = vadd.f32 0.0, %v4729
    %v4731 = vpop.f32.mrb[0].mxu0
    %4732 = vmatprep.mubr.f32.mxu0 0.0
    %4733 = vmatmul.mubr.f32.gmra.mrb[0].mxu0 %v4557
    %v4734 = vpop.f32.mrb[0].mxu0
    %v4735 = vadd.f32 0.0, %v4734
    %v4736 = vpop.f32.mrb[0].mxu0
    %4737 = vmatprep.mubr.f32.mxu0 0.0
    %4738 = vmatmul.mubr.f32.gmra.mrb[0].mxu0 %v4559
    %v4739 = vpop.f32.mrb[0].mxu0
    %v4740 = vadd.f32 0.0, %v4739
    %v4741 = vpop.f32.mrb[0].mxu0
    %4742 = vmatprep.mubr.f32.mxu0 0.0
    %4743 = vmatmul.mubr.f32.gmra.mrb[0].mxu0 %v4561
    %v4744 = vpop.f32.mrb[0].mxu0
    %v4745 = vadd.f32 0.0, %v4744
    %v4746 = vpop.f32.mrb[0].mxu0
    %4747 = vmatprep.mubr.f32.mxu0 0.0
    %4748 = vmatmul.mubr.f32.gmra.mrb[0].mxu0 %v4563
    %v4749 = vpop.f32.mrb[0].mxu0
    %v4750 = vadd.f32 0.0, %v4749
    %v4751 = vpop.f32.mrb[0].mxu0
    %4752 = vmatprep.mubr.f32.mxu0 0.0
    %4753 = vmatmul.mubr.f32.gmra.mrb[0].mxu0 %v4565
    %v4754 = vpop.f32.mrb[0].mxu0
    %v4755 = vadd.f32 0.0, %v4754
    %v4756 = vpop.f32.mrb[0].mxu0
    %4757 = vmatprep.mubr.f32.mxu0 0.0
    %4758 = vmatmul.mubr.f32.gmra.mrb[0].mxu0 %v4567
    %v4759 = vpop.f32.mrb[0].mxu0
    %v4760 = vadd.f32 0.0, %v4759
    %v4761 = vpop.f32.mrb[0].mxu0
    %4762 = vmatprep.mubr.f32.mxu0 0.0
    %4763 = vmatmul.mubr.f32.gmra.mrb[0].mxu0 %v4569
    %v4764 = vpop.f32.mrb[0].mxu0
    %v4765 = vadd.f32 0.0, %v4764
    %v4766 = vpop.f32.mrb[0].mxu0
    %4767 = vmatprep.mubr.f32.mxu0 0.0
    %4768 = vmatmul.mubr.f32.gmra.mrb[0].mxu0 %v4571
    %v4769 = vpop.f32.mrb[0].mxu0
    %v4770 = vadd.f32 0.0, %v4769
    %v4771 = vpop.f32.mrb[0].mxu0
    %4772 = vmatprep.mubr.f32.mxu0 0.0
    %4773 = vmatmul.mubr.f32.gmra.mrb[0].mxu0 %v4573
    %v4774 = vpop.f32.mrb[0].mxu0
    %v4775 = vadd.f32 0.0, %v4774
    %v4776 = vpop.f32.mrb[0].mxu0
    %4777 = vmatprep.mubr.f32.mxu0 0.0
    %4778 = vmatmul.mubr.f32.gmra.mrb[0].mxu0 %v4575
    %v4779 = vpop.f32.mrb[0].mxu0
    %v4780 = vadd.f32 0.0, %v4779
    %v4781 = vpop.f32.mrb[0].mxu0
    %4782 = vmatprep.mubr.f32.mxu0 0.0
    %4783 = vmatmul.mubr.f32.gmra.mrb[0].mxu0 %v4577
    %v4784 = vpop.f32.mrb[0].mxu0
    %v4785 = vadd.f32 0.0, %v4784
    %v4786 = vpop.f32.mrb[0].mxu0
    %4787 = vmatprep.mubr.f32.mxu0 0.0
    %4788 = vmatmul.mubr.f32.gmra.mrb[0].mxu0 %v4579
    %v4789 = vpop.f32.mrb[0].mxu0
    %v4790 = vadd.f32 0.0, %v4789
    %v4791 = vpop.f32.mrb[0].mxu0
    %4792 = vmatprep.mubr.f32.mxu0 0.0
    %4793 = vmatmul.mubr.f32.gmra.mrb[0].mxu0 %v4581
    %v4794 = vpop.f32.mrb[0].mxu0
    %v4795 = vadd.f32 0.0, %v4794
    %v4796 = vpop.f32.mrb[0].mxu0
    %4797 = vmatprep.mubr.f32.mxu0 0.0
    %4798 = vmatmul.mubr.f32.gmra.mrb[0].mxu0 %v4583
    %v4799 = vpop.f32.mrb[0].mxu0
    %v4800 = vadd.f32 0.0, %v4799
    %v4801 = vpop.f32.mrb[0].mxu0
    %4802 = vmatprep.mubr.f32.mxu0 0.0
    %4803 = vmatmul.mubr.f32.gmra.mrb[0].mxu0 %v4585
    %v4804 = vpop.f32.mrb[0].mxu0
    %v4805 = vadd.f32 0.0, %v4804
    %v4806 = vpop.f32.mrb[0].mxu0
    %4807 = vmatprep.mubr.f32.mxu0 0.0
    %4808 = vmatmul.mubr.f32.gmra.mrb[0].mxu0 %v4587
    %v4809 = vpop.f32.mrb[0].mxu0
    %v4810 = vadd.f32 0.0, %v4809
    %v4811 = vpop.f32.mrb[0].mxu0
    %4812 = vmatprep.mubr.f32.mxu0 0.0
    %4813 = vmatmul.mubr.f32.gmra.mrb[0].mxu0 %v4589
    %v4814 = vpop.f32.mrb[0].mxu0
    %v4815 = vadd.f32 0.0, %v4814
    %v4816 = vpop.f32.mrb[0].mxu0
    %4817 = vmatprep.mubr.f32.mxu0 0.0
    %4818 = vmatmul.mubr.f32.gmra.mrb[0].mxu0 %v4591
    %v4819 = vpop.f32.mrb[0].mxu0
    %v4820 = vadd.f32 0.0, %v4819
    %v4821 = vpop.f32.mrb[0].mxu0
    %4822 = vmatprep.mubr.f32.mxu0 0.0
    %4823 = vmatmul.mubr.f32.gmra.mrb[0].mxu0 %v4593
    %v4824 = vpop.f32.mrb[0].mxu0
    %v4825 = vadd.f32 0.0, %v4824
    %v4826 = vpop.f32.mrb[0].mxu0
    %4827 = vmatprep.mubr.f32.mxu0 0.0
    %4828 = vmatmul.mubr.f32.gmra.mrb[0].mxu0 %v4595
    %v4829 = vpop.f32.mrb[0].mxu0
    %v4830 = vadd.f32 0.0, %v4829
    %v4831 = vpop.f32.mrb[0].mxu0
    %4832 = vmatprep.mubr.f32.mxu0 0.0
    %4833 = vmatmul.mubr.f32.gmra.mrb[0].mxu0 %v4597
    %v4834 = vpop.f32.mrb[0].mxu0
    %v4835 = vadd.f32 0.0, %v4834
    %v4836 = vpop.f32.mrb[0].mxu0
    %4837 = vmatprep.mubr.f32.mxu0 0.0
    %4838 = vmatmul.mubr.f32.gmra.mrb[0].mxu0 %v4599
    %v4839 = vpop.f32.mrb[0].mxu0
    %v4840 = vadd.f32 0.0, %v4839
    %v4841 = vpop.f32.mrb[0].mxu0
    %4842 = vmatprep.mubr.f32.mxu0 0.0
    %4843 = vmatmul.mubr.f32.gmra.mrb[0].mxu0 %v4601
    %v4844 = vpop.f32.mrb[0].mxu0
    %v4845 = vadd.f32 0.0, %v4844
    %v4846 = vpop.f32.mrb[0].mxu0
    %4847 = vmatprep.mubr.f32.mxu0 0.0
    %4848 = vmatmul.mubr.f32.gmra.mrb[0].mxu0 %v4603
    %v4849 = vpop.f32.mrb[0].mxu0
    %v4850 = vadd.f32 0.0, %v4849
    %v4851 = vpop.f32.mrb[0].mxu0
    %4852 = vmatprep.mubr.f32.mxu0 0.0
    %4853 = vmatmul.mubr.f32.gmra.mrb[0].mxu0 %v4605
    %v4854 = vpop.f32.mrb[0].mxu0
    %v4855 = vadd.f32 0.0, %v4854
    %v4856 = vpop.f32.mrb[0].mxu0
    %4857 = vmatprep.mubr.f32.mxu0 0.0
    %4858 = vmatmul.mubr.f32.gmra.mrb[0].mxu0 %v4607
    %v4859 = vpop.f32.mrb[0].mxu0
    %v4860 = vadd.f32 0.0, %v4859
    %v4861 = vpop.f32.mrb[0].mxu0
    %4862 = vmatprep.mubr.f32.mxu0 0.0
    %4863 = vmatmul.mubr.f32.gmra.mrb[0].mxu0 %v4609
    %v4864 = vpop.f32.mrb[0].mxu0
    %v4865 = vadd.f32 0.0, %v4864
    %v4866 = vpop.f32.mrb[0].mxu0
    %4867 = vmatprep.mubr.f32.mxu0 0.0
    %4868 = vmatmul.mubr.f32.gmra.mrb[0].mxu0 %v4611
    %v4869 = vpop.f32.mrb[0].mxu0
    %v4870 = vadd.f32 0.0, %v4869
    %v4871 = vpop.f32.mrb[0].mxu0
    %4872 = vmatprep.mubr.f32.mxu0 0.0
    %4873 = vmatmul.mubr.f32.gmra.mrb[0].mxu0 %v4613
    %v4874 = vpop.f32.mrb[0].mxu0
    %v4875 = vadd.f32 0.0, %v4874
    %v4876 = vpop.f32.mrb[0].mxu0
    %4877 = vmatprep.mubr.f32.mxu0 0.0
    %4878 = vmatmul.mubr.f32.gmra.mrb[0].mxu0 %v4615
    %v4879 = vpop.f32.mrb[0].mxu0
    %v4880 = vadd.f32 0.0, %v4879
    %v4881 = vpop.f32.mrb[0].mxu0
    %4882 = vmatprep.mubr.f32.mxu0 0.0
    %4883 = vmatmul.mubr.f32.gmra.mrb[0].mxu0 %v4617
    %v4884 = vpop.f32.mrb[0].mxu0
    %v4885 = vadd.f32 0.0, %v4884
    %v4886 = vpop.f32.mrb[0].mxu0
    %4887 = vmatprep.mubr.f32.mxu0 0.0
    %4888 = vmatmul.mubr.f32.gmra.mrb[0].mxu0 %v4619
    %v4889 = vpop.f32.mrb[0].mxu0
    %v4890 = vadd.f32 0.0, %v4889
    %v4891 = vpop.f32.mrb[0].mxu0
    %4892 = vmatprep.mubr.f32.mxu0 0.0
    %4893 = vmatmul.mubr.f32.gmra.mrb[0].mxu0 %v4621
    %v4894 = vpop.f32.mrb[0].mxu0
    %v4895 = vadd.f32 0.0, %v4894
    %v4896 = vpop.f32.mrb[0].mxu0
    %4897 = vmatprep.mubr.f32.mxu0 0.0
    %4898 = vmatmul.mubr.f32.gmra.mrb[0].mxu0 %v4623
    %v4899 = vpop.f32.mrb[0].mxu0
    %v4900 = vadd.f32 0.0, %v4899
    %v4901 = vpop.f32.mrb[0].mxu0
    %4902 = vmatprep.mubr.f32.mxu0 0.0
    %4903 = vmatmul.mubr.f32.gmra.mrb[0].mxu0 %v4625
    %v4904 = vpop.f32.mrb[0].mxu0
    %v4905 = vadd.f32 0.0, %v4904
    %v4906 = vpop.f32.mrb[0].mxu0
    %4907 = vmatprep.mubr.f32.mxu0 0.0
    %4908 = vmatmul.mubr.f32.gmra.mrb[0].mxu0 %v4627
    %v4909 = vpop.f32.mrb[0].mxu0
    %v4910 = vadd.f32 0.0, %v4909
    %v4911 = vpop.f32.mrb[0].mxu0
    %4912 = vmatprep.mubr.f32.mxu0 0.0
    %4913 = vmatmul.mubr.f32.gmra.mrb[0].mxu0 %v4629
    %v4914 = vpop.f32.mrb[0].mxu0
    %v4915 = vadd.f32 0.0, %v4914
    %v4916 = vpop.f32.mrb[0].mxu0
    %4917 = vmatprep.mubr.f32.mxu0 0.0
    %4918 = vmatmul.mubr.f32.gmra.mrb[0].mxu0 %v4631
    %v4919 = vpop.f32.mrb[0].mxu0
    %v4920 = vadd.f32 0.0, %v4919
    %v4921 = vpop.f32.mrb[0].mxu0
    %4922 = vmatprep.mubr.f32.mxu0 0.0
    %4923 = vmatmul.mubr.f32.gmra.mrb[0].mxu0 %v4633
    %v4924 = vpop.f32.mrb[0].mxu0
    %v4925 = vadd.f32 0.0, %v4924
    %v4926 = vpop.f32.mrb[0].mxu0
    %4927 = vmatprep.mubr.f32.mxu0 0.0
    %4928 = vmatmul.mubr.f32.gmra.mrb[0].mxu0 %v4635
    %v4929 = vpop.f32.mrb[0].mxu0
    %v4930 = vadd.f32 0.0, %v4929
    %v4931 = vpop.f32.mrb[0].mxu0
    %4932 = vmatprep.mubr.f32.mxu0 0.0
    %4933 = vmatmul.mubr.f32.gmra.mrb[0].mxu0 %v4637
    %v4934 = vpop.f32.mrb[0].mxu0
    %v4935 = vadd.f32 0.0, %v4934
    %v4936 = vpop.f32.mrb[0].mxu0
    %4937 = vmatprep.mubr.f32.mxu0 0.0
    %4938 = vmatmul.mubr.f32.gmra.mrb[0].mxu0 %v4639
    %v4939 = vpop.f32.mrb[0].mxu0
    %v4940 = vadd.f32 0.0, %v4939
    %v4941 = vpop.f32.mrb[0].mxu0
    %4942 = vmatprep.mubr.f32.mxu0 0.0
    %4943 = vmatmul.mubr.f32.gmra.mrb[0].mxu0 %v4641
    %v4944 = vpop.f32.mrb[0].mxu0
    %v4945 = vadd.f32 0.0, %v4944
    %v4946 = vpop.f32.mrb[0].mxu0
    %4947 = vdwg.mxu0
    %4996 = vrot.lane.b32.xlu0 %v782, 96
    %v4997 = vpop.permute.xlu0 %4996
    %4998 = vrot.lane.b32.xlu0 %v783, 96
    %v4999 = vpop.permute.xlu0 %4998
    %5000 = vrot.lane.b32.xlu0 %v784, 96
    %v5001 = vpop.permute.xlu0 %5000
    %5002 = vrot.lane.b32.xlu0 %v785, 96
    %v5003 = vpop.permute.xlu0 %5002
    %5004 = vrot.lane.b32.xlu0 %v786, 96
    %v5005 = vpop.permute.xlu0 %5004
    %5006 = vrot.lane.b32.xlu0 %v787, 96
    %v5007 = vpop.permute.xlu0 %5006
    %5008 = vrot.lane.b32.xlu0 %v788, 96
    %v5009 = vpop.permute.xlu0 %5008
    %5010 = vrot.lane.b32.xlu0 %v789, 96
    %v5011 = vpop.permute.xlu0 %5010
    %5012 = vrot.lane.b32.xlu0 %v790, 96
    %v5013 = vpop.permute.xlu0 %5012
    %5014 = vrot.lane.b32.xlu0 %v791, 96
    %v5015 = vpop.permute.xlu0 %5014
    %5016 = vrot.lane.b32.xlu0 %v792, 96
    %v5017 = vpop.permute.xlu0 %5016
    %5018 = vrot.lane.b32.xlu0 %v793, 96
    %v5019 = vpop.permute.xlu0 %5018
    %5020 = vrot.lane.b32.xlu0 %v794, 96
    %v5021 = vpop.permute.xlu0 %5020
    %5022 = vrot.lane.b32.xlu0 %v795, 96
    %v5023 = vpop.permute.xlu0 %5022
    %5024 = vrot.lane.b32.xlu0 %v796, 96
    %v5025 = vpop.permute.xlu0 %5024
    %5026 = vrot.lane.b32.xlu0 %v797, 96
    %v5027 = vpop.permute.xlu0 %5026
    %5028 = vrot.lane.b32.xlu0 %v798, 96
    %v5029 = vpop.permute.xlu0 %5028
    %5030 = vrot.lane.b32.xlu0 %v799, 96
    %v5031 = vpop.permute.xlu0 %5030
    %5032 = vrot.lane.b32.xlu0 %v800, 96
    %v5033 = vpop.permute.xlu0 %5032
    %5034 = vrot.lane.b32.xlu0 %v801, 96
    %v5035 = vpop.permute.xlu0 %5034
    %5036 = vrot.lane.b32.xlu0 %v802, 96
    %v5037 = vpop.permute.xlu0 %5036
    %5038 = vrot.lane.b32.xlu0 %v803, 96
    %v5039 = vpop.permute.xlu0 %5038
    %5040 = vrot.lane.b32.xlu0 %v804, 96
    %v5041 = vpop.permute.xlu0 %5040
    %5042 = vrot.lane.b32.xlu0 %v805, 96
    %v5043 = vpop.permute.xlu0 %5042
    %5044 = vrot.lane.b32.xlu0 %v806, 96
    %v5045 = vpop.permute.xlu0 %5044
    %5046 = vrot.lane.b32.xlu0 %v807, 96
    %v5047 = vpop.permute.xlu0 %5046
    %5048 = vrot.lane.b32.xlu0 %v808, 96
    %v5049 = vpop.permute.xlu0 %5048
    %5050 = vrot.lane.b32.xlu0 %v809, 96
    %v5051 = vpop.permute.xlu0 %5050
    %5052 = vrot.lane.b32.xlu0 %v810, 96
    %v5053 = vpop.permute.xlu0 %5052
    %5054 = vrot.lane.b32.xlu0 %v811, 96
    %v5055 = vpop.permute.xlu0 %5054
    %5056 = vrot.lane.b32.xlu0 %v812, 96
    %v5057 = vpop.permute.xlu0 %5056
    %5058 = vrot.lane.b32.xlu0 %v813, 96
    %v5059 = vpop.permute.xlu0 %5058
    %5060 = vrot.lane.b32.xlu0 %v814, 96
    %v5061 = vpop.permute.xlu0 %5060
    %5062 = vrot.lane.b32.xlu0 %v815, 96
    %v5063 = vpop.permute.xlu0 %5062
    %5064 = vrot.lane.b32.xlu0 %v816, 96
    %v5065 = vpop.permute.xlu0 %5064
    %5066 = vrot.lane.b32.xlu0 %v817, 96
    %v5067 = vpop.permute.xlu0 %5066
    %5068 = vrot.lane.b32.xlu0 %v818, 96
    %v5069 = vpop.permute.xlu0 %5068
    %5070 = vrot.lane.b32.xlu0 %v819, 96
    %v5071 = vpop.permute.xlu0 %5070
    %5072 = vrot.lane.b32.xlu0 %v820, 96
    %v5073 = vpop.permute.xlu0 %5072
    %5074 = vrot.lane.b32.xlu0 %v821, 96
    %v5075 = vpop.permute.xlu0 %5074
    %5076 = vrot.lane.b32.xlu0 %v822, 96
    %v5077 = vpop.permute.xlu0 %5076
    %5078 = vrot.lane.b32.xlu0 %v823, 96
    %v5079 = vpop.permute.xlu0 %5078
    %5080 = vrot.lane.b32.xlu0 %v824, 96
    %v5081 = vpop.permute.xlu0 %5080
    %5082 = vrot.lane.b32.xlu0 %v825, 96
    %v5083 = vpop.permute.xlu0 %5082
    %5084 = vrot.lane.b32.xlu0 %v826, 96
    %v5085 = vpop.permute.xlu0 %5084
    %5086 = vrot.lane.b32.xlu0 %v827, 96
    %v5087 = vpop.permute.xlu0 %5086
    %5088 = vrot.lane.b32.xlu0 %v828, 96
    %v5089 = vpop.permute.xlu0 %5088
    %5090 = vrot.lane.b32.xlu0 %v829, 96
    %v5091 = vpop.permute.xlu0 %5090
    %v5092 = vsel %vm332, %v4997, 0
    %v5094 = vsel %vm332, %v4999, 0
    %v5096 = vsel %vm332, %v5001, 0
    %v5098 = vsel %vm332, %v5003, 0
    %v5100 = vsel %vm332, %v5005, 0
    %v5102 = vsel %vm332, %v5007, 0
    %v5104 = vsel %vm332, %v5009, 0
    %v5106 = vsel %vm332, %v5011, 0
    %v5108 = vsel %vm332, %v5013, 0
    %v5110 = vsel %vm332, %v5015, 0
    %v5112 = vsel %vm332, %v5017, 0
    %v5114 = vsel %vm332, %v5019, 0
    %v5116 = vsel %vm332, %v5021, 0
    %v5118 = vsel %vm332, %v5023, 0
    %v5120 = vsel %vm332, %v5025, 0
    %v5122 = vsel %vm332, %v5027, 0
    %v5124 = vsel %vm332, %v5029, 0
    %v5126 = vsel %vm332, %v5031, 0
    %v5128 = vsel %vm332, %v5033, 0
    %v5130 = vsel %vm332, %v5035, 0
    %v5132 = vsel %vm332, %v5037, 0
    %v5134 = vsel %vm332, %v5039, 0
    %v5136 = vsel %vm332, %v5041, 0
    %v5138 = vsel %vm332, %v5043, 0
    %v5140 = vsel %vm332, %v5045, 0
    %v5142 = vsel %vm332, %v5047, 0
    %v5144 = vsel %vm332, %v5049, 0
    %v5146 = vsel %vm332, %v5051, 0
    %v5148 = vsel %vm332, %v5053, 0
    %v5150 = vsel %vm332, %v5055, 0
    %v5152 = vsel %vm332, %v5057, 0
    %v5154 = vsel %vm332, %v5059, 0
    %v5156 = vsel %vm332, %v5061, 0
    %v5158 = vsel %vm332, %v5063, 0
    %v5160 = vsel %vm332, %v5065, 0
    %v5162 = vsel %vm332, %v5067, 0
    %v5164 = vsel %vm332, %v5069, 0
    %v5166 = vsel %vm332, %v5071, 0
    %v5168 = vsel %vm332, %v5073, 0
    %v5170 = vsel %vm332, %v5075, 0
    %v5172 = vsel %vm332, %v5077, 0
    %v5174 = vsel %vm332, %v5079, 0
    %v5176 = vsel %vm332, %v5081, 0
    %v5178 = vsel %vm332, %v5083, 0
    %v5180 = vsel %vm332, %v5085, 0
    %v5182 = vsel %vm332, %v5087, 0
    %v5184 = vsel %vm332, %v5089, 0
    %v5186 = vsel %vm332, %v5091, 0
    %5188 = vmatprep.subr.mxu0 0.0
    %5189 = vmatpush1.msra.mxu0 %v4391
    %5190 = vmatprep.subr.mxu0 0.0
    %5191 = vmatpush1.msra.mxu0 %v4392
    %5192 = vmatprep.subr.mxu0 0.0
    %5193 = vmatpush1.msra.mxu0 %v4393
    %5194 = vmatprep.subr.mxu0 0.0
    %5195 = vmatpush1.msra.mxu0 %v4394
    %5196 = vmatprep.subr.mxu0 0.0
    %5197 = vmatpush1.msra.mxu0 0.0
    %5198 = vmatprep.subr.mxu0 0.0
    %5199 = vmatpush1.msra.mxu0 0.0
    %5200 = vmatprep.subr.mxu0 0.0
    %5201 = vmatpush1.msra.mxu0 0.0
    %5202 = vmatprep.subr.mxu0 0.0
    %5203 = vmatpush1.msra.mxu0 0.0
    %5204 = vmatprep.subr.mxu0 0.0
    %5205 = vmatpush1.msra.mxu0 0.0
    %5206 = vmatprep.subr.mxu0 0.0
    %5207 = vmatpush1.msra.mxu0 0.0
    %5208 = vmatprep.subr.mxu0 0.0
    %5209 = vmatpush1.msra.mxu0 0.0
    %5210 = vmatprep.subr.mxu0 0.0
    %5211 = vmatpush1.msra.mxu0 0.0
    %5212 = vmatprep.subr.mxu0 0.0
    %5213 = vmatpush1.msra.mxu0 0.0
    %5214 = vmatprep.subr.mxu0 0.0
    %5215 = vmatpush1.msra.mxu0 0.0
    %5216 = vmatprep.subr.mxu0 0.0
    %5217 = vmatpush1.msra.mxu0 0.0
    %5218 = vmatprep.subr.mxu0 0.0
    %5219 = vmatpush1.msra.mxu0 0.0
    %5220 = vmatprep.subr.mxu0 0.0
    %5221 = vmatpush1.msra.mxu0 0.0
    %5222 = vmatprep.subr.mxu0 0.0
    %5223 = vmatpush1.msra.mxu0 0.0
    %5224 = vmatprep.subr.mxu0 0.0
    %5225 = vmatpush1.msra.mxu0 0.0
    %5226 = vmatprep.subr.mxu0 0.0
    %5227 = vmatpush1.msra.mxu0 0.0
    %5228 = vmatprep.subr.mxu0 0.0
    %5229 = vmatpush1.msra.mxu0 0.0
    %5230 = vmatprep.subr.mxu0 0.0
    %5231 = vmatpush1.msra.mxu0 0.0
    %5232 = vmatprep.subr.mxu0 0.0
    %5233 = vmatpush1.msra.mxu0 0.0
    %5234 = vmatprep.subr.mxu0 0.0
    %5235 = vmatpush1.msra.mxu0 0.0
    %5236 = vmatprep.subr.mxu0 0.0
    %5237 = vmatpush1.msra.mxu0 0.0
    %5238 = vmatprep.subr.mxu0 0.0
    %5239 = vmatpush1.msra.mxu0 0.0
    %5240 = vmatprep.subr.mxu0 0.0
    %5241 = vmatpush1.msra.mxu0 0.0
    %5242 = vmatprep.subr.mxu0 0.0
    %5243 = vmatpush1.msra.mxu0 0.0
    %5244 = vmatprep.subr.mxu0 0.0
    %5245 = vmatpush1.msra.mxu0 0.0
    %5246 = vmatprep.subr.mxu0 0.0
    %5247 = vmatpush1.msra.mxu0 0.0
    %5248 = vmatprep.subr.mxu0 0.0
    %5249 = vmatpush1.msra.mxu0 0.0
    %5250 = vmatprep.subr.mxu0 0.0
    %5251 = vmatpush1.msra.mxu0 0.0
    %5252 = vmatprep.mubr.f32.mxu0 0.0
    %5253 = vmatmul.mubr.f32.gmra.mrb[0].mxu0 %v5092
    %v5254 = vpop.f32.mrb[0].mxu0
    %v5255 = vadd.f32 %v4710, %v5254
    %v5256 = vpop.f32.mrb[0].mxu0
    %5257 = vmatprep.mubr.f32.mxu0 0.0
    %5258 = vmatmul.mubr.f32.gmra.mrb[0].mxu0 %v5094
    %v5259 = vpop.f32.mrb[0].mxu0
    %v5260 = vadd.f32 %v4715, %v5259
    %v5261 = vpop.f32.mrb[0].mxu0
    %5262 = vmatprep.mubr.f32.mxu0 0.0
    %5263 = vmatmul.mubr.f32.gmra.mrb[0].mxu0 %v5096
    %v5264 = vpop.f32.mrb[0].mxu0
    %v5265 = vadd.f32 %v4720, %v5264
    %v5266 = vpop.f32.mrb[0].mxu0
    %5267 = vmatprep.mubr.f32.mxu0 0.0
    %5268 = vmatmul.mubr.f32.gmra.mrb[0].mxu0 %v5098
    %v5269 = vpop.f32.mrb[0].mxu0
    %v5270 = vadd.f32 %v4725, %v5269
    %v5271 = vpop.f32.mrb[0].mxu0
    %5272 = vmatprep.mubr.f32.mxu0 0.0
    %5273 = vmatmul.mubr.f32.gmra.mrb[0].mxu0 %v5100
    %v5274 = vpop.f32.mrb[0].mxu0
    %v5275 = vadd.f32 %v4730, %v5274
    %v5276 = vpop.f32.mrb[0].mxu0
    %5277 = vmatprep.mubr.f32.mxu0 0.0
    %5278 = vmatmul.mubr.f32.gmra.mrb[0].mxu0 %v5102
    %v5279 = vpop.f32.mrb[0].mxu0
    %v5280 = vadd.f32 %v4735, %v5279
    %v5281 = vpop.f32.mrb[0].mxu0
    %5282 = vmatprep.mubr.f32.mxu0 0.0
    %5283 = vmatmul.mubr.f32.gmra.mrb[0].mxu0 %v5104
    %v5284 = vpop.f32.mrb[0].mxu0
    %v5285 = vadd.f32 %v4740, %v5284
    %v5286 = vpop.f32.mrb[0].mxu0
    %5287 = vmatprep.mubr.f32.mxu0 0.0
    %5288 = vmatmul.mubr.f32.gmra.mrb[0].mxu0 %v5106
    %v5289 = vpop.f32.mrb[0].mxu0
    %v5290 = vadd.f32 %v4745, %v5289
    %v5291 = vpop.f32.mrb[0].mxu0
    %5292 = vmatprep.mubr.f32.mxu0 0.0
    %5293 = vmatmul.mubr.f32.gmra.mrb[0].mxu0 %v5108
    %v5294 = vpop.f32.mrb[0].mxu0
    %v5295 = vadd.f32 %v4750, %v5294
    %v5296 = vpop.f32.mrb[0].mxu0
    %5297 = vmatprep.mubr.f32.mxu0 0.0
    %5298 = vmatmul.mubr.f32.gmra.mrb[0].mxu0 %v5110
    %v5299 = vpop.f32.mrb[0].mxu0
    %v5300 = vadd.f32 %v4755, %v5299
    %v5301 = vpop.f32.mrb[0].mxu0
    %5302 = vmatprep.mubr.f32.mxu0 0.0
    %5303 = vmatmul.mubr.f32.gmra.mrb[0].mxu0 %v5112
    %v5304 = vpop.f32.mrb[0].mxu0
    %v5305 = vadd.f32 %v4760, %v5304
    %v5306 = vpop.f32.mrb[0].mxu0
    %5307 = vmatprep.mubr.f32.mxu0 0.0
    %5308 = vmatmul.mubr.f32.gmra.mrb[0].mxu0 %v5114
    %v5309 = vpop.f32.mrb[0].mxu0
    %v5310 = vadd.f32 %v4765, %v5309
    %v5311 = vpop.f32.mrb[0].mxu0
    %5312 = vmatprep.mubr.f32.mxu0 0.0
    %5313 = vmatmul.mubr.f32.gmra.mrb[0].mxu0 %v5116
    %v5314 = vpop.f32.mrb[0].mxu0
    %v5315 = vadd.f32 %v4770, %v5314
    %v5316 = vpop.f32.mrb[0].mxu0
    %5317 = vmatprep.mubr.f32.mxu0 0.0
    %5318 = vmatmul.mubr.f32.gmra.mrb[0].mxu0 %v5118
    %v5319 = vpop.f32.mrb[0].mxu0
    %v5320 = vadd.f32 %v4775, %v5319
    %v5321 = vpop.f32.mrb[0].mxu0
    %5322 = vmatprep.mubr.f32.mxu0 0.0
    %5323 = vmatmul.mubr.f32.gmra.mrb[0].mxu0 %v5120
    %v5324 = vpop.f32.mrb[0].mxu0
    %v5325 = vadd.f32 %v4780, %v5324
    %v5326 = vpop.f32.mrb[0].mxu0
    %5327 = vmatprep.mubr.f32.mxu0 0.0
    %5328 = vmatmul.mubr.f32.gmra.mrb[0].mxu0 %v5122
    %v5329 = vpop.f32.mrb[0].mxu0
    %v5330 = vadd.f32 %v4785, %v5329
    %v5331 = vpop.f32.mrb[0].mxu0
    %5332 = vmatprep.mubr.f32.mxu0 0.0
    %5333 = vmatmul.mubr.f32.gmra.mrb[0].mxu0 %v5124
    %v5334 = vpop.f32.mrb[0].mxu0
    %v5335 = vadd.f32 %v4790, %v5334
    %v5336 = vpop.f32.mrb[0].mxu0
    %5337 = vmatprep.mubr.f32.mxu0 0.0
    %5338 = vmatmul.mubr.f32.gmra.mrb[0].mxu0 %v5126
    %v5339 = vpop.f32.mrb[0].mxu0
    %v5340 = vadd.f32 %v4795, %v5339
    %v5341 = vpop.f32.mrb[0].mxu0
    %5342 = vmatprep.mubr.f32.mxu0 0.0
    %5343 = vmatmul.mubr.f32.gmra.mrb[0].mxu0 %v5128
    %v5344 = vpop.f32.mrb[0].mxu0
    %v5345 = vadd.f32 %v4800, %v5344
    %v5346 = vpop.f32.mrb[0].mxu0
    %5347 = vmatprep.mubr.f32.mxu0 0.0
    %5348 = vmatmul.mubr.f32.gmra.mrb[0].mxu0 %v5130
    %v5349 = vpop.f32.mrb[0].mxu0
    %v5350 = vadd.f32 %v4805, %v5349
    %v5351 = vpop.f32.mrb[0].mxu0
    %5352 = vmatprep.mubr.f32.mxu0 0.0
    %5353 = vmatmul.mubr.f32.gmra.mrb[0].mxu0 %v5132
    %v5354 = vpop.f32.mrb[0].mxu0
    %v5355 = vadd.f32 %v4810, %v5354
    %v5356 = vpop.f32.mrb[0].mxu0
    %5357 = vmatprep.mubr.f32.mxu0 0.0
    %5358 = vmatmul.mubr.f32.gmra.mrb[0].mxu0 %v5134
    %v5359 = vpop.f32.mrb[0].mxu0
    %v5360 = vadd.f32 %v4815, %v5359
    %v5361 = vpop.f32.mrb[0].mxu0
    %5362 = vmatprep.mubr.f32.mxu0 0.0
    %5363 = vmatmul.mubr.f32.gmra.mrb[0].mxu0 %v5136
    %v5364 = vpop.f32.mrb[0].mxu0
    %v5365 = vadd.f32 %v4820, %v5364
    %v5366 = vpop.f32.mrb[0].mxu0
    %5367 = vmatprep.mubr.f32.mxu0 0.0
    %5368 = vmatmul.mubr.f32.gmra.mrb[0].mxu0 %v5138
    %v5369 = vpop.f32.mrb[0].mxu0
    %v5370 = vadd.f32 %v4825, %v5369
    %v5371 = vpop.f32.mrb[0].mxu0
    %5372 = vmatprep.mubr.f32.mxu0 0.0
    %5373 = vmatmul.mubr.f32.gmra.mrb[0].mxu0 %v5140
    %v5374 = vpop.f32.mrb[0].mxu0
    %v5375 = vadd.f32 %v4830, %v5374
    %v5376 = vpop.f32.mrb[0].mxu0
    %5377 = vmatprep.mubr.f32.mxu0 0.0
    %5378 = vmatmul.mubr.f32.gmra.mrb[0].mxu0 %v5142
    %v5379 = vpop.f32.mrb[0].mxu0
    %v5380 = vadd.f32 %v4835, %v5379
    %v5381 = vpop.f32.mrb[0].mxu0
    %5382 = vmatprep.mubr.f32.mxu0 0.0
    %5383 = vmatmul.mubr.f32.gmra.mrb[0].mxu0 %v5144
    %v5384 = vpop.f32.mrb[0].mxu0
    %v5385 = vadd.f32 %v4840, %v5384
    %v5386 = vpop.f32.mrb[0].mxu0
    %5387 = vmatprep.mubr.f32.mxu0 0.0
    %5388 = vmatmul.mubr.f32.gmra.mrb[0].mxu0 %v5146
    %v5389 = vpop.f32.mrb[0].mxu0
    %v5390 = vadd.f32 %v4845, %v5389
    %v5391 = vpop.f32.mrb[0].mxu0
    %5392 = vmatprep.mubr.f32.mxu0 0.0
    %5393 = vmatmul.mubr.f32.gmra.mrb[0].mxu0 %v5148
    %v5394 = vpop.f32.mrb[0].mxu0
    %v5395 = vadd.f32 %v4850, %v5394
    %v5396 = vpop.f32.mrb[0].mxu0
    %5397 = vmatprep.mubr.f32.mxu0 0.0
    %5398 = vmatmul.mubr.f32.gmra.mrb[0].mxu0 %v5150
    %v5399 = vpop.f32.mrb[0].mxu0
    %v5400 = vadd.f32 %v4855, %v5399
    %v5401 = vpop.f32.mrb[0].mxu0
    %5402 = vmatprep.mubr.f32.mxu0 0.0
    %5403 = vmatmul.mubr.f32.gmra.mrb[0].mxu0 %v5152
    %v5404 = vpop.f32.mrb[0].mxu0
    %v5405 = vadd.f32 %v4860, %v5404
    %v5406 = vpop.f32.mrb[0].mxu0
    %5407 = vmatprep.mubr.f32.mxu0 0.0
    %5408 = vmatmul.mubr.f32.gmra.mrb[0].mxu0 %v5154
    %v5409 = vpop.f32.mrb[0].mxu0
    %v5410 = vadd.f32 %v4865, %v5409
    %v5411 = vpop.f32.mrb[0].mxu0
    %5412 = vmatprep.mubr.f32.mxu0 0.0
    %5413 = vmatmul.mubr.f32.gmra.mrb[0].mxu0 %v5156
    %v5414 = vpop.f32.mrb[0].mxu0
    %v5415 = vadd.f32 %v4870, %v5414
    %v5416 = vpop.f32.mrb[0].mxu0
    %5417 = vmatprep.mubr.f32.mxu0 0.0
    %5418 = vmatmul.mubr.f32.gmra.mrb[0].mxu0 %v5158
    %v5419 = vpop.f32.mrb[0].mxu0
    %v5420 = vadd.f32 %v4875, %v5419
    %v5421 = vpop.f32.mrb[0].mxu0
    %5422 = vmatprep.mubr.f32.mxu0 0.0
    %5423 = vmatmul.mubr.f32.gmra.mrb[0].mxu0 %v5160
    %v5424 = vpop.f32.mrb[0].mxu0
    %v5425 = vadd.f32 %v4880, %v5424
    %v5426 = vpop.f32.mrb[0].mxu0
    %5427 = vmatprep.mubr.f32.mxu0 0.0
    %5428 = vmatmul.mubr.f32.gmra.mrb[0].mxu0 %v5162
    %v5429 = vpop.f32.mrb[0].mxu0
    %v5430 = vadd.f32 %v4885, %v5429
    %v5431 = vpop.f32.mrb[0].mxu0
    %5432 = vmatprep.mubr.f32.mxu0 0.0
    %5433 = vmatmul.mubr.f32.gmra.mrb[0].mxu0 %v5164
    %v5434 = vpop.f32.mrb[0].mxu0
    %v5435 = vadd.f32 %v4890, %v5434
    %v5436 = vpop.f32.mrb[0].mxu0
    %5437 = vmatprep.mubr.f32.mxu0 0.0
    %5438 = vmatmul.mubr.f32.gmra.mrb[0].mxu0 %v5166
    %v5439 = vpop.f32.mrb[0].mxu0
    %v5440 = vadd.f32 %v4895, %v5439
    %v5441 = vpop.f32.mrb[0].mxu0
    %5442 = vmatprep.mubr.f32.mxu0 0.0
    %5443 = vmatmul.mubr.f32.gmra.mrb[0].mxu0 %v5168
    %v5444 = vpop.f32.mrb[0].mxu0
    %v5445 = vadd.f32 %v4900, %v5444
    %v5446 = vpop.f32.mrb[0].mxu0
    %5447 = vmatprep.mubr.f32.mxu0 0.0
    %5448 = vmatmul.mubr.f32.gmra.mrb[0].mxu0 %v5170
    %v5449 = vpop.f32.mrb[0].mxu0
    %v5450 = vadd.f32 %v4905, %v5449
    %v5451 = vpop.f32.mrb[0].mxu0
    %5452 = vmatprep.mubr.f32.mxu0 0.0
    %5453 = vmatmul.mubr.f32.gmra.mrb[0].mxu0 %v5172
    %v5454 = vpop.f32.mrb[0].mxu0
    %v5455 = vadd.f32 %v4910, %v5454
    %v5456 = vpop.f32.mrb[0].mxu0
    %5457 = vmatprep.mubr.f32.mxu0 0.0
    %5458 = vmatmul.mubr.f32.gmra.mrb[0].mxu0 %v5174
    %v5459 = vpop.f32.mrb[0].mxu0
    %v5460 = vadd.f32 %v4915, %v5459
    %v5461 = vpop.f32.mrb[0].mxu0
    %5462 = vmatprep.mubr.f32.mxu0 0.0
    %5463 = vmatmul.mubr.f32.gmra.mrb[0].mxu0 %v5176
    %v5464 = vpop.f32.mrb[0].mxu0
    %v5465 = vadd.f32 %v4920, %v5464
    %v5466 = vpop.f32.mrb[0].mxu0
    %5467 = vmatprep.mubr.f32.mxu0 0.0
    %5468 = vmatmul.mubr.f32.gmra.mrb[0].mxu0 %v5178
    %v5469 = vpop.f32.mrb[0].mxu0
    %v5470 = vadd.f32 %v4925, %v5469
    %v5471 = vpop.f32.mrb[0].mxu0
    %5472 = vmatprep.mubr.f32.mxu0 0.0
    %5473 = vmatmul.mubr.f32.gmra.mrb[0].mxu0 %v5180
    %v5474 = vpop.f32.mrb[0].mxu0
    %v5475 = vadd.f32 %v4930, %v5474
    %v5476 = vpop.f32.mrb[0].mxu0
    %5477 = vmatprep.mubr.f32.mxu0 0.0
    %5478 = vmatmul.mubr.f32.gmra.mrb[0].mxu0 %v5182
    %v5479 = vpop.f32.mrb[0].mxu0
    %v5480 = vadd.f32 %v4935, %v5479
    %v5481 = vpop.f32.mrb[0].mxu0
    %5482 = vmatprep.mubr.f32.mxu0 0.0
    %5483 = vmatmul.mubr.f32.gmra.mrb[0].mxu0 %v5184
    %v5484 = vpop.f32.mrb[0].mxu0
    %v5485 = vadd.f32 %v4940, %v5484
    %v5486 = vpop.f32.mrb[0].mxu0
    %5487 = vmatprep.mubr.f32.mxu0 0.0
    %5488 = vmatmul.mubr.f32.gmra.mrb[0].mxu0 %v5186
    %v5489 = vpop.f32.mrb[0].mxu0
    %v5490 = vadd.f32 %v4945, %v5489
    %v5491 = vpop.f32.mrb[0].mxu0
    %5492 = vdwg.mxu0
    %v5494 = vsel %vm332, %v4201, 0
    %v5497 = vsel %vm332, %v4204, 0
    %v5500 = vsel %vm332, %v4209, 0
    %v5503 = vsel %vm332, %v4212, 0
    %v5506 = vsel %vm332, %v4217, 0
    %v5509 = vsel %vm332, %v4220, 0
    %v5512 = vsel %vm332, %v4225, 0
    %v5515 = vsel %vm332, %v4228, 0
    %v5518 = vsel %vm332, %v4233, 0
    %v5521 = vsel %vm332, %v4236, 0
    %v5524 = vsel %vm332, %v4241, 0
    %v5527 = vsel %vm332, %v4244, 0
    %v5530 = vsel %vm332, %v4249, 0
    %v5533 = vsel %vm332, %v4252, 0
    %v5536 = vsel %vm332, %v4257, 0
    %v5539 = vsel %vm332, %v4260, 0
    %v5542 = vsel %vm332, %v4265, 0
    %v5545 = vsel %vm332, %v4268, 0
    %v5548 = vsel %vm332, %v4273, 0
    %v5551 = vsel %vm332, %v4276, 0
    %v5554 = vsel %vm332, %v4281, 0
    %v5557 = vsel %vm332, %v4284, 0
    %v5560 = vsel %vm332, %v4289, 0
    %v5563 = vsel %vm332, %v4292, 0
    %v5566 = vsel %vm332, %v4297, 0
    %v5569 = vsel %vm332, %v4300, 0
    %v5572 = vsel %vm332, %v4305, 0
    %v5575 = vsel %vm332, %v4308, 0
    %v5578 = vsel %vm332, %v4313, 0
    %v5581 = vsel %vm332, %v4316, 0
    %v5584 = vsel %vm332, %v4321, 0
    %v5587 = vsel %vm332, %v4324, 0
    %v5590 = vsel %vm332, %v4329, 0
    %v5593 = vsel %vm332, %v4332, 0
    %v5596 = vsel %vm332, %v4337, 0
    %v5599 = vsel %vm332, %v4340, 0
    %v5602 = vsel %vm332, %v4345, 0
    %v5605 = vsel %vm332, %v4348, 0
    %v5608 = vsel %vm332, %v4353, 0
    %v5611 = vsel %vm332, %v4356, 0
    %v5614 = vsel %vm332, %v4361, 0
    %v5617 = vsel %vm332, %v4364, 0
    %v5620 = vsel %vm332, %v4369, 0
    %v5623 = vsel %vm332, %v4372, 0
    %v5626 = vsel %vm332, %v4377, 0
    %v5629 = vsel %vm332, %v4380, 0
    %v5632 = vsel %vm332, %v4385, 0
    %v5635 = vsel %vm332, %v4388, 0
    %5637 = vmatprep.subr.mxu0 0.0
    %5638 = vmatpush1.msra.mxu0 %v4399
    %5639 = vmatprep.subr.mxu0 0.0
    %5640 = vmatpush1.msra.mxu0 %v4400
    %5641 = vmatprep.subr.mxu0 0.0
    %5642 = vmatpush1.msra.mxu0 %v4401
    %5643 = vmatprep.subr.mxu0 0.0
    %5644 = vmatpush1.msra.mxu0 %v4402
    %5645 = vmatprep.subr.mxu0 0.0
    %5646 = vmatpush1.msra.mxu0 0.0
    %5647 = vmatprep.subr.mxu0 0.0
    %5648 = vmatpush1.msra.mxu0 0.0
    %5649 = vmatprep.subr.mxu0 0.0
    %5650 = vmatpush1.msra.mxu0 0.0
    %5651 = vmatprep.subr.mxu0 0.0
    %5652 = vmatpush1.msra.mxu0 0.0
    %5653 = vmatprep.subr.mxu0 0.0
    %5654 = vmatpush1.msra.mxu0 0.0
    %5655 = vmatprep.subr.mxu0 0.0
    %5656 = vmatpush1.msra.mxu0 0.0
    %5657 = vmatprep.subr.mxu0 0.0
    %5658 = vmatpush1.msra.mxu0 0.0
    %5659 = vmatprep.subr.mxu0 0.0
    %5660 = vmatpush1.msra.mxu0 0.0
    %5661 = vmatprep.subr.mxu0 0.0
    %5662 = vmatpush1.msra.mxu0 0.0
    %5663 = vmatprep.subr.mxu0 0.0
    %5664 = vmatpush1.msra.mxu0 0.0
    %5665 = vmatprep.subr.mxu0 0.0
    %5666 = vmatpush1.msra.mxu0 0.0
    %5667 = vmatprep.subr.mxu0 0.0
    %5668 = vmatpush1.msra.mxu0 0.0
    %5669 = vmatprep.subr.mxu0 0.0
    %5670 = vmatpush1.msra.mxu0 0.0
    %5671 = vmatprep.subr.mxu0 0.0
    %5672 = vmatpush1.msra.mxu0 0.0
    %5673 = vmatprep.subr.mxu0 0.0
    %5674 = vmatpush1.msra.mxu0 0.0
    %5675 = vmatprep.subr.mxu0 0.0
    %5676 = vmatpush1.msra.mxu0 0.0
    %5677 = vmatprep.subr.mxu0 0.0
    %5678 = vmatpush1.msra.mxu0 0.0
    %5679 = vmatprep.subr.mxu0 0.0
    %5680 = vmatpush1.msra.mxu0 0.0
    %5681 = vmatprep.subr.mxu0 0.0
    %5682 = vmatpush1.msra.mxu0 0.0
    %5683 = vmatprep.subr.mxu0 0.0
    %5684 = vmatpush1.msra.mxu0 0.0
    %5685 = vmatprep.subr.mxu0 0.0
    %5686 = vmatpush1.msra.mxu0 0.0
    %5687 = vmatprep.subr.mxu0 0.0
    %5688 = vmatpush1.msra.mxu0 0.0
    %5689 = vmatprep.subr.mxu0 0.0
    %5690 = vmatpush1.msra.mxu0 0.0
    %5691 = vmatprep.subr.mxu0 0.0
    %5692 = vmatpush1.msra.mxu0 0.0
    %5693 = vmatprep.subr.mxu0 0.0
    %5694 = vmatpush1.msra.mxu0 0.0
    %5695 = vmatprep.subr.mxu0 0.0
    %5696 = vmatpush1.msra.mxu0 0.0
    %5697 = vmatprep.subr.mxu0 0.0
    %5698 = vmatpush1.msra.mxu0 0.0
    %5699 = vmatprep.subr.mxu0 0.0
    %5700 = vmatpush1.msra.mxu0 0.0
    %5701 = vmatprep.mubr.f32.mxu0 0.0
    %5702 = vmatmul.mubr.f32.gmra.mrb[0].mxu0 %v5494
    %v5703 = vpop.f32.mrb[0].mxu0
    %v5704 = vadd.f32 0.0, %v5703
    %v5705 = vpop.f32.mrb[0].mxu0
    %5706 = vmatprep.mubr.f32.mxu0 0.0
    %5707 = vmatmul.mubr.f32.gmra.mrb[0].mxu0 %v5497
    %v5708 = vpop.f32.mrb[0].mxu0
    %v5709 = vadd.f32 0.0, %v5708
    %v5710 = vpop.f32.mrb[0].mxu0
    %5711 = vmatprep.mubr.f32.mxu0 0.0
    %5712 = vmatmul.mubr.f32.gmra.mrb[0].mxu0 %v5500
    %v5713 = vpop.f32.mrb[0].mxu0
    %v5714 = vadd.f32 0.0, %v5713
    %v5715 = vpop.f32.mrb[0].mxu0
    %5716 = vmatprep.mubr.f32.mxu0 0.0
    %5717 = vmatmul.mubr.f32.gmra.mrb[0].mxu0 %v5503
    %v5718 = vpop.f32.mrb[0].mxu0
    %v5719 = vadd.f32 0.0, %v5718
    %v5720 = vpop.f32.mrb[0].mxu0
    %5721 = vmatprep.mubr.f32.mxu0 0.0
    %5722 = vmatmul.mubr.f32.gmra.mrb[0].mxu0 %v5506
    %v5723 = vpop.f32.mrb[0].mxu0
    %v5724 = vadd.f32 0.0, %v5723
    %v5725 = vpop.f32.mrb[0].mxu0
    %5726 = vmatprep.mubr.f32.mxu0 0.0
    %5727 = vmatmul.mubr.f32.gmra.mrb[0].mxu0 %v5509
    %v5728 = vpop.f32.mrb[0].mxu0
    %v5729 = vadd.f32 0.0, %v5728
    %v5730 = vpop.f32.mrb[0].mxu0
    %5731 = vmatprep.mubr.f32.mxu0 0.0
    %5732 = vmatmul.mubr.f32.gmra.mrb[0].mxu0 %v5512
    %v5733 = vpop.f32.mrb[0].mxu0
    %v5734 = vadd.f32 0.0, %v5733
    %v5735 = vpop.f32.mrb[0].mxu0
    %5736 = vmatprep.mubr.f32.mxu0 0.0
    %5737 = vmatmul.mubr.f32.gmra.mrb[0].mxu0 %v5515
    %v5738 = vpop.f32.mrb[0].mxu0
    %v5739 = vadd.f32 0.0, %v5738
    %v5740 = vpop.f32.mrb[0].mxu0
    %5741 = vmatprep.mubr.f32.mxu0 0.0
    %5742 = vmatmul.mubr.f32.gmra.mrb[0].mxu0 %v5518
    %v5743 = vpop.f32.mrb[0].mxu0
    %v5744 = vadd.f32 0.0, %v5743
    %v5745 = vpop.f32.mrb[0].mxu0
    %5746 = vmatprep.mubr.f32.mxu0 0.0
    %5747 = vmatmul.mubr.f32.gmra.mrb[0].mxu0 %v5521
    %v5748 = vpop.f32.mrb[0].mxu0
    %v5749 = vadd.f32 0.0, %v5748
    %v5750 = vpop.f32.mrb[0].mxu0
    %5751 = vmatprep.mubr.f32.mxu0 0.0
    %5752 = vmatmul.mubr.f32.gmra.mrb[0].mxu0 %v5524
    %v5753 = vpop.f32.mrb[0].mxu0
    %v5754 = vadd.f32 0.0, %v5753
    %v5755 = vpop.f32.mrb[0].mxu0
    %5756 = vmatprep.mubr.f32.mxu0 0.0
    %5757 = vmatmul.mubr.f32.gmra.mrb[0].mxu0 %v5527
    %v5758 = vpop.f32.mrb[0].mxu0
    %v5759 = vadd.f32 0.0, %v5758
    %v5760 = vpop.f32.mrb[0].mxu0
    %5761 = vmatprep.mubr.f32.mxu0 0.0
    %5762 = vmatmul.mubr.f32.gmra.mrb[0].mxu0 %v5530
    %v5763 = vpop.f32.mrb[0].mxu0
    %v5764 = vadd.f32 0.0, %v5763
    %v5765 = vpop.f32.mrb[0].mxu0
    %5766 = vmatprep.mubr.f32.mxu0 0.0
    %5767 = vmatmul.mubr.f32.gmra.mrb[0].mxu0 %v5533
    %v5768 = vpop.f32.mrb[0].mxu0
    %v5769 = vadd.f32 0.0, %v5768
    %v5770 = vpop.f32.mrb[0].mxu0
    %5771 = vmatprep.mubr.f32.mxu0 0.0
    %5772 = vmatmul.mubr.f32.gmra.mrb[0].mxu0 %v5536
    %v5773 = vpop.f32.mrb[0].mxu0
    %v5774 = vadd.f32 0.0, %v5773
    %v5775 = vpop.f32.mrb[0].mxu0
    %5776 = vmatprep.mubr.f32.mxu0 0.0
    %5777 = vmatmul.mubr.f32.gmra.mrb[0].mxu0 %v5539
    %v5778 = vpop.f32.mrb[0].mxu0
    %v5779 = vadd.f32 0.0, %v5778
    %v5780 = vpop.f32.mrb[0].mxu0
    %5781 = vmatprep.mubr.f32.mxu0 0.0
    %5782 = vmatmul.mubr.f32.gmra.mrb[0].mxu0 %v5542
    %v5783 = vpop.f32.mrb[0].mxu0
    %v5784 = vadd.f32 0.0, %v5783
    %v5785 = vpop.f32.mrb[0].mxu0
    %5786 = vmatprep.mubr.f32.mxu0 0.0
    %5787 = vmatmul.mubr.f32.gmra.mrb[0].mxu0 %v5545
    %v5788 = vpop.f32.mrb[0].mxu0
    %v5789 = vadd.f32 0.0, %v5788
    %v5790 = vpop.f32.mrb[0].mxu0
    %5791 = vmatprep.mubr.f32.mxu0 0.0
    %5792 = vmatmul.mubr.f32.gmra.mrb[0].mxu0 %v5548
    %v5793 = vpop.f32.mrb[0].mxu0
    %v5794 = vadd.f32 0.0, %v5793
    %v5795 = vpop.f32.mrb[0].mxu0
    %5796 = vmatprep.mubr.f32.mxu0 0.0
    %5797 = vmatmul.mubr.f32.gmra.mrb[0].mxu0 %v5551
    %v5798 = vpop.f32.mrb[0].mxu0
    %v5799 = vadd.f32 0.0, %v5798
    %v5800 = vpop.f32.mrb[0].mxu0
    %5801 = vmatprep.mubr.f32.mxu0 0.0
    %5802 = vmatmul.mubr.f32.gmra.mrb[0].mxu0 %v5554
    %v5803 = vpop.f32.mrb[0].mxu0
    %v5804 = vadd.f32 0.0, %v5803
    %v5805 = vpop.f32.mrb[0].mxu0
    %5806 = vmatprep.mubr.f32.mxu0 0.0
    %5807 = vmatmul.mubr.f32.gmra.mrb[0].mxu0 %v5557
    %v5808 = vpop.f32.mrb[0].mxu0
    %v5809 = vadd.f32 0.0, %v5808
    %v5810 = vpop.f32.mrb[0].mxu0
    %5811 = vmatprep.mubr.f32.mxu0 0.0
    %5812 = vmatmul.mubr.f32.gmra.mrb[0].mxu0 %v5560
    %v5813 = vpop.f32.mrb[0].mxu0
    %v5814 = vadd.f32 0.0, %v5813
    %v5815 = vpop.f32.mrb[0].mxu0
    %5816 = vmatprep.mubr.f32.mxu0 0.0
    %5817 = vmatmul.mubr.f32.gmra.mrb[0].mxu0 %v5563
    %v5818 = vpop.f32.mrb[0].mxu0
    %v5819 = vadd.f32 0.0, %v5818
    %v5820 = vpop.f32.mrb[0].mxu0
    %5821 = vmatprep.mubr.f32.mxu0 0.0
    %5822 = vmatmul.mubr.f32.gmra.mrb[0].mxu0 %v5566
    %v5823 = vpop.f32.mrb[0].mxu0
    %v5824 = vadd.f32 0.0, %v5823
    %v5825 = vpop.f32.mrb[0].mxu0
    %5826 = vmatprep.mubr.f32.mxu0 0.0
    %5827 = vmatmul.mubr.f32.gmra.mrb[0].mxu0 %v5569
    %v5828 = vpop.f32.mrb[0].mxu0
    %v5829 = vadd.f32 0.0, %v5828
    %v5830 = vpop.f32.mrb[0].mxu0
    %5831 = vmatprep.mubr.f32.mxu0 0.0
    %5832 = vmatmul.mubr.f32.gmra.mrb[0].mxu0 %v5572
    %v5833 = vpop.f32.mrb[0].mxu0
    %v5834 = vadd.f32 0.0, %v5833
    %v5835 = vpop.f32.mrb[0].mxu0
    %5836 = vmatprep.mubr.f32.mxu0 0.0
    %5837 = vmatmul.mubr.f32.gmra.mrb[0].mxu0 %v5575
    %v5838 = vpop.f32.mrb[0].mxu0
    %v5839 = vadd.f32 0.0, %v5838
    %v5840 = vpop.f32.mrb[0].mxu0
    %5841 = vmatprep.mubr.f32.mxu0 0.0
    %5842 = vmatmul.mubr.f32.gmra.mrb[0].mxu0 %v5578
    %v5843 = vpop.f32.mrb[0].mxu0
    %v5844 = vadd.f32 0.0, %v5843
    %v5845 = vpop.f32.mrb[0].mxu0
    %5846 = vmatprep.mubr.f32.mxu0 0.0
    %5847 = vmatmul.mubr.f32.gmra.mrb[0].mxu0 %v5581
    %v5848 = vpop.f32.mrb[0].mxu0
    %v5849 = vadd.f32 0.0, %v5848
    %v5850 = vpop.f32.mrb[0].mxu0
    %5851 = vmatprep.mubr.f32.mxu0 0.0
    %5852 = vmatmul.mubr.f32.gmra.mrb[0].mxu0 %v5584
    %v5853 = vpop.f32.mrb[0].mxu0
    %v5854 = vadd.f32 0.0, %v5853
    %v5855 = vpop.f32.mrb[0].mxu0
    %5856 = vmatprep.mubr.f32.mxu0 0.0
    %5857 = vmatmul.mubr.f32.gmra.mrb[0].mxu0 %v5587
    %v5858 = vpop.f32.mrb[0].mxu0
    %v5859 = vadd.f32 0.0, %v5858
    %v5860 = vpop.f32.mrb[0].mxu0
    %5861 = vmatprep.mubr.f32.mxu0 0.0
    %5862 = vmatmul.mubr.f32.gmra.mrb[0].mxu0 %v5590
    %v5863 = vpop.f32.mrb[0].mxu0
    %v5864 = vadd.f32 0.0, %v5863
    %v5865 = vpop.f32.mrb[0].mxu0
    %5866 = vmatprep.mubr.f32.mxu0 0.0
    %5867 = vmatmul.mubr.f32.gmra.mrb[0].mxu0 %v5593
    %v5868 = vpop.f32.mrb[0].mxu0
    %v5869 = vadd.f32 0.0, %v5868
    %v5870 = vpop.f32.mrb[0].mxu0
    %5871 = vmatprep.mubr.f32.mxu0 0.0
    %5872 = vmatmul.mubr.f32.gmra.mrb[0].mxu0 %v5596
    %v5873 = vpop.f32.mrb[0].mxu0
    %v5874 = vadd.f32 0.0, %v5873
    %v5875 = vpop.f32.mrb[0].mxu0
    %5876 = vmatprep.mubr.f32.mxu0 0.0
    %5877 = vmatmul.mubr.f32.gmra.mrb[0].mxu0 %v5599
    %v5878 = vpop.f32.mrb[0].mxu0
    %v5879 = vadd.f32 0.0, %v5878
    %v5880 = vpop.f32.mrb[0].mxu0
    %5881 = vmatprep.mubr.f32.mxu0 0.0
    %5882 = vmatmul.mubr.f32.gmra.mrb[0].mxu0 %v5602
    %v5883 = vpop.f32.mrb[0].mxu0
    %v5884 = vadd.f32 0.0, %v5883
    %v5885 = vpop.f32.mrb[0].mxu0
    %5886 = vmatprep.mubr.f32.mxu0 0.0
    %5887 = vmatmul.mubr.f32.gmra.mrb[0].mxu0 %v5605
    %v5888 = vpop.f32.mrb[0].mxu0
    %v5889 = vadd.f32 0.0, %v5888
    %v5890 = vpop.f32.mrb[0].mxu0
    %5891 = vmatprep.mubr.f32.mxu0 0.0
    %5892 = vmatmul.mubr.f32.gmra.mrb[0].mxu0 %v5608
    %v5893 = vpop.f32.mrb[0].mxu0
    %v5894 = vadd.f32 0.0, %v5893
    %v5895 = vpop.f32.mrb[0].mxu0
    %5896 = vmatprep.mubr.f32.mxu0 0.0
    %5897 = vmatmul.mubr.f32.gmra.mrb[0].mxu0 %v5611
    %v5898 = vpop.f32.mrb[0].mxu0
    %v5899 = vadd.f32 0.0, %v5898
    %v5900 = vpop.f32.mrb[0].mxu0
    %5901 = vmatprep.mubr.f32.mxu0 0.0
    %5902 = vmatmul.mubr.f32.gmra.mrb[0].mxu0 %v5614
    %v5903 = vpop.f32.mrb[0].mxu0
    %v5904 = vadd.f32 0.0, %v5903
    %v5905 = vpop.f32.mrb[0].mxu0
    %5906 = vmatprep.mubr.f32.mxu0 0.0
    %5907 = vmatmul.mubr.f32.gmra.mrb[0].mxu0 %v5617
    %v5908 = vpop.f32.mrb[0].mxu0
    %v5909 = vadd.f32 0.0, %v5908
    %v5910 = vpop.f32.mrb[0].mxu0
    %5911 = vmatprep.mubr.f32.mxu0 0.0
    %5912 = vmatmul.mubr.f32.gmra.mrb[0].mxu0 %v5620
    %v5913 = vpop.f32.mrb[0].mxu0
    %v5914 = vadd.f32 0.0, %v5913
    %v5915 = vpop.f32.mrb[0].mxu0
    %5916 = vmatprep.mubr.f32.mxu0 0.0
    %5917 = vmatmul.mubr.f32.gmra.mrb[0].mxu0 %v5623
    %v5918 = vpop.f32.mrb[0].mxu0
    %v5919 = vadd.f32 0.0, %v5918
    %v5920 = vpop.f32.mrb[0].mxu0
    %5921 = vmatprep.mubr.f32.mxu0 0.0
    %5922 = vmatmul.mubr.f32.gmra.mrb[0].mxu0 %v5626
    %v5923 = vpop.f32.mrb[0].mxu0
    %v5924 = vadd.f32 0.0, %v5923
    %v5925 = vpop.f32.mrb[0].mxu0
    %5926 = vmatprep.mubr.f32.mxu0 0.0
    %5927 = vmatmul.mubr.f32.gmra.mrb[0].mxu0 %v5629
    %v5928 = vpop.f32.mrb[0].mxu0
    %v5929 = vadd.f32 0.0, %v5928
    %v5930 = vpop.f32.mrb[0].mxu0
    %5931 = vmatprep.mubr.f32.mxu0 0.0
    %5932 = vmatmul.mubr.f32.gmra.mrb[0].mxu0 %v5632
    %v5933 = vpop.f32.mrb[0].mxu0
    %v5934 = vadd.f32 0.0, %v5933
    %v5935 = vpop.f32.mrb[0].mxu0
    %5936 = vmatprep.mubr.f32.mxu0 0.0
    %5937 = vmatmul.mubr.f32.gmra.mrb[0].mxu0 %v5635
    %v5938 = vpop.f32.mrb[0].mxu0
    %v5939 = vadd.f32 0.0, %v5938
    %v5940 = vpop.f32.mrb[0].mxu0
    %5941 = vdwg.mxu0
    %v5942 = vadd.f32 %v5255, %v5704
    %v5943 = vadd.f32 %v5260, %v5709
    %v5944 = vadd.f32 %v5265, %v5714
    %v5945 = vadd.f32 %v5270, %v5719
    %v5946 = vadd.f32 %v5275, %v5724
    %v5947 = vadd.f32 %v5280, %v5729
    %v5948 = vadd.f32 %v5285, %v5734
    %v5949 = vadd.f32 %v5290, %v5739
    %v5950 = vadd.f32 %v5295, %v5744
    %v5951 = vadd.f32 %v5300, %v5749
    %v5952 = vadd.f32 %v5305, %v5754
    %v5953 = vadd.f32 %v5310, %v5759
    %v5954 = vadd.f32 %v5315, %v5764
    %v5955 = vadd.f32 %v5320, %v5769
    %v5956 = vadd.f32 %v5325, %v5774
    %v5957 = vadd.f32 %v5330, %v5779
    %v5958 = vadd.f32 %v5335, %v5784
    %v5959 = vadd.f32 %v5340, %v5789
    %v5960 = vadd.f32 %v5345, %v5794
    %v5961 = vadd.f32 %v5350, %v5799
    %v5962 = vadd.f32 %v5355, %v5804
    %v5963 = vadd.f32 %v5360, %v5809
    %v5964 = vadd.f32 %v5365, %v5814
    %v5965 = vadd.f32 %v5370, %v5819
    %v5966 = vadd.f32 %v5375, %v5824
    %v5967 = vadd.f32 %v5380, %v5829
    %v5968 = vadd.f32 %v5385, %v5834
    %v5969 = vadd.f32 %v5390, %v5839
    %v5970 = vadd.f32 %v5395, %v5844
    %v5971 = vadd.f32 %v5400, %v5849
    %v5972 = vadd.f32 %v5405, %v5854
    %v5973 = vadd.f32 %v5410, %v5859
    %v5974 = vadd.f32 %v5415, %v5864
    %v5975 = vadd.f32 %v5420, %v5869
    %v5976 = vadd.f32 %v5425, %v5874
    %v5977 = vadd.f32 %v5430, %v5879
    %v5978 = vadd.f32 %v5435, %v5884
    %v5979 = vadd.f32 %v5440, %v5889
    %v5980 = vadd.f32 %v5445, %v5894
    %v5981 = vadd.f32 %v5450, %v5899
    %v5982 = vadd.f32 %v5455, %v5904
    %v5983 = vadd.f32 %v5460, %v5909
    %v5984 = vadd.f32 %v5465, %v5914
    %v5985 = vadd.f32 %v5470, %v5919
    %v5986 = vadd.f32 %v5475, %v5924
    %v5987 = vadd.f32 %v5480, %v5929
    %v5988 = vadd.f32 %v5485, %v5934
    %v5989 = vadd.f32 %v5490, %v5939
    %v5990 = vld [vmem:[%s8] sm:$0x1]
    %v5992 = vlaneseq
    %v5993 = vshrl.u32 %v5992, 7
    %v5994 = vsub.s32 0, %v5993
    %v5995 = vrot.slane %v5990, %v5994
    %v5997 = vadd.f32 %v5942, %v5995
    %v5998 = vadd.f32 %v5943, %v5995
    %v5999 = vadd.f32 %v5944, %v5995
    %v6000 = vadd.f32 %v5945, %v5995
    %v6001 = vadd.f32 %v5946, %v5995
    %v6002 = vadd.f32 %v5947, %v5995
    %v6003 = vadd.f32 %v5948, %v5995
    %v6004 = vadd.f32 %v5949, %v5995
    %v6005 = vadd.f32 %v5950, %v5995
    %v6006 = vadd.f32 %v5951, %v5995
    %v6007 = vadd.f32 %v5952, %v5995
    %v6008 = vadd.f32 %v5953, %v5995
    %v6009 = vadd.f32 %v5954, %v5995
    %v6010 = vadd.f32 %v5955, %v5995
    %v6011 = vadd.f32 %v5956, %v5995
    %v6012 = vadd.f32 %v5957, %v5995
    %v6013 = vadd.f32 %v5958, %v5995
    %v6014 = vadd.f32 %v5959, %v5995
    %v6015 = vadd.f32 %v5960, %v5995
    %v6016 = vadd.f32 %v5961, %v5995
    %v6017 = vadd.f32 %v5962, %v5995
    %v6018 = vadd.f32 %v5963, %v5995
    %v6019 = vadd.f32 %v5964, %v5995
    %v6020 = vadd.f32 %v5965, %v5995
    %v6021 = vadd.f32 %v5966, %v5995
    %v6022 = vadd.f32 %v5967, %v5995
    %v6023 = vadd.f32 %v5968, %v5995
    %v6024 = vadd.f32 %v5969, %v5995
    %v6025 = vadd.f32 %v5970, %v5995
    %v6026 = vadd.f32 %v5971, %v5995
    %v6027 = vadd.f32 %v5972, %v5995
    %v6028 = vadd.f32 %v5973, %v5995
    %v6029 = vadd.f32 %v5974, %v5995
    %v6030 = vadd.f32 %v5975, %v5995
    %v6031 = vadd.f32 %v5976, %v5995
    %v6032 = vadd.f32 %v5977, %v5995
    %v6033 = vadd.f32 %v5978, %v5995
    %v6034 = vadd.f32 %v5979, %v5995
    %v6035 = vadd.f32 %v5980, %v5995
    %v6036 = vadd.f32 %v5981, %v5995
    %v6037 = vadd.f32 %v5982, %v5995
    %v6038 = vadd.f32 %v5983, %v5995
    %v6039 = vadd.f32 %v5984, %v5995
    %v6040 = vadd.f32 %v5985, %v5995
    %v6041 = vadd.f32 %v5986, %v5995
    %v6042 = vadd.f32 %v5987, %v5995
    %v6043 = vadd.f32 %v5988, %v5995
    %v6044 = vadd.f32 %v5989, %v5995
    %v6045 = vmax.f32 %v5997, 0.0
    %v6046 = vmax.f32 %v5998, 0.0
    %v6047 = vmax.f32 %v5999, 0.0
    %v6048 = vmax.f32 %v6000, 0.0
    %v6049 = vmax.f32 %v6001, 0.0
    %v6050 = vmax.f32 %v6002, 0.0
    %v6051 = vmax.f32 %v6003, 0.0
    %v6052 = vmax.f32 %v6004, 0.0
    %v6053 = vmax.f32 %v6005, 0.0
    %v6054 = vmax.f32 %v6006, 0.0
    %v6055 = vmax.f32 %v6007, 0.0
    %v6056 = vmax.f32 %v6008, 0.0
    %v6057 = vmax.f32 %v6009, 0.0
    %v6058 = vmax.f32 %v6010, 0.0
    %v6059 = vmax.f32 %v6011, 0.0
    %v6060 = vmax.f32 %v6012, 0.0
    %v6061 = vmax.f32 %v6013, 0.0
    %v6062 = vmax.f32 %v6014, 0.0
    %v6063 = vmax.f32 %v6015, 0.0
    %v6064 = vmax.f32 %v6016, 0.0
    %v6065 = vmax.f32 %v6017, 0.0
    %v6066 = vmax.f32 %v6018, 0.0
    %v6067 = vmax.f32 %v6019, 0.0
    %v6068 = vmax.f32 %v6020, 0.0
    %v6069 = vmax.f32 %v6021, 0.0
    %v6070 = vmax.f32 %v6022, 0.0
    %v6071 = vmax.f32 %v6023, 0.0
    %v6072 = vmax.f32 %v6024, 0.0
    %v6073 = vmax.f32 %v6025, 0.0
    %v6074 = vmax.f32 %v6026, 0.0
    %v6075 = vmax.f32 %v6027, 0.0
    %v6076 = vmax.f32 %v6028, 0.0
    %v6077 = vmax.f32 %v6029, 0.0
    %v6078 = vmax.f32 %v6030, 0.0
    %v6079 = vmax.f32 %v6031, 0.0
    %v6080 = vmax.f32 %v6032, 0.0
    %v6081 = vmax.f32 %v6033, 0.0
    %v6082 = vmax.f32 %v6034, 0.0
    %v6083 = vmax.f32 %v6035, 0.0
    %v6084 = vmax.f32 %v6036, 0.0
    %v6085 = vmax.f32 %v6037, 0.0
    %v6086 = vmax.f32 %v6038, 0.0
    %v6087 = vmax.f32 %v6039, 0.0
    %v6088 = vmax.f32 %v6040, 0.0
    %v6089 = vmax.f32 %v6041, 0.0
    %v6090 = vmax.f32 %v6042, 0.0
    %v6091 = vmax.f32 %v6043, 0.0
    %v6092 = vmax.f32 %v6044, 0.0
    %v6093 = vld [vmem:[#allocation7] sm:$0xff]
    %v6094 = vld [vmem:[#allocation7 + $0x8] sm:$0xff]
    %v6095 = vld [vmem:[#allocation7 + $0x10] sm:$0xff]
    %v6096 = vld [vmem:[#allocation7 + $0x18] sm:$0xff]
    %v6097 = vld [vmem:[#allocation7 + $0x20] sm:$0xff]
    %v6098 = vld [vmem:[#allocation7 + $0x28] sm:$0xff]
    %v6099 = vld [vmem:[#allocation7 + $0x30] sm:$0xff]
    %v6100 = vld [vmem:[#allocation7 + $0x38] sm:$0xff]
    %v6102 = vsel %vm332, %v6045, 0
    %v6105 = vsel %vm332, %v6046, 0
    %v6108 = vsel %vm332, %v6047, 0
    %v6111 = vsel %vm332, %v6048, 0
    %v6114 = vsel %vm332, %v6049, 0
    %v6117 = vsel %vm332, %v6050, 0
    %v6120 = vsel %vm332, %v6051, 0
    %v6123 = vsel %vm332, %v6052, 0
    %v6126 = vsel %vm332, %v6053, 0
    %v6129 = vsel %vm332, %v6054, 0
    %v6132 = vsel %vm332, %v6055, 0
    %v6135 = vsel %vm332, %v6056, 0
    %v6138 = vsel %vm332, %v6057, 0
    %v6141 = vsel %vm332, %v6058, 0
    %v6144 = vsel %vm332, %v6059, 0
    %v6147 = vsel %vm332, %v6060, 0
    %v6150 = vsel %vm332, %v6061, 0
    %v6153 = vsel %vm332, %v6062, 0
    %v6156 = vsel %vm332, %v6063, 0
    %v6159 = vsel %vm332, %v6064, 0
    %v6162 = vsel %vm332, %v6065, 0
    %v6165 = vsel %vm332, %v6066, 0
    %v6168 = vsel %vm332, %v6067, 0
    %v6171 = vsel %vm332, %v6068, 0
    %v6174 = vsel %vm332, %v6069, 0
    %v6177 = vsel %vm332, %v6070, 0
    %v6180 = vsel %vm332, %v6071, 0
    %v6183 = vsel %vm332, %v6072, 0
    %v6186 = vsel %vm332, %v6073, 0
    %v6189 = vsel %vm332, %v6074, 0
    %v6192 = vsel %vm332, %v6075, 0
    %v6195 = vsel %vm332, %v6076, 0
    %v6198 = vsel %vm332, %v6077, 0
    %v6201 = vsel %vm332, %v6078, 0
    %v6204 = vsel %vm332, %v6079, 0
    %v6207 = vsel %vm332, %v6080, 0
    %v6210 = vsel %vm332, %v6081, 0
    %v6213 = vsel %vm332, %v6082, 0
    %v6216 = vsel %vm332, %v6083, 0
    %v6219 = vsel %vm332, %v6084, 0
    %v6222 = vsel %vm332, %v6085, 0
    %v6225 = vsel %vm332, %v6086, 0
    %v6228 = vsel %vm332, %v6087, 0
    %v6231 = vsel %vm332, %v6088, 0
    %v6234 = vsel %vm332, %v6089, 0
    %v6237 = vsel %vm332, %v6090, 0
    %v6240 = vsel %vm332, %v6091, 0
    %v6243 = vsel %vm332, %v6092, 0
    %6245 = vmatprep.subr.mxu0 0.0
    %6246 = vmatpush1.msra.mxu0 %v6097
    %6247 = vmatprep.subr.mxu0 0.0
    %6248 = vmatpush1.msra.mxu0 %v6098
    %6249 = vmatprep.subr.mxu0 0.0
    %6250 = vmatpush1.msra.mxu0 %v6099
    %6251 = vmatprep.subr.mxu0 0.0
    %6252 = vmatpush1.msra.mxu0 %v6100
    %6253 = vmatprep.subr.mxu0 0.0
    %6254 = vmatpush1.msra.mxu0 0.0
    %6255 = vmatprep.subr.mxu0 0.0
    %6256 = vmatpush1.msra.mxu0 0.0
    %6257 = vmatprep.subr.mxu0 0.0
    %6258 = vmatpush1.msra.mxu0 0.0
    %6259 = vmatprep.subr.mxu0 0.0
    %6260 = vmatpush1.msra.mxu0 0.0
    %6261 = vmatprep.subr.mxu0 0.0
    %6262 = vmatpush1.msra.mxu0 0.0
    %6263 = vmatprep.subr.mxu0 0.0
    %6264 = vmatpush1.msra.mxu0 0.0
    %6265 = vmatprep.subr.mxu0 0.0
    %6266 = vmatpush1.msra.mxu0 0.0
    %6267 = vmatprep.subr.mxu0 0.0
    %6268 = vmatpush1.msra.mxu0 0.0
    %6269 = vmatprep.subr.mxu0 0.0
    %6270 = vmatpush1.msra.mxu0 0.0
    %6271 = vmatprep.subr.mxu0 0.0
    %6272 = vmatpush1.msra.mxu0 0.0
    %6273 = vmatprep.subr.mxu0 0.0
    %6274 = vmatpush1.msra.mxu0 0.0
    %6275 = vmatprep.subr.mxu0 0.0
    %6276 = vmatpush1.msra.mxu0 0.0
    %6277 = vmatprep.subr.mxu0 0.0
    %6278 = vmatpush1.msra.mxu0 0.0
    %6279 = vmatprep.subr.mxu0 0.0
    %6280 = vmatpush1.msra.mxu0 0.0
    %6281 = vmatprep.subr.mxu0 0.0
    %6282 = vmatpush1.msra.mxu0 0.0
    %6283 = vmatprep.subr.mxu0 0.0
    %6284 = vmatpush1.msra.mxu0 0.0
    %6285 = vmatprep.subr.mxu0 0.0
    %6286 = vmatpush1.msra.mxu0 0.0
    %6287 = vmatprep.subr.mxu0 0.0
    %6288 = vmatpush1.msra.mxu0 0.0
    %6289 = vmatprep.subr.mxu0 0.0
    %6290 = vmatpush1.msra.mxu0 0.0
    %6291 = vmatprep.subr.mxu0 0.0
    %6292 = vmatpush1.msra.mxu0 0.0
    %6293 = vmatprep.subr.mxu0 0.0
    %6294 = vmatpush1.msra.mxu0 0.0
    %6295 = vmatprep.subr.mxu0 0.0
    %6296 = vmatpush1.msra.mxu0 0.0
    %6297 = vmatprep.subr.mxu0 0.0
    %6298 = vmatpush1.msra.mxu0 0.0
    %6299 = vmatprep.subr.mxu0 0.0
    %6300 = vmatpush1.msra.mxu0 0.0
    %6301 = vmatprep.subr.mxu0 0.0
    %6302 = vmatpush1.msra.mxu0 0.0
    %6303 = vmatprep.subr.mxu0 0.0
    %6304 = vmatpush1.msra.mxu0 0.0
    %6305 = vmatprep.subr.mxu0 0.0
    %6306 = vmatpush1.msra.mxu0 0.0
    %6307 = vmatprep.subr.mxu0 0.0
    %6308 = vmatpush1.msra.mxu0 0.0
    %6309 = vmatprep.mubr.f32.mxu0 0.0
    %6310 = vmatmul.mubr.f32.gmra.mrb[0].mxu0 %v6102
    %v6311 = vpop.f32.mrb[0].mxu0
    %v6312 = vadd.f32 0.0, %v6311
    %v6313 = vpop.f32.mrb[0].mxu0
    %6314 = vmatprep.mubr.f32.mxu0 0.0
    %6315 = vmatmul.mubr.f32.gmra.mrb[0].mxu0 %v6105
    %v6316 = vpop.f32.mrb[0].mxu0
    %v6317 = vadd.f32 0.0, %v6316
    %v6318 = vpop.f32.mrb[0].mxu0
    %6319 = vmatprep.mubr.f32.mxu0 0.0
    %6320 = vmatmul.mubr.f32.gmra.mrb[0].mxu0 %v6108
    %v6321 = vpop.f32.mrb[0].mxu0
    %v6322 = vadd.f32 0.0, %v6321
    %v6323 = vpop.f32.mrb[0].mxu0
    %6324 = vmatprep.mubr.f32.mxu0 0.0
    %6325 = vmatmul.mubr.f32.gmra.mrb[0].mxu0 %v6111
    %v6326 = vpop.f32.mrb[0].mxu0
    %v6327 = vadd.f32 0.0, %v6326
    %v6328 = vpop.f32.mrb[0].mxu0
    %6329 = vmatprep.mubr.f32.mxu0 0.0
    %6330 = vmatmul.mubr.f32.gmra.mrb[0].mxu0 %v6114
    %v6331 = vpop.f32.mrb[0].mxu0
    %v6332 = vadd.f32 0.0, %v6331
    %v6333 = vpop.f32.mrb[0].mxu0
    %6334 = vmatprep.mubr.f32.mxu0 0.0
    %6335 = vmatmul.mubr.f32.gmra.mrb[0].mxu0 %v6117
    %v6336 = vpop.f32.mrb[0].mxu0
    %v6337 = vadd.f32 0.0, %v6336
    %v6338 = vpop.f32.mrb[0].mxu0
    %6339 = vmatprep.mubr.f32.mxu0 0.0
    %6340 = vmatmul.mubr.f32.gmra.mrb[0].mxu0 %v6120
    %v6341 = vpop.f32.mrb[0].mxu0
    %v6342 = vadd.f32 0.0, %v6341
    %v6343 = vpop.f32.mrb[0].mxu0
    %6344 = vmatprep.mubr.f32.mxu0 0.0
    %6345 = vmatmul.mubr.f32.gmra.mrb[0].mxu0 %v6123
    %v6346 = vpop.f32.mrb[0].mxu0
    %v6347 = vadd.f32 0.0, %v6346
    %v6348 = vpop.f32.mrb[0].mxu0
    %6349 = vmatprep.mubr.f32.mxu0 0.0
    %6350 = vmatmul.mubr.f32.gmra.mrb[0].mxu0 %v6126
    %v6351 = vpop.f32.mrb[0].mxu0
    %v6352 = vadd.f32 0.0, %v6351
    %v6353 = vpop.f32.mrb[0].mxu0
    %6354 = vmatprep.mubr.f32.mxu0 0.0
    %6355 = vmatmul.mubr.f32.gmra.mrb[0].mxu0 %v6129
    %v6356 = vpop.f32.mrb[0].mxu0
    %v6357 = vadd.f32 0.0, %v6356
    %v6358 = vpop.f32.mrb[0].mxu0
    %6359 = vmatprep.mubr.f32.mxu0 0.0
    %6360 = vmatmul.mubr.f32.gmra.mrb[0].mxu0 %v6132
    %v6361 = vpop.f32.mrb[0].mxu0
    %v6362 = vadd.f32 0.0, %v6361
    %v6363 = vpop.f32.mrb[0].mxu0
    %6364 = vmatprep.mubr.f32.mxu0 0.0
    %6365 = vmatmul.mubr.f32.gmra.mrb[0].mxu0 %v6135
    %v6366 = vpop.f32.mrb[0].mxu0
    %v6367 = vadd.f32 0.0, %v6366
    %v6368 = vpop.f32.mrb[0].mxu0
    %6369 = vmatprep.mubr.f32.mxu0 0.0
    %6370 = vmatmul.mubr.f32.gmra.mrb[0].mxu0 %v6138
    %v6371 = vpop.f32.mrb[0].mxu0
    %v6372 = vadd.f32 0.0, %v6371
    %v6373 = vpop.f32.mrb[0].mxu0
    %6374 = vmatprep.mubr.f32.mxu0 0.0
    %6375 = vmatmul.mubr.f32.gmra.mrb[0].mxu0 %v6141
    %v6376 = vpop.f32.mrb[0].mxu0
    %v6377 = vadd.f32 0.0, %v6376
    %v6378 = vpop.f32.mrb[0].mxu0
    %6379 = vmatprep.mubr.f32.mxu0 0.0
    %6380 = vmatmul.mubr.f32.gmra.mrb[0].mxu0 %v6144
    %v6381 = vpop.f32.mrb[0].mxu0
    %v6382 = vadd.f32 0.0, %v6381
    %v6383 = vpop.f32.mrb[0].mxu0
    %6384 = vmatprep.mubr.f32.mxu0 0.0
    %6385 = vmatmul.mubr.f32.gmra.mrb[0].mxu0 %v6147
    %v6386 = vpop.f32.mrb[0].mxu0
    %v6387 = vadd.f32 0.0, %v6386
    %v6388 = vpop.f32.mrb[0].mxu0
    %6389 = vmatprep.mubr.f32.mxu0 0.0
    %6390 = vmatmul.mubr.f32.gmra.mrb[0].mxu0 %v6150
    %v6391 = vpop.f32.mrb[0].mxu0
    %v6392 = vadd.f32 0.0, %v6391
    %v6393 = vpop.f32.mrb[0].mxu0
    %6394 = vmatprep.mubr.f32.mxu0 0.0
    %6395 = vmatmul.mubr.f32.gmra.mrb[0].mxu0 %v6153
    %v6396 = vpop.f32.mrb[0].mxu0
    %v6397 = vadd.f32 0.0, %v6396
    %v6398 = vpop.f32.mrb[0].mxu0
    %6399 = vmatprep.mubr.f32.mxu0 0.0
    %6400 = vmatmul.mubr.f32.gmra.mrb[0].mxu0 %v6156
    %v6401 = vpop.f32.mrb[0].mxu0
    %v6402 = vadd.f32 0.0, %v6401
    %v6403 = vpop.f32.mrb[0].mxu0
    %6404 = vmatprep.mubr.f32.mxu0 0.0
    %6405 = vmatmul.mubr.f32.gmra.mrb[0].mxu0 %v6159
    %v6406 = vpop.f32.mrb[0].mxu0
    %v6407 = vadd.f32 0.0, %v6406
    %v6408 = vpop.f32.mrb[0].mxu0
    %6409 = vmatprep.mubr.f32.mxu0 0.0
    %6410 = vmatmul.mubr.f32.gmra.mrb[0].mxu0 %v6162
    %v6411 = vpop.f32.mrb[0].mxu0
    %v6412 = vadd.f32 0.0, %v6411
    %v6413 = vpop.f32.mrb[0].mxu0
    %6414 = vmatprep.mubr.f32.mxu0 0.0
    %6415 = vmatmul.mubr.f32.gmra.mrb[0].mxu0 %v6165
    %v6416 = vpop.f32.mrb[0].mxu0
    %v6417 = vadd.f32 0.0, %v6416
    %v6418 = vpop.f32.mrb[0].mxu0
    %6419 = vmatprep.mubr.f32.mxu0 0.0
    %6420 = vmatmul.mubr.f32.gmra.mrb[0].mxu0 %v6168
    %v6421 = vpop.f32.mrb[0].mxu0
    %v6422 = vadd.f32 0.0, %v6421
    %v6423 = vpop.f32.mrb[0].mxu0
    %6424 = vmatprep.mubr.f32.mxu0 0.0
    %6425 = vmatmul.mubr.f32.gmra.mrb[0].mxu0 %v6171
    %v6426 = vpop.f32.mrb[0].mxu0
    %v6427 = vadd.f32 0.0, %v6426
    %v6428 = vpop.f32.mrb[0].mxu0
    %6429 = vmatprep.mubr.f32.mxu0 0.0
    %6430 = vmatmul.mubr.f32.gmra.mrb[0].mxu0 %v6174
    %v6431 = vpop.f32.mrb[0].mxu0
    %v6432 = vadd.f32 0.0, %v6431
    %v6433 = vpop.f32.mrb[0].mxu0
    %6434 = vmatprep.mubr.f32.mxu0 0.0
    %6435 = vmatmul.mubr.f32.gmra.mrb[0].mxu0 %v6177
    %v6436 = vpop.f32.mrb[0].mxu0
    %v6437 = vadd.f32 0.0, %v6436
    %v6438 = vpop.f32.mrb[0].mxu0
    %6439 = vmatprep.mubr.f32.mxu0 0.0
    %6440 = vmatmul.mubr.f32.gmra.mrb[0].mxu0 %v6180
    %v6441 = vpop.f32.mrb[0].mxu0
    %v6442 = vadd.f32 0.0, %v6441
    %v6443 = vpop.f32.mrb[0].mxu0
    %6444 = vmatprep.mubr.f32.mxu0 0.0
    %6445 = vmatmul.mubr.f32.gmra.mrb[0].mxu0 %v6183
    %v6446 = vpop.f32.mrb[0].mxu0
    %v6447 = vadd.f32 0.0, %v6446
    %v6448 = vpop.f32.mrb[0].mxu0
    %6449 = vmatprep.mubr.f32.mxu0 0.0
    %6450 = vmatmul.mubr.f32.gmra.mrb[0].mxu0 %v6186
    %v6451 = vpop.f32.mrb[0].mxu0
    %v6452 = vadd.f32 0.0, %v6451
    %v6453 = vpop.f32.mrb[0].mxu0
    %6454 = vmatprep.mubr.f32.mxu0 0.0
    %6455 = vmatmul.mubr.f32.gmra.mrb[0].mxu0 %v6189
    %v6456 = vpop.f32.mrb[0].mxu0
    %v6457 = vadd.f32 0.0, %v6456
    %v6458 = vpop.f32.mrb[0].mxu0
    %6459 = vmatprep.mubr.f32.mxu0 0.0
    %6460 = vmatmul.mubr.f32.gmra.mrb[0].mxu0 %v6192
    %v6461 = vpop.f32.mrb[0].mxu0
    %v6462 = vadd.f32 0.0, %v6461
    %v6463 = vpop.f32.mrb[0].mxu0
    %6464 = vmatprep.mubr.f32.mxu0 0.0
    %6465 = vmatmul.mubr.f32.gmra.mrb[0].mxu0 %v6195
    %v6466 = vpop.f32.mrb[0].mxu0
    %v6467 = vadd.f32 0.0, %v6466
    %v6468 = vpop.f32.mrb[0].mxu0
    %6469 = vmatprep.mubr.f32.mxu0 0.0
    %6470 = vmatmul.mubr.f32.gmra.mrb[0].mxu0 %v6198
    %v6471 = vpop.f32.mrb[0].mxu0
    %v6472 = vadd.f32 0.0, %v6471
    %v6473 = vpop.f32.mrb[0].mxu0
    %6474 = vmatprep.mubr.f32.mxu0 0.0
    %6475 = vmatmul.mubr.f32.gmra.mrb[0].mxu0 %v6201
    %v6476 = vpop.f32.mrb[0].mxu0
    %v6477 = vadd.f32 0.0, %v6476
    %v6478 = vpop.f32.mrb[0].mxu0
    %6479 = vmatprep.mubr.f32.mxu0 0.0
    %6480 = vmatmul.mubr.f32.gmra.mrb[0].mxu0 %v6204
    %v6481 = vpop.f32.mrb[0].mxu0
    %v6482 = vadd.f32 0.0, %v6481
    %v6483 = vpop.f32.mrb[0].mxu0
    %6484 = vmatprep.mubr.f32.mxu0 0.0
    %6485 = vmatmul.mubr.f32.gmra.mrb[0].mxu0 %v6207
    %v6486 = vpop.f32.mrb[0].mxu0
    %v6487 = vadd.f32 0.0, %v6486
    %v6488 = vpop.f32.mrb[0].mxu0
    %6489 = vmatprep.mubr.f32.mxu0 0.0
    %6490 = vmatmul.mubr.f32.gmra.mrb[0].mxu0 %v6210
    %v6491 = vpop.f32.mrb[0].mxu0
    %v6492 = vadd.f32 0.0, %v6491
    %v6493 = vpop.f32.mrb[0].mxu0
    %6494 = vmatprep.mubr.f32.mxu0 0.0
    %6495 = vmatmul.mubr.f32.gmra.mrb[0].mxu0 %v6213
    %v6496 = vpop.f32.mrb[0].mxu0
    %v6497 = vadd.f32 0.0, %v6496
    %v6498 = vpop.f32.mrb[0].mxu0
    %6499 = vmatprep.mubr.f32.mxu0 0.0
    %6500 = vmatmul.mubr.f32.gmra.mrb[0].mxu0 %v6216
    %v6501 = vpop.f32.mrb[0].mxu0
    %v6502 = vadd.f32 0.0, %v6501
    %v6503 = vpop.f32.mrb[0].mxu0
    %6504 = vmatprep.mubr.f32.mxu0 0.0
    %6505 = vmatmul.mubr.f32.gmra.mrb[0].mxu0 %v6219
    %v6506 = vpop.f32.mrb[0].mxu0
    %v6507 = vadd.f32 0.0, %v6506
    %v6508 = vpop.f32.mrb[0].mxu0
    %6509 = vmatprep.mubr.f32.mxu0 0.0
    %6510 = vmatmul.mubr.f32.gmra.mrb[0].mxu0 %v6222
    %v6511 = vpop.f32.mrb[0].mxu0
    %v6512 = vadd.f32 0.0, %v6511
    %v6513 = vpop.f32.mrb[0].mxu0
    %6514 = vmatprep.mubr.f32.mxu0 0.0
    %6515 = vmatmul.mubr.f32.gmra.mrb[0].mxu0 %v6225
    %v6516 = vpop.f32.mrb[0].mxu0
    %v6517 = vadd.f32 0.0, %v6516
    %v6518 = vpop.f32.mrb[0].mxu0
    %6519 = vmatprep.mubr.f32.mxu0 0.0
    %6520 = vmatmul.mubr.f32.gmra.mrb[0].mxu0 %v6228
    %v6521 = vpop.f32.mrb[0].mxu0
    %v6522 = vadd.f32 0.0, %v6521
    %v6523 = vpop.f32.mrb[0].mxu0
    %6524 = vmatprep.mubr.f32.mxu0 0.0
    %6525 = vmatmul.mubr.f32.gmra.mrb[0].mxu0 %v6231
    %v6526 = vpop.f32.mrb[0].mxu0
    %v6527 = vadd.f32 0.0, %v6526
    %v6528 = vpop.f32.mrb[0].mxu0
    %6529 = vmatprep.mubr.f32.mxu0 0.0
    %6530 = vmatmul.mubr.f32.gmra.mrb[0].mxu0 %v6234
    %v6531 = vpop.f32.mrb[0].mxu0
    %v6532 = vadd.f32 0.0, %v6531
    %v6533 = vpop.f32.mrb[0].mxu0
    %6534 = vmatprep.mubr.f32.mxu0 0.0
    %6535 = vmatmul.mubr.f32.gmra.mrb[0].mxu0 %v6237
    %v6536 = vpop.f32.mrb[0].mxu0
    %v6537 = vadd.f32 0.0, %v6536
    %v6538 = vpop.f32.mrb[0].mxu0
    %6539 = vmatprep.mubr.f32.mxu0 0.0
    %6540 = vmatmul.mubr.f32.gmra.mrb[0].mxu0 %v6240
    %v6541 = vpop.f32.mrb[0].mxu0
    %v6542 = vadd.f32 0.0, %v6541
    %v6543 = vpop.f32.mrb[0].mxu0
    %6544 = vmatprep.mubr.f32.mxu0 0.0
    %6545 = vmatmul.mubr.f32.gmra.mrb[0].mxu0 %v6243
    %v6546 = vpop.f32.mrb[0].mxu0
    %v6547 = vadd.f32 0.0, %v6546
    %v6548 = vpop.f32.mrb[0].mxu0
    %6549 = vdwg.mxu0
    %v6551 = vsel %vm332, %v3655, 0
    %v6554 = vsel %vm332, %v3658, 0
    %v6557 = vsel %vm332, %v3663, 0
    %v6560 = vsel %vm332, %v3666, 0
    %v6563 = vsel %vm332, %v3671, 0
    %v6566 = vsel %vm332, %v3674, 0
    %v6569 = vsel %vm332, %v3679, 0
    %v6572 = vsel %vm332, %v3682, 0
    %v6575 = vsel %vm332, %v3687, 0
    %v6578 = vsel %vm332, %v3690, 0
    %v6581 = vsel %vm332, %v3695, 0
    %v6584 = vsel %vm332, %v3698, 0
    %v6587 = vsel %vm332, %v3703, 0
    %v6590 = vsel %vm332, %v3706, 0
    %v6593 = vsel %vm332, %v3711, 0
    %v6596 = vsel %vm332, %v3714, 0
    %v6599 = vsel %vm332, %v3719, 0
    %v6602 = vsel %vm332, %v3722, 0
    %v6605 = vsel %vm332, %v3727, 0
    %v6608 = vsel %vm332, %v3730, 0
    %v6611 = vsel %vm332, %v3735, 0
    %v6614 = vsel %vm332, %v3738, 0
    %v6617 = vsel %vm332, %v3743, 0
    %v6620 = vsel %vm332, %v3746, 0
    %v6623 = vsel %vm332, %v3751, 0
    %v6626 = vsel %vm332, %v3754, 0
    %v6629 = vsel %vm332, %v3759, 0
    %v6632 = vsel %vm332, %v3762, 0
    %v6635 = vsel %vm332, %v3767, 0
    %v6638 = vsel %vm332, %v3770, 0
    %v6641 = vsel %vm332, %v3775, 0
    %v6644 = vsel %vm332, %v3778, 0
    %v6647 = vsel %vm332, %v3783, 0
    %v6650 = vsel %vm332, %v3786, 0
    %v6653 = vsel %vm332, %v3791, 0
    %v6656 = vsel %vm332, %v3794, 0
    %v6659 = vsel %vm332, %v3799, 0
    %v6662 = vsel %vm332, %v3802, 0
    %v6665 = vsel %vm332, %v3807, 0
    %v6668 = vsel %vm332, %v3810, 0
    %v6671 = vsel %vm332, %v3815, 0
    %v6674 = vsel %vm332, %v3818, 0
    %v6677 = vsel %vm332, %v3823, 0
    %v6680 = vsel %vm332, %v3826, 0
    %v6683 = vsel %vm332, %v3831, 0
    %v6686 = vsel %vm332, %v3834, 0
    %v6689 = vsel %vm332, %v3839, 0
    %v6692 = vsel %vm332, %v3842, 0
    %6694 = vmatprep.subr.mxu0 0.0
    %6695 = vmatpush1.msra.mxu0 %v6093
    %6696 = vmatprep.subr.mxu0 0.0
    %6697 = vmatpush1.msra.mxu0 %v6094
    %6698 = vmatprep.subr.mxu0 0.0
    %6699 = vmatpush1.msra.mxu0 %v6095
    %6700 = vmatprep.subr.mxu0 0.0
    %6701 = vmatpush1.msra.mxu0 %v6096
    %6702 = vmatprep.subr.mxu0 0.0
    %6703 = vmatpush1.msra.mxu0 0.0
    %6704 = vmatprep.subr.mxu0 0.0
    %6705 = vmatpush1.msra.mxu0 0.0
    %6706 = vmatprep.subr.mxu0 0.0
    %6707 = vmatpush1.msra.mxu0 0.0
    %6708 = vmatprep.subr.mxu0 0.0
    %6709 = vmatpush1.msra.mxu0 0.0
    %6710 = vmatprep.subr.mxu0 0.0
    %6711 = vmatpush1.msra.mxu0 0.0
    %6712 = vmatprep.subr.mxu0 0.0
    %6713 = vmatpush1.msra.mxu0 0.0
    %6714 = vmatprep.subr.mxu0 0.0
    %6715 = vmatpush1.msra.mxu0 0.0
    %6716 = vmatprep.subr.mxu0 0.0
    %6717 = vmatpush1.msra.mxu0 0.0
    %6718 = vmatprep.subr.mxu0 0.0
    %6719 = vmatpush1.msra.mxu0 0.0
    %6720 = vmatprep.subr.mxu0 0.0
    %6721 = vmatpush1.msra.mxu0 0.0
    %6722 = vmatprep.subr.mxu0 0.0
    %6723 = vmatpush1.msra.mxu0 0.0
    %6724 = vmatprep.subr.mxu0 0.0
    %6725 = vmatpush1.msra.mxu0 0.0
    %6726 = vmatprep.subr.mxu0 0.0
    %6727 = vmatpush1.msra.mxu0 0.0
    %6728 = vmatprep.subr.mxu0 0.0
    %6729 = vmatpush1.msra.mxu0 0.0
    %6730 = vmatprep.subr.mxu0 0.0
    %6731 = vmatpush1.msra.mxu0 0.0
    %6732 = vmatprep.subr.mxu0 0.0
    %6733 = vmatpush1.msra.mxu0 0.0
    %6734 = vmatprep.subr.mxu0 0.0
    %6735 = vmatpush1.msra.mxu0 0.0
    %6736 = vmatprep.subr.mxu0 0.0
    %6737 = vmatpush1.msra.mxu0 0.0
    %6738 = vmatprep.subr.mxu0 0.0
    %6739 = vmatpush1.msra.mxu0 0.0
    %6740 = vmatprep.subr.mxu0 0.0
    %6741 = vmatpush1.msra.mxu0 0.0
    %6742 = vmatprep.subr.mxu0 0.0
    %6743 = vmatpush1.msra.mxu0 0.0
    %6744 = vmatprep.subr.mxu0 0.0
    %6745 = vmatpush1.msra.mxu0 0.0
    %6746 = vmatprep.subr.mxu0 0.0
    %6747 = vmatpush1.msra.mxu0 0.0
    %6748 = vmatprep.subr.mxu0 0.0
    %6749 = vmatpush1.msra.mxu0 0.0
    %6750 = vmatprep.subr.mxu0 0.0
    %6751 = vmatpush1.msra.mxu0 0.0
    %6752 = vmatprep.subr.mxu0 0.0
    %6753 = vmatpush1.msra.mxu0 0.0
    %6754 = vmatprep.subr.mxu0 0.0
    %6755 = vmatpush1.msra.mxu0 0.0
    %6756 = vmatprep.subr.mxu0 0.0
    %6757 = vmatpush1.msra.mxu0 0.0
    %6758 = vmatprep.mubr.f32.mxu0 0.0
    %6759 = vmatmul.mubr.f32.gmra.mrb[0].mxu0 %v6551
    %v6760 = vpop.f32.mrb[0].mxu0
    %v6761 = vadd.f32 %v6312, %v6760
    %v6762 = vpop.f32.mrb[0].mxu0
    %6763 = vmatprep.mubr.f32.mxu0 0.0
    %6764 = vmatmul.mubr.f32.gmra.mrb[0].mxu0 %v6554
    %v6765 = vpop.f32.mrb[0].mxu0
    %v6766 = vadd.f32 %v6317, %v6765
    %v6767 = vpop.f32.mrb[0].mxu0
    %6768 = vmatprep.mubr.f32.mxu0 0.0
    %6769 = vmatmul.mubr.f32.gmra.mrb[0].mxu0 %v6557
    %v6770 = vpop.f32.mrb[0].mxu0
    %v6771 = vadd.f32 %v6322, %v6770
    %v6772 = vpop.f32.mrb[0].mxu0
    %6773 = vmatprep.mubr.f32.mxu0 0.0
    %6774 = vmatmul.mubr.f32.gmra.mrb[0].mxu0 %v6560
    %v6775 = vpop.f32.mrb[0].mxu0
    %v6776 = vadd.f32 %v6327, %v6775
    %v6777 = vpop.f32.mrb[0].mxu0
    %6778 = vmatprep.mubr.f32.mxu0 0.0
    %6779 = vmatmul.mubr.f32.gmra.mrb[0].mxu0 %v6563
    %v6780 = vpop.f32.mrb[0].mxu0
    %v6781 = vadd.f32 %v6332, %v6780
    %v6782 = vpop.f32.mrb[0].mxu0
    %6783 = vmatprep.mubr.f32.mxu0 0.0
    %6784 = vmatmul.mubr.f32.gmra.mrb[0].mxu0 %v6566
    %v6785 = vpop.f32.mrb[0].mxu0
    %v6786 = vadd.f32 %v6337, %v6785
    %v6787 = vpop.f32.mrb[0].mxu0
    %6788 = vmatprep.mubr.f32.mxu0 0.0
    %6789 = vmatmul.mubr.f32.gmra.mrb[0].mxu0 %v6569
    %v6790 = vpop.f32.mrb[0].mxu0
    %v6791 = vadd.f32 %v6342, %v6790
    %v6792 = vpop.f32.mrb[0].mxu0
    %6793 = vmatprep.mubr.f32.mxu0 0.0
    %6794 = vmatmul.mubr.f32.gmra.mrb[0].mxu0 %v6572
    %v6795 = vpop.f32.mrb[0].mxu0
    %v6796 = vadd.f32 %v6347, %v6795
    %v6797 = vpop.f32.mrb[0].mxu0
    %6798 = vmatprep.mubr.f32.mxu0 0.0
    %6799 = vmatmul.mubr.f32.gmra.mrb[0].mxu0 %v6575
    %v6800 = vpop.f32.mrb[0].mxu0
    %v6801 = vadd.f32 %v6352, %v6800
    %v6802 = vpop.f32.mrb[0].mxu0
    %6803 = vmatprep.mubr.f32.mxu0 0.0
    %6804 = vmatmul.mubr.f32.gmra.mrb[0].mxu0 %v6578
    %v6805 = vpop.f32.mrb[0].mxu0
    %v6806 = vadd.f32 %v6357, %v6805
    %v6807 = vpop.f32.mrb[0].mxu0
    %6808 = vmatprep.mubr.f32.mxu0 0.0
    %6809 = vmatmul.mubr.f32.gmra.mrb[0].mxu0 %v6581
    %v6810 = vpop.f32.mrb[0].mxu0
    %v6811 = vadd.f32 %v6362, %v6810
    %v6812 = vpop.f32.mrb[0].mxu0
    %6813 = vmatprep.mubr.f32.mxu0 0.0
    %6814 = vmatmul.mubr.f32.gmra.mrb[0].mxu0 %v6584
    %v6815 = vpop.f32.mrb[0].mxu0
    %v6816 = vadd.f32 %v6367, %v6815
    %v6817 = vpop.f32.mrb[0].mxu0
    %6818 = vmatprep.mubr.f32.mxu0 0.0
    %6819 = vmatmul.mubr.f32.gmra.mrb[0].mxu0 %v6587
    %v6820 = vpop.f32.mrb[0].mxu0
    %v6821 = vadd.f32 %v6372, %v6820
    %v6822 = vpop.f32.mrb[0].mxu0
    %6823 = vmatprep.mubr.f32.mxu0 0.0
    %6824 = vmatmul.mubr.f32.gmra.mrb[0].mxu0 %v6590
    %v6825 = vpop.f32.mrb[0].mxu0
    %v6826 = vadd.f32 %v6377, %v6825
    %v6827 = vpop.f32.mrb[0].mxu0
    %6828 = vmatprep.mubr.f32.mxu0 0.0
    %6829 = vmatmul.mubr.f32.gmra.mrb[0].mxu0 %v6593
    %v6830 = vpop.f32.mrb[0].mxu0
    %v6831 = vadd.f32 %v6382, %v6830
    %v6832 = vpop.f32.mrb[0].mxu0
    %6833 = vmatprep.mubr.f32.mxu0 0.0
    %6834 = vmatmul.mubr.f32.gmra.mrb[0].mxu0 %v6596
    %v6835 = vpop.f32.mrb[0].mxu0
    %v6836 = vadd.f32 %v6387, %v6835
    %v6837 = vpop.f32.mrb[0].mxu0
    %6838 = vmatprep.mubr.f32.mxu0 0.0
    %6839 = vmatmul.mubr.f32.gmra.mrb[0].mxu0 %v6599
    %v6840 = vpop.f32.mrb[0].mxu0
    %v6841 = vadd.f32 %v6392, %v6840
    %v6842 = vpop.f32.mrb[0].mxu0
    %6843 = vmatprep.mubr.f32.mxu0 0.0
    %6844 = vmatmul.mubr.f32.gmra.mrb[0].mxu0 %v6602
    %v6845 = vpop.f32.mrb[0].mxu0
    %v6846 = vadd.f32 %v6397, %v6845
    %v6847 = vpop.f32.mrb[0].mxu0
    %6848 = vmatprep.mubr.f32.mxu0 0.0
    %6849 = vmatmul.mubr.f32.gmra.mrb[0].mxu0 %v6605
    %v6850 = vpop.f32.mrb[0].mxu0
    %v6851 = vadd.f32 %v6402, %v6850
    %v6852 = vpop.f32.mrb[0].mxu0
    %6853 = vmatprep.mubr.f32.mxu0 0.0
    %6854 = vmatmul.mubr.f32.gmra.mrb[0].mxu0 %v6608
    %v6855 = vpop.f32.mrb[0].mxu0
    %v6856 = vadd.f32 %v6407, %v6855
    %v6857 = vpop.f32.mrb[0].mxu0
    %6858 = vmatprep.mubr.f32.mxu0 0.0
    %6859 = vmatmul.mubr.f32.gmra.mrb[0].mxu0 %v6611
    %v6860 = vpop.f32.mrb[0].mxu0
    %v6861 = vadd.f32 %v6412, %v6860
    %v6862 = vpop.f32.mrb[0].mxu0
    %6863 = vmatprep.mubr.f32.mxu0 0.0
    %6864 = vmatmul.mubr.f32.gmra.mrb[0].mxu0 %v6614
    %v6865 = vpop.f32.mrb[0].mxu0
    %v6866 = vadd.f32 %v6417, %v6865
    %v6867 = vpop.f32.mrb[0].mxu0
    %6868 = vmatprep.mubr.f32.mxu0 0.0
    %6869 = vmatmul.mubr.f32.gmra.mrb[0].mxu0 %v6617
    %v6870 = vpop.f32.mrb[0].mxu0
    %v6871 = vadd.f32 %v6422, %v6870
    %v6872 = vpop.f32.mrb[0].mxu0
    %6873 = vmatprep.mubr.f32.mxu0 0.0
    %6874 = vmatmul.mubr.f32.gmra.mrb[0].mxu0 %v6620
    %v6875 = vpop.f32.mrb[0].mxu0
    %v6876 = vadd.f32 %v6427, %v6875
    %v6877 = vpop.f32.mrb[0].mxu0
    %6878 = vmatprep.mubr.f32.mxu0 0.0
    %6879 = vmatmul.mubr.f32.gmra.mrb[0].mxu0 %v6623
    %v6880 = vpop.f32.mrb[0].mxu0
    %v6881 = vadd.f32 %v6432, %v6880
    %v6882 = vpop.f32.mrb[0].mxu0
    %6883 = vmatprep.mubr.f32.mxu0 0.0
    %6884 = vmatmul.mubr.f32.gmra.mrb[0].mxu0 %v6626
    %v6885 = vpop.f32.mrb[0].mxu0
    %v6886 = vadd.f32 %v6437, %v6885
    %v6887 = vpop.f32.mrb[0].mxu0
    %6888 = vmatprep.mubr.f32.mxu0 0.0
    %6889 = vmatmul.mubr.f32.gmra.mrb[0].mxu0 %v6629
    %v6890 = vpop.f32.mrb[0].mxu0
    %v6891 = vadd.f32 %v6442, %v6890
    %v6892 = vpop.f32.mrb[0].mxu0
    %6893 = vmatprep.mubr.f32.mxu0 0.0
    %6894 = vmatmul.mubr.f32.gmra.mrb[0].mxu0 %v6632
    %v6895 = vpop.f32.mrb[0].mxu0
    %v6896 = vadd.f32 %v6447, %v6895
    %v6897 = vpop.f32.mrb[0].mxu0
    %6898 = vmatprep.mubr.f32.mxu0 0.0
    %6899 = vmatmul.mubr.f32.gmra.mrb[0].mxu0 %v6635
    %v6900 = vpop.f32.mrb[0].mxu0
    %v6901 = vadd.f32 %v6452, %v6900
    %v6902 = vpop.f32.mrb[0].mxu0
    %6903 = vmatprep.mubr.f32.mxu0 0.0
    %6904 = vmatmul.mubr.f32.gmra.mrb[0].mxu0 %v6638
    %v6905 = vpop.f32.mrb[0].mxu0
    %v6906 = vadd.f32 %v6457, %v6905
    %v6907 = vpop.f32.mrb[0].mxu0
    %6908 = vmatprep.mubr.f32.mxu0 0.0
    %6909 = vmatmul.mubr.f32.gmra.mrb[0].mxu0 %v6641
    %v6910 = vpop.f32.mrb[0].mxu0
    %v6911 = vadd.f32 %v6462, %v6910
    %v6912 = vpop.f32.mrb[0].mxu0
    %6913 = vmatprep.mubr.f32.mxu0 0.0
    %6914 = vmatmul.mubr.f32.gmra.mrb[0].mxu0 %v6644
    %v6915 = vpop.f32.mrb[0].mxu0
    %v6916 = vadd.f32 %v6467, %v6915
    %v6917 = vpop.f32.mrb[0].mxu0
    %6918 = vmatprep.mubr.f32.mxu0 0.0
    %6919 = vmatmul.mubr.f32.gmra.mrb[0].mxu0 %v6647
    %v6920 = vpop.f32.mrb[0].mxu0
    %v6921 = vadd.f32 %v6472, %v6920
    %v6922 = vpop.f32.mrb[0].mxu0
    %6923 = vmatprep.mubr.f32.mxu0 0.0
    %6924 = vmatmul.mubr.f32.gmra.mrb[0].mxu0 %v6650
    %v6925 = vpop.f32.mrb[0].mxu0
    %v6926 = vadd.f32 %v6477, %v6925
    %v6927 = vpop.f32.mrb[0].mxu0
    %6928 = vmatprep.mubr.f32.mxu0 0.0
    %6929 = vmatmul.mubr.f32.gmra.mrb[0].mxu0 %v6653
    %v6930 = vpop.f32.mrb[0].mxu0
    %v6931 = vadd.f32 %v6482, %v6930
    %v6932 = vpop.f32.mrb[0].mxu0
    %6933 = vmatprep.mubr.f32.mxu0 0.0
    %6934 = vmatmul.mubr.f32.gmra.mrb[0].mxu0 %v6656
    %v6935 = vpop.f32.mrb[0].mxu0
    %v6936 = vadd.f32 %v6487, %v6935
    %v6937 = vpop.f32.mrb[0].mxu0
    %6938 = vmatprep.mubr.f32.mxu0 0.0
    %6939 = vmatmul.mubr.f32.gmra.mrb[0].mxu0 %v6659
    %v6940 = vpop.f32.mrb[0].mxu0
    %v6941 = vadd.f32 %v6492, %v6940
    %v6942 = vpop.f32.mrb[0].mxu0
    %6943 = vmatprep.mubr.f32.mxu0 0.0
    %6944 = vmatmul.mubr.f32.gmra.mrb[0].mxu0 %v6662
    %v6945 = vpop.f32.mrb[0].mxu0
    %v6946 = vadd.f32 %v6497, %v6945
    %v6947 = vpop.f32.mrb[0].mxu0
    %6948 = vmatprep.mubr.f32.mxu0 0.0
    %6949 = vmatmul.mubr.f32.gmra.mrb[0].mxu0 %v6665
    %v6950 = vpop.f32.mrb[0].mxu0
    %v6951 = vadd.f32 %v6502, %v6950
    %v6952 = vpop.f32.mrb[0].mxu0
    %6953 = vmatprep.mubr.f32.mxu0 0.0
    %6954 = vmatmul.mubr.f32.gmra.mrb[0].mxu0 %v6668
    %v6955 = vpop.f32.mrb[0].mxu0
    %v6956 = vadd.f32 %v6507, %v6955
    %v6957 = vpop.f32.mrb[0].mxu0
    %6958 = vmatprep.mubr.f32.mxu0 0.0
    %6959 = vmatmul.mubr.f32.gmra.mrb[0].mxu0 %v6671
    %v6960 = vpop.f32.mrb[0].mxu0
    %v6961 = vadd.f32 %v6512, %v6960
    %v6962 = vpop.f32.mrb[0].mxu0
    %6963 = vmatprep.mubr.f32.mxu0 0.0
    %6964 = vmatmul.mubr.f32.gmra.mrb[0].mxu0 %v6674
    %v6965 = vpop.f32.mrb[0].mxu0
    %v6966 = vadd.f32 %v6517, %v6965
    %v6967 = vpop.f32.mrb[0].mxu0
    %6968 = vmatprep.mubr.f32.mxu0 0.0
    %6969 = vmatmul.mubr.f32.gmra.mrb[0].mxu0 %v6677
    %v6970 = vpop.f32.mrb[0].mxu0
    %v6971 = vadd.f32 %v6522, %v6970
    %v6972 = vpop.f32.mrb[0].mxu0
    %6973 = vmatprep.mubr.f32.mxu0 0.0
    %6974 = vmatmul.mubr.f32.gmra.mrb[0].mxu0 %v6680
    %v6975 = vpop.f32.mrb[0].mxu0
    %v6976 = vadd.f32 %v6527, %v6975
    %v6977 = vpop.f32.mrb[0].mxu0
    %6978 = vmatprep.mubr.f32.mxu0 0.0
    %6979 = vmatmul.mubr.f32.gmra.mrb[0].mxu0 %v6683
    %v6980 = vpop.f32.mrb[0].mxu0
    %v6981 = vadd.f32 %v6532, %v6980
    %v6982 = vpop.f32.mrb[0].mxu0
    %6983 = vmatprep.mubr.f32.mxu0 0.0
    %6984 = vmatmul.mubr.f32.gmra.mrb[0].mxu0 %v6686
    %v6985 = vpop.f32.mrb[0].mxu0
    %v6986 = vadd.f32 %v6537, %v6985
    %v6987 = vpop.f32.mrb[0].mxu0
    %6988 = vmatprep.mubr.f32.mxu0 0.0
    %6989 = vmatmul.mubr.f32.gmra.mrb[0].mxu0 %v6689
    %v6990 = vpop.f32.mrb[0].mxu0
    %v6991 = vadd.f32 %v6542, %v6990
    %v6992 = vpop.f32.mrb[0].mxu0
    %6993 = vmatprep.mubr.f32.mxu0 0.0
    %6994 = vmatmul.mubr.f32.gmra.mrb[0].mxu0 %v6692
    %v6995 = vpop.f32.mrb[0].mxu0
    %v6996 = vadd.f32 %v6547, %v6995
    %v6997 = vpop.f32.mrb[0].mxu0
    %6998 = vdwg.mxu0
    %v6999 = vld [vmem:[%s10] sm:$0x1]
    %v7001 = vlaneseq
    %v7002 = vshrl.u32 %v7001, 7
    %v7003 = vsub.s32 0, %v7002
    %v7004 = vrot.slane %v6999, %v7003
    %v7006 = vadd.f32 %v6761, %v7004
    %v7007 = vadd.f32 %v6766, %v7004
    %v7008 = vadd.f32 %v6771, %v7004
    %v7009 = vadd.f32 %v6776, %v7004
    %v7010 = vadd.f32 %v6781, %v7004
    %v7011 = vadd.f32 %v6786, %v7004
    %v7012 = vadd.f32 %v6791, %v7004
    %v7013 = vadd.f32 %v6796, %v7004
    %v7014 = vadd.f32 %v6801, %v7004
    %v7015 = vadd.f32 %v6806, %v7004
    %v7016 = vadd.f32 %v6811, %v7004
    %v7017 = vadd.f32 %v6816, %v7004
    %v7018 = vadd.f32 %v6821, %v7004
    %v7019 = vadd.f32 %v6826, %v7004
    %v7020 = vadd.f32 %v6831, %v7004
    %v7021 = vadd.f32 %v6836, %v7004
    %v7022 = vadd.f32 %v6841, %v7004
    %v7023 = vadd.f32 %v6846, %v7004
    %v7024 = vadd.f32 %v6851, %v7004
    %v7025 = vadd.f32 %v6856, %v7004
    %v7026 = vadd.f32 %v6861, %v7004
    %v7027 = vadd.f32 %v6866, %v7004
    %v7028 = vadd.f32 %v6871, %v7004
    %v7029 = vadd.f32 %v6876, %v7004
    %v7030 = vadd.f32 %v6881, %v7004
    %v7031 = vadd.f32 %v6886, %v7004
    %v7032 = vadd.f32 %v6891, %v7004
    %v7033 = vadd.f32 %v6896, %v7004
    %v7034 = vadd.f32 %v6901, %v7004
    %v7035 = vadd.f32 %v6906, %v7004
    %v7036 = vadd.f32 %v6911, %v7004
    %v7037 = vadd.f32 %v6916, %v7004
    %v7038 = vadd.f32 %v6921, %v7004
    %v7039 = vadd.f32 %v6926, %v7004
    %v7040 = vadd.f32 %v6931, %v7004
    %v7041 = vadd.f32 %v6936, %v7004
    %v7042 = vadd.f32 %v6941, %v7004
    %v7043 = vadd.f32 %v6946, %v7004
    %v7044 = vadd.f32 %v6951, %v7004
    %v7045 = vadd.f32 %v6956, %v7004
    %v7046 = vadd.f32 %v6961, %v7004
    %v7047 = vadd.f32 %v6966, %v7004
    %v7048 = vadd.f32 %v6971, %v7004
    %v7049 = vadd.f32 %v6976, %v7004
    %v7050 = vadd.f32 %v6981, %v7004
    %v7051 = vadd.f32 %v6986, %v7004
    %v7052 = vadd.f32 %v6991, %v7004
    %v7053 = vadd.f32 %v6996, %v7004
    %7054 = vst [vmem:[#allocation8] sm:$0xff] %v7006
    %7055 = vst [vmem:[#allocation8 + $0x8] sm:$0xff] %v7007
    %7056 = vst [vmem:[#allocation8 + $0x10] sm:$0xff] %v7008
    %7057 = vst [vmem:[#allocation8 + $0x18] sm:$0xff] %v7009
    %7058 = vst [vmem:[#allocation8 + $0x20] sm:$0xff] %v7010
    %7059 = vst [vmem:[#allocation8 + $0x28] sm:$0xff] %v7011
    %7060 = vst [vmem:[#allocation8 + $0x30] sm:$0xff] %v7012
    %7061 = vst [vmem:[#allocation8 + $0x38] sm:$0xff] %v7013
    %7062 = vst [vmem:[#allocation8 + $0x40] sm:$0xff] %v7014
    %7063 = vst [vmem:[#allocation8 + $0x48] sm:$0xff] %v7015
    %7064 = vst [vmem:[#allocation8 + $0x50] sm:$0xff] %v7016
    %7065 = vst [vmem:[#allocation8 + $0x58] sm:$0xff] %v7017
    %7066 = vst [vmem:[#allocation8 + $0x60] sm:$0xff] %v7018
    %7067 = vst [vmem:[#allocation8 + $0x68] sm:$0xff] %v7019
    %7068 = vst [vmem:[#allocation8 + $0x70] sm:$0xff] %v7020
    %7069 = vst [vmem:[#allocation8 + $0x78] sm:$0xff] %v7021
    %7070 = vst [vmem:[#allocation8 + $0x80] sm:$0xff] %v7022
    %7071 = vst [vmem:[#allocation8 + $0x88] sm:$0xff] %v7023
    %7072 = vst [vmem:[#allocation8 + $0x90] sm:$0xff] %v7024
    %7073 = vst [vmem:[#allocation8 + $0x98] sm:$0xff] %v7025
    %7074 = vst [vmem:[#allocation8 + $0xa0] sm:$0xff] %v7026
    %7075 = vst [vmem:[#allocation8 + $0xa8] sm:$0xff] %v7027
    %7076 = vst [vmem:[#allocation8 + $0xb0] sm:$0xff] %v7028
    %7077 = vst [vmem:[#allocation8 + $0xb8] sm:$0xff] %v7029
    %7078 = vst [vmem:[#allocation8 + $0xc0] sm:$0xff] %v7030
    %7079 = vst [vmem:[#allocation8 + $0xc8] sm:$0xff] %v7031
    %7080 = vst [vmem:[#allocation8 + $0xd0] sm:$0xff] %v7032
    %7081 = vst [vmem:[#allocation8 + $0xd8] sm:$0xff] %v7033
    %7082 = vst [vmem:[#allocation8 + $0xe0] sm:$0xff] %v7034
    %7083 = vst [vmem:[#allocation8 + $0xe8] sm:$0xff] %v7035
    %7084 = vst [vmem:[#allocation8 + $0xf0] sm:$0xff] %v7036
    %7085 = vst [vmem:[#allocation8 + $0xf8] sm:$0xff] %v7037
    %7086 = vst [vmem:[#allocation8 + $0x100] sm:$0xff] %v7038
    %7087 = vst [vmem:[#allocation8 + $0x108] sm:$0xff] %v7039
    %7088 = vst [vmem:[#allocation8 + $0x110] sm:$0xff] %v7040
    %7089 = vst [vmem:[#allocation8 + $0x118] sm:$0xff] %v7041
    %7090 = vst [vmem:[#allocation8 + $0x120] sm:$0xff] %v7042
    %7091 = vst [vmem:[#allocation8 + $0x128] sm:$0xff] %v7043
    %7092 = vst [vmem:[#allocation8 + $0x130] sm:$0xff] %v7044
    %7093 = vst [vmem:[#allocation8 + $0x138] sm:$0xff] %v7045
    %7094 = vst [vmem:[#allocation8 + $0x140] sm:$0xff] %v7046
    %7095 = vst [vmem:[#allocation8 + $0x148] sm:$0xff] %v7047
    %7096 = vst [vmem:[#allocation8 + $0x150] sm:$0xff] %v7048
    %7097 = vst [vmem:[#allocation8 + $0x158] sm:$0xff] %v7049
    %7098 = vst [vmem:[#allocation8 + $0x160] sm:$0xff] %v7050
    %7099 = vst [vmem:[#allocation8 + $0x168] sm:$0xff] %v7051
    %7100 = vst [vmem:[#allocation8 + $0x170] sm:$0xff] %v7052
    %7101 = vst [vmem:[#allocation8 + $0x178] sm:$0xff] %v7053
    // Predicated region
    $region58: #{tpu_custom_call.1} parent=1 // pred_check
      _
    $region59: #{tpu_custom_call.1} parent=1 // pred_check_branch
      %7103 = sbr.rel (0) target = $region61
    $region60: #{tpu_custom_call.1} parent=1 // pred_region
      %s7105 = ssub.s32 6144, 6144
      %7106 = vsyncadd [#allocation4], %s7105
      %s7107 = sshll.u32 [#allocation8], 4
      %s7108 = int_to_ptr.vmem [resolvable:$true] %s7107
      %7113 = dma.vmem_to_hbm [thread:$0]  %s7108, 6144, %s11, [#allocation4], 128, 128, 8
    $region61: #{tpu_custom_call.1} parent=1 // pred_fallthru
      _
    // Predicated region
    $region62: #{tpu_custom_call.1} parent=1 // pred_check
      _
    $region63: #{tpu_custom_call.1} parent=1 // pred_check_branch
      %7115 = sbr.rel (0) target = $region65
    $region64: #{tpu_custom_call.1} parent=1 // pred_region
      %7116 = dma.done [#allocation4], 6144
    $region65: #{tpu_custom_call.1} parent=1 // pred_fallthru
      _
    %7117 = vsyncpa [#allocation3], 1
    %7118 = vsyncpa [#allocation6], 1
    %7119 = vsyncpa [#allocation4], 1

</llo_original>
